<compile_context>
chip_gen: v7x
topology: tpu7x:2x2x1
jax: 0.10.0
libtpu: 0.0.40
codegen_flags: <defaults>
</compile_context>

<pallas_src>
import functools

import numpy as np
import jax
import jax.numpy as jnp
from jax.experimental import pallas as pl
from jax.experimental.pallas import tpu as pltpu

EPS = 1e-5


# --------------------------------------------------------------------------
# Kernel
# --------------------------------------------------------------------------
def _pna_kernel(n_src, pack,
                hd_ref, srcp_ref, ef_ref,
                wpd_ref, bp_ref, wpe_ref,
                w1_ref, b1_ref, w2_ref, b2_ref,
                out_ref,
                dst_t, sum_s, sqs_s, max_s, min_s):
    """Grid = (dst blocks [parallel], src chunks [arbitrary / accumulated])."""
    k = pl.program_id(1)

    # ---- init per destination block (first source chunk) -------------------
    @pl.when(k == 0)
    def _init():
        # Destination-side pretrans projection + bias (constant across chunks).
        dst_t[...] = (jnp.dot(hd_ref[...], wpd_ref[...],
                              preferred_element_type=jnp.float32)
                      + bp_ref[...])
        sum_s[...] = jnp.zeros_like(sum_s)
        sqs_s[...] = jnp.zeros_like(sqs_s)
        max_s[...] = jnp.full_like(max_s, -jnp.inf)
        min_s[...] = jnp.full_like(min_s, jnp.inf)

    # ---- one source chunk: pretrans messages + running statistics ----------
    ef = ef_ref[...]                                    # [TN, C, Fe]
    tn, c, fe = ef.shape
    f = dst_t.shape[-1]
    # Flat 2-D MXU matmul for the edge projection of this chunk.
    e = jnp.dot(ef.reshape(tn * c, fe), wpe_ref[...],
                preferred_element_type=jnp.float32).reshape(tn, c, f)
    m = e + srcp_ref[...][None, :, :] + dst_t[...][:, None, :]   # pretrans, no act
    sum_s[...] += jnp.sum(m, axis=1)
    sqs_s[...] += jnp.sum(m * m, axis=1)
    max_s[...] = jnp.maximum(max_s[...], jnp.max(m, axis=1))
    min_s[...] = jnp.minimum(min_s[...], jnp.min(m, axis=1))

    # ---- finalize: aggregators + fused posttrans MLP + residual ------------
    @pl.when(k == pl.num_programs(1) - 1)
    def _finish():
        hd = hd_ref[...].astype(jnp.float32)
        inv_n = 1.0 / float(n_src)
        mean_a = sum_s[...] * inv_n
        var_a = jnp.maximum(sqs_s[...] * inv_n - mean_a * mean_a, 0.0)  # relu()
        std_a = jnp.sqrt(var_a + EPS)
        # Scalers are already folded into the aggregate half of w1 (wrapper).
        feat = jnp.concatenate([hd, mean_a, max_s[...], min_s[...], std_a],
                               axis=-1)                            # [TN, 5F]
        hidden = jnp.maximum(
            jnp.dot(feat.astype(w1_ref.dtype), w1_ref[...],
                    preferred_element_type=jnp.float32) + b1_ref[...], 0.0)
        out = (jnp.dot(hidden.astype(w2_ref.dtype), w2_ref[...],
                       preferred_element_type=jnp.float32)
               + b2_ref[...]) + hd                                 # residual
        if pack > 1:
            # Lane-dense store: pack `pack` node rows into one 128-wide row.
            out = out.reshape(tn // pack, pack * f)
        out_ref[...] = out.astype(out_ref.dtype)


# --------------------------------------------------------------------------
# Generation-aware tuning helpers
# --------------------------------------------------------------------------
def _tpu_info():
    """(vmem_capacity_bytes, has_two_tensorcores) with safe fallbacks."""
    vmem_cap = 64 * 1024 * 1024          # conservative (v7x per-core) default
    two_tc = False
    try:
        info = pltpu.get_tpu_info()
        vmem_cap = int(getattr(info, "vmem_capacity_bytes", vmem_cap))
    except Exception:
        pass
    try:
        kind = jax.devices()[0].device_kind.lower()
        two_tc = "v7" in kind            # only v7x has 2 TensorCores per chip
    except Exception:
        pass
    return vmem_cap, two_tc


def _pick_chunk(n_src, target):
    """Largest multiple-of-8 divisor of n_src that is <= target (fallback n_src)."""
    if target is None or target <= 0:
        target = min(n_src, 256)
    target = min(target, n_src)
    best = None
    for c in range(8, n_src + 1, 8):
        if n_src % c == 0 and c <= target:
            best = c
    return best if best is not None else n_src


def _pick_tile_n(n_dst, chunk, fe, in_bytes, vmem_cap, two_tc, base):
    """Destination tile: biggest that fits the edge-block budget; >=2 blocks on v7x."""
    fe_pad = -(-fe // 128) * 128                        # conservative lane padding
    edge_budget = max(vmem_cap // 6, 4 * 1024 * 1024)
    per_row = 2 * chunk * fe_pad * in_bytes             # double-buffered edge bytes/row
    t = max(base, (edge_budget // per_row) // base * base)
    n_dst_pad = -(-n_dst // base) * base
    t = min(t, n_dst_pad)
    if two_tc and t >= n_dst_pad and n_dst_pad > base:
        t = max(base, (-(-(n_dst_pad // 2) // base)) * base)
    return int(t)


# --------------------------------------------------------------------------
# Wrapper
# --------------------------------------------------------------------------
def pna_layer_forward(h, edge_feat, params, *, avg_d_log=1.0, tile_n=None,
                      neighbor_chunk=None, use_bf16=False, lane_dense_out=False):
    """h: [N, F] float32; edge_feat: [N_dst, N_src, Fe] float32 (dense graph)."""
    h = jnp.asarray(h, jnp.float32)
    edge_feat = jnp.asarray(edge_feat, jnp.float32)
    N, F = h.shape
    Fe = edge_feat.shape[-1]
    D = N                                    # fully-connected: degree == N
    amp = float(np.log(D + 1) / avg_d_log)   # scale_amplification
    att = float(avg_d_log / np.log(D + 1))   # scale_attenuation

    wps, wpd, wpe, bp, w1s, w1a, b1, w2, b2 = [jnp.asarray(p, jnp.float32)
                                               for p in params]

    # Fold the static scalers into the aggregate half of the first posttrans
    # layer, then fuse self/agg halves into one [5F, F] weight (single MXU issue).
    F4 = 4 * F
    w1a_eff = w1a[:F4] + amp * w1a[F4:2 * F4] + att * w1a[2 * F4:3 * F4]
    w1_full = jnp.concatenate([w1s, w1a_eff], axis=0)              # [5F, F]

    # Source-side pretrans projection hoisted out of the grid.
    src_proj = jnp.dot(h, wps, preferred_element_type=jnp.float32)  # [N, F]

    vmem_cap, two_tc = _tpu_info()
    in_bytes = 2 if use_bf16 else 4

    # Lane-dense output packing factor (128-wide rows) — guarded, off by default.
    pack = 1
    if lane_dense_out and F < 128 and (128 % F) == 0:
        pack = 128 // F
    base = 8 * pack

    # Source chunk (reduction grid axis) must divide N exactly — no src padding,
    # so the aggregation statistics are untouched.
    chunk_sz = _pick_chunk(N, neighbor_chunk)
    if tile_n is None:
        tile_n = _pick_tile_n(N, chunk_sz, Fe, in_bytes, vmem_cap, two_tc, base)
    tile_n = max(base, (int(tile_n) // base) * base)

    # Pad the destination axis only; padded rows are sliced off at the end.
    n_blocks = -(-N // tile_n)
    N_pad = n_blocks * tile_n
    if N_pad != N:
        h_dst = jnp.pad(h, ((0, N_pad - N), (0, 0)))
        ef = jnp.pad(edge_feat, ((0, N_pad - N), (0, 0), (0, 0)))
    else:
        h_dst, ef = h, edge_feat

    # bf16 at the pallas_call boundary: halves the dominant edge-feature HBM
    # stream and block footprint; accumulation stays f32 inside the kernel.
    if use_bf16:
        cast = lambda a: a.astype(jnp.bfloat16)
        h_dst, src_proj, ef = cast(h_dst), cast(src_proj), cast(ef)
        wpd_k, wpe_k, w1_k, w2_k = cast(wpd), cast(wpe), cast(w1_full), cast(w2)
    else:
        wpd_k, wpe_k, w1_k, w2_k = wpd, wpe, w1_full, w2

    # Generation-aware VMEM limit (conservative: minor dims lane-pad to 128).
    f_pad = -(-F // 128) * 128
    fe_pad = -(-Fe // 128) * 128
    est = (2 * tile_n * chunk_sz * fe_pad * in_bytes       # edge block (x2 buffers)
           + 2 * chunk_sz * f_pad * in_bytes               # src-proj chunk
           + 2 * tile_n * f_pad * in_bytes                 # dst h block
           + 2 * tile_n * f_pad * 4                        # out block
           + 5 * tile_n * f_pad * 4                        # accumulator scratch
           + 2 * (7 * F + Fe) * f_pad * in_bytes           # resident weights
           + 2 * 3 * 8 * f_pad * 4)                        # biases
    vmem_ceiling = max(int(vmem_cap * 3 // 4), 16 * 1024 * 1024)
    vmem_limit = int(min(max(2 * est, 16 * 1024 * 1024), vmem_ceiling))

    grid = (N_pad // tile_n, N // chunk_sz)
    kernel = functools.partial(_pna_kernel, N, pack)

    out = pl.pallas_call(
        kernel,
        out_shape=jax.ShapeDtypeStruct((N_pad // pack, pack * F), jnp.float32),
        grid_spec=pltpu.PrefetchScalarGridSpec(
            num_scalar_prefetch=0,
            grid=grid,
            in_specs=[
                pl.BlockSpec((tile_n, F), lambda i, k: (i, 0)),              # h (dst)
                pl.BlockSpec((chunk_sz, F), lambda i, k: (k, 0)),            # src_proj
                pl.BlockSpec((tile_n, chunk_sz, Fe), lambda i, k: (i, k, 0)),  # edges
                pl.BlockSpec((F, F), lambda i, k: (0, 0)),                   # Wpre_dst
                pl.BlockSpec((1, F), lambda i, k: (0, 0)),                   # b_pre
                pl.BlockSpec((Fe, F), lambda i, k: (0, 0)),                  # Wpre_edge
                pl.BlockSpec((5 * F, F), lambda i, k: (0, 0)),               # W1 fused
                pl.BlockSpec((1, F), lambda i, k: (0, 0)),                   # b1
                pl.BlockSpec((F, F), lambda i, k: (0, 0)),                   # W2
                pl.BlockSpec((1, F), lambda i, k: (0, 0)),                   # b2
            ],
            out_specs=pl.BlockSpec((tile_n // pack, pack * F),
                                   lambda i, k: (i, 0)),
            scratch_shapes=[pltpu.VMEM((tile_n, F), jnp.float32)
                            for _ in range(5)],          # dst_t, sum, sumsq, max, min
        ),
        compiler_params=pltpu.CompilerParams(
            dimension_semantics=("parallel", "arbitrary"),
            vmem_limit_bytes=vmem_limit),
    )(h_dst, src_proj, ef, wpd_k, bp, wpe_k, w1_k, b1, w2_k, b2)

    return out.reshape(N_pad, F)[:N]


# --------------------------------------------------------------------------
# Pure-JAX reference (mirrors the PyTorch/DGL forward literally)
# --------------------------------------------------------------------------
def pna_layer_reference(h, edge_feat, params, *, avg_d_log=1.0):
    wps, wpd, wpe, bp, w1s, w1a, b1, w2, b2 = params
    N, F = h.shape
    D = N
    amp = np.log(D + 1) / avg_d_log
    att = avg_d_log / np.log(D + 1)

    src = jnp.broadcast_to(h[None, :, :], (N, N, F))
    dst = jnp.broadcast_to(h[:, None, :], (N, N, F))
    z2 = jnp.concatenate([src, dst, edge_feat], axis=-1)
    wpre = jnp.concatenate([wps, wpd, wpe], axis=0)
    e = z2 @ wpre + bp                                   # pretrans (no last act)

    mean_a = e.mean(axis=-2)
    max_a = e.max(axis=-2)
    min_a = e.min(axis=-2)
    var_a = jnp.maximum((e * e).mean(axis=-2) - mean_a * mean_a, 0.0)
    std_a = jnp.sqrt(var_a + EPS)
    agg = jnp.concatenate([mean_a, max_a, min_a, std_a], axis=-1)
    scaled = jnp.concatenate([agg, agg * amp, agg * att], axis=-1)

    cat = jnp.concatenate([h, scaled], axis=-1)
    w1 = jnp.concatenate([w1s, w1a], axis=0)
    hid = jnp.maximum(cat @ w1 + b1, 0.0)
    out = hid @ w2 + b2
    return out + h


def init_params(key, in_dim, in_dim_edges, out_dim, n_aggr=4, n_scal=3):
    ks = jax.random.split(key, 9)
    s = 0.1
    wps = (jax.random.normal(ks[0], (in_dim, in_dim)) * s).astype(jnp.float32)
    wpd = (jax.random.normal(ks[1], (in_dim, in_dim)) * s).astype(jnp.float32)
    wpe = (jax.random.normal(ks[2], (in_dim_edges, in_dim)) * s).astype(jnp.float32)
    bp = (jax.random.normal(ks[3], (1, in_dim)) * s).astype(jnp.float32)
    w1s = (jax.random.normal(ks[4], (in_dim, out_dim)) * s).astype(jnp.float32)
    w1a = (jax.random.normal(ks[5], (n_aggr * n_scal * in_dim, out_dim)) * s
           ).astype(jnp.float32)
    b1 = (jax.random.normal(ks[6], (1, out_dim)) * s).astype(jnp.float32)
    w2 = (jax.random.normal(ks[7], (out_dim, out_dim)) * s).astype(jnp.float32)
    b2 = (jax.random.normal(ks[8], (1, out_dim)) * s).astype(jnp.float32)
    return (wps, wpd, wpe, bp, w1s, w1a, b1, w2, b2)


if __name__ == "__main__":
    # Small, module-consistent shapes: in_dim=out_dim=32 (residual), Fe=16,
    # fully-connected graph (degree D = N).
    F, Fe = 32, 16
    key = jax.random.PRNGKey(0)
    k_h, k_e, k_p, k_h2, k_e2 = jax.random.split(key, 5)
    params = init_params(k_p, F, Fe, F)

    # --- Test A: N=64, auto-selected tile/chunk (generation-aware budgets).
    N = 64
    h = jax.random.normal(k_h, (N, F), dtype=jnp.float32)
    edge_feat = jax.random.normal(k_e, (N, N, Fe), dtype=jnp.float32)
    ref = jax.block_until_ready(pna_layer_reference(h, edge_feat, params))
    out = jax.block_until_ready(pna_layer_forward(h, edge_feat, params))
    np.testing.assert_allclose(np.asarray(out), np.asarray(ref),
                               rtol=1e-4, atol=1e-4)

    # --- Test B: same inputs, 2 dst blocks x 2 src chunks — exercises the
    #     parallel dst axis and the accumulator (arbitrary) src axis.
    out_b = jax.block_until_ready(
        pna_layer_forward(h, edge_feat, params, tile_n=32, neighbor_chunk=32))
    np.testing.assert_allclose(np.asarray(out_b), np.asarray(ref),
                               rtol=1e-4, atol=1e-4)

    # --- Test C: N=40 with tile_n=32 — exercises the remainder-safe
    #     destination padding path (sources stay unpadded).
    N2 = 40
    h2 = jax.random.normal(k_h2, (N2, F), dtype=jnp.float32)
    e2 = jax.random.normal(k_e2, (N2, N2, Fe), dtype=jnp.float32)
    ref2 = jax.block_until_ready(pna_layer_reference(h2, e2, params))
    out2 = jax.block_until_ready(
        pna_layer_forward(h2, e2, params, tile_n=32))
    np.testing.assert_allclose(np.asarray(out2), np.asarray(ref2),
                               rtol=1e-4, atol=1e-4)

    print("KERNEL_OK")
</pallas_src>

<mosaic_0001>
module attributes {stable_mosaic.version = 11 : i64} {
  func.func @_pna_kernel(%arg0: i32, %arg1: i32, %arg2: memref<64x32xf32, #tpu.memory_space<vmem>>, %arg3: memref<64x32xf32, #tpu.memory_space<vmem>>, %arg4: memref<64x64x16xf32, #tpu.memory_space<vmem>>, %arg5: memref<32x32xf32, #tpu.memory_space<vmem>>, %arg6: memref<1x32xf32, #tpu.memory_space<vmem>>, %arg7: memref<16x32xf32, #tpu.memory_space<vmem>>, %arg8: memref<160x32xf32, #tpu.memory_space<vmem>>, %arg9: memref<1x32xf32, #tpu.memory_space<vmem>>, %arg10: memref<32x32xf32, #tpu.memory_space<vmem>>, %arg11: memref<1x32xf32, #tpu.memory_space<vmem>>, %arg12: memref<64x32xf32, #tpu.memory_space<vmem>>, %arg13: memref<64x32xf32, #tpu.memory_space<vmem>>, %arg14: memref<64x32xf32, #tpu.memory_space<vmem>>, %arg15: memref<64x32xf32, #tpu.memory_space<vmem>>, %arg16: memref<64x32xf32, #tpu.memory_space<vmem>>, %arg17: memref<64x32xf32, #tpu.memory_space<vmem>>) attributes {dimension_semantics = [#tpu.dimension_semantics<parallel>, #tpu.dimension_semantics<arbitrary>], iteration_bounds = array<i64: 1, 1>, scalar_prefetch = 0 : i64, scratch_operands = 5 : i64, tpu.core_type = #tpu.core_type<tc>, window_params = [{transform_indices = @transform_0, window_bounds = array<i64: 64, 32>}, {transform_indices = @transform_1, window_bounds = array<i64: 64, 32>}, {transform_indices = @transform_2, window_bounds = array<i64: 64, 64, 16>}, {pipeline_mode = #tpu.pipeline_mode<synchronous>, transform_indices = @transform_3, window_bounds = array<i64: 32, 32>}, {pipeline_mode = #tpu.pipeline_mode<synchronous>, transform_indices = @transform_4, window_bounds = array<i64: 1, 32>}, {pipeline_mode = #tpu.pipeline_mode<synchronous>, transform_indices = @transform_5, window_bounds = array<i64: 16, 32>}, {pipeline_mode = #tpu.pipeline_mode<synchronous>, transform_indices = @transform_6, window_bounds = array<i64: 160, 32>}, {pipeline_mode = #tpu.pipeline_mode<synchronous>, transform_indices = @transform_7, window_bounds = array<i64: 1, 32>}, {pipeline_mode = #tpu.pipeline_mode<synchronous>, transform_indices = @transform_8, window_bounds = array<i64: 32, 32>}, {pipeline_mode = #tpu.pipeline_mode<synchronous>, transform_indices = @transform_9, window_bounds = array<i64: 1, 32>}, {transform_indices = @transform_10, window_bounds = array<i64: 64, 32>}]} {
    %c0_i32 = arith.constant 0 : i32
    %0 = arith.cmpi eq, %arg1, %c0_i32 : i32
    %1 = arith.extui %0 : i1 to i32
    %c0_i32_0 = arith.constant 0 : i32
    %2 = arith.cmpi ne, %1, %c0_i32_0 : i32
    scf.if %2 {
      %c0_31 = arith.constant 0 : index
      %c0_32 = arith.constant 0 : index
      %36 = vector.load %arg2[%c0_31, %c0_32] : memref<64x32xf32, #tpu.memory_space<vmem>>, vector<64x32xf32>
      %c0_33 = arith.constant 0 : index
      %c0_34 = arith.constant 0 : index
      %37 = vector.load %arg5[%c0_33, %c0_34] : memref<32x32xf32, #tpu.memory_space<vmem>>, vector<32x32xf32>
      %cst_35 = arith.constant dense<0.000000e+00> : vector<64x32xf32>
      %38 = tpu.matmul %36, %37, %cst_35 {dimension_numbers = #tpu.dot_dimension_numbers<[1], [0], [0], [1], [0, 0, 1, 1], [], []>} : vector<64x32xf32>, vector<32x32xf32>, vector<64x32xf32> -> vector<64x32xf32>
      %c0_36 = arith.constant 0 : index
      %c0_37 = arith.constant 0 : index
      %39 = vector.load %arg6[%c0_36, %c0_37] : memref<1x32xf32, #tpu.memory_space<vmem>>, vector<1x32xf32>
      %40 = vector.broadcast %39 : vector<1x32xf32> to vector<64x32xf32>
      %41 = arith.addf %38, %40 : vector<64x32xf32>
      %c0_38 = arith.constant 0 : index
      %c0_39 = arith.constant 0 : index
      %42 = vector.load %arg13[%c0_38, %c0_39] : memref<64x32xf32, #tpu.memory_space<vmem>>, vector<64x32xf32>
      tpu.vector_store %arg13[%c0_38, %c0_39], %41 {strides = array<i32>} : memref<64x32xf32, #tpu.memory_space<vmem>>, vector<64x32xf32>,
      %cst_40 = arith.constant 0.000000e+00 : f32
      %43 = vector.broadcast %cst_40 : f32 to vector<64x32xf32>
      %c0_41 = arith.constant 0 : index
      %c0_42 = arith.constant 0 : index
      %44 = vector.load %arg14[%c0_41, %c0_42] : memref<64x32xf32, #tpu.memory_space<vmem>>, vector<64x32xf32>
      tpu.vector_store %arg14[%c0_41, %c0_42], %43 {strides = array<i32>} : memref<64x32xf32, #tpu.memory_space<vmem>>, vector<64x32xf32>,
      %cst_43 = arith.constant 0.000000e+00 : f32
      %45 = vector.broadcast %cst_43 : f32 to vector<64x32xf32>
      %c0_44 = arith.constant 0 : index
      %c0_45 = arith.constant 0 : index
      %46 = vector.load %arg15[%c0_44, %c0_45] : memref<64x32xf32, #tpu.memory_space<vmem>>, vector<64x32xf32>
      tpu.vector_store %arg15[%c0_44, %c0_45], %45 {strides = array<i32>} : memref<64x32xf32, #tpu.memory_space<vmem>>, vector<64x32xf32>,
      %cst_46 = arith.constant 0xFF800000 : f32
      %47 = vector.broadcast %cst_46 : f32 to vector<64x32xf32>
      %c0_47 = arith.constant 0 : index
      %c0_48 = arith.constant 0 : index
      %48 = vector.load %arg16[%c0_47, %c0_48] : memref<64x32xf32, #tpu.memory_space<vmem>>, vector<64x32xf32>
      tpu.vector_store %arg16[%c0_47, %c0_48], %47 {strides = array<i32>} : memref<64x32xf32, #tpu.memory_space<vmem>>, vector<64x32xf32>,
      %cst_49 = arith.constant 0x7F800000 : f32
      %49 = vector.broadcast %cst_49 : f32 to vector<64x32xf32>
      %c0_50 = arith.constant 0 : index
      %c0_51 = arith.constant 0 : index
      %50 = vector.load %arg17[%c0_50, %c0_51] : memref<64x32xf32, #tpu.memory_space<vmem>>, vector<64x32xf32>
      tpu.vector_store %arg17[%c0_50, %c0_51], %49 {strides = array<i32>} : memref<64x32xf32, #tpu.memory_space<vmem>>, vector<64x32xf32>,
    } else {
    }
    %c0 = arith.constant 0 : index
    %c0_1 = arith.constant 0 : index
    %c0_2 = arith.constant 0 : index
    %3 = vector.load %arg4[%c0, %c0_1, %c0_2] : memref<64x64x16xf32, #tpu.memory_space<vmem>>, vector<64x64x16xf32>
    %4 = vector.shape_cast %3 : vector<64x64x16xf32> to vector<4096x16xf32>
    %c0_3 = arith.constant 0 : index
    %c0_4 = arith.constant 0 : index
    %5 = vector.load %arg7[%c0_3, %c0_4] : memref<16x32xf32, #tpu.memory_space<vmem>>, vector<16x32xf32>
    %cst = arith.constant dense<0.000000e+00> : vector<4096x32xf32>
    %6 = tpu.matmul %4, %5, %cst {dimension_numbers = #tpu.dot_dimension_numbers<[1], [0], [0], [1], [0, 0, 1, 1], [], []>} : vector<4096x16xf32>, vector<16x32xf32>, vector<4096x32xf32> -> vector<4096x32xf32>
    %7 = vector.shape_cast %6 : vector<4096x32xf32> to vector<64x64x32xf32>
    %c0_5 = arith.constant 0 : index
    %c0_6 = arith.constant 0 : index
    %8 = vector.load %arg3[%c0_5, %c0_6] : memref<64x32xf32, #tpu.memory_space<vmem>>, vector<64x32xf32>
    %9 = vector.shape_cast %8 : vector<64x32xf32> to vector<1x64x32xf32>
    %10 = vector.broadcast %9 : vector<1x64x32xf32> to vector<64x64x32xf32>
    %11 = arith.addf %7, %10 : vector<64x64x32xf32>
    %c0_7 = arith.constant 0 : index
    %c0_8 = arith.constant 0 : index
    %12 = vector.load %arg13[%c0_7, %c0_8] : memref<64x32xf32, #tpu.memory_space<vmem>>, vector<64x32xf32>
    %13 = vector.shape_cast %12 : vector<64x32xf32> to vector<64x1x32xf32>
    %14 = vector.broadcast %13 : vector<64x1x32xf32> to vector<64x64x32xf32>
    %15 = arith.addf %11, %14 : vector<64x64x32xf32>
    %c0_9 = arith.constant 0 : index
    %c0_10 = arith.constant 0 : index
    %16 = vector.load %arg14[%c0_9, %c0_10] : memref<64x32xf32, #tpu.memory_space<vmem>>, vector<64x32xf32>
    %cst_11 = arith.constant dense<0.000000e+00> : vector<64x32xf32>
    %17 = vector.multi_reduction <add>, %15, %cst_11 [1] : vector<64x64x32xf32> to vector<64x32xf32>
    %18 = arith.addf %16, %17 : vector<64x32xf32>
    %c0_12 = arith.constant 0 : index
    %c0_13 = arith.constant 0 : index
    %19 = vector.load %arg14[%c0_12, %c0_13] : memref<64x32xf32, #tpu.memory_space<vmem>>, vector<64x32xf32>
    tpu.vector_store %arg14[%c0_12, %c0_13], %18 {strides = array<i32>} : memref<64x32xf32, #tpu.memory_space<vmem>>, vector<64x32xf32>,
    %c0_14 = arith.constant 0 : index
    %c0_15 = arith.constant 0 : index
    %20 = vector.load %arg15[%c0_14, %c0_15] : memref<64x32xf32, #tpu.memory_space<vmem>>, vector<64x32xf32>
    %21 = arith.mulf %15, %15 : vector<64x64x32xf32>
    %cst_16 = arith.constant dense<0.000000e+00> : vector<64x32xf32>
    %22 = vector.multi_reduction <add>, %21, %cst_16 [1] : vector<64x64x32xf32> to vector<64x32xf32>
    %23 = arith.addf %20, %22 : vector<64x32xf32>
    %c0_17 = arith.constant 0 : index
    %c0_18 = arith.constant 0 : index
    %24 = vector.load %arg15[%c0_17, %c0_18] : memref<64x32xf32, #tpu.memory_space<vmem>>, vector<64x32xf32>
    tpu.vector_store %arg15[%c0_17, %c0_18], %23 {strides = array<i32>} : memref<64x32xf32, #tpu.memory_space<vmem>>, vector<64x32xf32>,
    %c0_19 = arith.constant 0 : index
    %c0_20 = arith.constant 0 : index
    %25 = vector.load %arg16[%c0_19, %c0_20] : memref<64x32xf32, #tpu.memory_space<vmem>>, vector<64x32xf32>
    %cst_21 = arith.constant dense<0xFF800000> : vector<64x32xf32>
    %26 = vector.multi_reduction <maximumf>, %15, %cst_21 [1] : vector<64x64x32xf32> to vector<64x32xf32>
    %27 = arith.maximumf %25, %26 : vector<64x32xf32>
    %c0_22 = arith.constant 0 : index
    %c0_23 = arith.constant 0 : index
    %28 = vector.load %arg16[%c0_22, %c0_23] : memref<64x32xf32, #tpu.memory_space<vmem>>, vector<64x32xf32>
    tpu.vector_store %arg16[%c0_22, %c0_23], %27 {strides = array<i32>} : memref<64x32xf32, #tpu.memory_space<vmem>>, vector<64x32xf32>,
    %c0_24 = arith.constant 0 : index
    %c0_25 = arith.constant 0 : index
    %29 = vector.load %arg17[%c0_24, %c0_25] : memref<64x32xf32, #tpu.memory_space<vmem>>, vector<64x32xf32>
    %cst_26 = arith.constant dense<0x7F800000> : vector<64x32xf32>
    %30 = vector.multi_reduction <minimumf>, %15, %cst_26 [1] : vector<64x64x32xf32> to vector<64x32xf32>
    %31 = arith.minimumf %29, %30 : vector<64x32xf32>
    %c0_27 = arith.constant 0 : index
    %c0_28 = arith.constant 0 : index
    %32 = vector.load %arg17[%c0_27, %c0_28] : memref<64x32xf32, #tpu.memory_space<vmem>>, vector<64x32xf32>
    tpu.vector_store %arg17[%c0_27, %c0_28], %31 {strides = array<i32>} : memref<64x32xf32, #tpu.memory_space<vmem>>, vector<64x32xf32>,
    %c0_i32_29 = arith.constant 0 : i32
    %33 = arith.cmpi eq, %arg1, %c0_i32_29 : i32
    %34 = arith.extui %33 : i1 to i32
    %c0_i32_30 = arith.constant 0 : i32
    %35 = arith.cmpi ne, %34, %c0_i32_30 : i32
    scf.if %35 {
      %c0_31 = arith.constant 0 : index
      %c0_32 = arith.constant 0 : index
      %36 = vector.load %arg2[%c0_31, %c0_32] : memref<64x32xf32, #tpu.memory_space<vmem>>, vector<64x32xf32>
      %c0_33 = arith.constant 0 : index
      %c0_34 = arith.constant 0 : index
      %37 = vector.load %arg14[%c0_33, %c0_34] : memref<64x32xf32, #tpu.memory_space<vmem>>, vector<64x32xf32>
      %cst_35 = arith.constant 1.562500e-02 : f32
      %38 = vector.broadcast %cst_35 : f32 to vector<64x32xf32>
      %39 = arith.mulf %37, %38 : vector<64x32xf32>
      %c0_36 = arith.constant 0 : index
      %c0_37 = arith.constant 0 : index
      %40 = vector.load %arg15[%c0_36, %c0_37] : memref<64x32xf32, #tpu.memory_space<vmem>>, vector<64x32xf32>
      %cst_38 = arith.constant 1.562500e-02 : f32
      %41 = vector.broadcast %cst_38 : f32 to vector<64x32xf32>
      %42 = arith.mulf %40, %41 : vector<64x32xf32>
      %43 = arith.mulf %39, %39 : vector<64x32xf32>
      %44 = arith.subf %42, %43 : vector<64x32xf32>
      %cst_39 = arith.constant 0.000000e+00 : f32
      %45 = vector.broadcast %cst_39 : f32 to vector<64x32xf32>
      %46 = arith.maximumf %44, %45 : vector<64x32xf32>
      %cst_40 = arith.constant 9.99999974E-6 : f32
      %47 = vector.broadcast %cst_40 : f32 to vector<64x32xf32>
      %48 = arith.addf %46, %47 : vector<64x32xf32>
      %49 = math.sqrt %48 : vector<64x32xf32>
      %c0_41 = arith.constant 0 : index
      %c0_42 = arith.constant 0 : index
      %50 = vector.load %arg16[%c0_41, %c0_42] : memref<64x32xf32, #tpu.memory_space<vmem>>, vector<64x32xf32>
      %c0_43 = arith.constant 0 : index
      %c0_44 = arith.constant 0 : index
      %51 = vector.load %arg17[%c0_43, %c0_44] : memref<64x32xf32, #tpu.memory_space<vmem>>, vector<64x32xf32>
      %52 = tpu.concatenate %36, %39, %50, %51, %49 in 1 : vector<64x32xf32>, vector<64x32xf32>, vector<64x32xf32>, vector<64x32xf32>, vector<64x32xf32> -> vector<64x160xf32>
      %c0_45 = arith.constant 0 : index
      %c0_46 = arith.constant 0 : index
      %53 = vector.load %arg8[%c0_45, %c0_46] : memref<160x32xf32, #tpu.memory_space<vmem>>, vector<160x32xf32>
      %cst_47 = arith.constant dense<0.000000e+00> : vector<64x32xf32>
      %54 = tpu.matmul %52, %53, %cst_47 {dimension_numbers = #tpu.dot_dimension_numbers<[1], [0], [0], [1], [0, 0, 1, 1], [], []>} : vector<64x160xf32>, vector<160x32xf32>, vector<64x32xf32> -> vector<64x32xf32>
      %c0_48 = arith.constant 0 : index
      %c0_49 = arith.constant 0 : index
      %55 = vector.load %arg9[%c0_48, %c0_49] : memref<1x32xf32, #tpu.memory_space<vmem>>, vector<1x32xf32>
      %56 = vector.broadcast %55 : vector<1x32xf32> to vector<64x32xf32>
      %57 = arith.addf %54, %56 : vector<64x32xf32>
      %cst_50 = arith.constant 0.000000e+00 : f32
      %58 = vector.broadcast %cst_50 : f32 to vector<64x32xf32>
      %59 = arith.maximumf %57, %58 : vector<64x32xf32>
      %c0_51 = arith.constant 0 : index
      %c0_52 = arith.constant 0 : index
      %60 = vector.load %arg10[%c0_51, %c0_52] : memref<32x32xf32, #tpu.memory_space<vmem>>, vector<32x32xf32>
      %cst_53 = arith.constant dense<0.000000e+00> : vector<64x32xf32>
      %61 = tpu.matmul %59, %60, %cst_53 {dimension_numbers = #tpu.dot_dimension_numbers<[1], [0], [0], [1], [0, 0, 1, 1], [], []>} : vector<64x32xf32>, vector<32x32xf32>, vector<64x32xf32> -> vector<64x32xf32>
      %c0_54 = arith.constant 0 : index
      %c0_55 = arith.constant 0 : index
      %62 = vector.load %arg11[%c0_54, %c0_55] : memref<1x32xf32, #tpu.memory_space<vmem>>, vector<1x32xf32>
      %63 = vector.broadcast %62 : vector<1x32xf32> to vector<64x32xf32>
      %64 = arith.addf %61, %63 : vector<64x32xf32>
      %65 = arith.addf %64, %36 : vector<64x32xf32>
      %c0_56 = arith.constant 0 : index
      %c0_57 = arith.constant 0 : index
      %66 = vector.load %arg12[%c0_56, %c0_57] : memref<64x32xf32, #tpu.memory_space<vmem>>, vector<64x32xf32>
      tpu.vector_store %arg12[%c0_56, %c0_57], %65 {strides = array<i32>} : memref<64x32xf32, #tpu.memory_space<vmem>>, vector<64x32xf32>,
    } else {
    }
    return
  }
  func.func @transform_0(%arg0: i32, %arg1: i32) -> (i32, i32) {
    %c0_i32 = arith.constant 0 : i32
    %c0_i32_0 = arith.constant 0 : i32
    return %arg0, %c0_i32 : i32, i32
  }
  func.func @transform_1(%arg0: i32, %arg1: i32) -> (i32, i32) {
    %c0_i32 = arith.constant 0 : i32
    %c0_i32_0 = arith.constant 0 : i32
    return %arg1, %c0_i32 : i32, i32
  }
  func.func @transform_2(%arg0: i32, %arg1: i32) -> (i32, i32, i32) {
    %c0_i32 = arith.constant 0 : i32
    %c0_i32_0 = arith.constant 0 : i32
    return %arg0, %arg1, %c0_i32 : i32, i32, i32
  }
  func.func @transform_3(%arg0: i32, %arg1: i32) -> (i32, i32) {
    %c0_i32 = arith.constant 0 : i32
    %c0_i32_0 = arith.constant 0 : i32
    %c0_i32_1 = arith.constant 0 : i32
    return %c0_i32, %c0_i32_0 : i32, i32
  }
  func.func @transform_4(%arg0: i32, %arg1: i32) -> (i32, i32) {
    %c0_i32 = arith.constant 0 : i32
    %c0_i32_0 = arith.constant 0 : i32
    %c0_i32_1 = arith.constant 0 : i32
    return %c0_i32, %c0_i32_0 : i32, i32
  }
  func.func @transform_5(%arg0: i32, %arg1: i32) -> (i32, i32) {
    %c0_i32 = arith.constant 0 : i32
    %c0_i32_0 = arith.constant 0 : i32
    %c0_i32_1 = arith.constant 0 : i32
    return %c0_i32, %c0_i32_0 : i32, i32
  }
  func.func @transform_6(%arg0: i32, %arg1: i32) -> (i32, i32) {
    %c0_i32 = arith.constant 0 : i32
    %c0_i32_0 = arith.constant 0 : i32
    %c0_i32_1 = arith.constant 0 : i32
    return %c0_i32, %c0_i32_0 : i32, i32
  }
  func.func @transform_7(%arg0: i32, %arg1: i32) -> (i32, i32) {
    %c0_i32 = arith.constant 0 : i32
    %c0_i32_0 = arith.constant 0 : i32
    %c0_i32_1 = arith.constant 0 : i32
    return %c0_i32, %c0_i32_0 : i32, i32
  }
  func.func @transform_8(%arg0: i32, %arg1: i32) -> (i32, i32) {
    %c0_i32 = arith.constant 0 : i32
    %c0_i32_0 = arith.constant 0 : i32
    %c0_i32_1 = arith.constant 0 : i32
    return %c0_i32, %c0_i32_0 : i32, i32
  }
  func.func @transform_9(%arg0: i32, %arg1: i32) -> (i32, i32) {
    %c0_i32 = arith.constant 0 : i32
    %c0_i32_0 = arith.constant 0 : i32
    %c0_i32_1 = arith.constant 0 : i32
    return %c0_i32, %c0_i32_0 : i32, i32
  }
  func.func @transform_10(%arg0: i32, %arg1: i32) -> (i32, i32) {
    %c0_i32 = arith.constant 0 : i32
    %c0_i32_0 = arith.constant 0 : i32
    return %arg0, %c0_i32 : i32, i32
  }
}

</mosaic_0001>

<llo_original>
// kernel: tpu_custom_call.1
$region0: #{tpu_custom_call.1}
  #allocation0 [shape = 'u32[]', space=smem, size = 0x4, offset = 0x4, fixed_abs, tag = 'smem constant byte address 0x4 - core index']
  #allocation1 [shape = 'u32[144,128]{1,0:T(1,128)}', space=vmem, size = 0x12000, scoped, tag = 'internal scratch']
  #allocation2 [shape = 'f32[64,32]{1,0:T(8,128)}', space=vmem, size = 0x8000, scoped, tag = 'scratch operand']
  #allocation3 [shape = 'f32[64,32]{1,0:T(8,128)}', space=vmem, size = 0x8000, scoped, tag = 'scratch operand']
  #allocation4 [shape = 'f32[64,32]{1,0:T(8,128)}', space=vmem, size = 0x8000, scoped, tag = 'scratch operand']
  #allocation5 [shape = 'f32[64,32]{1,0:T(8,128)}', space=vmem, size = 0x8000, scoped, tag = 'scratch operand']
  #allocation6 [shape = 'f32[64,32]{1,0:T(8,128)}', space=vmem, size = 0x8000, scoped, tag = 'scratch operand']
  %s0 = inlined_call_operand.vmem [shape: f32[64,32], index: 0, kind: input, shape index: {}]
  %s1 = inlined_call_operand.vmem [shape: f32[64,32], index: 1, kind: input, shape index: {}]
  %s2 = inlined_call_operand.vmem [shape: f32[64,64,16], index: 2, kind: input, shape index: {}]
  %s3 = inlined_call_operand.vmem [shape: f32[32,32], index: 3, kind: input, shape index: {}]
  %s4 = inlined_call_operand.vmem [shape: f32[1,32], index: 4, kind: input, shape index: {}]
  %s5 = inlined_call_operand.vmem [shape: f32[16,32], index: 5, kind: input, shape index: {}]
  %s6 = inlined_call_operand.vmem [shape: f32[160,32], index: 6, kind: input, shape index: {}]
  %s7 = inlined_call_operand.vmem [shape: f32[1,32], index: 7, kind: input, shape index: {}]
  %s8 = inlined_call_operand.vmem [shape: f32[32,32], index: 8, kind: input, shape index: {}]
  %s9 = inlined_call_operand.vmem [shape: f32[1,32], index: 9, kind: input, shape index: {}]
  %s10 = inlined_call_operand.vmem [shape: f32[64,32], index: 10, kind: output, shape index: {}]
  %s11 = sld [smem:[#allocation0]]
  $region58: #{tpu_custom_call.1} parent=0
    _
  %s13 = ssub.s32 1, %s11
  %s14 = scalar_select 0, %s13, %s11
  // Predicated region
  $region2: #{tpu_custom_call.1} parent=0 // pred_check
    _
  $region3: #{tpu_custom_call.1} parent=0 // pred_check_branch
    %16 = sbr.rel (0) target = $region5
  $region4: #{tpu_custom_call.1} parent=0 // pred_region
    _
  $region5: #{tpu_custom_call.1} parent=0 // pred_fallthru
    _
  // Predicated region
  $region6: #{tpu_custom_call.1} parent=0 // pred_check
    _
  $region7: #{tpu_custom_call.1} parent=0 // pred_check_branch
    %18 = sbr.rel (0) target = $region9
  $region8: #{tpu_custom_call.1} parent=0 // pred_region
    _
  $region9: #{tpu_custom_call.1} parent=0 // pred_fallthru
    _
  // Predicated region
  $region10: #{tpu_custom_call.1} parent=0 // pred_check
    _
  $region11: #{tpu_custom_call.1} parent=0 // pred_check_branch
    %20 = sbr.rel (0) target = $region13
  $region12: #{tpu_custom_call.1} parent=0 // pred_region
    _
  $region13: #{tpu_custom_call.1} parent=0 // pred_fallthru
    _
  // Predicated region
  $region14: #{tpu_custom_call.1} parent=0 // pred_check
    _
  $region15: #{tpu_custom_call.1} parent=0 // pred_check_branch
    %22 = sbr.rel (0) target = $region17
  $region16: #{tpu_custom_call.1} parent=0 // pred_region
    _
  $region17: #{tpu_custom_call.1} parent=0 // pred_fallthru
    _
  // Predicated region
  $region18: #{tpu_custom_call.1} parent=0 // pred_check
    _
  $region19: #{tpu_custom_call.1} parent=0 // pred_check_branch
    %24 = sbr.rel (0) target = $region21
  $region20: #{tpu_custom_call.1} parent=0 // pred_region
    _
  $region21: #{tpu_custom_call.1} parent=0 // pred_fallthru
    _
  // Predicated region
  $region22: #{tpu_custom_call.1} parent=0 // pred_check
    _
  $region23: #{tpu_custom_call.1} parent=0 // pred_check_branch
    %26 = sbr.rel (0) target = $region25
  $region24: #{tpu_custom_call.1} parent=0 // pred_region
    _
  $region25: #{tpu_custom_call.1} parent=0 // pred_fallthru
    _
  // Predicated region
  $region26: #{tpu_custom_call.1} parent=0 // pred_check
    _
  $region27: #{tpu_custom_call.1} parent=0 // pred_check_branch
    %28 = sbr.rel (0) target = $region29
  $region28: #{tpu_custom_call.1} parent=0 // pred_region
    _
  $region29: #{tpu_custom_call.1} parent=0 // pred_fallthru
    _
  // Predicated region
  $region30: #{tpu_custom_call.1} parent=0 // pred_check
    _
  $region31: #{tpu_custom_call.1} parent=0 // pred_check_branch
    %30 = sbr.rel (0) target = $region33
  $region32: #{tpu_custom_call.1} parent=0 // pred_region
    _
  $region33: #{tpu_custom_call.1} parent=0 // pred_fallthru
    _
  // Predicated region
  $region34: #{tpu_custom_call.1} parent=0 // pred_check
    _
  $region35: #{tpu_custom_call.1} parent=0 // pred_check_branch
    %32 = sbr.rel (0) target = $region37
  $region36: #{tpu_custom_call.1} parent=0 // pred_region
    _
  $region37: #{tpu_custom_call.1} parent=0 // pred_fallthru
    _
  // Predicated region
  $region38: #{tpu_custom_call.1} parent=0 // pred_check
    _
  $region39: #{tpu_custom_call.1} parent=0 // pred_check_branch
    %34 = sbr.rel (0) target = $region41
  $region40: #{tpu_custom_call.1} parent=0 // pred_region
    _
  $region41: #{tpu_custom_call.1} parent=0 // pred_fallthru
    _
  %p35 = scmp.eq.s32.totalorder 0, 0
  // Predicated region
  $region42: #{tpu_custom_call.1} parent=0 // pred_check
    %p36 = pneg %p35
  $region43: #{tpu_custom_call.1} parent=0 // pred_check_branch
    %38 = sbr.rel (%p36) target = $region45
  $region44: #{tpu_custom_call.1} parent=0 // pred_region
    %v39 = vld [vmem:[%s0] sm:$0xff]
    %v40 = vld [vmem:[%s0 + $0x8] sm:$0xff]
    %v41 = vld [vmem:[%s0 + $0x10] sm:$0xff]
    %v42 = vld [vmem:[%s0 + $0x18] sm:$0xff]
    %v43 = vld [vmem:[%s0 + $0x20] sm:$0xff]
    %v44 = vld [vmem:[%s0 + $0x28] sm:$0xff]
    %v45 = vld [vmem:[%s0 + $0x30] sm:$0xff]
    %v46 = vld [vmem:[%s0 + $0x38] sm:$0xff]
    %v47 = vld [vmem:[%s3] sm:$0xff]
    %v48 = vld [vmem:[%s3 + $0x8] sm:$0xff]
    %v49 = vld [vmem:[%s3 + $0x10] sm:$0xff]
    %v50 = vld [vmem:[%s3 + $0x18] sm:$0xff]
    %v51 = vld [vmem:[%s4] sm:$0x1]
    %v53 = vlaneseq
    %v54 = vshrl.u32 %v53, 7
    %v55 = vsub.s32 0, %v54
    %v56 = vrot.slane %v51, %v55
    %vm58 = vcmask 261120
    %v60 = vsel %vm58, %v39, 0
    %v63 = vsel %vm58, %v40, 0
    %v66 = vsel %vm58, %v41, 0
    %v69 = vsel %vm58, %v42, 0
    %v72 = vsel %vm58, %v43, 0
    %v75 = vsel %vm58, %v44, 0
    %v78 = vsel %vm58, %v45, 0
    %v81 = vsel %vm58, %v46, 0
    %83 = vmatprep.subr.mxu0 0.0
    %84 = vmatpush1.msra.mxu0 %v47
    %85 = vmatprep.subr.mxu0 0.0
    %86 = vmatpush1.msra.mxu0 %v48
    %87 = vmatprep.subr.mxu0 0.0
    %88 = vmatpush1.msra.mxu0 %v49
    %89 = vmatprep.subr.mxu0 0.0
    %90 = vmatpush1.msra.mxu0 %v50
    %91 = vmatprep.subr.mxu0 0.0
    %92 = vmatpush1.msra.mxu0 0.0
    %93 = vmatprep.subr.mxu0 0.0
    %94 = vmatpush1.msra.mxu0 0.0
    %95 = vmatprep.subr.mxu0 0.0
    %96 = vmatpush1.msra.mxu0 0.0
    %97 = vmatprep.subr.mxu0 0.0
    %98 = vmatpush1.msra.mxu0 0.0
    %99 = vmatprep.subr.mxu0 0.0
    %100 = vmatpush1.msra.mxu0 0.0
    %101 = vmatprep.subr.mxu0 0.0
    %102 = vmatpush1.msra.mxu0 0.0
    %103 = vmatprep.subr.mxu0 0.0
    %104 = vmatpush1.msra.mxu0 0.0
    %105 = vmatprep.subr.mxu0 0.0
    %106 = vmatpush1.msra.mxu0 0.0
    %107 = vmatprep.subr.mxu0 0.0
    %108 = vmatpush1.msra.mxu0 0.0
    %109 = vmatprep.subr.mxu0 0.0
    %110 = vmatpush1.msra.mxu0 0.0
    %111 = vmatprep.subr.mxu0 0.0
    %112 = vmatpush1.msra.mxu0 0.0
    %113 = vmatprep.subr.mxu0 0.0
    %114 = vmatpush1.msra.mxu0 0.0
    %115 = vmatprep.subr.mxu0 0.0
    %116 = vmatpush1.msra.mxu0 0.0
    %117 = vmatprep.subr.mxu0 0.0
    %118 = vmatpush1.msra.mxu0 0.0
    %119 = vmatprep.subr.mxu0 0.0
    %120 = vmatpush1.msra.mxu0 0.0
    %121 = vmatprep.subr.mxu0 0.0
    %122 = vmatpush1.msra.mxu0 0.0
    %123 = vmatprep.subr.mxu0 0.0
    %124 = vmatpush1.msra.mxu0 0.0
    %125 = vmatprep.subr.mxu0 0.0
    %126 = vmatpush1.msra.mxu0 0.0
    %127 = vmatprep.subr.mxu0 0.0
    %128 = vmatpush1.msra.mxu0 0.0
    %129 = vmatprep.subr.mxu0 0.0
    %130 = vmatpush1.msra.mxu0 0.0
    %131 = vmatprep.subr.mxu0 0.0
    %132 = vmatpush1.msra.mxu0 0.0
    %133 = vmatprep.subr.mxu0 0.0
    %134 = vmatpush1.msra.mxu0 0.0
    %135 = vmatprep.subr.mxu0 0.0
    %136 = vmatpush1.msra.mxu0 0.0
    %137 = vmatprep.subr.mxu0 0.0
    %138 = vmatpush1.msra.mxu0 0.0
    %139 = vmatprep.subr.mxu0 0.0
    %140 = vmatpush1.msra.mxu0 0.0
    %141 = vmatprep.subr.mxu0 0.0
    %142 = vmatpush1.msra.mxu0 0.0
    %143 = vmatprep.subr.mxu0 0.0
    %144 = vmatpush1.msra.mxu0 0.0
    %145 = vmatprep.subr.mxu0 0.0
    %146 = vmatpush1.msra.mxu0 0.0
    %147 = vmatprep.mubr.f32.mxu0 0.0
    %148 = vmatmul.mubr.f32.gmra.mrb[0].mxu0 %v60
    %v149 = vpop.f32.mrb[0].mxu0
    %v150 = vadd.f32 %v56, %v149
    %v151 = vpop.f32.mrb[0].mxu0
    %152 = vmatprep.mubr.f32.mxu0 0.0
    %153 = vmatmul.mubr.f32.gmra.mrb[0].mxu0 %v63
    %v154 = vpop.f32.mrb[0].mxu0
    %v155 = vadd.f32 %v56, %v154
    %v156 = vpop.f32.mrb[0].mxu0
    %157 = vmatprep.mubr.f32.mxu0 0.0
    %158 = vmatmul.mubr.f32.gmra.mrb[0].mxu0 %v66
    %v159 = vpop.f32.mrb[0].mxu0
    %v160 = vadd.f32 %v56, %v159
    %v161 = vpop.f32.mrb[0].mxu0
    %162 = vmatprep.mubr.f32.mxu0 0.0
    %163 = vmatmul.mubr.f32.gmra.mrb[0].mxu0 %v69
    %v164 = vpop.f32.mrb[0].mxu0
    %v165 = vadd.f32 %v56, %v164
    %v166 = vpop.f32.mrb[0].mxu0
    %167 = vmatprep.mubr.f32.mxu0 0.0
    %168 = vmatmul.mubr.f32.gmra.mrb[0].mxu0 %v72
    %v169 = vpop.f32.mrb[0].mxu0
    %v170 = vadd.f32 %v56, %v169
    %v171 = vpop.f32.mrb[0].mxu0
    %172 = vmatprep.mubr.f32.mxu0 0.0
    %173 = vmatmul.mubr.f32.gmra.mrb[0].mxu0 %v75
    %v174 = vpop.f32.mrb[0].mxu0
    %v175 = vadd.f32 %v56, %v174
    %v176 = vpop.f32.mrb[0].mxu0
    %177 = vmatprep.mubr.f32.mxu0 0.0
    %178 = vmatmul.mubr.f32.gmra.mrb[0].mxu0 %v78
    %v179 = vpop.f32.mrb[0].mxu0
    %v180 = vadd.f32 %v56, %v179
    %v181 = vpop.f32.mrb[0].mxu0
    %182 = vmatprep.mubr.f32.mxu0 0.0
    %183 = vmatmul.mubr.f32.gmra.mrb[0].mxu0 %v81
    %v184 = vpop.f32.mrb[0].mxu0
    %v185 = vadd.f32 %v56, %v184
    %v186 = vpop.f32.mrb[0].mxu0
    %187 = vdwg.mxu0
    %188 = vst.msk [vmem:[#allocation2] sm:$0xff] %vm58, %v150
    %189 = vst.msk [vmem:[#allocation2 + $0x8] sm:$0xff] %vm58, %v155
    %190 = vst.msk [vmem:[#allocation2 + $0x10] sm:$0xff] %vm58, %v160
    %191 = vst.msk [vmem:[#allocation2 + $0x18] sm:$0xff] %vm58, %v165
    %192 = vst.msk [vmem:[#allocation2 + $0x20] sm:$0xff] %vm58, %v170
    %193 = vst.msk [vmem:[#allocation2 + $0x28] sm:$0xff] %vm58, %v175
    %194 = vst.msk [vmem:[#allocation2 + $0x30] sm:$0xff] %vm58, %v180
    %195 = vst.msk [vmem:[#allocation2 + $0x38] sm:$0xff] %vm58, %v185
    %196 = vst.msk [vmem:[#allocation3] sm:$0xff] %vm58, 0.0
    %197 = vst.msk [vmem:[#allocation3 + $0x8] sm:$0xff] %vm58, 0.0
    %198 = vst.msk [vmem:[#allocation3 + $0x10] sm:$0xff] %vm58, 0.0
    %199 = vst.msk [vmem:[#allocation3 + $0x18] sm:$0xff] %vm58, 0.0
    %200 = vst.msk [vmem:[#allocation3 + $0x20] sm:$0xff] %vm58, 0.0
    %201 = vst.msk [vmem:[#allocation3 + $0x28] sm:$0xff] %vm58, 0.0
    %202 = vst.msk [vmem:[#allocation3 + $0x30] sm:$0xff] %vm58, 0.0
    %203 = vst.msk [vmem:[#allocation3 + $0x38] sm:$0xff] %vm58, 0.0
    %204 = vst.msk [vmem:[#allocation4] sm:$0xff] %vm58, 0.0
    %205 = vst.msk [vmem:[#allocation4 + $0x8] sm:$0xff] %vm58, 0.0
    %206 = vst.msk [vmem:[#allocation4 + $0x10] sm:$0xff] %vm58, 0.0
    %207 = vst.msk [vmem:[#allocation4 + $0x18] sm:$0xff] %vm58, 0.0
    %208 = vst.msk [vmem:[#allocation4 + $0x20] sm:$0xff] %vm58, 0.0
    %209 = vst.msk [vmem:[#allocation4 + $0x28] sm:$0xff] %vm58, 0.0
    %210 = vst.msk [vmem:[#allocation4 + $0x30] sm:$0xff] %vm58, 0.0
    %211 = vst.msk [vmem:[#allocation4 + $0x38] sm:$0xff] %vm58, 0.0
    %212 = vst.msk [vmem:[#allocation5] sm:$0xff] %vm58, -inf
    %213 = vst.msk [vmem:[#allocation5 + $0x8] sm:$0xff] %vm58, -inf
    %214 = vst.msk [vmem:[#allocation5 + $0x10] sm:$0xff] %vm58, -inf
    %215 = vst.msk [vmem:[#allocation5 + $0x18] sm:$0xff] %vm58, -inf
    %216 = vst.msk [vmem:[#allocation5 + $0x20] sm:$0xff] %vm58, -inf
    %217 = vst.msk [vmem:[#allocation5 + $0x28] sm:$0xff] %vm58, -inf
    %218 = vst.msk [vmem:[#allocation5 + $0x30] sm:$0xff] %vm58, -inf
    %219 = vst.msk [vmem:[#allocation5 + $0x38] sm:$0xff] %vm58, -inf
    %220 = vst.msk [vmem:[#allocation6] sm:$0xff] %vm58, inf
    %221 = vst.msk [vmem:[#allocation6 + $0x8] sm:$0xff] %vm58, inf
    %222 = vst.msk [vmem:[#allocation6 + $0x10] sm:$0xff] %vm58, inf
    %223 = vst.msk [vmem:[#allocation6 + $0x18] sm:$0xff] %vm58, inf
    %224 = vst.msk [vmem:[#allocation6 + $0x20] sm:$0xff] %vm58, inf
    %225 = vst.msk [vmem:[#allocation6 + $0x28] sm:$0xff] %vm58, inf
    %226 = vst.msk [vmem:[#allocation6 + $0x30] sm:$0xff] %vm58, inf
    %227 = vst.msk [vmem:[#allocation6 + $0x38] sm:$0xff] %vm58, inf
  $region45: #{tpu_custom_call.1} parent=0 // pred_fallthru
    _
  %v228 = vld [vmem:[%s2] sm:$0xff]
  %v229 = vld [vmem:[%s2 + $0x8] sm:$0xff]
  %v230 = vld [vmem:[%s2 + $0x10] sm:$0xff]
  %v231 = vld [vmem:[%s2 + $0x18] sm:$0xff]
  %v232 = vld [vmem:[%s2 + $0x20] sm:$0xff]
  %v233 = vld [vmem:[%s2 + $0x28] sm:$0xff]
  %v234 = vld [vmem:[%s2 + $0x30] sm:$0xff]
  %v235 = vld [vmem:[%s2 + $0x38] sm:$0xff]
  %v236 = vld [vmem:[%s2 + $0x40] sm:$0xff]
  %v237 = vld [vmem:[%s2 + $0x48] sm:$0xff]
  %v238 = vld [vmem:[%s2 + $0x50] sm:$0xff]
  %v239 = vld [vmem:[%s2 + $0x58] sm:$0xff]
  %v240 = vld [vmem:[%s2 + $0x60] sm:$0xff]
  %v241 = vld [vmem:[%s2 + $0x68] sm:$0xff]
  %v242 = vld [vmem:[%s2 + $0x70] sm:$0xff]
  %v243 = vld [vmem:[%s2 + $0x78] sm:$0xff]
  %v244 = vld [vmem:[%s2 + $0x80] sm:$0xff]
  %v245 = vld [vmem:[%s2 + $0x88] sm:$0xff]
  %v246 = vld [vmem:[%s2 + $0x90] sm:$0xff]
  %v247 = vld [vmem:[%s2 + $0x98] sm:$0xff]
  %v248 = vld [vmem:[%s2 + $0xa0] sm:$0xff]
  %v249 = vld [vmem:[%s2 + $0xa8] sm:$0xff]
  %v250 = vld [vmem:[%s2 + $0xb0] sm:$0xff]
  %v251 = vld [vmem:[%s2 + $0xb8] sm:$0xff]
  %v252 = vld [vmem:[%s2 + $0xc0] sm:$0xff]
  %v253 = vld [vmem:[%s2 + $0xc8] sm:$0xff]
  %v254 = vld [vmem:[%s2 + $0xd0] sm:$0xff]
  %v255 = vld [vmem:[%s2 + $0xd8] sm:$0xff]
  %v256 = vld [vmem:[%s2 + $0xe0] sm:$0xff]
  %v257 = vld [vmem:[%s2 + $0xe8] sm:$0xff]
  %v258 = vld [vmem:[%s2 + $0xf0] sm:$0xff]
  %v259 = vld [vmem:[%s2 + $0xf8] sm:$0xff]
  %v260 = vld [vmem:[%s2 + $0x100] sm:$0xff]
  %v261 = vld [vmem:[%s2 + $0x108] sm:$0xff]
  %v262 = vld [vmem:[%s2 + $0x110] sm:$0xff]
  %v263 = vld [vmem:[%s2 + $0x118] sm:$0xff]
  %v264 = vld [vmem:[%s2 + $0x120] sm:$0xff]
  %v265 = vld [vmem:[%s2 + $0x128] sm:$0xff]
  %v266 = vld [vmem:[%s2 + $0x130] sm:$0xff]
  %v267 = vld [vmem:[%s2 + $0x138] sm:$0xff]
  %v268 = vld [vmem:[%s2 + $0x140] sm:$0xff]
  %v269 = vld [vmem:[%s2 + $0x148] sm:$0xff]
  %v270 = vld [vmem:[%s2 + $0x150] sm:$0xff]
  %v271 = vld [vmem:[%s2 + $0x158] sm:$0xff]
  %v272 = vld [vmem:[%s2 + $0x160] sm:$0xff]
  %v273 = vld [vmem:[%s2 + $0x168] sm:$0xff]
  %v274 = vld [vmem:[%s2 + $0x170] sm:$0xff]
  %v275 = vld [vmem:[%s2 + $0x178] sm:$0xff]
  %v276 = vld [vmem:[%s2 + $0x180] sm:$0xff]
  %v277 = vld [vmem:[%s2 + $0x188] sm:$0xff]
  %v278 = vld [vmem:[%s2 + $0x190] sm:$0xff]
  %v279 = vld [vmem:[%s2 + $0x198] sm:$0xff]
  %v280 = vld [vmem:[%s2 + $0x1a0] sm:$0xff]
  %v281 = vld [vmem:[%s2 + $0x1a8] sm:$0xff]
  %v282 = vld [vmem:[%s2 + $0x1b0] sm:$0xff]
  %v283 = vld [vmem:[%s2 + $0x1b8] sm:$0xff]
  %v284 = vld [vmem:[%s2 + $0x1c0] sm:$0xff]
  %v285 = vld [vmem:[%s2 + $0x1c8] sm:$0xff]
  %v286 = vld [vmem:[%s2 + $0x1d0] sm:$0xff]
  %v287 = vld [vmem:[%s2 + $0x1d8] sm:$0xff]
  %v288 = vld [vmem:[%s2 + $0x1e0] sm:$0xff]
  %v289 = vld [vmem:[%s2 + $0x1e8] sm:$0xff]
  %v290 = vld [vmem:[%s2 + $0x1f0] sm:$0xff]
  %v291 = vld [vmem:[%s2 + $0x1f8] sm:$0xff]
  %v292 = vld [vmem:[%s2 + $0x200] sm:$0xff]
  %v293 = vld [vmem:[%s2 + $0x208] sm:$0xff]
  %v294 = vld [vmem:[%s2 + $0x210] sm:$0xff]
  %v295 = vld [vmem:[%s2 + $0x218] sm:$0xff]
  %v296 = vld [vmem:[%s2 + $0x220] sm:$0xff]
  %v297 = vld [vmem:[%s2 + $0x228] sm:$0xff]
  %v298 = vld [vmem:[%s2 + $0x230] sm:$0xff]
  %v299 = vld [vmem:[%s2 + $0x238] sm:$0xff]
  %v300 = vld [vmem:[%s2 + $0x240] sm:$0xff]
  %v301 = vld [vmem:[%s2 + $0x248] sm:$0xff]
  %v302 = vld [vmem:[%s2 + $0x250] sm:$0xff]
  %v303 = vld [vmem:[%s2 + $0x258] sm:$0xff]
  %v304 = vld [vmem:[%s2 + $0x260] sm:$0xff]
  %v305 = vld [vmem:[%s2 + $0x268] sm:$0xff]
  %v306 = vld [vmem:[%s2 + $0x270] sm:$0xff]
  %v307 = vld [vmem:[%s2 + $0x278] sm:$0xff]
  %v308 = vld [vmem:[%s2 + $0x280] sm:$0xff]
  %v309 = vld [vmem:[%s2 + $0x288] sm:$0xff]
  %v310 = vld [vmem:[%s2 + $0x290] sm:$0xff]
  %v311 = vld [vmem:[%s2 + $0x298] sm:$0xff]
  %v312 = vld [vmem:[%s2 + $0x2a0] sm:$0xff]
  %v313 = vld [vmem:[%s2 + $0x2a8] sm:$0xff]
  %v314 = vld [vmem:[%s2 + $0x2b0] sm:$0xff]
  %v315 = vld [vmem:[%s2 + $0x2b8] sm:$0xff]
  %v316 = vld [vmem:[%s2 + $0x2c0] sm:$0xff]
  %v317 = vld [vmem:[%s2 + $0x2c8] sm:$0xff]
  %v318 = vld [vmem:[%s2 + $0x2d0] sm:$0xff]
  %v319 = vld [vmem:[%s2 + $0x2d8] sm:$0xff]
  %v320 = vld [vmem:[%s2 + $0x2e0] sm:$0xff]
  %v321 = vld [vmem:[%s2 + $0x2e8] sm:$0xff]
  %v322 = vld [vmem:[%s2 + $0x2f0] sm:$0xff]
  %v323 = vld [vmem:[%s2 + $0x2f8] sm:$0xff]
  %v324 = vld [vmem:[%s2 + $0x300] sm:$0xff]
  %v325 = vld [vmem:[%s2 + $0x308] sm:$0xff]
  %v326 = vld [vmem:[%s2 + $0x310] sm:$0xff]
  %v327 = vld [vmem:[%s2 + $0x318] sm:$0xff]
  %v328 = vld [vmem:[%s2 + $0x320] sm:$0xff]
  %v329 = vld [vmem:[%s2 + $0x328] sm:$0xff]
  %v330 = vld [vmem:[%s2 + $0x330] sm:$0xff]
  %v331 = vld [vmem:[%s2 + $0x338] sm:$0xff]
  %v332 = vld [vmem:[%s2 + $0x340] sm:$0xff]
  %v333 = vld [vmem:[%s2 + $0x348] sm:$0xff]
  %v334 = vld [vmem:[%s2 + $0x350] sm:$0xff]
  %v335 = vld [vmem:[%s2 + $0x358] sm:$0xff]
  %v336 = vld [vmem:[%s2 + $0x360] sm:$0xff]
  %v337 = vld [vmem:[%s2 + $0x368] sm:$0xff]
  %v338 = vld [vmem:[%s2 + $0x370] sm:$0xff]
  %v339 = vld [vmem:[%s2 + $0x378] sm:$0xff]
  %v340 = vld [vmem:[%s2 + $0x380] sm:$0xff]
  %v341 = vld [vmem:[%s2 + $0x388] sm:$0xff]
  %v342 = vld [vmem:[%s2 + $0x390] sm:$0xff]
  %v343 = vld [vmem:[%s2 + $0x398] sm:$0xff]
  %v344 = vld [vmem:[%s2 + $0x3a0] sm:$0xff]
  %v345 = vld [vmem:[%s2 + $0x3a8] sm:$0xff]
  %v346 = vld [vmem:[%s2 + $0x3b0] sm:$0xff]
  %v347 = vld [vmem:[%s2 + $0x3b8] sm:$0xff]
  %v348 = vld [vmem:[%s2 + $0x3c0] sm:$0xff]
  %v349 = vld [vmem:[%s2 + $0x3c8] sm:$0xff]
  %v350 = vld [vmem:[%s2 + $0x3d0] sm:$0xff]
  %v351 = vld [vmem:[%s2 + $0x3d8] sm:$0xff]
  %v352 = vld [vmem:[%s2 + $0x3e0] sm:$0xff]
  %v353 = vld [vmem:[%s2 + $0x3e8] sm:$0xff]
  %v354 = vld [vmem:[%s2 + $0x3f0] sm:$0xff]
  %v355 = vld [vmem:[%s2 + $0x3f8] sm:$0xff]
  %v356 = vld [vmem:[%s2 + $0x400] sm:$0xff]
  %v357 = vld [vmem:[%s2 + $0x408] sm:$0xff]
  %v358 = vld [vmem:[%s2 + $0x410] sm:$0xff]
  %v359 = vld [vmem:[%s2 + $0x418] sm:$0xff]
  %v360 = vld [vmem:[%s2 + $0x420] sm:$0xff]
  %v361 = vld [vmem:[%s2 + $0x428] sm:$0xff]
  %v362 = vld [vmem:[%s2 + $0x430] sm:$0xff]
  %v363 = vld [vmem:[%s2 + $0x438] sm:$0xff]
  %v364 = vld [vmem:[%s2 + $0x440] sm:$0xff]
  %v365 = vld [vmem:[%s2 + $0x448] sm:$0xff]
  %v366 = vld [vmem:[%s2 + $0x450] sm:$0xff]
  %v367 = vld [vmem:[%s2 + $0x458] sm:$0xff]
  %v368 = vld [vmem:[%s2 + $0x460] sm:$0xff]
  %v369 = vld [vmem:[%s2 + $0x468] sm:$0xff]
  %v370 = vld [vmem:[%s2 + $0x470] sm:$0xff]
  %v371 = vld [vmem:[%s2 + $0x478] sm:$0xff]
  %v372 = vld [vmem:[%s2 + $0x480] sm:$0xff]
  %v373 = vld [vmem:[%s2 + $0x488] sm:$0xff]
  %v374 = vld [vmem:[%s2 + $0x490] sm:$0xff]
  %v375 = vld [vmem:[%s2 + $0x498] sm:$0xff]
  %v376 = vld [vmem:[%s2 + $0x4a0] sm:$0xff]
  %v377 = vld [vmem:[%s2 + $0x4a8] sm:$0xff]
  %v378 = vld [vmem:[%s2 + $0x4b0] sm:$0xff]
  %v379 = vld [vmem:[%s2 + $0x4b8] sm:$0xff]
  %v380 = vld [vmem:[%s2 + $0x4c0] sm:$0xff]
  %v381 = vld [vmem:[%s2 + $0x4c8] sm:$0xff]
  %v382 = vld [vmem:[%s2 + $0x4d0] sm:$0xff]
  %v383 = vld [vmem:[%s2 + $0x4d8] sm:$0xff]
  %v384 = vld [vmem:[%s2 + $0x4e0] sm:$0xff]
  %v385 = vld [vmem:[%s2 + $0x4e8] sm:$0xff]
  %v386 = vld [vmem:[%s2 + $0x4f0] sm:$0xff]
  %v387 = vld [vmem:[%s2 + $0x4f8] sm:$0xff]
  %v388 = vld [vmem:[%s2 + $0x500] sm:$0xff]
  %v389 = vld [vmem:[%s2 + $0x508] sm:$0xff]
  %v390 = vld [vmem:[%s2 + $0x510] sm:$0xff]
  %v391 = vld [vmem:[%s2 + $0x518] sm:$0xff]
  %v392 = vld [vmem:[%s2 + $0x520] sm:$0xff]
  %v393 = vld [vmem:[%s2 + $0x528] sm:$0xff]
  %v394 = vld [vmem:[%s2 + $0x530] sm:$0xff]
  %v395 = vld [vmem:[%s2 + $0x538] sm:$0xff]
  %v396 = vld [vmem:[%s2 + $0x540] sm:$0xff]
  %v397 = vld [vmem:[%s2 + $0x548] sm:$0xff]
  %v398 = vld [vmem:[%s2 + $0x550] sm:$0xff]
  %v399 = vld [vmem:[%s2 + $0x558] sm:$0xff]
  %v400 = vld [vmem:[%s2 + $0x560] sm:$0xff]
  %v401 = vld [vmem:[%s2 + $0x568] sm:$0xff]
  %v402 = vld [vmem:[%s2 + $0x570] sm:$0xff]
  %v403 = vld [vmem:[%s2 + $0x578] sm:$0xff]
  %v404 = vld [vmem:[%s2 + $0x580] sm:$0xff]
  %v405 = vld [vmem:[%s2 + $0x588] sm:$0xff]
  %v406 = vld [vmem:[%s2 + $0x590] sm:$0xff]
  %v407 = vld [vmem:[%s2 + $0x598] sm:$0xff]
  %v408 = vld [vmem:[%s2 + $0x5a0] sm:$0xff]
  %v409 = vld [vmem:[%s2 + $0x5a8] sm:$0xff]
  %v410 = vld [vmem:[%s2 + $0x5b0] sm:$0xff]
  %v411 = vld [vmem:[%s2 + $0x5b8] sm:$0xff]
  %v412 = vld [vmem:[%s2 + $0x5c0] sm:$0xff]
  %v413 = vld [vmem:[%s2 + $0x5c8] sm:$0xff]
  %v414 = vld [vmem:[%s2 + $0x5d0] sm:$0xff]
  %v415 = vld [vmem:[%s2 + $0x5d8] sm:$0xff]
  %v416 = vld [vmem:[%s2 + $0x5e0] sm:$0xff]
  %v417 = vld [vmem:[%s2 + $0x5e8] sm:$0xff]
  %v418 = vld [vmem:[%s2 + $0x5f0] sm:$0xff]
  %v419 = vld [vmem:[%s2 + $0x5f8] sm:$0xff]
  %v420 = vld [vmem:[%s2 + $0x600] sm:$0xff]
  %v421 = vld [vmem:[%s2 + $0x608] sm:$0xff]
  %v422 = vld [vmem:[%s2 + $0x610] sm:$0xff]
  %v423 = vld [vmem:[%s2 + $0x618] sm:$0xff]
  %v424 = vld [vmem:[%s2 + $0x620] sm:$0xff]
  %v425 = vld [vmem:[%s2 + $0x628] sm:$0xff]
  %v426 = vld [vmem:[%s2 + $0x630] sm:$0xff]
  %v427 = vld [vmem:[%s2 + $0x638] sm:$0xff]
  %v428 = vld [vmem:[%s2 + $0x640] sm:$0xff]
  %v429 = vld [vmem:[%s2 + $0x648] sm:$0xff]
  %v430 = vld [vmem:[%s2 + $0x650] sm:$0xff]
  %v431 = vld [vmem:[%s2 + $0x658] sm:$0xff]
  %v432 = vld [vmem:[%s2 + $0x660] sm:$0xff]
  %v433 = vld [vmem:[%s2 + $0x668] sm:$0xff]
  %v434 = vld [vmem:[%s2 + $0x670] sm:$0xff]
  %v435 = vld [vmem:[%s2 + $0x678] sm:$0xff]
  %v436 = vld [vmem:[%s2 + $0x680] sm:$0xff]
  %v437 = vld [vmem:[%s2 + $0x688] sm:$0xff]
  %v438 = vld [vmem:[%s2 + $0x690] sm:$0xff]
  %v439 = vld [vmem:[%s2 + $0x698] sm:$0xff]
  %v440 = vld [vmem:[%s2 + $0x6a0] sm:$0xff]
  %v441 = vld [vmem:[%s2 + $0x6a8] sm:$0xff]
  %v442 = vld [vmem:[%s2 + $0x6b0] sm:$0xff]
  %v443 = vld [vmem:[%s2 + $0x6b8] sm:$0xff]
  %v444 = vld [vmem:[%s2 + $0x6c0] sm:$0xff]
  %v445 = vld [vmem:[%s2 + $0x6c8] sm:$0xff]
  %v446 = vld [vmem:[%s2 + $0x6d0] sm:$0xff]
  %v447 = vld [vmem:[%s2 + $0x6d8] sm:$0xff]
  %v448 = vld [vmem:[%s2 + $0x6e0] sm:$0xff]
  %v449 = vld [vmem:[%s2 + $0x6e8] sm:$0xff]
  %v450 = vld [vmem:[%s2 + $0x6f0] sm:$0xff]
  %v451 = vld [vmem:[%s2 + $0x6f8] sm:$0xff]
  %v452 = vld [vmem:[%s2 + $0x700] sm:$0xff]
  %v453 = vld [vmem:[%s2 + $0x708] sm:$0xff]
  %v454 = vld [vmem:[%s2 + $0x710] sm:$0xff]
  %v455 = vld [vmem:[%s2 + $0x718] sm:$0xff]
  %v456 = vld [vmem:[%s2 + $0x720] sm:$0xff]
  %v457 = vld [vmem:[%s2 + $0x728] sm:$0xff]
  %v458 = vld [vmem:[%s2 + $0x730] sm:$0xff]
  %v459 = vld [vmem:[%s2 + $0x738] sm:$0xff]
  %v460 = vld [vmem:[%s2 + $0x740] sm:$0xff]
  %v461 = vld [vmem:[%s2 + $0x748] sm:$0xff]
  %v462 = vld [vmem:[%s2 + $0x750] sm:$0xff]
  %v463 = vld [vmem:[%s2 + $0x758] sm:$0xff]
  %v464 = vld [vmem:[%s2 + $0x760] sm:$0xff]
  %v465 = vld [vmem:[%s2 + $0x768] sm:$0xff]
  %v466 = vld [vmem:[%s2 + $0x770] sm:$0xff]
  %v467 = vld [vmem:[%s2 + $0x778] sm:$0xff]
  %v468 = vld [vmem:[%s2 + $0x780] sm:$0xff]
  %v469 = vld [vmem:[%s2 + $0x788] sm:$0xff]
  %v470 = vld [vmem:[%s2 + $0x790] sm:$0xff]
  %v471 = vld [vmem:[%s2 + $0x798] sm:$0xff]
  %v472 = vld [vmem:[%s2 + $0x7a0] sm:$0xff]
  %v473 = vld [vmem:[%s2 + $0x7a8] sm:$0xff]
  %v474 = vld [vmem:[%s2 + $0x7b0] sm:$0xff]
  %v475 = vld [vmem:[%s2 + $0x7b8] sm:$0xff]
  %v476 = vld [vmem:[%s2 + $0x7c0] sm:$0xff]
  %v477 = vld [vmem:[%s2 + $0x7c8] sm:$0xff]
  %v478 = vld [vmem:[%s2 + $0x7d0] sm:$0xff]
  %v479 = vld [vmem:[%s2 + $0x7d8] sm:$0xff]
  %v480 = vld [vmem:[%s2 + $0x7e0] sm:$0xff]
  %v481 = vld [vmem:[%s2 + $0x7e8] sm:$0xff]
  %v482 = vld [vmem:[%s2 + $0x7f0] sm:$0xff]
  %v483 = vld [vmem:[%s2 + $0x7f8] sm:$0xff]
  %v484 = vld [vmem:[%s2 + $0x800] sm:$0xff]
  %v485 = vld [vmem:[%s2 + $0x808] sm:$0xff]
  %v486 = vld [vmem:[%s2 + $0x810] sm:$0xff]
  %v487 = vld [vmem:[%s2 + $0x818] sm:$0xff]
  %v488 = vld [vmem:[%s2 + $0x820] sm:$0xff]
  %v489 = vld [vmem:[%s2 + $0x828] sm:$0xff]
  %v490 = vld [vmem:[%s2 + $0x830] sm:$0xff]
  %v491 = vld [vmem:[%s2 + $0x838] sm:$0xff]
  %v492 = vld [vmem:[%s2 + $0x840] sm:$0xff]
  %v493 = vld [vmem:[%s2 + $0x848] sm:$0xff]
  %v494 = vld [vmem:[%s2 + $0x850] sm:$0xff]
  %v495 = vld [vmem:[%s2 + $0x858] sm:$0xff]
  %v496 = vld [vmem:[%s2 + $0x860] sm:$0xff]
  %v497 = vld [vmem:[%s2 + $0x868] sm:$0xff]
  %v498 = vld [vmem:[%s2 + $0x870] sm:$0xff]
  %v499 = vld [vmem:[%s2 + $0x878] sm:$0xff]
  %v500 = vld [vmem:[%s2 + $0x880] sm:$0xff]
  %v501 = vld [vmem:[%s2 + $0x888] sm:$0xff]
  %v502 = vld [vmem:[%s2 + $0x890] sm:$0xff]
  %v503 = vld [vmem:[%s2 + $0x898] sm:$0xff]
  %v504 = vld [vmem:[%s2 + $0x8a0] sm:$0xff]
  %v505 = vld [vmem:[%s2 + $0x8a8] sm:$0xff]
  %v506 = vld [vmem:[%s2 + $0x8b0] sm:$0xff]
  %v507 = vld [vmem:[%s2 + $0x8b8] sm:$0xff]
  %v508 = vld [vmem:[%s2 + $0x8c0] sm:$0xff]
  %v509 = vld [vmem:[%s2 + $0x8c8] sm:$0xff]
  %v510 = vld [vmem:[%s2 + $0x8d0] sm:$0xff]
  %v511 = vld [vmem:[%s2 + $0x8d8] sm:$0xff]
  %v512 = vld [vmem:[%s2 + $0x8e0] sm:$0xff]
  %v513 = vld [vmem:[%s2 + $0x8e8] sm:$0xff]
  %v514 = vld [vmem:[%s2 + $0x8f0] sm:$0xff]
  %v515 = vld [vmem:[%s2 + $0x8f8] sm:$0xff]
  %v516 = vld [vmem:[%s2 + $0x900] sm:$0xff]
  %v517 = vld [vmem:[%s2 + $0x908] sm:$0xff]
  %v518 = vld [vmem:[%s2 + $0x910] sm:$0xff]
  %v519 = vld [vmem:[%s2 + $0x918] sm:$0xff]
  %v520 = vld [vmem:[%s2 + $0x920] sm:$0xff]
  %v521 = vld [vmem:[%s2 + $0x928] sm:$0xff]
  %v522 = vld [vmem:[%s2 + $0x930] sm:$0xff]
  %v523 = vld [vmem:[%s2 + $0x938] sm:$0xff]
  %v524 = vld [vmem:[%s2 + $0x940] sm:$0xff]
  %v525 = vld [vmem:[%s2 + $0x948] sm:$0xff]
  %v526 = vld [vmem:[%s2 + $0x950] sm:$0xff]
  %v527 = vld [vmem:[%s2 + $0x958] sm:$0xff]
  %v528 = vld [vmem:[%s2 + $0x960] sm:$0xff]
  %v529 = vld [vmem:[%s2 + $0x968] sm:$0xff]
  %v530 = vld [vmem:[%s2 + $0x970] sm:$0xff]
  %v531 = vld [vmem:[%s2 + $0x978] sm:$0xff]
  %v532 = vld [vmem:[%s2 + $0x980] sm:$0xff]
  %v533 = vld [vmem:[%s2 + $0x988] sm:$0xff]
  %v534 = vld [vmem:[%s2 + $0x990] sm:$0xff]
  %v535 = vld [vmem:[%s2 + $0x998] sm:$0xff]
  %v536 = vld [vmem:[%s2 + $0x9a0] sm:$0xff]
  %v537 = vld [vmem:[%s2 + $0x9a8] sm:$0xff]
  %v538 = vld [vmem:[%s2 + $0x9b0] sm:$0xff]
  %v539 = vld [vmem:[%s2 + $0x9b8] sm:$0xff]
  %v540 = vld [vmem:[%s2 + $0x9c0] sm:$0xff]
  %v541 = vld [vmem:[%s2 + $0x9c8] sm:$0xff]
  %v542 = vld [vmem:[%s2 + $0x9d0] sm:$0xff]
  %v543 = vld [vmem:[%s2 + $0x9d8] sm:$0xff]
  %v544 = vld [vmem:[%s2 + $0x9e0] sm:$0xff]
  %v545 = vld [vmem:[%s2 + $0x9e8] sm:$0xff]
  %v546 = vld [vmem:[%s2 + $0x9f0] sm:$0xff]
  %v547 = vld [vmem:[%s2 + $0x9f8] sm:$0xff]
  %v548 = vld [vmem:[%s2 + $0xa00] sm:$0xff]
  %v549 = vld [vmem:[%s2 + $0xa08] sm:$0xff]
  %v550 = vld [vmem:[%s2 + $0xa10] sm:$0xff]
  %v551 = vld [vmem:[%s2 + $0xa18] sm:$0xff]
  %v552 = vld [vmem:[%s2 + $0xa20] sm:$0xff]
  %v553 = vld [vmem:[%s2 + $0xa28] sm:$0xff]
  %v554 = vld [vmem:[%s2 + $0xa30] sm:$0xff]
  %v555 = vld [vmem:[%s2 + $0xa38] sm:$0xff]
  %v556 = vld [vmem:[%s2 + $0xa40] sm:$0xff]
  %v557 = vld [vmem:[%s2 + $0xa48] sm:$0xff]
  %v558 = vld [vmem:[%s2 + $0xa50] sm:$0xff]
  %v559 = vld [vmem:[%s2 + $0xa58] sm:$0xff]
  %v560 = vld [vmem:[%s2 + $0xa60] sm:$0xff]
  %v561 = vld [vmem:[%s2 + $0xa68] sm:$0xff]
  %v562 = vld [vmem:[%s2 + $0xa70] sm:$0xff]
  %v563 = vld [vmem:[%s2 + $0xa78] sm:$0xff]
  %v564 = vld [vmem:[%s2 + $0xa80] sm:$0xff]
  %v565 = vld [vmem:[%s2 + $0xa88] sm:$0xff]
  %v566 = vld [vmem:[%s2 + $0xa90] sm:$0xff]
  %v567 = vld [vmem:[%s2 + $0xa98] sm:$0xff]
  %v568 = vld [vmem:[%s2 + $0xaa0] sm:$0xff]
  %v569 = vld [vmem:[%s2 + $0xaa8] sm:$0xff]
  %v570 = vld [vmem:[%s2 + $0xab0] sm:$0xff]
  %v571 = vld [vmem:[%s2 + $0xab8] sm:$0xff]
  %v572 = vld [vmem:[%s2 + $0xac0] sm:$0xff]
  %v573 = vld [vmem:[%s2 + $0xac8] sm:$0xff]
  %v574 = vld [vmem:[%s2 + $0xad0] sm:$0xff]
  %v575 = vld [vmem:[%s2 + $0xad8] sm:$0xff]
  %v576 = vld [vmem:[%s2 + $0xae0] sm:$0xff]
  %v577 = vld [vmem:[%s2 + $0xae8] sm:$0xff]
  %v578 = vld [vmem:[%s2 + $0xaf0] sm:$0xff]
  %v579 = vld [vmem:[%s2 + $0xaf8] sm:$0xff]
  %v580 = vld [vmem:[%s2 + $0xb00] sm:$0xff]
  %v581 = vld [vmem:[%s2 + $0xb08] sm:$0xff]
  %v582 = vld [vmem:[%s2 + $0xb10] sm:$0xff]
  %v583 = vld [vmem:[%s2 + $0xb18] sm:$0xff]
  %v584 = vld [vmem:[%s2 + $0xb20] sm:$0xff]
  %v585 = vld [vmem:[%s2 + $0xb28] sm:$0xff]
  %v586 = vld [vmem:[%s2 + $0xb30] sm:$0xff]
  %v587 = vld [vmem:[%s2 + $0xb38] sm:$0xff]
  %v588 = vld [vmem:[%s2 + $0xb40] sm:$0xff]
  %v589 = vld [vmem:[%s2 + $0xb48] sm:$0xff]
  %v590 = vld [vmem:[%s2 + $0xb50] sm:$0xff]
  %v591 = vld [vmem:[%s2 + $0xb58] sm:$0xff]
  %v592 = vld [vmem:[%s2 + $0xb60] sm:$0xff]
  %v593 = vld [vmem:[%s2 + $0xb68] sm:$0xff]
  %v594 = vld [vmem:[%s2 + $0xb70] sm:$0xff]
  %v595 = vld [vmem:[%s2 + $0xb78] sm:$0xff]
  %v596 = vld [vmem:[%s2 + $0xb80] sm:$0xff]
  %v597 = vld [vmem:[%s2 + $0xb88] sm:$0xff]
  %v598 = vld [vmem:[%s2 + $0xb90] sm:$0xff]
  %v599 = vld [vmem:[%s2 + $0xb98] sm:$0xff]
  %v600 = vld [vmem:[%s2 + $0xba0] sm:$0xff]
  %v601 = vld [vmem:[%s2 + $0xba8] sm:$0xff]
  %v602 = vld [vmem:[%s2 + $0xbb0] sm:$0xff]
  %v603 = vld [vmem:[%s2 + $0xbb8] sm:$0xff]
  %v604 = vld [vmem:[%s2 + $0xbc0] sm:$0xff]
  %v605 = vld [vmem:[%s2 + $0xbc8] sm:$0xff]
  %v606 = vld [vmem:[%s2 + $0xbd0] sm:$0xff]
  %v607 = vld [vmem:[%s2 + $0xbd8] sm:$0xff]
  %v608 = vld [vmem:[%s2 + $0xbe0] sm:$0xff]
  %v609 = vld [vmem:[%s2 + $0xbe8] sm:$0xff]
  %v610 = vld [vmem:[%s2 + $0xbf0] sm:$0xff]
  %v611 = vld [vmem:[%s2 + $0xbf8] sm:$0xff]
  %v612 = vld [vmem:[%s2 + $0xc00] sm:$0xff]
  %v613 = vld [vmem:[%s2 + $0xc08] sm:$0xff]
  %v614 = vld [vmem:[%s2 + $0xc10] sm:$0xff]
  %v615 = vld [vmem:[%s2 + $0xc18] sm:$0xff]
  %v616 = vld [vmem:[%s2 + $0xc20] sm:$0xff]
  %v617 = vld [vmem:[%s2 + $0xc28] sm:$0xff]
  %v618 = vld [vmem:[%s2 + $0xc30] sm:$0xff]
  %v619 = vld [vmem:[%s2 + $0xc38] sm:$0xff]
  %v620 = vld [vmem:[%s2 + $0xc40] sm:$0xff]
  %v621 = vld [vmem:[%s2 + $0xc48] sm:$0xff]
  %v622 = vld [vmem:[%s2 + $0xc50] sm:$0xff]
  %v623 = vld [vmem:[%s2 + $0xc58] sm:$0xff]
  %v624 = vld [vmem:[%s2 + $0xc60] sm:$0xff]
  %v625 = vld [vmem:[%s2 + $0xc68] sm:$0xff]
  %v626 = vld [vmem:[%s2 + $0xc70] sm:$0xff]
  %v627 = vld [vmem:[%s2 + $0xc78] sm:$0xff]
  %v628 = vld [vmem:[%s2 + $0xc80] sm:$0xff]
  %v629 = vld [vmem:[%s2 + $0xc88] sm:$0xff]
  %v630 = vld [vmem:[%s2 + $0xc90] sm:$0xff]
  %v631 = vld [vmem:[%s2 + $0xc98] sm:$0xff]
  %v632 = vld [vmem:[%s2 + $0xca0] sm:$0xff]
  %v633 = vld [vmem:[%s2 + $0xca8] sm:$0xff]
  %v634 = vld [vmem:[%s2 + $0xcb0] sm:$0xff]
  %v635 = vld [vmem:[%s2 + $0xcb8] sm:$0xff]
  %v636 = vld [vmem:[%s2 + $0xcc0] sm:$0xff]
  %v637 = vld [vmem:[%s2 + $0xcc8] sm:$0xff]
  %v638 = vld [vmem:[%s2 + $0xcd0] sm:$0xff]
  %v639 = vld [vmem:[%s2 + $0xcd8] sm:$0xff]
  %v640 = vld [vmem:[%s2 + $0xce0] sm:$0xff]
  %v641 = vld [vmem:[%s2 + $0xce8] sm:$0xff]
  %v642 = vld [vmem:[%s2 + $0xcf0] sm:$0xff]
  %v643 = vld [vmem:[%s2 + $0xcf8] sm:$0xff]
  %v644 = vld [vmem:[%s2 + $0xd00] sm:$0xff]
  %v645 = vld [vmem:[%s2 + $0xd08] sm:$0xff]
  %v646 = vld [vmem:[%s2 + $0xd10] sm:$0xff]
  %v647 = vld [vmem:[%s2 + $0xd18] sm:$0xff]
  %v648 = vld [vmem:[%s2 + $0xd20] sm:$0xff]
  %v649 = vld [vmem:[%s2 + $0xd28] sm:$0xff]
  %v650 = vld [vmem:[%s2 + $0xd30] sm:$0xff]
  %v651 = vld [vmem:[%s2 + $0xd38] sm:$0xff]
  %v652 = vld [vmem:[%s2 + $0xd40] sm:$0xff]
  %v653 = vld [vmem:[%s2 + $0xd48] sm:$0xff]
  %v654 = vld [vmem:[%s2 + $0xd50] sm:$0xff]
  %v655 = vld [vmem:[%s2 + $0xd58] sm:$0xff]
  %v656 = vld [vmem:[%s2 + $0xd60] sm:$0xff]
  %v657 = vld [vmem:[%s2 + $0xd68] sm:$0xff]
  %v658 = vld [vmem:[%s2 + $0xd70] sm:$0xff]
  %v659 = vld [vmem:[%s2 + $0xd78] sm:$0xff]
  %v660 = vld [vmem:[%s2 + $0xd80] sm:$0xff]
  %v661 = vld [vmem:[%s2 + $0xd88] sm:$0xff]
  %v662 = vld [vmem:[%s2 + $0xd90] sm:$0xff]
  %v663 = vld [vmem:[%s2 + $0xd98] sm:$0xff]
  %v664 = vld [vmem:[%s2 + $0xda0] sm:$0xff]
  %v665 = vld [vmem:[%s2 + $0xda8] sm:$0xff]
  %v666 = vld [vmem:[%s2 + $0xdb0] sm:$0xff]
  %v667 = vld [vmem:[%s2 + $0xdb8] sm:$0xff]
  %v668 = vld [vmem:[%s2 + $0xdc0] sm:$0xff]
  %v669 = vld [vmem:[%s2 + $0xdc8] sm:$0xff]
  %v670 = vld [vmem:[%s2 + $0xdd0] sm:$0xff]
  %v671 = vld [vmem:[%s2 + $0xdd8] sm:$0xff]
  %v672 = vld [vmem:[%s2 + $0xde0] sm:$0xff]
  %v673 = vld [vmem:[%s2 + $0xde8] sm:$0xff]
  %v674 = vld [vmem:[%s2 + $0xdf0] sm:$0xff]
  %v675 = vld [vmem:[%s2 + $0xdf8] sm:$0xff]
  %v676 = vld [vmem:[%s2 + $0xe00] sm:$0xff]
  %v677 = vld [vmem:[%s2 + $0xe08] sm:$0xff]
  %v678 = vld [vmem:[%s2 + $0xe10] sm:$0xff]
  %v679 = vld [vmem:[%s2 + $0xe18] sm:$0xff]
  %v680 = vld [vmem:[%s2 + $0xe20] sm:$0xff]
  %v681 = vld [vmem:[%s2 + $0xe28] sm:$0xff]
  %v682 = vld [vmem:[%s2 + $0xe30] sm:$0xff]
  %v683 = vld [vmem:[%s2 + $0xe38] sm:$0xff]
  %v684 = vld [vmem:[%s2 + $0xe40] sm:$0xff]
  %v685 = vld [vmem:[%s2 + $0xe48] sm:$0xff]
  %v686 = vld [vmem:[%s2 + $0xe50] sm:$0xff]
  %v687 = vld [vmem:[%s2 + $0xe58] sm:$0xff]
  %v688 = vld [vmem:[%s2 + $0xe60] sm:$0xff]
  %v689 = vld [vmem:[%s2 + $0xe68] sm:$0xff]
  %v690 = vld [vmem:[%s2 + $0xe70] sm:$0xff]
  %v691 = vld [vmem:[%s2 + $0xe78] sm:$0xff]
  %v692 = vld [vmem:[%s2 + $0xe80] sm:$0xff]
  %v693 = vld [vmem:[%s2 + $0xe88] sm:$0xff]
  %v694 = vld [vmem:[%s2 + $0xe90] sm:$0xff]
  %v695 = vld [vmem:[%s2 + $0xe98] sm:$0xff]
  %v696 = vld [vmem:[%s2 + $0xea0] sm:$0xff]
  %v697 = vld [vmem:[%s2 + $0xea8] sm:$0xff]
  %v698 = vld [vmem:[%s2 + $0xeb0] sm:$0xff]
  %v699 = vld [vmem:[%s2 + $0xeb8] sm:$0xff]
  %v700 = vld [vmem:[%s2 + $0xec0] sm:$0xff]
  %v701 = vld [vmem:[%s2 + $0xec8] sm:$0xff]
  %v702 = vld [vmem:[%s2 + $0xed0] sm:$0xff]
  %v703 = vld [vmem:[%s2 + $0xed8] sm:$0xff]
  %v704 = vld [vmem:[%s2 + $0xee0] sm:$0xff]
  %v705 = vld [vmem:[%s2 + $0xee8] sm:$0xff]
  %v706 = vld [vmem:[%s2 + $0xef0] sm:$0xff]
  %v707 = vld [vmem:[%s2 + $0xef8] sm:$0xff]
  %v708 = vld [vmem:[%s2 + $0xf00] sm:$0xff]
  %v709 = vld [vmem:[%s2 + $0xf08] sm:$0xff]
  %v710 = vld [vmem:[%s2 + $0xf10] sm:$0xff]
  %v711 = vld [vmem:[%s2 + $0xf18] sm:$0xff]
  %v712 = vld [vmem:[%s2 + $0xf20] sm:$0xff]
  %v713 = vld [vmem:[%s2 + $0xf28] sm:$0xff]
  %v714 = vld [vmem:[%s2 + $0xf30] sm:$0xff]
  %v715 = vld [vmem:[%s2 + $0xf38] sm:$0xff]
  %v716 = vld [vmem:[%s2 + $0xf40] sm:$0xff]
  %v717 = vld [vmem:[%s2 + $0xf48] sm:$0xff]
  %v718 = vld [vmem:[%s2 + $0xf50] sm:$0xff]
  %v719 = vld [vmem:[%s2 + $0xf58] sm:$0xff]
  %v720 = vld [vmem:[%s2 + $0xf60] sm:$0xff]
  %v721 = vld [vmem:[%s2 + $0xf68] sm:$0xff]
  %v722 = vld [vmem:[%s2 + $0xf70] sm:$0xff]
  %v723 = vld [vmem:[%s2 + $0xf78] sm:$0xff]
  %v724 = vld [vmem:[%s2 + $0xf80] sm:$0xff]
  %v725 = vld [vmem:[%s2 + $0xf88] sm:$0xff]
  %v726 = vld [vmem:[%s2 + $0xf90] sm:$0xff]
  %v727 = vld [vmem:[%s2 + $0xf98] sm:$0xff]
  %v728 = vld [vmem:[%s2 + $0xfa0] sm:$0xff]
  %v729 = vld [vmem:[%s2 + $0xfa8] sm:$0xff]
  %v730 = vld [vmem:[%s2 + $0xfb0] sm:$0xff]
  %v731 = vld [vmem:[%s2 + $0xfb8] sm:$0xff]
  %v732 = vld [vmem:[%s2 + $0xfc0] sm:$0xff]
  %v733 = vld [vmem:[%s2 + $0xfc8] sm:$0xff]
  %v734 = vld [vmem:[%s2 + $0xfd0] sm:$0xff]
  %v735 = vld [vmem:[%s2 + $0xfd8] sm:$0xff]
  %v736 = vld [vmem:[%s2 + $0xfe0] sm:$0xff]
  %v737 = vld [vmem:[%s2 + $0xfe8] sm:$0xff]
  %v738 = vld [vmem:[%s2 + $0xff0] sm:$0xff]
  %v739 = vld [vmem:[%s2 + $0xff8] sm:$0xff]
  %v740 = vld [vmem:[%s5] sm:$0xff]
  %v741 = vld [vmem:[%s5 + $0x8] sm:$0xff]
  %vm742 = vcmask 130048
  %v744 = vsel %vm742, %v228, 0
  %v747 = vsel %vm742, %v229, 0
  %v750 = vsel %vm742, %v230, 0
  %v753 = vsel %vm742, %v231, 0
  %v756 = vsel %vm742, %v232, 0
  %v759 = vsel %vm742, %v233, 0
  %v762 = vsel %vm742, %v234, 0
  %v765 = vsel %vm742, %v235, 0
  %v768 = vsel %vm742, %v236, 0
  %v771 = vsel %vm742, %v237, 0
  %v774 = vsel %vm742, %v238, 0
  %v777 = vsel %vm742, %v239, 0
  %v780 = vsel %vm742, %v240, 0
  %v783 = vsel %vm742, %v241, 0
  %v786 = vsel %vm742, %v242, 0
  %v789 = vsel %vm742, %v243, 0
  %v792 = vsel %vm742, %v244, 0
  %v795 = vsel %vm742, %v245, 0
  %v798 = vsel %vm742, %v246, 0
  %v801 = vsel %vm742, %v247, 0
  %v804 = vsel %vm742, %v248, 0
  %v807 = vsel %vm742, %v249, 0
  %v810 = vsel %vm742, %v250, 0
  %v813 = vsel %vm742, %v251, 0
  %v816 = vsel %vm742, %v252, 0
  %v819 = vsel %vm742, %v253, 0
  %v822 = vsel %vm742, %v254, 0
  %v825 = vsel %vm742, %v255, 0
  %v828 = vsel %vm742, %v256, 0
  %v831 = vsel %vm742, %v257, 0
  %v834 = vsel %vm742, %v258, 0
  %v837 = vsel %vm742, %v259, 0
  %v840 = vsel %vm742, %v260, 0
  %v843 = vsel %vm742, %v261, 0
  %v846 = vsel %vm742, %v262, 0
  %v849 = vsel %vm742, %v263, 0
  %v852 = vsel %vm742, %v264, 0
  %v855 = vsel %vm742, %v265, 0
  %v858 = vsel %vm742, %v266, 0
  %v861 = vsel %vm742, %v267, 0
  %v864 = vsel %vm742, %v268, 0
  %v867 = vsel %vm742, %v269, 0
  %v870 = vsel %vm742, %v270, 0
  %v873 = vsel %vm742, %v271, 0
  %v876 = vsel %vm742, %v272, 0
  %v879 = vsel %vm742, %v273, 0
  %v882 = vsel %vm742, %v274, 0
  %v885 = vsel %vm742, %v275, 0
  %v888 = vsel %vm742, %v276, 0
  %v891 = vsel %vm742, %v277, 0
  %v894 = vsel %vm742, %v278, 0
  %v897 = vsel %vm742, %v279, 0
  %v900 = vsel %vm742, %v280, 0
  %v903 = vsel %vm742, %v281, 0
  %v906 = vsel %vm742, %v282, 0
  %v909 = vsel %vm742, %v283, 0
  %v912 = vsel %vm742, %v284, 0
  %v915 = vsel %vm742, %v285, 0
  %v918 = vsel %vm742, %v286, 0
  %v921 = vsel %vm742, %v287, 0
  %v924 = vsel %vm742, %v288, 0
  %v927 = vsel %vm742, %v289, 0
  %v930 = vsel %vm742, %v290, 0
  %v933 = vsel %vm742, %v291, 0
  %v936 = vsel %vm742, %v292, 0
  %v939 = vsel %vm742, %v293, 0
  %v942 = vsel %vm742, %v294, 0
  %v945 = vsel %vm742, %v295, 0
  %v948 = vsel %vm742, %v296, 0
  %v951 = vsel %vm742, %v297, 0
  %v954 = vsel %vm742, %v298, 0
  %v957 = vsel %vm742, %v299, 0
  %v960 = vsel %vm742, %v300, 0
  %v963 = vsel %vm742, %v301, 0
  %v966 = vsel %vm742, %v302, 0
  %v969 = vsel %vm742, %v303, 0
  %v972 = vsel %vm742, %v304, 0
  %v975 = vsel %vm742, %v305, 0
  %v978 = vsel %vm742, %v306, 0
  %v981 = vsel %vm742, %v307, 0
  %v984 = vsel %vm742, %v308, 0
  %v987 = vsel %vm742, %v309, 0
  %v990 = vsel %vm742, %v310, 0
  %v993 = vsel %vm742, %v311, 0
  %v996 = vsel %vm742, %v312, 0
  %v999 = vsel %vm742, %v313, 0
  %v1002 = vsel %vm742, %v314, 0
  %v1005 = vsel %vm742, %v315, 0
  %v1008 = vsel %vm742, %v316, 0
  %v1011 = vsel %vm742, %v317, 0
  %v1014 = vsel %vm742, %v318, 0
  %v1017 = vsel %vm742, %v319, 0
  %v1020 = vsel %vm742, %v320, 0
  %v1023 = vsel %vm742, %v321, 0
  %v1026 = vsel %vm742, %v322, 0
  %v1029 = vsel %vm742, %v323, 0
  %v1032 = vsel %vm742, %v324, 0
  %v1035 = vsel %vm742, %v325, 0
  %v1038 = vsel %vm742, %v326, 0
  %v1041 = vsel %vm742, %v327, 0
  %v1044 = vsel %vm742, %v328, 0
  %v1047 = vsel %vm742, %v329, 0
  %v1050 = vsel %vm742, %v330, 0
  %v1053 = vsel %vm742, %v331, 0
  %v1056 = vsel %vm742, %v332, 0
  %v1059 = vsel %vm742, %v333, 0
  %v1062 = vsel %vm742, %v334, 0
  %v1065 = vsel %vm742, %v335, 0
  %v1068 = vsel %vm742, %v336, 0
  %v1071 = vsel %vm742, %v337, 0
  %v1074 = vsel %vm742, %v338, 0
  %v1077 = vsel %vm742, %v339, 0
  %v1080 = vsel %vm742, %v340, 0
  %v1083 = vsel %vm742, %v341, 0
  %v1086 = vsel %vm742, %v342, 0
  %v1089 = vsel %vm742, %v343, 0
  %v1092 = vsel %vm742, %v344, 0
  %v1095 = vsel %vm742, %v345, 0
  %v1098 = vsel %vm742, %v346, 0
  %v1101 = vsel %vm742, %v347, 0
  %v1104 = vsel %vm742, %v348, 0
  %v1107 = vsel %vm742, %v349, 0
  %v1110 = vsel %vm742, %v350, 0
  %v1113 = vsel %vm742, %v351, 0
  %v1116 = vsel %vm742, %v352, 0
  %v1119 = vsel %vm742, %v353, 0
  %v1122 = vsel %vm742, %v354, 0
  %v1125 = vsel %vm742, %v355, 0
  %v1128 = vsel %vm742, %v356, 0
  %v1131 = vsel %vm742, %v357, 0
  %v1134 = vsel %vm742, %v358, 0
  %v1137 = vsel %vm742, %v359, 0
  %v1140 = vsel %vm742, %v360, 0
  %v1143 = vsel %vm742, %v361, 0
  %v1146 = vsel %vm742, %v362, 0
  %v1149 = vsel %vm742, %v363, 0
  %v1152 = vsel %vm742, %v364, 0
  %v1155 = vsel %vm742, %v365, 0
  %v1158 = vsel %vm742, %v366, 0
  %v1161 = vsel %vm742, %v367, 0
  %v1164 = vsel %vm742, %v368, 0
  %v1167 = vsel %vm742, %v369, 0
  %v1170 = vsel %vm742, %v370, 0
  %v1173 = vsel %vm742, %v371, 0
  %v1176 = vsel %vm742, %v372, 0
  %v1179 = vsel %vm742, %v373, 0
  %v1182 = vsel %vm742, %v374, 0
  %v1185 = vsel %vm742, %v375, 0
  %v1188 = vsel %vm742, %v376, 0
  %v1191 = vsel %vm742, %v377, 0
  %v1194 = vsel %vm742, %v378, 0
  %v1197 = vsel %vm742, %v379, 0
  %v1200 = vsel %vm742, %v380, 0
  %v1203 = vsel %vm742, %v381, 0
  %v1206 = vsel %vm742, %v382, 0
  %v1209 = vsel %vm742, %v383, 0
  %v1212 = vsel %vm742, %v384, 0
  %v1215 = vsel %vm742, %v385, 0
  %v1218 = vsel %vm742, %v386, 0
  %v1221 = vsel %vm742, %v387, 0
  %v1224 = vsel %vm742, %v388, 0
  %v1227 = vsel %vm742, %v389, 0
  %v1230 = vsel %vm742, %v390, 0
  %v1233 = vsel %vm742, %v391, 0
  %v1236 = vsel %vm742, %v392, 0
  %v1239 = vsel %vm742, %v393, 0
  %v1242 = vsel %vm742, %v394, 0
  %v1245 = vsel %vm742, %v395, 0
  %v1248 = vsel %vm742, %v396, 0
  %v1251 = vsel %vm742, %v397, 0
  %v1254 = vsel %vm742, %v398, 0
  %v1257 = vsel %vm742, %v399, 0
  %v1260 = vsel %vm742, %v400, 0
  %v1263 = vsel %vm742, %v401, 0
  %v1266 = vsel %vm742, %v402, 0
  %v1269 = vsel %vm742, %v403, 0
  %v1272 = vsel %vm742, %v404, 0
  %v1275 = vsel %vm742, %v405, 0
  %v1278 = vsel %vm742, %v406, 0
  %v1281 = vsel %vm742, %v407, 0
  %v1284 = vsel %vm742, %v408, 0
  %v1287 = vsel %vm742, %v409, 0
  %v1290 = vsel %vm742, %v410, 0
  %v1293 = vsel %vm742, %v411, 0
  %v1296 = vsel %vm742, %v412, 0
  %v1299 = vsel %vm742, %v413, 0
  %v1302 = vsel %vm742, %v414, 0
  %v1305 = vsel %vm742, %v415, 0
  %v1308 = vsel %vm742, %v416, 0
  %v1311 = vsel %vm742, %v417, 0
  %v1314 = vsel %vm742, %v418, 0
  %v1317 = vsel %vm742, %v419, 0
  %v1320 = vsel %vm742, %v420, 0
  %v1323 = vsel %vm742, %v421, 0
  %v1326 = vsel %vm742, %v422, 0
  %v1329 = vsel %vm742, %v423, 0
  %v1332 = vsel %vm742, %v424, 0
  %v1335 = vsel %vm742, %v425, 0
  %v1338 = vsel %vm742, %v426, 0
  %v1341 = vsel %vm742, %v427, 0
  %v1344 = vsel %vm742, %v428, 0
  %v1347 = vsel %vm742, %v429, 0
  %v1350 = vsel %vm742, %v430, 0
  %v1353 = vsel %vm742, %v431, 0
  %v1356 = vsel %vm742, %v432, 0
  %v1359 = vsel %vm742, %v433, 0
  %v1362 = vsel %vm742, %v434, 0
  %v1365 = vsel %vm742, %v435, 0
  %v1368 = vsel %vm742, %v436, 0
  %v1371 = vsel %vm742, %v437, 0
  %v1374 = vsel %vm742, %v438, 0
  %v1377 = vsel %vm742, %v439, 0
  %v1380 = vsel %vm742, %v440, 0
  %v1383 = vsel %vm742, %v441, 0
  %v1386 = vsel %vm742, %v442, 0
  %v1389 = vsel %vm742, %v443, 0
  %v1392 = vsel %vm742, %v444, 0
  %v1395 = vsel %vm742, %v445, 0
  %v1398 = vsel %vm742, %v446, 0
  %v1401 = vsel %vm742, %v447, 0
  %v1404 = vsel %vm742, %v448, 0
  %v1407 = vsel %vm742, %v449, 0
  %v1410 = vsel %vm742, %v450, 0
  %v1413 = vsel %vm742, %v451, 0
  %v1416 = vsel %vm742, %v452, 0
  %v1419 = vsel %vm742, %v453, 0
  %v1422 = vsel %vm742, %v454, 0
  %v1425 = vsel %vm742, %v455, 0
  %v1428 = vsel %vm742, %v456, 0
  %v1431 = vsel %vm742, %v457, 0
  %v1434 = vsel %vm742, %v458, 0
  %v1437 = vsel %vm742, %v459, 0
  %v1440 = vsel %vm742, %v460, 0
  %v1443 = vsel %vm742, %v461, 0
  %v1446 = vsel %vm742, %v462, 0
  %v1449 = vsel %vm742, %v463, 0
  %v1452 = vsel %vm742, %v464, 0
  %v1455 = vsel %vm742, %v465, 0
  %v1458 = vsel %vm742, %v466, 0
  %v1461 = vsel %vm742, %v467, 0
  %v1464 = vsel %vm742, %v468, 0
  %v1467 = vsel %vm742, %v469, 0
  %v1470 = vsel %vm742, %v470, 0
  %v1473 = vsel %vm742, %v471, 0
  %v1476 = vsel %vm742, %v472, 0
  %v1479 = vsel %vm742, %v473, 0
  %v1482 = vsel %vm742, %v474, 0
  %v1485 = vsel %vm742, %v475, 0
  %v1488 = vsel %vm742, %v476, 0
  %v1491 = vsel %vm742, %v477, 0
  %v1494 = vsel %vm742, %v478, 0
  %v1497 = vsel %vm742, %v479, 0
  %v1500 = vsel %vm742, %v480, 0
  %v1503 = vsel %vm742, %v481, 0
  %v1506 = vsel %vm742, %v482, 0
  %v1509 = vsel %vm742, %v483, 0
  %v1512 = vsel %vm742, %v484, 0
  %v1515 = vsel %vm742, %v485, 0
  %v1518 = vsel %vm742, %v486, 0
  %v1521 = vsel %vm742, %v487, 0
  %v1524 = vsel %vm742, %v488, 0
  %v1527 = vsel %vm742, %v489, 0
  %v1530 = vsel %vm742, %v490, 0
  %v1533 = vsel %vm742, %v491, 0
  %v1536 = vsel %vm742, %v492, 0
  %v1539 = vsel %vm742, %v493, 0
  %v1542 = vsel %vm742, %v494, 0
  %v1545 = vsel %vm742, %v495, 0
  %v1548 = vsel %vm742, %v496, 0
  %v1551 = vsel %vm742, %v497, 0
  %v1554 = vsel %vm742, %v498, 0
  %v1557 = vsel %vm742, %v499, 0
  %v1560 = vsel %vm742, %v500, 0
  %v1563 = vsel %vm742, %v501, 0
  %v1566 = vsel %vm742, %v502, 0
  %v1569 = vsel %vm742, %v503, 0
  %v1572 = vsel %vm742, %v504, 0
  %v1575 = vsel %vm742, %v505, 0
  %v1578 = vsel %vm742, %v506, 0
  %v1581 = vsel %vm742, %v507, 0
  %v1584 = vsel %vm742, %v508, 0
  %v1587 = vsel %vm742, %v509, 0
  %v1590 = vsel %vm742, %v510, 0
  %v1593 = vsel %vm742, %v511, 0
  %v1596 = vsel %vm742, %v512, 0
  %v1599 = vsel %vm742, %v513, 0
  %v1602 = vsel %vm742, %v514, 0
  %v1605 = vsel %vm742, %v515, 0
  %v1608 = vsel %vm742, %v516, 0
  %v1611 = vsel %vm742, %v517, 0
  %v1614 = vsel %vm742, %v518, 0
  %v1617 = vsel %vm742, %v519, 0
  %v1620 = vsel %vm742, %v520, 0
  %v1623 = vsel %vm742, %v521, 0
  %v1626 = vsel %vm742, %v522, 0
  %v1629 = vsel %vm742, %v523, 0
  %v1632 = vsel %vm742, %v524, 0
  %v1635 = vsel %vm742, %v525, 0
  %v1638 = vsel %vm742, %v526, 0
  %v1641 = vsel %vm742, %v527, 0
  %v1644 = vsel %vm742, %v528, 0
  %v1647 = vsel %vm742, %v529, 0
  %v1650 = vsel %vm742, %v530, 0
  %v1653 = vsel %vm742, %v531, 0
  %v1656 = vsel %vm742, %v532, 0
  %v1659 = vsel %vm742, %v533, 0
  %v1662 = vsel %vm742, %v534, 0
  %v1665 = vsel %vm742, %v535, 0
  %v1668 = vsel %vm742, %v536, 0
  %v1671 = vsel %vm742, %v537, 0
  %v1674 = vsel %vm742, %v538, 0
  %v1677 = vsel %vm742, %v539, 0
  %v1680 = vsel %vm742, %v540, 0
  %v1683 = vsel %vm742, %v541, 0
  %v1686 = vsel %vm742, %v542, 0
  %v1689 = vsel %vm742, %v543, 0
  %v1692 = vsel %vm742, %v544, 0
  %v1695 = vsel %vm742, %v545, 0
  %v1698 = vsel %vm742, %v546, 0
  %v1701 = vsel %vm742, %v547, 0
  %v1704 = vsel %vm742, %v548, 0
  %v1707 = vsel %vm742, %v549, 0
  %v1710 = vsel %vm742, %v550, 0
  %v1713 = vsel %vm742, %v551, 0
  %v1716 = vsel %vm742, %v552, 0
  %v1719 = vsel %vm742, %v553, 0
  %v1722 = vsel %vm742, %v554, 0
  %v1725 = vsel %vm742, %v555, 0
  %v1728 = vsel %vm742, %v556, 0
  %v1731 = vsel %vm742, %v557, 0
  %v1734 = vsel %vm742, %v558, 0
  %v1737 = vsel %vm742, %v559, 0
  %v1740 = vsel %vm742, %v560, 0
  %v1743 = vsel %vm742, %v561, 0
  %v1746 = vsel %vm742, %v562, 0
  %v1749 = vsel %vm742, %v563, 0
  %v1752 = vsel %vm742, %v564, 0
  %v1755 = vsel %vm742, %v565, 0
  %v1758 = vsel %vm742, %v566, 0
  %v1761 = vsel %vm742, %v567, 0
  %v1764 = vsel %vm742, %v568, 0
  %v1767 = vsel %vm742, %v569, 0
  %v1770 = vsel %vm742, %v570, 0
  %v1773 = vsel %vm742, %v571, 0
  %v1776 = vsel %vm742, %v572, 0
  %v1779 = vsel %vm742, %v573, 0
  %v1782 = vsel %vm742, %v574, 0
  %v1785 = vsel %vm742, %v575, 0
  %v1788 = vsel %vm742, %v576, 0
  %v1791 = vsel %vm742, %v577, 0
  %v1794 = vsel %vm742, %v578, 0
  %v1797 = vsel %vm742, %v579, 0
  %v1800 = vsel %vm742, %v580, 0
  %v1803 = vsel %vm742, %v581, 0
  %v1806 = vsel %vm742, %v582, 0
  %v1809 = vsel %vm742, %v583, 0
  %v1812 = vsel %vm742, %v584, 0
  %v1815 = vsel %vm742, %v585, 0
  %v1818 = vsel %vm742, %v586, 0
  %v1821 = vsel %vm742, %v587, 0
  %v1824 = vsel %vm742, %v588, 0
  %v1827 = vsel %vm742, %v589, 0
  %v1830 = vsel %vm742, %v590, 0
  %v1833 = vsel %vm742, %v591, 0
  %v1836 = vsel %vm742, %v592, 0
  %v1839 = vsel %vm742, %v593, 0
  %v1842 = vsel %vm742, %v594, 0
  %v1845 = vsel %vm742, %v595, 0
  %v1848 = vsel %vm742, %v596, 0
  %v1851 = vsel %vm742, %v597, 0
  %v1854 = vsel %vm742, %v598, 0
  %v1857 = vsel %vm742, %v599, 0
  %v1860 = vsel %vm742, %v600, 0
  %v1863 = vsel %vm742, %v601, 0
  %v1866 = vsel %vm742, %v602, 0
  %v1869 = vsel %vm742, %v603, 0
  %v1872 = vsel %vm742, %v604, 0
  %v1875 = vsel %vm742, %v605, 0
  %v1878 = vsel %vm742, %v606, 0
  %v1881 = vsel %vm742, %v607, 0
  %v1884 = vsel %vm742, %v608, 0
  %v1887 = vsel %vm742, %v609, 0
  %v1890 = vsel %vm742, %v610, 0
  %v1893 = vsel %vm742, %v611, 0
  %v1896 = vsel %vm742, %v612, 0
  %v1899 = vsel %vm742, %v613, 0
  %v1902 = vsel %vm742, %v614, 0
  %v1905 = vsel %vm742, %v615, 0
  %v1908 = vsel %vm742, %v616, 0
  %v1911 = vsel %vm742, %v617, 0
  %v1914 = vsel %vm742, %v618, 0
  %v1917 = vsel %vm742, %v619, 0
  %v1920 = vsel %vm742, %v620, 0
  %v1923 = vsel %vm742, %v621, 0
  %v1926 = vsel %vm742, %v622, 0
  %v1929 = vsel %vm742, %v623, 0
  %v1932 = vsel %vm742, %v624, 0
  %v1935 = vsel %vm742, %v625, 0
  %v1938 = vsel %vm742, %v626, 0
  %v1941 = vsel %vm742, %v627, 0
  %v1944 = vsel %vm742, %v628, 0
  %v1947 = vsel %vm742, %v629, 0
  %v1950 = vsel %vm742, %v630, 0
  %v1953 = vsel %vm742, %v631, 0
  %v1956 = vsel %vm742, %v632, 0
  %v1959 = vsel %vm742, %v633, 0
  %v1962 = vsel %vm742, %v634, 0
  %v1965 = vsel %vm742, %v635, 0
  %v1968 = vsel %vm742, %v636, 0
  %v1971 = vsel %vm742, %v637, 0
  %v1974 = vsel %vm742, %v638, 0
  %v1977 = vsel %vm742, %v639, 0
  %v1980 = vsel %vm742, %v640, 0
  %v1983 = vsel %vm742, %v641, 0
  %v1986 = vsel %vm742, %v642, 0
  %v1989 = vsel %vm742, %v643, 0
  %v1992 = vsel %vm742, %v644, 0
  %v1995 = vsel %vm742, %v645, 0
  %v1998 = vsel %vm742, %v646, 0
  %v2001 = vsel %vm742, %v647, 0
  %v2004 = vsel %vm742, %v648, 0
  %v2007 = vsel %vm742, %v649, 0
  %v2010 = vsel %vm742, %v650, 0
  %v2013 = vsel %vm742, %v651, 0
  %v2016 = vsel %vm742, %v652, 0
  %v2019 = vsel %vm742, %v653, 0
  %v2022 = vsel %vm742, %v654, 0
  %v2025 = vsel %vm742, %v655, 0
  %v2028 = vsel %vm742, %v656, 0
  %v2031 = vsel %vm742, %v657, 0
  %v2034 = vsel %vm742, %v658, 0
  %v2037 = vsel %vm742, %v659, 0
  %v2040 = vsel %vm742, %v660, 0
  %v2043 = vsel %vm742, %v661, 0
  %v2046 = vsel %vm742, %v662, 0
  %v2049 = vsel %vm742, %v663, 0
  %v2052 = vsel %vm742, %v664, 0
  %v2055 = vsel %vm742, %v665, 0
  %v2058 = vsel %vm742, %v666, 0
  %v2061 = vsel %vm742, %v667, 0
  %v2064 = vsel %vm742, %v668, 0
  %v2067 = vsel %vm742, %v669, 0
  %v2070 = vsel %vm742, %v670, 0
  %v2073 = vsel %vm742, %v671, 0
  %v2076 = vsel %vm742, %v672, 0
  %v2079 = vsel %vm742, %v673, 0
  %v2082 = vsel %vm742, %v674, 0
  %v2085 = vsel %vm742, %v675, 0
  %v2088 = vsel %vm742, %v676, 0
  %v2091 = vsel %vm742, %v677, 0
  %v2094 = vsel %vm742, %v678, 0
  %v2097 = vsel %vm742, %v679, 0
  %v2100 = vsel %vm742, %v680, 0
  %v2103 = vsel %vm742, %v681, 0
  %v2106 = vsel %vm742, %v682, 0
  %v2109 = vsel %vm742, %v683, 0
  %v2112 = vsel %vm742, %v684, 0
  %v2115 = vsel %vm742, %v685, 0
  %v2118 = vsel %vm742, %v686, 0
  %v2121 = vsel %vm742, %v687, 0
  %v2124 = vsel %vm742, %v688, 0
  %v2127 = vsel %vm742, %v689, 0
  %v2130 = vsel %vm742, %v690, 0
  %v2133 = vsel %vm742, %v691, 0
  %v2136 = vsel %vm742, %v692, 0
  %v2139 = vsel %vm742, %v693, 0
  %v2142 = vsel %vm742, %v694, 0
  %v2145 = vsel %vm742, %v695, 0
  %v2148 = vsel %vm742, %v696, 0
  %v2151 = vsel %vm742, %v697, 0
  %v2154 = vsel %vm742, %v698, 0
  %v2157 = vsel %vm742, %v699, 0
  %v2160 = vsel %vm742, %v700, 0
  %v2163 = vsel %vm742, %v701, 0
  %v2166 = vsel %vm742, %v702, 0
  %v2169 = vsel %vm742, %v703, 0
  %v2172 = vsel %vm742, %v704, 0
  %v2175 = vsel %vm742, %v705, 0
  %v2178 = vsel %vm742, %v706, 0
  %v2181 = vsel %vm742, %v707, 0
  %v2184 = vsel %vm742, %v708, 0
  %v2187 = vsel %vm742, %v709, 0
  %v2190 = vsel %vm742, %v710, 0
  %v2193 = vsel %vm742, %v711, 0
  %v2196 = vsel %vm742, %v712, 0
  %v2199 = vsel %vm742, %v713, 0
  %v2202 = vsel %vm742, %v714, 0
  %v2205 = vsel %vm742, %v715, 0
  %v2208 = vsel %vm742, %v716, 0
  %v2211 = vsel %vm742, %v717, 0
  %v2214 = vsel %vm742, %v718, 0
  %v2217 = vsel %vm742, %v719, 0
  %v2220 = vsel %vm742, %v720, 0
  %v2223 = vsel %vm742, %v721, 0
  %v2226 = vsel %vm742, %v722, 0
  %v2229 = vsel %vm742, %v723, 0
  %v2232 = vsel %vm742, %v724, 0
  %v2235 = vsel %vm742, %v725, 0
  %v2238 = vsel %vm742, %v726, 0
  %v2241 = vsel %vm742, %v727, 0
  %v2244 = vsel %vm742, %v728, 0
  %v2247 = vsel %vm742, %v729, 0
  %v2250 = vsel %vm742, %v730, 0
  %v2253 = vsel %vm742, %v731, 0
  %v2256 = vsel %vm742, %v732, 0
  %v2259 = vsel %vm742, %v733, 0
  %v2262 = vsel %vm742, %v734, 0
  %v2265 = vsel %vm742, %v735, 0
  %v2268 = vsel %vm742, %v736, 0
  %v2271 = vsel %vm742, %v737, 0
  %v2274 = vsel %vm742, %v738, 0
  %v2277 = vsel %vm742, %v739, 0
  %2279 = vmatprep.subr.mxu0 0.0
  %2280 = vmatpush1.msra.mxu0 %v740
  %2281 = vmatprep.subr.mxu0 0.0
  %2282 = vmatpush1.msra.mxu0 %v741
  %2283 = vmatprep.subr.mxu0 0.0
  %2284 = vmatpush1.msra.mxu0 0.0
  %2285 = vmatprep.subr.mxu0 0.0
  %2286 = vmatpush1.msra.mxu0 0.0
  %2287 = vmatprep.subr.mxu0 0.0
  %2288 = vmatpush1.msra.mxu0 0.0
  %2289 = vmatprep.subr.mxu0 0.0
  %2290 = vmatpush1.msra.mxu0 0.0
  %2291 = vmatprep.subr.mxu0 0.0
  %2292 = vmatpush1.msra.mxu0 0.0
  %2293 = vmatprep.subr.mxu0 0.0
  %2294 = vmatpush1.msra.mxu0 0.0
  %2295 = vmatprep.subr.mxu0 0.0
  %2296 = vmatpush1.msra.mxu0 0.0
  %2297 = vmatprep.subr.mxu0 0.0
  %2298 = vmatpush1.msra.mxu0 0.0
  %2299 = vmatprep.subr.mxu0 0.0
  %2300 = vmatpush1.msra.mxu0 0.0
  %2301 = vmatprep.subr.mxu0 0.0
  %2302 = vmatpush1.msra.mxu0 0.0
  %2303 = vmatprep.subr.mxu0 0.0
  %2304 = vmatpush1.msra.mxu0 0.0
  %2305 = vmatprep.subr.mxu0 0.0
  %2306 = vmatpush1.msra.mxu0 0.0
  %2307 = vmatprep.subr.mxu0 0.0
  %2308 = vmatpush1.msra.mxu0 0.0
  %2309 = vmatprep.subr.mxu0 0.0
  %2310 = vmatpush1.msra.mxu0 0.0
  %2311 = vmatprep.subr.mxu0 0.0
  %2312 = vmatpush1.msra.mxu0 0.0
  %2313 = vmatprep.subr.mxu0 0.0
  %2314 = vmatpush1.msra.mxu0 0.0
  %2315 = vmatprep.subr.mxu0 0.0
  %2316 = vmatpush1.msra.mxu0 0.0
  %2317 = vmatprep.subr.mxu0 0.0
  %2318 = vmatpush1.msra.mxu0 0.0
  %2319 = vmatprep.subr.mxu0 0.0
  %2320 = vmatpush1.msra.mxu0 0.0
  %2321 = vmatprep.subr.mxu0 0.0
  %2322 = vmatpush1.msra.mxu0 0.0
  %2323 = vmatprep.subr.mxu0 0.0
  %2324 = vmatpush1.msra.mxu0 0.0
  %2325 = vmatprep.subr.mxu0 0.0
  %2326 = vmatpush1.msra.mxu0 0.0
  %2327 = vmatprep.subr.mxu0 0.0
  %2328 = vmatpush1.msra.mxu0 0.0
  %2329 = vmatprep.subr.mxu0 0.0
  %2330 = vmatpush1.msra.mxu0 0.0
  %2331 = vmatprep.subr.mxu0 0.0
  %2332 = vmatpush1.msra.mxu0 0.0
  %2333 = vmatprep.subr.mxu0 0.0
  %2334 = vmatpush1.msra.mxu0 0.0
  %2335 = vmatprep.subr.mxu0 0.0
  %2336 = vmatpush1.msra.mxu0 0.0
  %2337 = vmatprep.subr.mxu0 0.0
  %2338 = vmatpush1.msra.mxu0 0.0
  %2339 = vmatprep.subr.mxu0 0.0
  %2340 = vmatpush1.msra.mxu0 0.0
  %2341 = vmatprep.subr.mxu0 0.0
  %2342 = vmatpush1.msra.mxu0 0.0
  %2343 = vmatprep.mubr.f32.mxu0 0.0
  %2344 = vmatmul.mubr.f32.gmra.mrb[0].mxu0 %v744
  %v2345 = vpop.f32.mrb[0].mxu0
  %v2346 = vadd.f32 0.0, %v2345
  %v2347 = vpop.f32.mrb[0].mxu0
  %2348 = vmatprep.mubr.f32.mxu0 0.0
  %2349 = vmatmul.mubr.f32.gmra.mrb[0].mxu0 %v747
  %v2350 = vpop.f32.mrb[0].mxu0
  %v2351 = vadd.f32 0.0, %v2350
  %v2352 = vpop.f32.mrb[0].mxu0
  %2353 = vmatprep.mubr.f32.mxu0 0.0
  %2354 = vmatmul.mubr.f32.gmra.mrb[0].mxu0 %v750
  %v2355 = vpop.f32.mrb[0].mxu0
  %v2356 = vadd.f32 0.0, %v2355
  %v2357 = vpop.f32.mrb[0].mxu0
  %2358 = vmatprep.mubr.f32.mxu0 0.0
  %2359 = vmatmul.mubr.f32.gmra.mrb[0].mxu0 %v753
  %v2360 = vpop.f32.mrb[0].mxu0
  %v2361 = vadd.f32 0.0, %v2360
  %v2362 = vpop.f32.mrb[0].mxu0
  %2363 = vmatprep.mubr.f32.mxu0 0.0
  %2364 = vmatmul.mubr.f32.gmra.mrb[0].mxu0 %v756
  %v2365 = vpop.f32.mrb[0].mxu0
  %v2366 = vadd.f32 0.0, %v2365
  %v2367 = vpop.f32.mrb[0].mxu0
  %2368 = vmatprep.mubr.f32.mxu0 0.0
  %2369 = vmatmul.mubr.f32.gmra.mrb[0].mxu0 %v759
  %v2370 = vpop.f32.mrb[0].mxu0
  %v2371 = vadd.f32 0.0, %v2370
  %v2372 = vpop.f32.mrb[0].mxu0
  %2373 = vmatprep.mubr.f32.mxu0 0.0
  %2374 = vmatmul.mubr.f32.gmra.mrb[0].mxu0 %v762
  %v2375 = vpop.f32.mrb[0].mxu0
  %v2376 = vadd.f32 0.0, %v2375
  %v2377 = vpop.f32.mrb[0].mxu0
  %2378 = vmatprep.mubr.f32.mxu0 0.0
  %2379 = vmatmul.mubr.f32.gmra.mrb[0].mxu0 %v765
  %v2380 = vpop.f32.mrb[0].mxu0
  %v2381 = vadd.f32 0.0, %v2380
  %v2382 = vpop.f32.mrb[0].mxu0
  %2383 = vmatprep.mubr.f32.mxu0 0.0
  %2384 = vmatmul.mubr.f32.gmra.mrb[0].mxu0 %v768
  %v2385 = vpop.f32.mrb[0].mxu0
  %v2386 = vadd.f32 0.0, %v2385
  %v2387 = vpop.f32.mrb[0].mxu0
  %2388 = vmatprep.mubr.f32.mxu0 0.0
  %2389 = vmatmul.mubr.f32.gmra.mrb[0].mxu0 %v771
  %v2390 = vpop.f32.mrb[0].mxu0
  %v2391 = vadd.f32 0.0, %v2390
  %v2392 = vpop.f32.mrb[0].mxu0
  %2393 = vmatprep.mubr.f32.mxu0 0.0
  %2394 = vmatmul.mubr.f32.gmra.mrb[0].mxu0 %v774
  %v2395 = vpop.f32.mrb[0].mxu0
  %v2396 = vadd.f32 0.0, %v2395
  %v2397 = vpop.f32.mrb[0].mxu0
  %2398 = vmatprep.mubr.f32.mxu0 0.0
  %2399 = vmatmul.mubr.f32.gmra.mrb[0].mxu0 %v777
  %v2400 = vpop.f32.mrb[0].mxu0
  %v2401 = vadd.f32 0.0, %v2400
  %v2402 = vpop.f32.mrb[0].mxu0
  %2403 = vmatprep.mubr.f32.mxu0 0.0
  %2404 = vmatmul.mubr.f32.gmra.mrb[0].mxu0 %v780
  %v2405 = vpop.f32.mrb[0].mxu0
  %v2406 = vadd.f32 0.0, %v2405
  %v2407 = vpop.f32.mrb[0].mxu0
  %2408 = vmatprep.mubr.f32.mxu0 0.0
  %2409 = vmatmul.mubr.f32.gmra.mrb[0].mxu0 %v783
  %v2410 = vpop.f32.mrb[0].mxu0
  %v2411 = vadd.f32 0.0, %v2410
  %v2412 = vpop.f32.mrb[0].mxu0
  %2413 = vmatprep.mubr.f32.mxu0 0.0
  %2414 = vmatmul.mubr.f32.gmra.mrb[0].mxu0 %v786
  %v2415 = vpop.f32.mrb[0].mxu0
  %v2416 = vadd.f32 0.0, %v2415
  %v2417 = vpop.f32.mrb[0].mxu0
  %2418 = vmatprep.mubr.f32.mxu0 0.0
  %2419 = vmatmul.mubr.f32.gmra.mrb[0].mxu0 %v789
  %v2420 = vpop.f32.mrb[0].mxu0
  %v2421 = vadd.f32 0.0, %v2420
  %v2422 = vpop.f32.mrb[0].mxu0
  %2423 = vmatprep.mubr.f32.mxu0 0.0
  %2424 = vmatmul.mubr.f32.gmra.mrb[0].mxu0 %v792
  %v2425 = vpop.f32.mrb[0].mxu0
  %v2426 = vadd.f32 0.0, %v2425
  %v2427 = vpop.f32.mrb[0].mxu0
  %2428 = vmatprep.mubr.f32.mxu0 0.0
  %2429 = vmatmul.mubr.f32.gmra.mrb[0].mxu0 %v795
  %v2430 = vpop.f32.mrb[0].mxu0
  %v2431 = vadd.f32 0.0, %v2430
  %v2432 = vpop.f32.mrb[0].mxu0
  %2433 = vmatprep.mubr.f32.mxu0 0.0
  %2434 = vmatmul.mubr.f32.gmra.mrb[0].mxu0 %v798
  %v2435 = vpop.f32.mrb[0].mxu0
  %v2436 = vadd.f32 0.0, %v2435
  %v2437 = vpop.f32.mrb[0].mxu0
  %2438 = vmatprep.mubr.f32.mxu0 0.0
  %2439 = vmatmul.mubr.f32.gmra.mrb[0].mxu0 %v801
  %v2440 = vpop.f32.mrb[0].mxu0
  %v2441 = vadd.f32 0.0, %v2440
  %v2442 = vpop.f32.mrb[0].mxu0
  %2443 = vmatprep.mubr.f32.mxu0 0.0
  %2444 = vmatmul.mubr.f32.gmra.mrb[0].mxu0 %v804
  %v2445 = vpop.f32.mrb[0].mxu0
  %v2446 = vadd.f32 0.0, %v2445
  %v2447 = vpop.f32.mrb[0].mxu0
  %2448 = vmatprep.mubr.f32.mxu0 0.0
  %2449 = vmatmul.mubr.f32.gmra.mrb[0].mxu0 %v807
  %v2450 = vpop.f32.mrb[0].mxu0
  %v2451 = vadd.f32 0.0, %v2450
  %v2452 = vpop.f32.mrb[0].mxu0
  %2453 = vmatprep.mubr.f32.mxu0 0.0
  %2454 = vmatmul.mubr.f32.gmra.mrb[0].mxu0 %v810
  %v2455 = vpop.f32.mrb[0].mxu0
  %v2456 = vadd.f32 0.0, %v2455
  %v2457 = vpop.f32.mrb[0].mxu0
  %2458 = vmatprep.mubr.f32.mxu0 0.0
  %2459 = vmatmul.mubr.f32.gmra.mrb[0].mxu0 %v813
  %v2460 = vpop.f32.mrb[0].mxu0
  %v2461 = vadd.f32 0.0, %v2460
  %v2462 = vpop.f32.mrb[0].mxu0
  %2463 = vmatprep.mubr.f32.mxu0 0.0
  %2464 = vmatmul.mubr.f32.gmra.mrb[0].mxu0 %v816
  %v2465 = vpop.f32.mrb[0].mxu0
  %v2466 = vadd.f32 0.0, %v2465
  %v2467 = vpop.f32.mrb[0].mxu0
  %2468 = vmatprep.mubr.f32.mxu0 0.0
  %2469 = vmatmul.mubr.f32.gmra.mrb[0].mxu0 %v819
  %v2470 = vpop.f32.mrb[0].mxu0
  %v2471 = vadd.f32 0.0, %v2470
  %v2472 = vpop.f32.mrb[0].mxu0
  %2473 = vmatprep.mubr.f32.mxu0 0.0
  %2474 = vmatmul.mubr.f32.gmra.mrb[0].mxu0 %v822
  %v2475 = vpop.f32.mrb[0].mxu0
  %v2476 = vadd.f32 0.0, %v2475
  %v2477 = vpop.f32.mrb[0].mxu0
  %2478 = vmatprep.mubr.f32.mxu0 0.0
  %2479 = vmatmul.mubr.f32.gmra.mrb[0].mxu0 %v825
  %v2480 = vpop.f32.mrb[0].mxu0
  %v2481 = vadd.f32 0.0, %v2480
  %v2482 = vpop.f32.mrb[0].mxu0
  %2483 = vmatprep.mubr.f32.mxu0 0.0
  %2484 = vmatmul.mubr.f32.gmra.mrb[0].mxu0 %v828
  %v2485 = vpop.f32.mrb[0].mxu0
  %v2486 = vadd.f32 0.0, %v2485
  %v2487 = vpop.f32.mrb[0].mxu0
  %2488 = vmatprep.mubr.f32.mxu0 0.0
  %2489 = vmatmul.mubr.f32.gmra.mrb[0].mxu0 %v831
  %v2490 = vpop.f32.mrb[0].mxu0
  %v2491 = vadd.f32 0.0, %v2490
  %v2492 = vpop.f32.mrb[0].mxu0
  %2493 = vmatprep.mubr.f32.mxu0 0.0
  %2494 = vmatmul.mubr.f32.gmra.mrb[0].mxu0 %v834
  %v2495 = vpop.f32.mrb[0].mxu0
  %v2496 = vadd.f32 0.0, %v2495
  %v2497 = vpop.f32.mrb[0].mxu0
  %2498 = vmatprep.mubr.f32.mxu0 0.0
  %2499 = vmatmul.mubr.f32.gmra.mrb[0].mxu0 %v837
  %v2500 = vpop.f32.mrb[0].mxu0
  %v2501 = vadd.f32 0.0, %v2500
  %v2502 = vpop.f32.mrb[0].mxu0
  %2503 = vmatprep.mubr.f32.mxu0 0.0
  %2504 = vmatmul.mubr.f32.gmra.mrb[0].mxu0 %v840
  %v2505 = vpop.f32.mrb[0].mxu0
  %v2506 = vadd.f32 0.0, %v2505
  %v2507 = vpop.f32.mrb[0].mxu0
  %2508 = vmatprep.mubr.f32.mxu0 0.0
  %2509 = vmatmul.mubr.f32.gmra.mrb[0].mxu0 %v843
  %v2510 = vpop.f32.mrb[0].mxu0
  %v2511 = vadd.f32 0.0, %v2510
  %v2512 = vpop.f32.mrb[0].mxu0
  %2513 = vmatprep.mubr.f32.mxu0 0.0
  %2514 = vmatmul.mubr.f32.gmra.mrb[0].mxu0 %v846
  %v2515 = vpop.f32.mrb[0].mxu0
  %v2516 = vadd.f32 0.0, %v2515
  %v2517 = vpop.f32.mrb[0].mxu0
  %2518 = vmatprep.mubr.f32.mxu0 0.0
  %2519 = vmatmul.mubr.f32.gmra.mrb[0].mxu0 %v849
  %v2520 = vpop.f32.mrb[0].mxu0
  %v2521 = vadd.f32 0.0, %v2520
  %v2522 = vpop.f32.mrb[0].mxu0
  %2523 = vmatprep.mubr.f32.mxu0 0.0
  %2524 = vmatmul.mubr.f32.gmra.mrb[0].mxu0 %v852
  %v2525 = vpop.f32.mrb[0].mxu0
  %v2526 = vadd.f32 0.0, %v2525
  %v2527 = vpop.f32.mrb[0].mxu0
  %2528 = vmatprep.mubr.f32.mxu0 0.0
  %2529 = vmatmul.mubr.f32.gmra.mrb[0].mxu0 %v855
  %v2530 = vpop.f32.mrb[0].mxu0
  %v2531 = vadd.f32 0.0, %v2530
  %v2532 = vpop.f32.mrb[0].mxu0
  %2533 = vmatprep.mubr.f32.mxu0 0.0
  %2534 = vmatmul.mubr.f32.gmra.mrb[0].mxu0 %v858
  %v2535 = vpop.f32.mrb[0].mxu0
  %v2536 = vadd.f32 0.0, %v2535
  %v2537 = vpop.f32.mrb[0].mxu0
  %2538 = vmatprep.mubr.f32.mxu0 0.0
  %2539 = vmatmul.mubr.f32.gmra.mrb[0].mxu0 %v861
  %v2540 = vpop.f32.mrb[0].mxu0
  %v2541 = vadd.f32 0.0, %v2540
  %v2542 = vpop.f32.mrb[0].mxu0
  %2543 = vmatprep.mubr.f32.mxu0 0.0
  %2544 = vmatmul.mubr.f32.gmra.mrb[0].mxu0 %v864
  %v2545 = vpop.f32.mrb[0].mxu0
  %v2546 = vadd.f32 0.0, %v2545
  %v2547 = vpop.f32.mrb[0].mxu0
  %2548 = vmatprep.mubr.f32.mxu0 0.0
  %2549 = vmatmul.mubr.f32.gmra.mrb[0].mxu0 %v867
  %v2550 = vpop.f32.mrb[0].mxu0
  %v2551 = vadd.f32 0.0, %v2550
  %v2552 = vpop.f32.mrb[0].mxu0
  %2553 = vmatprep.mubr.f32.mxu0 0.0
  %2554 = vmatmul.mubr.f32.gmra.mrb[0].mxu0 %v870
  %v2555 = vpop.f32.mrb[0].mxu0
  %v2556 = vadd.f32 0.0, %v2555
  %v2557 = vpop.f32.mrb[0].mxu0
  %2558 = vmatprep.mubr.f32.mxu0 0.0
  %2559 = vmatmul.mubr.f32.gmra.mrb[0].mxu0 %v873
  %v2560 = vpop.f32.mrb[0].mxu0
  %v2561 = vadd.f32 0.0, %v2560
  %v2562 = vpop.f32.mrb[0].mxu0
  %2563 = vmatprep.mubr.f32.mxu0 0.0
  %2564 = vmatmul.mubr.f32.gmra.mrb[0].mxu0 %v876
  %v2565 = vpop.f32.mrb[0].mxu0
  %v2566 = vadd.f32 0.0, %v2565
  %v2567 = vpop.f32.mrb[0].mxu0
  %2568 = vmatprep.mubr.f32.mxu0 0.0
  %2569 = vmatmul.mubr.f32.gmra.mrb[0].mxu0 %v879
  %v2570 = vpop.f32.mrb[0].mxu0
  %v2571 = vadd.f32 0.0, %v2570
  %v2572 = vpop.f32.mrb[0].mxu0
  %2573 = vmatprep.mubr.f32.mxu0 0.0
  %2574 = vmatmul.mubr.f32.gmra.mrb[0].mxu0 %v882
  %v2575 = vpop.f32.mrb[0].mxu0
  %v2576 = vadd.f32 0.0, %v2575
  %v2577 = vpop.f32.mrb[0].mxu0
  %2578 = vmatprep.mubr.f32.mxu0 0.0
  %2579 = vmatmul.mubr.f32.gmra.mrb[0].mxu0 %v885
  %v2580 = vpop.f32.mrb[0].mxu0
  %v2581 = vadd.f32 0.0, %v2580
  %v2582 = vpop.f32.mrb[0].mxu0
  %2583 = vmatprep.mubr.f32.mxu0 0.0
  %2584 = vmatmul.mubr.f32.gmra.mrb[0].mxu0 %v888
  %v2585 = vpop.f32.mrb[0].mxu0
  %v2586 = vadd.f32 0.0, %v2585
  %v2587 = vpop.f32.mrb[0].mxu0
  %2588 = vmatprep.mubr.f32.mxu0 0.0
  %2589 = vmatmul.mubr.f32.gmra.mrb[0].mxu0 %v891
  %v2590 = vpop.f32.mrb[0].mxu0
  %v2591 = vadd.f32 0.0, %v2590
  %v2592 = vpop.f32.mrb[0].mxu0
  %2593 = vmatprep.mubr.f32.mxu0 0.0
  %2594 = vmatmul.mubr.f32.gmra.mrb[0].mxu0 %v894
  %v2595 = vpop.f32.mrb[0].mxu0
  %v2596 = vadd.f32 0.0, %v2595
  %v2597 = vpop.f32.mrb[0].mxu0
  %2598 = vmatprep.mubr.f32.mxu0 0.0
  %2599 = vmatmul.mubr.f32.gmra.mrb[0].mxu0 %v897
  %v2600 = vpop.f32.mrb[0].mxu0
  %v2601 = vadd.f32 0.0, %v2600
  %v2602 = vpop.f32.mrb[0].mxu0
  %2603 = vmatprep.mubr.f32.mxu0 0.0
  %2604 = vmatmul.mubr.f32.gmra.mrb[0].mxu0 %v900
  %v2605 = vpop.f32.mrb[0].mxu0
  %v2606 = vadd.f32 0.0, %v2605
  %v2607 = vpop.f32.mrb[0].mxu0
  %2608 = vmatprep.mubr.f32.mxu0 0.0
  %2609 = vmatmul.mubr.f32.gmra.mrb[0].mxu0 %v903
  %v2610 = vpop.f32.mrb[0].mxu0
  %v2611 = vadd.f32 0.0, %v2610
  %v2612 = vpop.f32.mrb[0].mxu0
  %2613 = vmatprep.mubr.f32.mxu0 0.0
  %2614 = vmatmul.mubr.f32.gmra.mrb[0].mxu0 %v906
  %v2615 = vpop.f32.mrb[0].mxu0
  %v2616 = vadd.f32 0.0, %v2615
  %v2617 = vpop.f32.mrb[0].mxu0
  %2618 = vmatprep.mubr.f32.mxu0 0.0
  %2619 = vmatmul.mubr.f32.gmra.mrb[0].mxu0 %v909
  %v2620 = vpop.f32.mrb[0].mxu0
  %v2621 = vadd.f32 0.0, %v2620
  %v2622 = vpop.f32.mrb[0].mxu0
  %2623 = vmatprep.mubr.f32.mxu0 0.0
  %2624 = vmatmul.mubr.f32.gmra.mrb[0].mxu0 %v912
  %v2625 = vpop.f32.mrb[0].mxu0
  %v2626 = vadd.f32 0.0, %v2625
  %v2627 = vpop.f32.mrb[0].mxu0
  %2628 = vmatprep.mubr.f32.mxu0 0.0
  %2629 = vmatmul.mubr.f32.gmra.mrb[0].mxu0 %v915
  %v2630 = vpop.f32.mrb[0].mxu0
  %v2631 = vadd.f32 0.0, %v2630
  %v2632 = vpop.f32.mrb[0].mxu0
  %2633 = vmatprep.mubr.f32.mxu0 0.0
  %2634 = vmatmul.mubr.f32.gmra.mrb[0].mxu0 %v918
  %v2635 = vpop.f32.mrb[0].mxu0
  %v2636 = vadd.f32 0.0, %v2635
  %v2637 = vpop.f32.mrb[0].mxu0
  %2638 = vmatprep.mubr.f32.mxu0 0.0
  %2639 = vmatmul.mubr.f32.gmra.mrb[0].mxu0 %v921
  %v2640 = vpop.f32.mrb[0].mxu0
  %v2641 = vadd.f32 0.0, %v2640
  %v2642 = vpop.f32.mrb[0].mxu0
  %2643 = vmatprep.mubr.f32.mxu0 0.0
  %2644 = vmatmul.mubr.f32.gmra.mrb[0].mxu0 %v924
  %v2645 = vpop.f32.mrb[0].mxu0
  %v2646 = vadd.f32 0.0, %v2645
  %v2647 = vpop.f32.mrb[0].mxu0
  %2648 = vmatprep.mubr.f32.mxu0 0.0
  %2649 = vmatmul.mubr.f32.gmra.mrb[0].mxu0 %v927
  %v2650 = vpop.f32.mrb[0].mxu0
  %v2651 = vadd.f32 0.0, %v2650
  %v2652 = vpop.f32.mrb[0].mxu0
  %2653 = vmatprep.mubr.f32.mxu0 0.0
  %2654 = vmatmul.mubr.f32.gmra.mrb[0].mxu0 %v930
  %v2655 = vpop.f32.mrb[0].mxu0
  %v2656 = vadd.f32 0.0, %v2655
  %v2657 = vpop.f32.mrb[0].mxu0
  %2658 = vmatprep.mubr.f32.mxu0 0.0
  %2659 = vmatmul.mubr.f32.gmra.mrb[0].mxu0 %v933
  %v2660 = vpop.f32.mrb[0].mxu0
  %v2661 = vadd.f32 0.0, %v2660
  %v2662 = vpop.f32.mrb[0].mxu0
  %2663 = vmatprep.mubr.f32.mxu0 0.0
  %2664 = vmatmul.mubr.f32.gmra.mrb[0].mxu0 %v936
  %v2665 = vpop.f32.mrb[0].mxu0
  %v2666 = vadd.f32 0.0, %v2665
  %v2667 = vpop.f32.mrb[0].mxu0
  %2668 = vmatprep.mubr.f32.mxu0 0.0
  %2669 = vmatmul.mubr.f32.gmra.mrb[0].mxu0 %v939
  %v2670 = vpop.f32.mrb[0].mxu0
  %v2671 = vadd.f32 0.0, %v2670
  %v2672 = vpop.f32.mrb[0].mxu0
  %2673 = vmatprep.mubr.f32.mxu0 0.0
  %2674 = vmatmul.mubr.f32.gmra.mrb[0].mxu0 %v942
  %v2675 = vpop.f32.mrb[0].mxu0
  %v2676 = vadd.f32 0.0, %v2675
  %v2677 = vpop.f32.mrb[0].mxu0
  %2678 = vmatprep.mubr.f32.mxu0 0.0
  %2679 = vmatmul.mubr.f32.gmra.mrb[0].mxu0 %v945
  %v2680 = vpop.f32.mrb[0].mxu0
  %v2681 = vadd.f32 0.0, %v2680
  %v2682 = vpop.f32.mrb[0].mxu0
  %2683 = vmatprep.mubr.f32.mxu0 0.0
  %2684 = vmatmul.mubr.f32.gmra.mrb[0].mxu0 %v948
  %v2685 = vpop.f32.mrb[0].mxu0
  %v2686 = vadd.f32 0.0, %v2685
  %v2687 = vpop.f32.mrb[0].mxu0
  %2688 = vmatprep.mubr.f32.mxu0 0.0
  %2689 = vmatmul.mubr.f32.gmra.mrb[0].mxu0 %v951
  %v2690 = vpop.f32.mrb[0].mxu0
  %v2691 = vadd.f32 0.0, %v2690
  %v2692 = vpop.f32.mrb[0].mxu0
  %2693 = vmatprep.mubr.f32.mxu0 0.0
  %2694 = vmatmul.mubr.f32.gmra.mrb[0].mxu0 %v954
  %v2695 = vpop.f32.mrb[0].mxu0
  %v2696 = vadd.f32 0.0, %v2695
  %v2697 = vpop.f32.mrb[0].mxu0
  %2698 = vmatprep.mubr.f32.mxu0 0.0
  %2699 = vmatmul.mubr.f32.gmra.mrb[0].mxu0 %v957
  %v2700 = vpop.f32.mrb[0].mxu0
  %v2701 = vadd.f32 0.0, %v2700
  %v2702 = vpop.f32.mrb[0].mxu0
  %2703 = vmatprep.mubr.f32.mxu0 0.0
  %2704 = vmatmul.mubr.f32.gmra.mrb[0].mxu0 %v960
  %v2705 = vpop.f32.mrb[0].mxu0
  %v2706 = vadd.f32 0.0, %v2705
  %v2707 = vpop.f32.mrb[0].mxu0
  %2708 = vmatprep.mubr.f32.mxu0 0.0
  %2709 = vmatmul.mubr.f32.gmra.mrb[0].mxu0 %v963
  %v2710 = vpop.f32.mrb[0].mxu0
  %v2711 = vadd.f32 0.0, %v2710
  %v2712 = vpop.f32.mrb[0].mxu0
  %2713 = vmatprep.mubr.f32.mxu0 0.0
  %2714 = vmatmul.mubr.f32.gmra.mrb[0].mxu0 %v966
  %v2715 = vpop.f32.mrb[0].mxu0
  %v2716 = vadd.f32 0.0, %v2715
  %v2717 = vpop.f32.mrb[0].mxu0
  %2718 = vmatprep.mubr.f32.mxu0 0.0
  %2719 = vmatmul.mubr.f32.gmra.mrb[0].mxu0 %v969
  %v2720 = vpop.f32.mrb[0].mxu0
  %v2721 = vadd.f32 0.0, %v2720
  %v2722 = vpop.f32.mrb[0].mxu0
  %2723 = vmatprep.mubr.f32.mxu0 0.0
  %2724 = vmatmul.mubr.f32.gmra.mrb[0].mxu0 %v972
  %v2725 = vpop.f32.mrb[0].mxu0
  %v2726 = vadd.f32 0.0, %v2725
  %v2727 = vpop.f32.mrb[0].mxu0
  %2728 = vmatprep.mubr.f32.mxu0 0.0
  %2729 = vmatmul.mubr.f32.gmra.mrb[0].mxu0 %v975
  %v2730 = vpop.f32.mrb[0].mxu0
  %v2731 = vadd.f32 0.0, %v2730
  %v2732 = vpop.f32.mrb[0].mxu0
  %2733 = vmatprep.mubr.f32.mxu0 0.0
  %2734 = vmatmul.mubr.f32.gmra.mrb[0].mxu0 %v978
  %v2735 = vpop.f32.mrb[0].mxu0
  %v2736 = vadd.f32 0.0, %v2735
  %v2737 = vpop.f32.mrb[0].mxu0
  %2738 = vmatprep.mubr.f32.mxu0 0.0
  %2739 = vmatmul.mubr.f32.gmra.mrb[0].mxu0 %v981
  %v2740 = vpop.f32.mrb[0].mxu0
  %v2741 = vadd.f32 0.0, %v2740
  %v2742 = vpop.f32.mrb[0].mxu0
  %2743 = vmatprep.mubr.f32.mxu0 0.0
  %2744 = vmatmul.mubr.f32.gmra.mrb[0].mxu0 %v984
  %v2745 = vpop.f32.mrb[0].mxu0
  %v2746 = vadd.f32 0.0, %v2745
  %v2747 = vpop.f32.mrb[0].mxu0
  %2748 = vmatprep.mubr.f32.mxu0 0.0
  %2749 = vmatmul.mubr.f32.gmra.mrb[0].mxu0 %v987
  %v2750 = vpop.f32.mrb[0].mxu0
  %v2751 = vadd.f32 0.0, %v2750
  %v2752 = vpop.f32.mrb[0].mxu0
  %2753 = vmatprep.mubr.f32.mxu0 0.0
  %2754 = vmatmul.mubr.f32.gmra.mrb[0].mxu0 %v990
  %v2755 = vpop.f32.mrb[0].mxu0
  %v2756 = vadd.f32 0.0, %v2755
  %v2757 = vpop.f32.mrb[0].mxu0
  %2758 = vmatprep.mubr.f32.mxu0 0.0
  %2759 = vmatmul.mubr.f32.gmra.mrb[0].mxu0 %v993
  %v2760 = vpop.f32.mrb[0].mxu0
  %v2761 = vadd.f32 0.0, %v2760
  %v2762 = vpop.f32.mrb[0].mxu0
  %2763 = vmatprep.mubr.f32.mxu0 0.0
  %2764 = vmatmul.mubr.f32.gmra.mrb[0].mxu0 %v996
  %v2765 = vpop.f32.mrb[0].mxu0
  %v2766 = vadd.f32 0.0, %v2765
  %v2767 = vpop.f32.mrb[0].mxu0
  %2768 = vmatprep.mubr.f32.mxu0 0.0
  %2769 = vmatmul.mubr.f32.gmra.mrb[0].mxu0 %v999
  %v2770 = vpop.f32.mrb[0].mxu0
  %v2771 = vadd.f32 0.0, %v2770
  %v2772 = vpop.f32.mrb[0].mxu0
  %2773 = vmatprep.mubr.f32.mxu0 0.0
  %2774 = vmatmul.mubr.f32.gmra.mrb[0].mxu0 %v1002
  %v2775 = vpop.f32.mrb[0].mxu0
  %v2776 = vadd.f32 0.0, %v2775
  %v2777 = vpop.f32.mrb[0].mxu0
  %2778 = vmatprep.mubr.f32.mxu0 0.0
  %2779 = vmatmul.mubr.f32.gmra.mrb[0].mxu0 %v1005
  %v2780 = vpop.f32.mrb[0].mxu0
  %v2781 = vadd.f32 0.0, %v2780
  %v2782 = vpop.f32.mrb[0].mxu0
  %2783 = vmatprep.mubr.f32.mxu0 0.0
  %2784 = vmatmul.mubr.f32.gmra.mrb[0].mxu0 %v1008
  %v2785 = vpop.f32.mrb[0].mxu0
  %v2786 = vadd.f32 0.0, %v2785
  %v2787 = vpop.f32.mrb[0].mxu0
  %2788 = vmatprep.mubr.f32.mxu0 0.0
  %2789 = vmatmul.mubr.f32.gmra.mrb[0].mxu0 %v1011
  %v2790 = vpop.f32.mrb[0].mxu0
  %v2791 = vadd.f32 0.0, %v2790
  %v2792 = vpop.f32.mrb[0].mxu0
  %2793 = vmatprep.mubr.f32.mxu0 0.0
  %2794 = vmatmul.mubr.f32.gmra.mrb[0].mxu0 %v1014
  %v2795 = vpop.f32.mrb[0].mxu0
  %v2796 = vadd.f32 0.0, %v2795
  %v2797 = vpop.f32.mrb[0].mxu0
  %2798 = vmatprep.mubr.f32.mxu0 0.0
  %2799 = vmatmul.mubr.f32.gmra.mrb[0].mxu0 %v1017
  %v2800 = vpop.f32.mrb[0].mxu0
  %v2801 = vadd.f32 0.0, %v2800
  %v2802 = vpop.f32.mrb[0].mxu0
  %2803 = vmatprep.mubr.f32.mxu0 0.0
  %2804 = vmatmul.mubr.f32.gmra.mrb[0].mxu0 %v1020
  %v2805 = vpop.f32.mrb[0].mxu0
  %v2806 = vadd.f32 0.0, %v2805
  %v2807 = vpop.f32.mrb[0].mxu0
  %2808 = vmatprep.mubr.f32.mxu0 0.0
  %2809 = vmatmul.mubr.f32.gmra.mrb[0].mxu0 %v1023
  %v2810 = vpop.f32.mrb[0].mxu0
  %v2811 = vadd.f32 0.0, %v2810
  %v2812 = vpop.f32.mrb[0].mxu0
  %2813 = vmatprep.mubr.f32.mxu0 0.0
  %2814 = vmatmul.mubr.f32.gmra.mrb[0].mxu0 %v1026
  %v2815 = vpop.f32.mrb[0].mxu0
  %v2816 = vadd.f32 0.0, %v2815
  %v2817 = vpop.f32.mrb[0].mxu0
  %2818 = vmatprep.mubr.f32.mxu0 0.0
  %2819 = vmatmul.mubr.f32.gmra.mrb[0].mxu0 %v1029
  %v2820 = vpop.f32.mrb[0].mxu0
  %v2821 = vadd.f32 0.0, %v2820
  %v2822 = vpop.f32.mrb[0].mxu0
  %2823 = vmatprep.mubr.f32.mxu0 0.0
  %2824 = vmatmul.mubr.f32.gmra.mrb[0].mxu0 %v1032
  %v2825 = vpop.f32.mrb[0].mxu0
  %v2826 = vadd.f32 0.0, %v2825
  %v2827 = vpop.f32.mrb[0].mxu0
  %2828 = vmatprep.mubr.f32.mxu0 0.0
  %2829 = vmatmul.mubr.f32.gmra.mrb[0].mxu0 %v1035
  %v2830 = vpop.f32.mrb[0].mxu0
  %v2831 = vadd.f32 0.0, %v2830
  %v2832 = vpop.f32.mrb[0].mxu0
  %2833 = vmatprep.mubr.f32.mxu0 0.0
  %2834 = vmatmul.mubr.f32.gmra.mrb[0].mxu0 %v1038
  %v2835 = vpop.f32.mrb[0].mxu0
  %v2836 = vadd.f32 0.0, %v2835
  %v2837 = vpop.f32.mrb[0].mxu0
  %2838 = vmatprep.mubr.f32.mxu0 0.0
  %2839 = vmatmul.mubr.f32.gmra.mrb[0].mxu0 %v1041
  %v2840 = vpop.f32.mrb[0].mxu0
  %v2841 = vadd.f32 0.0, %v2840
  %v2842 = vpop.f32.mrb[0].mxu0
  %2843 = vmatprep.mubr.f32.mxu0 0.0
  %2844 = vmatmul.mubr.f32.gmra.mrb[0].mxu0 %v1044
  %v2845 = vpop.f32.mrb[0].mxu0
  %v2846 = vadd.f32 0.0, %v2845
  %v2847 = vpop.f32.mrb[0].mxu0
  %2848 = vmatprep.mubr.f32.mxu0 0.0
  %2849 = vmatmul.mubr.f32.gmra.mrb[0].mxu0 %v1047
  %v2850 = vpop.f32.mrb[0].mxu0
  %v2851 = vadd.f32 0.0, %v2850
  %v2852 = vpop.f32.mrb[0].mxu0
  %2853 = vmatprep.mubr.f32.mxu0 0.0
  %2854 = vmatmul.mubr.f32.gmra.mrb[0].mxu0 %v1050
  %v2855 = vpop.f32.mrb[0].mxu0
  %v2856 = vadd.f32 0.0, %v2855
  %v2857 = vpop.f32.mrb[0].mxu0
  %2858 = vmatprep.mubr.f32.mxu0 0.0
  %2859 = vmatmul.mubr.f32.gmra.mrb[0].mxu0 %v1053
  %v2860 = vpop.f32.mrb[0].mxu0
  %v2861 = vadd.f32 0.0, %v2860
  %v2862 = vpop.f32.mrb[0].mxu0
  %2863 = vmatprep.mubr.f32.mxu0 0.0
  %2864 = vmatmul.mubr.f32.gmra.mrb[0].mxu0 %v1056
  %v2865 = vpop.f32.mrb[0].mxu0
  %v2866 = vadd.f32 0.0, %v2865
  %v2867 = vpop.f32.mrb[0].mxu0
  %2868 = vmatprep.mubr.f32.mxu0 0.0
  %2869 = vmatmul.mubr.f32.gmra.mrb[0].mxu0 %v1059
  %v2870 = vpop.f32.mrb[0].mxu0
  %v2871 = vadd.f32 0.0, %v2870
  %v2872 = vpop.f32.mrb[0].mxu0
  %2873 = vmatprep.mubr.f32.mxu0 0.0
  %2874 = vmatmul.mubr.f32.gmra.mrb[0].mxu0 %v1062
  %v2875 = vpop.f32.mrb[0].mxu0
  %v2876 = vadd.f32 0.0, %v2875
  %v2877 = vpop.f32.mrb[0].mxu0
  %2878 = vmatprep.mubr.f32.mxu0 0.0
  %2879 = vmatmul.mubr.f32.gmra.mrb[0].mxu0 %v1065
  %v2880 = vpop.f32.mrb[0].mxu0
  %v2881 = vadd.f32 0.0, %v2880
  %v2882 = vpop.f32.mrb[0].mxu0
  %2883 = vmatprep.mubr.f32.mxu0 0.0
  %2884 = vmatmul.mubr.f32.gmra.mrb[0].mxu0 %v1068
  %v2885 = vpop.f32.mrb[0].mxu0
  %v2886 = vadd.f32 0.0, %v2885
  %v2887 = vpop.f32.mrb[0].mxu0
  %2888 = vmatprep.mubr.f32.mxu0 0.0
  %2889 = vmatmul.mubr.f32.gmra.mrb[0].mxu0 %v1071
  %v2890 = vpop.f32.mrb[0].mxu0
  %v2891 = vadd.f32 0.0, %v2890
  %v2892 = vpop.f32.mrb[0].mxu0
  %2893 = vmatprep.mubr.f32.mxu0 0.0
  %2894 = vmatmul.mubr.f32.gmra.mrb[0].mxu0 %v1074
  %v2895 = vpop.f32.mrb[0].mxu0
  %v2896 = vadd.f32 0.0, %v2895
  %v2897 = vpop.f32.mrb[0].mxu0
  %2898 = vmatprep.mubr.f32.mxu0 0.0
  %2899 = vmatmul.mubr.f32.gmra.mrb[0].mxu0 %v1077
  %v2900 = vpop.f32.mrb[0].mxu0
  %v2901 = vadd.f32 0.0, %v2900
  %v2902 = vpop.f32.mrb[0].mxu0
  %2903 = vmatprep.mubr.f32.mxu0 0.0
  %2904 = vmatmul.mubr.f32.gmra.mrb[0].mxu0 %v1080
  %v2905 = vpop.f32.mrb[0].mxu0
  %v2906 = vadd.f32 0.0, %v2905
  %v2907 = vpop.f32.mrb[0].mxu0
  %2908 = vmatprep.mubr.f32.mxu0 0.0
  %2909 = vmatmul.mubr.f32.gmra.mrb[0].mxu0 %v1083
  %v2910 = vpop.f32.mrb[0].mxu0
  %v2911 = vadd.f32 0.0, %v2910
  %v2912 = vpop.f32.mrb[0].mxu0
  %2913 = vmatprep.mubr.f32.mxu0 0.0
  %2914 = vmatmul.mubr.f32.gmra.mrb[0].mxu0 %v1086
  %v2915 = vpop.f32.mrb[0].mxu0
  %v2916 = vadd.f32 0.0, %v2915
  %v2917 = vpop.f32.mrb[0].mxu0
  %2918 = vmatprep.mubr.f32.mxu0 0.0
  %2919 = vmatmul.mubr.f32.gmra.mrb[0].mxu0 %v1089
  %v2920 = vpop.f32.mrb[0].mxu0
  %v2921 = vadd.f32 0.0, %v2920
  %v2922 = vpop.f32.mrb[0].mxu0
  %2923 = vmatprep.mubr.f32.mxu0 0.0
  %2924 = vmatmul.mubr.f32.gmra.mrb[0].mxu0 %v1092
  %v2925 = vpop.f32.mrb[0].mxu0
  %v2926 = vadd.f32 0.0, %v2925
  %v2927 = vpop.f32.mrb[0].mxu0
  %2928 = vmatprep.mubr.f32.mxu0 0.0
  %2929 = vmatmul.mubr.f32.gmra.mrb[0].mxu0 %v1095
  %v2930 = vpop.f32.mrb[0].mxu0
  %v2931 = vadd.f32 0.0, %v2930
  %v2932 = vpop.f32.mrb[0].mxu0
  %2933 = vmatprep.mubr.f32.mxu0 0.0
  %2934 = vmatmul.mubr.f32.gmra.mrb[0].mxu0 %v1098
  %v2935 = vpop.f32.mrb[0].mxu0
  %v2936 = vadd.f32 0.0, %v2935
  %v2937 = vpop.f32.mrb[0].mxu0
  %2938 = vmatprep.mubr.f32.mxu0 0.0
  %2939 = vmatmul.mubr.f32.gmra.mrb[0].mxu0 %v1101
  %v2940 = vpop.f32.mrb[0].mxu0
  %v2941 = vadd.f32 0.0, %v2940
  %v2942 = vpop.f32.mrb[0].mxu0
  %2943 = vmatprep.mubr.f32.mxu0 0.0
  %2944 = vmatmul.mubr.f32.gmra.mrb[0].mxu0 %v1104
  %v2945 = vpop.f32.mrb[0].mxu0
  %v2946 = vadd.f32 0.0, %v2945
  %v2947 = vpop.f32.mrb[0].mxu0
  %2948 = vmatprep.mubr.f32.mxu0 0.0
  %2949 = vmatmul.mubr.f32.gmra.mrb[0].mxu0 %v1107
  %v2950 = vpop.f32.mrb[0].mxu0
  %v2951 = vadd.f32 0.0, %v2950
  %v2952 = vpop.f32.mrb[0].mxu0
  %2953 = vmatprep.mubr.f32.mxu0 0.0
  %2954 = vmatmul.mubr.f32.gmra.mrb[0].mxu0 %v1110
  %v2955 = vpop.f32.mrb[0].mxu0
  %v2956 = vadd.f32 0.0, %v2955
  %v2957 = vpop.f32.mrb[0].mxu0
  %2958 = vmatprep.mubr.f32.mxu0 0.0
  %2959 = vmatmul.mubr.f32.gmra.mrb[0].mxu0 %v1113
  %v2960 = vpop.f32.mrb[0].mxu0
  %v2961 = vadd.f32 0.0, %v2960
  %v2962 = vpop.f32.mrb[0].mxu0
  %2963 = vmatprep.mubr.f32.mxu0 0.0
  %2964 = vmatmul.mubr.f32.gmra.mrb[0].mxu0 %v1116
  %v2965 = vpop.f32.mrb[0].mxu0
  %v2966 = vadd.f32 0.0, %v2965
  %v2967 = vpop.f32.mrb[0].mxu0
  %2968 = vmatprep.mubr.f32.mxu0 0.0
  %2969 = vmatmul.mubr.f32.gmra.mrb[0].mxu0 %v1119
  %v2970 = vpop.f32.mrb[0].mxu0
  %v2971 = vadd.f32 0.0, %v2970
  %v2972 = vpop.f32.mrb[0].mxu0
  %2973 = vmatprep.mubr.f32.mxu0 0.0
  %2974 = vmatmul.mubr.f32.gmra.mrb[0].mxu0 %v1122
  %v2975 = vpop.f32.mrb[0].mxu0
  %v2976 = vadd.f32 0.0, %v2975
  %v2977 = vpop.f32.mrb[0].mxu0
  %2978 = vmatprep.mubr.f32.mxu0 0.0
  %2979 = vmatmul.mubr.f32.gmra.mrb[0].mxu0 %v1125
  %v2980 = vpop.f32.mrb[0].mxu0
  %v2981 = vadd.f32 0.0, %v2980
  %v2982 = vpop.f32.mrb[0].mxu0
  %2983 = vmatprep.mubr.f32.mxu0 0.0
  %2984 = vmatmul.mubr.f32.gmra.mrb[0].mxu0 %v1128
  %v2985 = vpop.f32.mrb[0].mxu0
  %v2986 = vadd.f32 0.0, %v2985
  %v2987 = vpop.f32.mrb[0].mxu0
  %2988 = vmatprep.mubr.f32.mxu0 0.0
  %2989 = vmatmul.mubr.f32.gmra.mrb[0].mxu0 %v1131
  %v2990 = vpop.f32.mrb[0].mxu0
  %v2991 = vadd.f32 0.0, %v2990
  %v2992 = vpop.f32.mrb[0].mxu0
  %2993 = vmatprep.mubr.f32.mxu0 0.0
  %2994 = vmatmul.mubr.f32.gmra.mrb[0].mxu0 %v1134
  %v2995 = vpop.f32.mrb[0].mxu0
  %v2996 = vadd.f32 0.0, %v2995
  %v2997 = vpop.f32.mrb[0].mxu0
  %2998 = vmatprep.mubr.f32.mxu0 0.0
  %2999 = vmatmul.mubr.f32.gmra.mrb[0].mxu0 %v1137
  %v3000 = vpop.f32.mrb[0].mxu0
  %v3001 = vadd.f32 0.0, %v3000
  %v3002 = vpop.f32.mrb[0].mxu0
  %3003 = vmatprep.mubr.f32.mxu0 0.0
  %3004 = vmatmul.mubr.f32.gmra.mrb[0].mxu0 %v1140
  %v3005 = vpop.f32.mrb[0].mxu0
  %v3006 = vadd.f32 0.0, %v3005
  %v3007 = vpop.f32.mrb[0].mxu0
  %3008 = vmatprep.mubr.f32.mxu0 0.0
  %3009 = vmatmul.mubr.f32.gmra.mrb[0].mxu0 %v1143
  %v3010 = vpop.f32.mrb[0].mxu0
  %v3011 = vadd.f32 0.0, %v3010
  %v3012 = vpop.f32.mrb[0].mxu0
  %3013 = vmatprep.mubr.f32.mxu0 0.0
  %3014 = vmatmul.mubr.f32.gmra.mrb[0].mxu0 %v1146
  %v3015 = vpop.f32.mrb[0].mxu0
  %v3016 = vadd.f32 0.0, %v3015
  %v3017 = vpop.f32.mrb[0].mxu0
  %3018 = vmatprep.mubr.f32.mxu0 0.0
  %3019 = vmatmul.mubr.f32.gmra.mrb[0].mxu0 %v1149
  %v3020 = vpop.f32.mrb[0].mxu0
  %v3021 = vadd.f32 0.0, %v3020
  %v3022 = vpop.f32.mrb[0].mxu0
  %3023 = vmatprep.mubr.f32.mxu0 0.0
  %3024 = vmatmul.mubr.f32.gmra.mrb[0].mxu0 %v1152
  %v3025 = vpop.f32.mrb[0].mxu0
  %v3026 = vadd.f32 0.0, %v3025
  %v3027 = vpop.f32.mrb[0].mxu0
  %3028 = vmatprep.mubr.f32.mxu0 0.0
  %3029 = vmatmul.mubr.f32.gmra.mrb[0].mxu0 %v1155
  %v3030 = vpop.f32.mrb[0].mxu0
  %v3031 = vadd.f32 0.0, %v3030
  %v3032 = vpop.f32.mrb[0].mxu0
  %3033 = vmatprep.mubr.f32.mxu0 0.0
  %3034 = vmatmul.mubr.f32.gmra.mrb[0].mxu0 %v1158
  %v3035 = vpop.f32.mrb[0].mxu0
  %v3036 = vadd.f32 0.0, %v3035
  %v3037 = vpop.f32.mrb[0].mxu0
  %3038 = vmatprep.mubr.f32.mxu0 0.0
  %3039 = vmatmul.mubr.f32.gmra.mrb[0].mxu0 %v1161
  %v3040 = vpop.f32.mrb[0].mxu0
  %v3041 = vadd.f32 0.0, %v3040
  %v3042 = vpop.f32.mrb[0].mxu0
  %3043 = vmatprep.mubr.f32.mxu0 0.0
  %3044 = vmatmul.mubr.f32.gmra.mrb[0].mxu0 %v1164
  %v3045 = vpop.f32.mrb[0].mxu0
  %v3046 = vadd.f32 0.0, %v3045
  %v3047 = vpop.f32.mrb[0].mxu0
  %3048 = vmatprep.mubr.f32.mxu0 0.0
  %3049 = vmatmul.mubr.f32.gmra.mrb[0].mxu0 %v1167
  %v3050 = vpop.f32.mrb[0].mxu0
  %v3051 = vadd.f32 0.0, %v3050
  %v3052 = vpop.f32.mrb[0].mxu0
  %3053 = vmatprep.mubr.f32.mxu0 0.0
  %3054 = vmatmul.mubr.f32.gmra.mrb[0].mxu0 %v1170
  %v3055 = vpop.f32.mrb[0].mxu0
  %v3056 = vadd.f32 0.0, %v3055
  %v3057 = vpop.f32.mrb[0].mxu0
  %3058 = vmatprep.mubr.f32.mxu0 0.0
  %3059 = vmatmul.mubr.f32.gmra.mrb[0].mxu0 %v1173
  %v3060 = vpop.f32.mrb[0].mxu0
  %v3061 = vadd.f32 0.0, %v3060
  %v3062 = vpop.f32.mrb[0].mxu0
  %3063 = vmatprep.mubr.f32.mxu0 0.0
  %3064 = vmatmul.mubr.f32.gmra.mrb[0].mxu0 %v1176
  %v3065 = vpop.f32.mrb[0].mxu0
  %v3066 = vadd.f32 0.0, %v3065
  %v3067 = vpop.f32.mrb[0].mxu0
  %3068 = vmatprep.mubr.f32.mxu0 0.0
  %3069 = vmatmul.mubr.f32.gmra.mrb[0].mxu0 %v1179
  %v3070 = vpop.f32.mrb[0].mxu0
  %v3071 = vadd.f32 0.0, %v3070
  %v3072 = vpop.f32.mrb[0].mxu0
  %3073 = vmatprep.mubr.f32.mxu0 0.0
  %3074 = vmatmul.mubr.f32.gmra.mrb[0].mxu0 %v1182
  %v3075 = vpop.f32.mrb[0].mxu0
  %v3076 = vadd.f32 0.0, %v3075
  %v3077 = vpop.f32.mrb[0].mxu0
  %3078 = vmatprep.mubr.f32.mxu0 0.0
  %3079 = vmatmul.mubr.f32.gmra.mrb[0].mxu0 %v1185
  %v3080 = vpop.f32.mrb[0].mxu0
  %v3081 = vadd.f32 0.0, %v3080
  %v3082 = vpop.f32.mrb[0].mxu0
  %3083 = vmatprep.mubr.f32.mxu0 0.0
  %3084 = vmatmul.mubr.f32.gmra.mrb[0].mxu0 %v1188
  %v3085 = vpop.f32.mrb[0].mxu0
  %v3086 = vadd.f32 0.0, %v3085
  %v3087 = vpop.f32.mrb[0].mxu0
  %3088 = vmatprep.mubr.f32.mxu0 0.0
  %3089 = vmatmul.mubr.f32.gmra.mrb[0].mxu0 %v1191
  %v3090 = vpop.f32.mrb[0].mxu0
  %v3091 = vadd.f32 0.0, %v3090
  %v3092 = vpop.f32.mrb[0].mxu0
  %3093 = vmatprep.mubr.f32.mxu0 0.0
  %3094 = vmatmul.mubr.f32.gmra.mrb[0].mxu0 %v1194
  %v3095 = vpop.f32.mrb[0].mxu0
  %v3096 = vadd.f32 0.0, %v3095
  %v3097 = vpop.f32.mrb[0].mxu0
  %3098 = vmatprep.mubr.f32.mxu0 0.0
  %3099 = vmatmul.mubr.f32.gmra.mrb[0].mxu0 %v1197
  %v3100 = vpop.f32.mrb[0].mxu0
  %v3101 = vadd.f32 0.0, %v3100
  %v3102 = vpop.f32.mrb[0].mxu0
  %3103 = vmatprep.mubr.f32.mxu0 0.0
  %3104 = vmatmul.mubr.f32.gmra.mrb[0].mxu0 %v1200
  %v3105 = vpop.f32.mrb[0].mxu0
  %v3106 = vadd.f32 0.0, %v3105
  %v3107 = vpop.f32.mrb[0].mxu0
  %3108 = vmatprep.mubr.f32.mxu0 0.0
  %3109 = vmatmul.mubr.f32.gmra.mrb[0].mxu0 %v1203
  %v3110 = vpop.f32.mrb[0].mxu0
  %v3111 = vadd.f32 0.0, %v3110
  %v3112 = vpop.f32.mrb[0].mxu0
  %3113 = vmatprep.mubr.f32.mxu0 0.0
  %3114 = vmatmul.mubr.f32.gmra.mrb[0].mxu0 %v1206
  %v3115 = vpop.f32.mrb[0].mxu0
  %v3116 = vadd.f32 0.0, %v3115
  %v3117 = vpop.f32.mrb[0].mxu0
  %3118 = vmatprep.mubr.f32.mxu0 0.0
  %3119 = vmatmul.mubr.f32.gmra.mrb[0].mxu0 %v1209
  %v3120 = vpop.f32.mrb[0].mxu0
  %v3121 = vadd.f32 0.0, %v3120
  %v3122 = vpop.f32.mrb[0].mxu0
  %3123 = vmatprep.mubr.f32.mxu0 0.0
  %3124 = vmatmul.mubr.f32.gmra.mrb[0].mxu0 %v1212
  %v3125 = vpop.f32.mrb[0].mxu0
  %v3126 = vadd.f32 0.0, %v3125
  %v3127 = vpop.f32.mrb[0].mxu0
  %3128 = vmatprep.mubr.f32.mxu0 0.0
  %3129 = vmatmul.mubr.f32.gmra.mrb[0].mxu0 %v1215
  %v3130 = vpop.f32.mrb[0].mxu0
  %v3131 = vadd.f32 0.0, %v3130
  %v3132 = vpop.f32.mrb[0].mxu0
  %3133 = vmatprep.mubr.f32.mxu0 0.0
  %3134 = vmatmul.mubr.f32.gmra.mrb[0].mxu0 %v1218
  %v3135 = vpop.f32.mrb[0].mxu0
  %v3136 = vadd.f32 0.0, %v3135
  %v3137 = vpop.f32.mrb[0].mxu0
  %3138 = vmatprep.mubr.f32.mxu0 0.0
  %3139 = vmatmul.mubr.f32.gmra.mrb[0].mxu0 %v1221
  %v3140 = vpop.f32.mrb[0].mxu0
  %v3141 = vadd.f32 0.0, %v3140
  %v3142 = vpop.f32.mrb[0].mxu0
  %3143 = vmatprep.mubr.f32.mxu0 0.0
  %3144 = vmatmul.mubr.f32.gmra.mrb[0].mxu0 %v1224
  %v3145 = vpop.f32.mrb[0].mxu0
  %v3146 = vadd.f32 0.0, %v3145
  %v3147 = vpop.f32.mrb[0].mxu0
  %3148 = vmatprep.mubr.f32.mxu0 0.0
  %3149 = vmatmul.mubr.f32.gmra.mrb[0].mxu0 %v1227
  %v3150 = vpop.f32.mrb[0].mxu0
  %v3151 = vadd.f32 0.0, %v3150
  %v3152 = vpop.f32.mrb[0].mxu0
  %3153 = vmatprep.mubr.f32.mxu0 0.0
  %3154 = vmatmul.mubr.f32.gmra.mrb[0].mxu0 %v1230
  %v3155 = vpop.f32.mrb[0].mxu0
  %v3156 = vadd.f32 0.0, %v3155
  %v3157 = vpop.f32.mrb[0].mxu0
  %3158 = vmatprep.mubr.f32.mxu0 0.0
  %3159 = vmatmul.mubr.f32.gmra.mrb[0].mxu0 %v1233
  %v3160 = vpop.f32.mrb[0].mxu0
  %v3161 = vadd.f32 0.0, %v3160
  %v3162 = vpop.f32.mrb[0].mxu0
  %3163 = vmatprep.mubr.f32.mxu0 0.0
  %3164 = vmatmul.mubr.f32.gmra.mrb[0].mxu0 %v1236
  %v3165 = vpop.f32.mrb[0].mxu0
  %v3166 = vadd.f32 0.0, %v3165
  %v3167 = vpop.f32.mrb[0].mxu0
  %3168 = vmatprep.mubr.f32.mxu0 0.0
  %3169 = vmatmul.mubr.f32.gmra.mrb[0].mxu0 %v1239
  %v3170 = vpop.f32.mrb[0].mxu0
  %v3171 = vadd.f32 0.0, %v3170
  %v3172 = vpop.f32.mrb[0].mxu0
  %3173 = vmatprep.mubr.f32.mxu0 0.0
  %3174 = vmatmul.mubr.f32.gmra.mrb[0].mxu0 %v1242
  %v3175 = vpop.f32.mrb[0].mxu0
  %v3176 = vadd.f32 0.0, %v3175
  %v3177 = vpop.f32.mrb[0].mxu0
  %3178 = vmatprep.mubr.f32.mxu0 0.0
  %3179 = vmatmul.mubr.f32.gmra.mrb[0].mxu0 %v1245
  %v3180 = vpop.f32.mrb[0].mxu0
  %v3181 = vadd.f32 0.0, %v3180
  %v3182 = vpop.f32.mrb[0].mxu0
  %3183 = vmatprep.mubr.f32.mxu0 0.0
  %3184 = vmatmul.mubr.f32.gmra.mrb[0].mxu0 %v1248
  %v3185 = vpop.f32.mrb[0].mxu0
  %v3186 = vadd.f32 0.0, %v3185
  %v3187 = vpop.f32.mrb[0].mxu0
  %3188 = vmatprep.mubr.f32.mxu0 0.0
  %3189 = vmatmul.mubr.f32.gmra.mrb[0].mxu0 %v1251
  %v3190 = vpop.f32.mrb[0].mxu0
  %v3191 = vadd.f32 0.0, %v3190
  %v3192 = vpop.f32.mrb[0].mxu0
  %3193 = vmatprep.mubr.f32.mxu0 0.0
  %3194 = vmatmul.mubr.f32.gmra.mrb[0].mxu0 %v1254
  %v3195 = vpop.f32.mrb[0].mxu0
  %v3196 = vadd.f32 0.0, %v3195
  %v3197 = vpop.f32.mrb[0].mxu0
  %3198 = vmatprep.mubr.f32.mxu0 0.0
  %3199 = vmatmul.mubr.f32.gmra.mrb[0].mxu0 %v1257
  %v3200 = vpop.f32.mrb[0].mxu0
  %v3201 = vadd.f32 0.0, %v3200
  %v3202 = vpop.f32.mrb[0].mxu0
  %3203 = vmatprep.mubr.f32.mxu0 0.0
  %3204 = vmatmul.mubr.f32.gmra.mrb[0].mxu0 %v1260
  %v3205 = vpop.f32.mrb[0].mxu0
  %v3206 = vadd.f32 0.0, %v3205
  %v3207 = vpop.f32.mrb[0].mxu0
  %3208 = vmatprep.mubr.f32.mxu0 0.0
  %3209 = vmatmul.mubr.f32.gmra.mrb[0].mxu0 %v1263
  %v3210 = vpop.f32.mrb[0].mxu0
  %v3211 = vadd.f32 0.0, %v3210
  %v3212 = vpop.f32.mrb[0].mxu0
  %3213 = vmatprep.mubr.f32.mxu0 0.0
  %3214 = vmatmul.mubr.f32.gmra.mrb[0].mxu0 %v1266
  %v3215 = vpop.f32.mrb[0].mxu0
  %v3216 = vadd.f32 0.0, %v3215
  %v3217 = vpop.f32.mrb[0].mxu0
  %3218 = vmatprep.mubr.f32.mxu0 0.0
  %3219 = vmatmul.mubr.f32.gmra.mrb[0].mxu0 %v1269
  %v3220 = vpop.f32.mrb[0].mxu0
  %v3221 = vadd.f32 0.0, %v3220
  %v3222 = vpop.f32.mrb[0].mxu0
  %3223 = vmatprep.mubr.f32.mxu0 0.0
  %3224 = vmatmul.mubr.f32.gmra.mrb[0].mxu0 %v1272
  %v3225 = vpop.f32.mrb[0].mxu0
  %v3226 = vadd.f32 0.0, %v3225
  %v3227 = vpop.f32.mrb[0].mxu0
  %3228 = vmatprep.mubr.f32.mxu0 0.0
  %3229 = vmatmul.mubr.f32.gmra.mrb[0].mxu0 %v1275
  %v3230 = vpop.f32.mrb[0].mxu0
  %v3231 = vadd.f32 0.0, %v3230
  %v3232 = vpop.f32.mrb[0].mxu0
  %3233 = vmatprep.mubr.f32.mxu0 0.0
  %3234 = vmatmul.mubr.f32.gmra.mrb[0].mxu0 %v1278
  %v3235 = vpop.f32.mrb[0].mxu0
  %v3236 = vadd.f32 0.0, %v3235
  %v3237 = vpop.f32.mrb[0].mxu0
  %3238 = vmatprep.mubr.f32.mxu0 0.0
  %3239 = vmatmul.mubr.f32.gmra.mrb[0].mxu0 %v1281
  %v3240 = vpop.f32.mrb[0].mxu0
  %v3241 = vadd.f32 0.0, %v3240
  %v3242 = vpop.f32.mrb[0].mxu0
  %3243 = vmatprep.mubr.f32.mxu0 0.0
  %3244 = vmatmul.mubr.f32.gmra.mrb[0].mxu0 %v1284
  %v3245 = vpop.f32.mrb[0].mxu0
  %v3246 = vadd.f32 0.0, %v3245
  %v3247 = vpop.f32.mrb[0].mxu0
  %3248 = vmatprep.mubr.f32.mxu0 0.0
  %3249 = vmatmul.mubr.f32.gmra.mrb[0].mxu0 %v1287
  %v3250 = vpop.f32.mrb[0].mxu0
  %v3251 = vadd.f32 0.0, %v3250
  %v3252 = vpop.f32.mrb[0].mxu0
  %3253 = vmatprep.mubr.f32.mxu0 0.0
  %3254 = vmatmul.mubr.f32.gmra.mrb[0].mxu0 %v1290
  %v3255 = vpop.f32.mrb[0].mxu0
  %v3256 = vadd.f32 0.0, %v3255
  %v3257 = vpop.f32.mrb[0].mxu0
  %3258 = vmatprep.mubr.f32.mxu0 0.0
  %3259 = vmatmul.mubr.f32.gmra.mrb[0].mxu0 %v1293
  %v3260 = vpop.f32.mrb[0].mxu0
  %v3261 = vadd.f32 0.0, %v3260
  %v3262 = vpop.f32.mrb[0].mxu0
  %3263 = vmatprep.mubr.f32.mxu0 0.0
  %3264 = vmatmul.mubr.f32.gmra.mrb[0].mxu0 %v1296
  %v3265 = vpop.f32.mrb[0].mxu0
  %v3266 = vadd.f32 0.0, %v3265
  %v3267 = vpop.f32.mrb[0].mxu0
  %3268 = vmatprep.mubr.f32.mxu0 0.0
  %3269 = vmatmul.mubr.f32.gmra.mrb[0].mxu0 %v1299
  %v3270 = vpop.f32.mrb[0].mxu0
  %v3271 = vadd.f32 0.0, %v3270
  %v3272 = vpop.f32.mrb[0].mxu0
  %3273 = vmatprep.mubr.f32.mxu0 0.0
  %3274 = vmatmul.mubr.f32.gmra.mrb[0].mxu0 %v1302
  %v3275 = vpop.f32.mrb[0].mxu0
  %v3276 = vadd.f32 0.0, %v3275
  %v3277 = vpop.f32.mrb[0].mxu0
  %3278 = vmatprep.mubr.f32.mxu0 0.0
  %3279 = vmatmul.mubr.f32.gmra.mrb[0].mxu0 %v1305
  %v3280 = vpop.f32.mrb[0].mxu0
  %v3281 = vadd.f32 0.0, %v3280
  %v3282 = vpop.f32.mrb[0].mxu0
  %3283 = vmatprep.mubr.f32.mxu0 0.0
  %3284 = vmatmul.mubr.f32.gmra.mrb[0].mxu0 %v1308
  %v3285 = vpop.f32.mrb[0].mxu0
  %v3286 = vadd.f32 0.0, %v3285
  %v3287 = vpop.f32.mrb[0].mxu0
  %3288 = vmatprep.mubr.f32.mxu0 0.0
  %3289 = vmatmul.mubr.f32.gmra.mrb[0].mxu0 %v1311
  %v3290 = vpop.f32.mrb[0].mxu0
  %v3291 = vadd.f32 0.0, %v3290
  %v3292 = vpop.f32.mrb[0].mxu0
  %3293 = vmatprep.mubr.f32.mxu0 0.0
  %3294 = vmatmul.mubr.f32.gmra.mrb[0].mxu0 %v1314
  %v3295 = vpop.f32.mrb[0].mxu0
  %v3296 = vadd.f32 0.0, %v3295
  %v3297 = vpop.f32.mrb[0].mxu0
  %3298 = vmatprep.mubr.f32.mxu0 0.0
  %3299 = vmatmul.mubr.f32.gmra.mrb[0].mxu0 %v1317
  %v3300 = vpop.f32.mrb[0].mxu0
  %v3301 = vadd.f32 0.0, %v3300
  %v3302 = vpop.f32.mrb[0].mxu0
  %3303 = vmatprep.mubr.f32.mxu0 0.0
  %3304 = vmatmul.mubr.f32.gmra.mrb[0].mxu0 %v1320
  %v3305 = vpop.f32.mrb[0].mxu0
  %v3306 = vadd.f32 0.0, %v3305
  %v3307 = vpop.f32.mrb[0].mxu0
  %3308 = vmatprep.mubr.f32.mxu0 0.0
  %3309 = vmatmul.mubr.f32.gmra.mrb[0].mxu0 %v1323
  %v3310 = vpop.f32.mrb[0].mxu0
  %v3311 = vadd.f32 0.0, %v3310
  %v3312 = vpop.f32.mrb[0].mxu0
  %3313 = vmatprep.mubr.f32.mxu0 0.0
  %3314 = vmatmul.mubr.f32.gmra.mrb[0].mxu0 %v1326
  %v3315 = vpop.f32.mrb[0].mxu0
  %v3316 = vadd.f32 0.0, %v3315
  %v3317 = vpop.f32.mrb[0].mxu0
  %3318 = vmatprep.mubr.f32.mxu0 0.0
  %3319 = vmatmul.mubr.f32.gmra.mrb[0].mxu0 %v1329
  %v3320 = vpop.f32.mrb[0].mxu0
  %v3321 = vadd.f32 0.0, %v3320
  %v3322 = vpop.f32.mrb[0].mxu0
  %3323 = vmatprep.mubr.f32.mxu0 0.0
  %3324 = vmatmul.mubr.f32.gmra.mrb[0].mxu0 %v1332
  %v3325 = vpop.f32.mrb[0].mxu0
  %v3326 = vadd.f32 0.0, %v3325
  %v3327 = vpop.f32.mrb[0].mxu0
  %3328 = vmatprep.mubr.f32.mxu0 0.0
  %3329 = vmatmul.mubr.f32.gmra.mrb[0].mxu0 %v1335
  %v3330 = vpop.f32.mrb[0].mxu0
  %v3331 = vadd.f32 0.0, %v3330
  %v3332 = vpop.f32.mrb[0].mxu0
  %3333 = vmatprep.mubr.f32.mxu0 0.0
  %3334 = vmatmul.mubr.f32.gmra.mrb[0].mxu0 %v1338
  %v3335 = vpop.f32.mrb[0].mxu0
  %v3336 = vadd.f32 0.0, %v3335
  %v3337 = vpop.f32.mrb[0].mxu0
  %3338 = vmatprep.mubr.f32.mxu0 0.0
  %3339 = vmatmul.mubr.f32.gmra.mrb[0].mxu0 %v1341
  %v3340 = vpop.f32.mrb[0].mxu0
  %v3341 = vadd.f32 0.0, %v3340
  %v3342 = vpop.f32.mrb[0].mxu0
  %3343 = vmatprep.mubr.f32.mxu0 0.0
  %3344 = vmatmul.mubr.f32.gmra.mrb[0].mxu0 %v1344
  %v3345 = vpop.f32.mrb[0].mxu0
  %v3346 = vadd.f32 0.0, %v3345
  %v3347 = vpop.f32.mrb[0].mxu0
  %3348 = vmatprep.mubr.f32.mxu0 0.0
  %3349 = vmatmul.mubr.f32.gmra.mrb[0].mxu0 %v1347
  %v3350 = vpop.f32.mrb[0].mxu0
  %v3351 = vadd.f32 0.0, %v3350
  %v3352 = vpop.f32.mrb[0].mxu0
  %3353 = vmatprep.mubr.f32.mxu0 0.0
  %3354 = vmatmul.mubr.f32.gmra.mrb[0].mxu0 %v1350
  %v3355 = vpop.f32.mrb[0].mxu0
  %v3356 = vadd.f32 0.0, %v3355
  %v3357 = vpop.f32.mrb[0].mxu0
  %3358 = vmatprep.mubr.f32.mxu0 0.0
  %3359 = vmatmul.mubr.f32.gmra.mrb[0].mxu0 %v1353
  %v3360 = vpop.f32.mrb[0].mxu0
  %v3361 = vadd.f32 0.0, %v3360
  %v3362 = vpop.f32.mrb[0].mxu0
  %3363 = vmatprep.mubr.f32.mxu0 0.0
  %3364 = vmatmul.mubr.f32.gmra.mrb[0].mxu0 %v1356
  %v3365 = vpop.f32.mrb[0].mxu0
  %v3366 = vadd.f32 0.0, %v3365
  %v3367 = vpop.f32.mrb[0].mxu0
  %3368 = vmatprep.mubr.f32.mxu0 0.0
  %3369 = vmatmul.mubr.f32.gmra.mrb[0].mxu0 %v1359
  %v3370 = vpop.f32.mrb[0].mxu0
  %v3371 = vadd.f32 0.0, %v3370
  %v3372 = vpop.f32.mrb[0].mxu0
  %3373 = vmatprep.mubr.f32.mxu0 0.0
  %3374 = vmatmul.mubr.f32.gmra.mrb[0].mxu0 %v1362
  %v3375 = vpop.f32.mrb[0].mxu0
  %v3376 = vadd.f32 0.0, %v3375
  %v3377 = vpop.f32.mrb[0].mxu0
  %3378 = vmatprep.mubr.f32.mxu0 0.0
  %3379 = vmatmul.mubr.f32.gmra.mrb[0].mxu0 %v1365
  %v3380 = vpop.f32.mrb[0].mxu0
  %v3381 = vadd.f32 0.0, %v3380
  %v3382 = vpop.f32.mrb[0].mxu0
  %3383 = vmatprep.mubr.f32.mxu0 0.0
  %3384 = vmatmul.mubr.f32.gmra.mrb[0].mxu0 %v1368
  %v3385 = vpop.f32.mrb[0].mxu0
  %v3386 = vadd.f32 0.0, %v3385
  %v3387 = vpop.f32.mrb[0].mxu0
  %3388 = vmatprep.mubr.f32.mxu0 0.0
  %3389 = vmatmul.mubr.f32.gmra.mrb[0].mxu0 %v1371
  %v3390 = vpop.f32.mrb[0].mxu0
  %v3391 = vadd.f32 0.0, %v3390
  %v3392 = vpop.f32.mrb[0].mxu0
  %3393 = vmatprep.mubr.f32.mxu0 0.0
  %3394 = vmatmul.mubr.f32.gmra.mrb[0].mxu0 %v1374
  %v3395 = vpop.f32.mrb[0].mxu0
  %v3396 = vadd.f32 0.0, %v3395
  %v3397 = vpop.f32.mrb[0].mxu0
  %3398 = vmatprep.mubr.f32.mxu0 0.0
  %3399 = vmatmul.mubr.f32.gmra.mrb[0].mxu0 %v1377
  %v3400 = vpop.f32.mrb[0].mxu0
  %v3401 = vadd.f32 0.0, %v3400
  %v3402 = vpop.f32.mrb[0].mxu0
  %3403 = vmatprep.mubr.f32.mxu0 0.0
  %3404 = vmatmul.mubr.f32.gmra.mrb[0].mxu0 %v1380
  %v3405 = vpop.f32.mrb[0].mxu0
  %v3406 = vadd.f32 0.0, %v3405
  %v3407 = vpop.f32.mrb[0].mxu0
  %3408 = vmatprep.mubr.f32.mxu0 0.0
  %3409 = vmatmul.mubr.f32.gmra.mrb[0].mxu0 %v1383
  %v3410 = vpop.f32.mrb[0].mxu0
  %v3411 = vadd.f32 0.0, %v3410
  %v3412 = vpop.f32.mrb[0].mxu0
  %3413 = vmatprep.mubr.f32.mxu0 0.0
  %3414 = vmatmul.mubr.f32.gmra.mrb[0].mxu0 %v1386
  %v3415 = vpop.f32.mrb[0].mxu0
  %v3416 = vadd.f32 0.0, %v3415
  %v3417 = vpop.f32.mrb[0].mxu0
  %3418 = vmatprep.mubr.f32.mxu0 0.0
  %3419 = vmatmul.mubr.f32.gmra.mrb[0].mxu0 %v1389
  %v3420 = vpop.f32.mrb[0].mxu0
  %v3421 = vadd.f32 0.0, %v3420
  %v3422 = vpop.f32.mrb[0].mxu0
  %3423 = vmatprep.mubr.f32.mxu0 0.0
  %3424 = vmatmul.mubr.f32.gmra.mrb[0].mxu0 %v1392
  %v3425 = vpop.f32.mrb[0].mxu0
  %v3426 = vadd.f32 0.0, %v3425
  %v3427 = vpop.f32.mrb[0].mxu0
  %3428 = vmatprep.mubr.f32.mxu0 0.0
  %3429 = vmatmul.mubr.f32.gmra.mrb[0].mxu0 %v1395
  %v3430 = vpop.f32.mrb[0].mxu0
  %v3431 = vadd.f32 0.0, %v3430
  %v3432 = vpop.f32.mrb[0].mxu0
  %3433 = vmatprep.mubr.f32.mxu0 0.0
  %3434 = vmatmul.mubr.f32.gmra.mrb[0].mxu0 %v1398
  %v3435 = vpop.f32.mrb[0].mxu0
  %v3436 = vadd.f32 0.0, %v3435
  %v3437 = vpop.f32.mrb[0].mxu0
  %3438 = vmatprep.mubr.f32.mxu0 0.0
  %3439 = vmatmul.mubr.f32.gmra.mrb[0].mxu0 %v1401
  %v3440 = vpop.f32.mrb[0].mxu0
  %v3441 = vadd.f32 0.0, %v3440
  %v3442 = vpop.f32.mrb[0].mxu0
  %3443 = vmatprep.mubr.f32.mxu0 0.0
  %3444 = vmatmul.mubr.f32.gmra.mrb[0].mxu0 %v1404
  %v3445 = vpop.f32.mrb[0].mxu0
  %v3446 = vadd.f32 0.0, %v3445
  %v3447 = vpop.f32.mrb[0].mxu0
  %3448 = vmatprep.mubr.f32.mxu0 0.0
  %3449 = vmatmul.mubr.f32.gmra.mrb[0].mxu0 %v1407
  %v3450 = vpop.f32.mrb[0].mxu0
  %v3451 = vadd.f32 0.0, %v3450
  %v3452 = vpop.f32.mrb[0].mxu0
  %3453 = vmatprep.mubr.f32.mxu0 0.0
  %3454 = vmatmul.mubr.f32.gmra.mrb[0].mxu0 %v1410
  %v3455 = vpop.f32.mrb[0].mxu0
  %v3456 = vadd.f32 0.0, %v3455
  %v3457 = vpop.f32.mrb[0].mxu0
  %3458 = vmatprep.mubr.f32.mxu0 0.0
  %3459 = vmatmul.mubr.f32.gmra.mrb[0].mxu0 %v1413
  %v3460 = vpop.f32.mrb[0].mxu0
  %v3461 = vadd.f32 0.0, %v3460
  %v3462 = vpop.f32.mrb[0].mxu0
  %3463 = vmatprep.mubr.f32.mxu0 0.0
  %3464 = vmatmul.mubr.f32.gmra.mrb[0].mxu0 %v1416
  %v3465 = vpop.f32.mrb[0].mxu0
  %v3466 = vadd.f32 0.0, %v3465
  %v3467 = vpop.f32.mrb[0].mxu0
  %3468 = vmatprep.mubr.f32.mxu0 0.0
  %3469 = vmatmul.mubr.f32.gmra.mrb[0].mxu0 %v1419
  %v3470 = vpop.f32.mrb[0].mxu0
  %v3471 = vadd.f32 0.0, %v3470
  %v3472 = vpop.f32.mrb[0].mxu0
  %3473 = vmatprep.mubr.f32.mxu0 0.0
  %3474 = vmatmul.mubr.f32.gmra.mrb[0].mxu0 %v1422
  %v3475 = vpop.f32.mrb[0].mxu0
  %v3476 = vadd.f32 0.0, %v3475
  %v3477 = vpop.f32.mrb[0].mxu0
  %3478 = vmatprep.mubr.f32.mxu0 0.0
  %3479 = vmatmul.mubr.f32.gmra.mrb[0].mxu0 %v1425
  %v3480 = vpop.f32.mrb[0].mxu0
  %v3481 = vadd.f32 0.0, %v3480
  %v3482 = vpop.f32.mrb[0].mxu0
  %3483 = vmatprep.mubr.f32.mxu0 0.0
  %3484 = vmatmul.mubr.f32.gmra.mrb[0].mxu0 %v1428
  %v3485 = vpop.f32.mrb[0].mxu0
  %v3486 = vadd.f32 0.0, %v3485
  %v3487 = vpop.f32.mrb[0].mxu0
  %3488 = vmatprep.mubr.f32.mxu0 0.0
  %3489 = vmatmul.mubr.f32.gmra.mrb[0].mxu0 %v1431
  %v3490 = vpop.f32.mrb[0].mxu0
  %v3491 = vadd.f32 0.0, %v3490
  %v3492 = vpop.f32.mrb[0].mxu0
  %3493 = vmatprep.mubr.f32.mxu0 0.0
  %3494 = vmatmul.mubr.f32.gmra.mrb[0].mxu0 %v1434
  %v3495 = vpop.f32.mrb[0].mxu0
  %v3496 = vadd.f32 0.0, %v3495
  %v3497 = vpop.f32.mrb[0].mxu0
  %3498 = vmatprep.mubr.f32.mxu0 0.0
  %3499 = vmatmul.mubr.f32.gmra.mrb[0].mxu0 %v1437
  %v3500 = vpop.f32.mrb[0].mxu0
  %v3501 = vadd.f32 0.0, %v3500
  %v3502 = vpop.f32.mrb[0].mxu0
  %3503 = vmatprep.mubr.f32.mxu0 0.0
  %3504 = vmatmul.mubr.f32.gmra.mrb[0].mxu0 %v1440
  %v3505 = vpop.f32.mrb[0].mxu0
  %v3506 = vadd.f32 0.0, %v3505
  %v3507 = vpop.f32.mrb[0].mxu0
  %3508 = vmatprep.mubr.f32.mxu0 0.0
  %3509 = vmatmul.mubr.f32.gmra.mrb[0].mxu0 %v1443
  %v3510 = vpop.f32.mrb[0].mxu0
  %v3511 = vadd.f32 0.0, %v3510
  %v3512 = vpop.f32.mrb[0].mxu0
  %3513 = vmatprep.mubr.f32.mxu0 0.0
  %3514 = vmatmul.mubr.f32.gmra.mrb[0].mxu0 %v1446
  %v3515 = vpop.f32.mrb[0].mxu0
  %v3516 = vadd.f32 0.0, %v3515
  %v3517 = vpop.f32.mrb[0].mxu0
  %3518 = vmatprep.mubr.f32.mxu0 0.0
  %3519 = vmatmul.mubr.f32.gmra.mrb[0].mxu0 %v1449
  %v3520 = vpop.f32.mrb[0].mxu0
  %v3521 = vadd.f32 0.0, %v3520
  %v3522 = vpop.f32.mrb[0].mxu0
  %3523 = vmatprep.mubr.f32.mxu0 0.0
  %3524 = vmatmul.mubr.f32.gmra.mrb[0].mxu0 %v1452
  %v3525 = vpop.f32.mrb[0].mxu0
  %v3526 = vadd.f32 0.0, %v3525
  %v3527 = vpop.f32.mrb[0].mxu0
  %3528 = vmatprep.mubr.f32.mxu0 0.0
  %3529 = vmatmul.mubr.f32.gmra.mrb[0].mxu0 %v1455
  %v3530 = vpop.f32.mrb[0].mxu0
  %v3531 = vadd.f32 0.0, %v3530
  %v3532 = vpop.f32.mrb[0].mxu0
  %3533 = vmatprep.mubr.f32.mxu0 0.0
  %3534 = vmatmul.mubr.f32.gmra.mrb[0].mxu0 %v1458
  %v3535 = vpop.f32.mrb[0].mxu0
  %v3536 = vadd.f32 0.0, %v3535
  %v3537 = vpop.f32.mrb[0].mxu0
  %3538 = vmatprep.mubr.f32.mxu0 0.0
  %3539 = vmatmul.mubr.f32.gmra.mrb[0].mxu0 %v1461
  %v3540 = vpop.f32.mrb[0].mxu0
  %v3541 = vadd.f32 0.0, %v3540
  %v3542 = vpop.f32.mrb[0].mxu0
  %3543 = vmatprep.mubr.f32.mxu0 0.0
  %3544 = vmatmul.mubr.f32.gmra.mrb[0].mxu0 %v1464
  %v3545 = vpop.f32.mrb[0].mxu0
  %v3546 = vadd.f32 0.0, %v3545
  %v3547 = vpop.f32.mrb[0].mxu0
  %3548 = vmatprep.mubr.f32.mxu0 0.0
  %3549 = vmatmul.mubr.f32.gmra.mrb[0].mxu0 %v1467
  %v3550 = vpop.f32.mrb[0].mxu0
  %v3551 = vadd.f32 0.0, %v3550
  %v3552 = vpop.f32.mrb[0].mxu0
  %3553 = vmatprep.mubr.f32.mxu0 0.0
  %3554 = vmatmul.mubr.f32.gmra.mrb[0].mxu0 %v1470
  %v3555 = vpop.f32.mrb[0].mxu0
  %v3556 = vadd.f32 0.0, %v3555
  %v3557 = vpop.f32.mrb[0].mxu0
  %3558 = vmatprep.mubr.f32.mxu0 0.0
  %3559 = vmatmul.mubr.f32.gmra.mrb[0].mxu0 %v1473
  %v3560 = vpop.f32.mrb[0].mxu0
  %v3561 = vadd.f32 0.0, %v3560
  %v3562 = vpop.f32.mrb[0].mxu0
  %3563 = vmatprep.mubr.f32.mxu0 0.0
  %3564 = vmatmul.mubr.f32.gmra.mrb[0].mxu0 %v1476
  %v3565 = vpop.f32.mrb[0].mxu0
  %v3566 = vadd.f32 0.0, %v3565
  %v3567 = vpop.f32.mrb[0].mxu0
  %3568 = vmatprep.mubr.f32.mxu0 0.0
  %3569 = vmatmul.mubr.f32.gmra.mrb[0].mxu0 %v1479
  %v3570 = vpop.f32.mrb[0].mxu0
  %v3571 = vadd.f32 0.0, %v3570
  %v3572 = vpop.f32.mrb[0].mxu0
  %3573 = vmatprep.mubr.f32.mxu0 0.0
  %3574 = vmatmul.mubr.f32.gmra.mrb[0].mxu0 %v1482
  %v3575 = vpop.f32.mrb[0].mxu0
  %v3576 = vadd.f32 0.0, %v3575
  %v3577 = vpop.f32.mrb[0].mxu0
  %3578 = vmatprep.mubr.f32.mxu0 0.0
  %3579 = vmatmul.mubr.f32.gmra.mrb[0].mxu0 %v1485
  %v3580 = vpop.f32.mrb[0].mxu0
  %v3581 = vadd.f32 0.0, %v3580
  %v3582 = vpop.f32.mrb[0].mxu0
  %3583 = vmatprep.mubr.f32.mxu0 0.0
  %3584 = vmatmul.mubr.f32.gmra.mrb[0].mxu0 %v1488
  %v3585 = vpop.f32.mrb[0].mxu0
  %v3586 = vadd.f32 0.0, %v3585
  %v3587 = vpop.f32.mrb[0].mxu0
  %3588 = vmatprep.mubr.f32.mxu0 0.0
  %3589 = vmatmul.mubr.f32.gmra.mrb[0].mxu0 %v1491
  %v3590 = vpop.f32.mrb[0].mxu0
  %v3591 = vadd.f32 0.0, %v3590
  %v3592 = vpop.f32.mrb[0].mxu0
  %3593 = vmatprep.mubr.f32.mxu0 0.0
  %3594 = vmatmul.mubr.f32.gmra.mrb[0].mxu0 %v1494
  %v3595 = vpop.f32.mrb[0].mxu0
  %v3596 = vadd.f32 0.0, %v3595
  %v3597 = vpop.f32.mrb[0].mxu0
  %3598 = vmatprep.mubr.f32.mxu0 0.0
  %3599 = vmatmul.mubr.f32.gmra.mrb[0].mxu0 %v1497
  %v3600 = vpop.f32.mrb[0].mxu0
  %v3601 = vadd.f32 0.0, %v3600
  %v3602 = vpop.f32.mrb[0].mxu0
  %3603 = vmatprep.mubr.f32.mxu0 0.0
  %3604 = vmatmul.mubr.f32.gmra.mrb[0].mxu0 %v1500
  %v3605 = vpop.f32.mrb[0].mxu0
  %v3606 = vadd.f32 0.0, %v3605
  %v3607 = vpop.f32.mrb[0].mxu0
  %3608 = vmatprep.mubr.f32.mxu0 0.0
  %3609 = vmatmul.mubr.f32.gmra.mrb[0].mxu0 %v1503
  %v3610 = vpop.f32.mrb[0].mxu0
  %v3611 = vadd.f32 0.0, %v3610
  %v3612 = vpop.f32.mrb[0].mxu0
  %3613 = vmatprep.mubr.f32.mxu0 0.0
  %3614 = vmatmul.mubr.f32.gmra.mrb[0].mxu0 %v1506
  %v3615 = vpop.f32.mrb[0].mxu0
  %v3616 = vadd.f32 0.0, %v3615
  %v3617 = vpop.f32.mrb[0].mxu0
  %3618 = vmatprep.mubr.f32.mxu0 0.0
  %3619 = vmatmul.mubr.f32.gmra.mrb[0].mxu0 %v1509
  %v3620 = vpop.f32.mrb[0].mxu0
  %v3621 = vadd.f32 0.0, %v3620
  %v3622 = vpop.f32.mrb[0].mxu0
  %3623 = vmatprep.mubr.f32.mxu0 0.0
  %3624 = vmatmul.mubr.f32.gmra.mrb[0].mxu0 %v1512
  %v3625 = vpop.f32.mrb[0].mxu0
  %v3626 = vadd.f32 0.0, %v3625
  %v3627 = vpop.f32.mrb[0].mxu0
  %3628 = vmatprep.mubr.f32.mxu0 0.0
  %3629 = vmatmul.mubr.f32.gmra.mrb[0].mxu0 %v1515
  %v3630 = vpop.f32.mrb[0].mxu0
  %v3631 = vadd.f32 0.0, %v3630
  %v3632 = vpop.f32.mrb[0].mxu0
  %3633 = vmatprep.mubr.f32.mxu0 0.0
  %3634 = vmatmul.mubr.f32.gmra.mrb[0].mxu0 %v1518
  %v3635 = vpop.f32.mrb[0].mxu0
  %v3636 = vadd.f32 0.0, %v3635
  %v3637 = vpop.f32.mrb[0].mxu0
  %3638 = vmatprep.mubr.f32.mxu0 0.0
  %3639 = vmatmul.mubr.f32.gmra.mrb[0].mxu0 %v1521
  %v3640 = vpop.f32.mrb[0].mxu0
  %v3641 = vadd.f32 0.0, %v3640
  %v3642 = vpop.f32.mrb[0].mxu0
  %3643 = vmatprep.mubr.f32.mxu0 0.0
  %3644 = vmatmul.mubr.f32.gmra.mrb[0].mxu0 %v1524
  %v3645 = vpop.f32.mrb[0].mxu0
  %v3646 = vadd.f32 0.0, %v3645
  %v3647 = vpop.f32.mrb[0].mxu0
  %3648 = vmatprep.mubr.f32.mxu0 0.0
  %3649 = vmatmul.mubr.f32.gmra.mrb[0].mxu0 %v1527
  %v3650 = vpop.f32.mrb[0].mxu0
  %v3651 = vadd.f32 0.0, %v3650
  %v3652 = vpop.f32.mrb[0].mxu0
  %3653 = vmatprep.mubr.f32.mxu0 0.0
  %3654 = vmatmul.mubr.f32.gmra.mrb[0].mxu0 %v1530
  %v3655 = vpop.f32.mrb[0].mxu0
  %v3656 = vadd.f32 0.0, %v3655
  %v3657 = vpop.f32.mrb[0].mxu0
  %3658 = vmatprep.mubr.f32.mxu0 0.0
  %3659 = vmatmul.mubr.f32.gmra.mrb[0].mxu0 %v1533
  %v3660 = vpop.f32.mrb[0].mxu0
  %v3661 = vadd.f32 0.0, %v3660
  %v3662 = vpop.f32.mrb[0].mxu0
  %3663 = vmatprep.mubr.f32.mxu0 0.0
  %3664 = vmatmul.mubr.f32.gmra.mrb[0].mxu0 %v1536
  %v3665 = vpop.f32.mrb[0].mxu0
  %v3666 = vadd.f32 0.0, %v3665
  %v3667 = vpop.f32.mrb[0].mxu0
  %3668 = vmatprep.mubr.f32.mxu0 0.0
  %3669 = vmatmul.mubr.f32.gmra.mrb[0].mxu0 %v1539
  %v3670 = vpop.f32.mrb[0].mxu0
  %v3671 = vadd.f32 0.0, %v3670
  %v3672 = vpop.f32.mrb[0].mxu0
  %3673 = vmatprep.mubr.f32.mxu0 0.0
  %3674 = vmatmul.mubr.f32.gmra.mrb[0].mxu0 %v1542
  %v3675 = vpop.f32.mrb[0].mxu0
  %v3676 = vadd.f32 0.0, %v3675
  %v3677 = vpop.f32.mrb[0].mxu0
  %3678 = vmatprep.mubr.f32.mxu0 0.0
  %3679 = vmatmul.mubr.f32.gmra.mrb[0].mxu0 %v1545
  %v3680 = vpop.f32.mrb[0].mxu0
  %v3681 = vadd.f32 0.0, %v3680
  %v3682 = vpop.f32.mrb[0].mxu0
  %3683 = vmatprep.mubr.f32.mxu0 0.0
  %3684 = vmatmul.mubr.f32.gmra.mrb[0].mxu0 %v1548
  %v3685 = vpop.f32.mrb[0].mxu0
  %v3686 = vadd.f32 0.0, %v3685
  %v3687 = vpop.f32.mrb[0].mxu0
  %3688 = vmatprep.mubr.f32.mxu0 0.0
  %3689 = vmatmul.mubr.f32.gmra.mrb[0].mxu0 %v1551
  %v3690 = vpop.f32.mrb[0].mxu0
  %v3691 = vadd.f32 0.0, %v3690
  %v3692 = vpop.f32.mrb[0].mxu0
  %3693 = vmatprep.mubr.f32.mxu0 0.0
  %3694 = vmatmul.mubr.f32.gmra.mrb[0].mxu0 %v1554
  %v3695 = vpop.f32.mrb[0].mxu0
  %v3696 = vadd.f32 0.0, %v3695
  %v3697 = vpop.f32.mrb[0].mxu0
  %3698 = vmatprep.mubr.f32.mxu0 0.0
  %3699 = vmatmul.mubr.f32.gmra.mrb[0].mxu0 %v1557
  %v3700 = vpop.f32.mrb[0].mxu0
  %v3701 = vadd.f32 0.0, %v3700
  %v3702 = vpop.f32.mrb[0].mxu0
  %3703 = vmatprep.mubr.f32.mxu0 0.0
  %3704 = vmatmul.mubr.f32.gmra.mrb[0].mxu0 %v1560
  %v3705 = vpop.f32.mrb[0].mxu0
  %v3706 = vadd.f32 0.0, %v3705
  %v3707 = vpop.f32.mrb[0].mxu0
  %3708 = vmatprep.mubr.f32.mxu0 0.0
  %3709 = vmatmul.mubr.f32.gmra.mrb[0].mxu0 %v1563
  %v3710 = vpop.f32.mrb[0].mxu0
  %v3711 = vadd.f32 0.0, %v3710
  %v3712 = vpop.f32.mrb[0].mxu0
  %3713 = vmatprep.mubr.f32.mxu0 0.0
  %3714 = vmatmul.mubr.f32.gmra.mrb[0].mxu0 %v1566
  %v3715 = vpop.f32.mrb[0].mxu0
  %v3716 = vadd.f32 0.0, %v3715
  %v3717 = vpop.f32.mrb[0].mxu0
  %3718 = vmatprep.mubr.f32.mxu0 0.0
  %3719 = vmatmul.mubr.f32.gmra.mrb[0].mxu0 %v1569
  %v3720 = vpop.f32.mrb[0].mxu0
  %v3721 = vadd.f32 0.0, %v3720
  %v3722 = vpop.f32.mrb[0].mxu0
  %3723 = vmatprep.mubr.f32.mxu0 0.0
  %3724 = vmatmul.mubr.f32.gmra.mrb[0].mxu0 %v1572
  %v3725 = vpop.f32.mrb[0].mxu0
  %v3726 = vadd.f32 0.0, %v3725
  %v3727 = vpop.f32.mrb[0].mxu0
  %3728 = vmatprep.mubr.f32.mxu0 0.0
  %3729 = vmatmul.mubr.f32.gmra.mrb[0].mxu0 %v1575
  %v3730 = vpop.f32.mrb[0].mxu0
  %v3731 = vadd.f32 0.0, %v3730
  %v3732 = vpop.f32.mrb[0].mxu0
  %3733 = vmatprep.mubr.f32.mxu0 0.0
  %3734 = vmatmul.mubr.f32.gmra.mrb[0].mxu0 %v1578
  %v3735 = vpop.f32.mrb[0].mxu0
  %v3736 = vadd.f32 0.0, %v3735
  %v3737 = vpop.f32.mrb[0].mxu0
  %3738 = vmatprep.mubr.f32.mxu0 0.0
  %3739 = vmatmul.mubr.f32.gmra.mrb[0].mxu0 %v1581
  %v3740 = vpop.f32.mrb[0].mxu0
  %v3741 = vadd.f32 0.0, %v3740
  %v3742 = vpop.f32.mrb[0].mxu0
  %3743 = vmatprep.mubr.f32.mxu0 0.0
  %3744 = vmatmul.mubr.f32.gmra.mrb[0].mxu0 %v1584
  %v3745 = vpop.f32.mrb[0].mxu0
  %v3746 = vadd.f32 0.0, %v3745
  %v3747 = vpop.f32.mrb[0].mxu0
  %3748 = vmatprep.mubr.f32.mxu0 0.0
  %3749 = vmatmul.mubr.f32.gmra.mrb[0].mxu0 %v1587
  %v3750 = vpop.f32.mrb[0].mxu0
  %v3751 = vadd.f32 0.0, %v3750
  %v3752 = vpop.f32.mrb[0].mxu0
  %3753 = vmatprep.mubr.f32.mxu0 0.0
  %3754 = vmatmul.mubr.f32.gmra.mrb[0].mxu0 %v1590
  %v3755 = vpop.f32.mrb[0].mxu0
  %v3756 = vadd.f32 0.0, %v3755
  %v3757 = vpop.f32.mrb[0].mxu0
  %3758 = vmatprep.mubr.f32.mxu0 0.0
  %3759 = vmatmul.mubr.f32.gmra.mrb[0].mxu0 %v1593
  %v3760 = vpop.f32.mrb[0].mxu0
  %v3761 = vadd.f32 0.0, %v3760
  %v3762 = vpop.f32.mrb[0].mxu0
  %3763 = vmatprep.mubr.f32.mxu0 0.0
  %3764 = vmatmul.mubr.f32.gmra.mrb[0].mxu0 %v1596
  %v3765 = vpop.f32.mrb[0].mxu0
  %v3766 = vadd.f32 0.0, %v3765
  %v3767 = vpop.f32.mrb[0].mxu0
  %3768 = vmatprep.mubr.f32.mxu0 0.0
  %3769 = vmatmul.mubr.f32.gmra.mrb[0].mxu0 %v1599
  %v3770 = vpop.f32.mrb[0].mxu0
  %v3771 = vadd.f32 0.0, %v3770
  %v3772 = vpop.f32.mrb[0].mxu0
  %3773 = vmatprep.mubr.f32.mxu0 0.0
  %3774 = vmatmul.mubr.f32.gmra.mrb[0].mxu0 %v1602
  %v3775 = vpop.f32.mrb[0].mxu0
  %v3776 = vadd.f32 0.0, %v3775
  %v3777 = vpop.f32.mrb[0].mxu0
  %3778 = vmatprep.mubr.f32.mxu0 0.0
  %3779 = vmatmul.mubr.f32.gmra.mrb[0].mxu0 %v1605
  %v3780 = vpop.f32.mrb[0].mxu0
  %v3781 = vadd.f32 0.0, %v3780
  %v3782 = vpop.f32.mrb[0].mxu0
  %3783 = vmatprep.mubr.f32.mxu0 0.0
  %3784 = vmatmul.mubr.f32.gmra.mrb[0].mxu0 %v1608
  %v3785 = vpop.f32.mrb[0].mxu0
  %v3786 = vadd.f32 0.0, %v3785
  %v3787 = vpop.f32.mrb[0].mxu0
  %3788 = vmatprep.mubr.f32.mxu0 0.0
  %3789 = vmatmul.mubr.f32.gmra.mrb[0].mxu0 %v1611
  %v3790 = vpop.f32.mrb[0].mxu0
  %v3791 = vadd.f32 0.0, %v3790
  %v3792 = vpop.f32.mrb[0].mxu0
  %3793 = vmatprep.mubr.f32.mxu0 0.0
  %3794 = vmatmul.mubr.f32.gmra.mrb[0].mxu0 %v1614
  %v3795 = vpop.f32.mrb[0].mxu0
  %v3796 = vadd.f32 0.0, %v3795
  %v3797 = vpop.f32.mrb[0].mxu0
  %3798 = vmatprep.mubr.f32.mxu0 0.0
  %3799 = vmatmul.mubr.f32.gmra.mrb[0].mxu0 %v1617
  %v3800 = vpop.f32.mrb[0].mxu0
  %v3801 = vadd.f32 0.0, %v3800
  %v3802 = vpop.f32.mrb[0].mxu0
  %3803 = vmatprep.mubr.f32.mxu0 0.0
  %3804 = vmatmul.mubr.f32.gmra.mrb[0].mxu0 %v1620
  %v3805 = vpop.f32.mrb[0].mxu0
  %v3806 = vadd.f32 0.0, %v3805
  %v3807 = vpop.f32.mrb[0].mxu0
  %3808 = vmatprep.mubr.f32.mxu0 0.0
  %3809 = vmatmul.mubr.f32.gmra.mrb[0].mxu0 %v1623
  %v3810 = vpop.f32.mrb[0].mxu0
  %v3811 = vadd.f32 0.0, %v3810
  %v3812 = vpop.f32.mrb[0].mxu0
  %3813 = vmatprep.mubr.f32.mxu0 0.0
  %3814 = vmatmul.mubr.f32.gmra.mrb[0].mxu0 %v1626
  %v3815 = vpop.f32.mrb[0].mxu0
  %v3816 = vadd.f32 0.0, %v3815
  %v3817 = vpop.f32.mrb[0].mxu0
  %3818 = vmatprep.mubr.f32.mxu0 0.0
  %3819 = vmatmul.mubr.f32.gmra.mrb[0].mxu0 %v1629
  %v3820 = vpop.f32.mrb[0].mxu0
  %v3821 = vadd.f32 0.0, %v3820
  %v3822 = vpop.f32.mrb[0].mxu0
  %3823 = vmatprep.mubr.f32.mxu0 0.0
  %3824 = vmatmul.mubr.f32.gmra.mrb[0].mxu0 %v1632
  %v3825 = vpop.f32.mrb[0].mxu0
  %v3826 = vadd.f32 0.0, %v3825
  %v3827 = vpop.f32.mrb[0].mxu0
  %3828 = vmatprep.mubr.f32.mxu0 0.0
  %3829 = vmatmul.mubr.f32.gmra.mrb[0].mxu0 %v1635
  %v3830 = vpop.f32.mrb[0].mxu0
  %v3831 = vadd.f32 0.0, %v3830
  %v3832 = vpop.f32.mrb[0].mxu0
  %3833 = vmatprep.mubr.f32.mxu0 0.0
  %3834 = vmatmul.mubr.f32.gmra.mrb[0].mxu0 %v1638
  %v3835 = vpop.f32.mrb[0].mxu0
  %v3836 = vadd.f32 0.0, %v3835
  %v3837 = vpop.f32.mrb[0].mxu0
  %3838 = vmatprep.mubr.f32.mxu0 0.0
  %3839 = vmatmul.mubr.f32.gmra.mrb[0].mxu0 %v1641
  %v3840 = vpop.f32.mrb[0].mxu0
  %v3841 = vadd.f32 0.0, %v3840
  %v3842 = vpop.f32.mrb[0].mxu0
  %3843 = vmatprep.mubr.f32.mxu0 0.0
  %3844 = vmatmul.mubr.f32.gmra.mrb[0].mxu0 %v1644
  %v3845 = vpop.f32.mrb[0].mxu0
  %v3846 = vadd.f32 0.0, %v3845
  %v3847 = vpop.f32.mrb[0].mxu0
  %3848 = vmatprep.mubr.f32.mxu0 0.0
  %3849 = vmatmul.mubr.f32.gmra.mrb[0].mxu0 %v1647
  %v3850 = vpop.f32.mrb[0].mxu0
  %v3851 = vadd.f32 0.0, %v3850
  %v3852 = vpop.f32.mrb[0].mxu0
  %3853 = vmatprep.mubr.f32.mxu0 0.0
  %3854 = vmatmul.mubr.f32.gmra.mrb[0].mxu0 %v1650
  %v3855 = vpop.f32.mrb[0].mxu0
  %v3856 = vadd.f32 0.0, %v3855
  %v3857 = vpop.f32.mrb[0].mxu0
  %3858 = vmatprep.mubr.f32.mxu0 0.0
  %3859 = vmatmul.mubr.f32.gmra.mrb[0].mxu0 %v1653
  %v3860 = vpop.f32.mrb[0].mxu0
  %v3861 = vadd.f32 0.0, %v3860
  %v3862 = vpop.f32.mrb[0].mxu0
  %3863 = vmatprep.mubr.f32.mxu0 0.0
  %3864 = vmatmul.mubr.f32.gmra.mrb[0].mxu0 %v1656
  %v3865 = vpop.f32.mrb[0].mxu0
  %v3866 = vadd.f32 0.0, %v3865
  %v3867 = vpop.f32.mrb[0].mxu0
  %3868 = vmatprep.mubr.f32.mxu0 0.0
  %3869 = vmatmul.mubr.f32.gmra.mrb[0].mxu0 %v1659
  %v3870 = vpop.f32.mrb[0].mxu0
  %v3871 = vadd.f32 0.0, %v3870
  %v3872 = vpop.f32.mrb[0].mxu0
  %3873 = vmatprep.mubr.f32.mxu0 0.0
  %3874 = vmatmul.mubr.f32.gmra.mrb[0].mxu0 %v1662
  %v3875 = vpop.f32.mrb[0].mxu0
  %v3876 = vadd.f32 0.0, %v3875
  %v3877 = vpop.f32.mrb[0].mxu0
  %3878 = vmatprep.mubr.f32.mxu0 0.0
  %3879 = vmatmul.mubr.f32.gmra.mrb[0].mxu0 %v1665
  %v3880 = vpop.f32.mrb[0].mxu0
  %v3881 = vadd.f32 0.0, %v3880
  %v3882 = vpop.f32.mrb[0].mxu0
  %3883 = vmatprep.mubr.f32.mxu0 0.0
  %3884 = vmatmul.mubr.f32.gmra.mrb[0].mxu0 %v1668
  %v3885 = vpop.f32.mrb[0].mxu0
  %v3886 = vadd.f32 0.0, %v3885
  %v3887 = vpop.f32.mrb[0].mxu0
  %3888 = vmatprep.mubr.f32.mxu0 0.0
  %3889 = vmatmul.mubr.f32.gmra.mrb[0].mxu0 %v1671
  %v3890 = vpop.f32.mrb[0].mxu0
  %v3891 = vadd.f32 0.0, %v3890
  %v3892 = vpop.f32.mrb[0].mxu0
  %3893 = vmatprep.mubr.f32.mxu0 0.0
  %3894 = vmatmul.mubr.f32.gmra.mrb[0].mxu0 %v1674
  %v3895 = vpop.f32.mrb[0].mxu0
  %v3896 = vadd.f32 0.0, %v3895
  %v3897 = vpop.f32.mrb[0].mxu0
  %3898 = vmatprep.mubr.f32.mxu0 0.0
  %3899 = vmatmul.mubr.f32.gmra.mrb[0].mxu0 %v1677
  %v3900 = vpop.f32.mrb[0].mxu0
  %v3901 = vadd.f32 0.0, %v3900
  %v3902 = vpop.f32.mrb[0].mxu0
  %3903 = vmatprep.mubr.f32.mxu0 0.0
  %3904 = vmatmul.mubr.f32.gmra.mrb[0].mxu0 %v1680
  %v3905 = vpop.f32.mrb[0].mxu0
  %v3906 = vadd.f32 0.0, %v3905
  %v3907 = vpop.f32.mrb[0].mxu0
  %3908 = vmatprep.mubr.f32.mxu0 0.0
  %3909 = vmatmul.mubr.f32.gmra.mrb[0].mxu0 %v1683
  %v3910 = vpop.f32.mrb[0].mxu0
  %v3911 = vadd.f32 0.0, %v3910
  %v3912 = vpop.f32.mrb[0].mxu0
  %3913 = vmatprep.mubr.f32.mxu0 0.0
  %3914 = vmatmul.mubr.f32.gmra.mrb[0].mxu0 %v1686
  %v3915 = vpop.f32.mrb[0].mxu0
  %v3916 = vadd.f32 0.0, %v3915
  %v3917 = vpop.f32.mrb[0].mxu0
  %3918 = vmatprep.mubr.f32.mxu0 0.0
  %3919 = vmatmul.mubr.f32.gmra.mrb[0].mxu0 %v1689
  %v3920 = vpop.f32.mrb[0].mxu0
  %v3921 = vadd.f32 0.0, %v3920
  %v3922 = vpop.f32.mrb[0].mxu0
  %3923 = vmatprep.mubr.f32.mxu0 0.0
  %3924 = vmatmul.mubr.f32.gmra.mrb[0].mxu0 %v1692
  %v3925 = vpop.f32.mrb[0].mxu0
  %v3926 = vadd.f32 0.0, %v3925
  %v3927 = vpop.f32.mrb[0].mxu0
  %3928 = vmatprep.mubr.f32.mxu0 0.0
  %3929 = vmatmul.mubr.f32.gmra.mrb[0].mxu0 %v1695
  %v3930 = vpop.f32.mrb[0].mxu0
  %v3931 = vadd.f32 0.0, %v3930
  %v3932 = vpop.f32.mrb[0].mxu0
  %3933 = vmatprep.mubr.f32.mxu0 0.0
  %3934 = vmatmul.mubr.f32.gmra.mrb[0].mxu0 %v1698
  %v3935 = vpop.f32.mrb[0].mxu0
  %v3936 = vadd.f32 0.0, %v3935
  %v3937 = vpop.f32.mrb[0].mxu0
  %3938 = vmatprep.mubr.f32.mxu0 0.0
  %3939 = vmatmul.mubr.f32.gmra.mrb[0].mxu0 %v1701
  %v3940 = vpop.f32.mrb[0].mxu0
  %v3941 = vadd.f32 0.0, %v3940
  %v3942 = vpop.f32.mrb[0].mxu0
  %3943 = vmatprep.mubr.f32.mxu0 0.0
  %3944 = vmatmul.mubr.f32.gmra.mrb[0].mxu0 %v1704
  %v3945 = vpop.f32.mrb[0].mxu0
  %v3946 = vadd.f32 0.0, %v3945
  %v3947 = vpop.f32.mrb[0].mxu0
  %3948 = vmatprep.mubr.f32.mxu0 0.0
  %3949 = vmatmul.mubr.f32.gmra.mrb[0].mxu0 %v1707
  %v3950 = vpop.f32.mrb[0].mxu0
  %v3951 = vadd.f32 0.0, %v3950
  %v3952 = vpop.f32.mrb[0].mxu0
  %3953 = vmatprep.mubr.f32.mxu0 0.0
  %3954 = vmatmul.mubr.f32.gmra.mrb[0].mxu0 %v1710
  %v3955 = vpop.f32.mrb[0].mxu0
  %v3956 = vadd.f32 0.0, %v3955
  %v3957 = vpop.f32.mrb[0].mxu0
  %3958 = vmatprep.mubr.f32.mxu0 0.0
  %3959 = vmatmul.mubr.f32.gmra.mrb[0].mxu0 %v1713
  %v3960 = vpop.f32.mrb[0].mxu0
  %v3961 = vadd.f32 0.0, %v3960
  %v3962 = vpop.f32.mrb[0].mxu0
  %3963 = vmatprep.mubr.f32.mxu0 0.0
  %3964 = vmatmul.mubr.f32.gmra.mrb[0].mxu0 %v1716
  %v3965 = vpop.f32.mrb[0].mxu0
  %v3966 = vadd.f32 0.0, %v3965
  %v3967 = vpop.f32.mrb[0].mxu0
  %3968 = vmatprep.mubr.f32.mxu0 0.0
  %3969 = vmatmul.mubr.f32.gmra.mrb[0].mxu0 %v1719
  %v3970 = vpop.f32.mrb[0].mxu0
  %v3971 = vadd.f32 0.0, %v3970
  %v3972 = vpop.f32.mrb[0].mxu0
  %3973 = vmatprep.mubr.f32.mxu0 0.0
  %3974 = vmatmul.mubr.f32.gmra.mrb[0].mxu0 %v1722
  %v3975 = vpop.f32.mrb[0].mxu0
  %v3976 = vadd.f32 0.0, %v3975
  %v3977 = vpop.f32.mrb[0].mxu0
  %3978 = vmatprep.mubr.f32.mxu0 0.0
  %3979 = vmatmul.mubr.f32.gmra.mrb[0].mxu0 %v1725
  %v3980 = vpop.f32.mrb[0].mxu0
  %v3981 = vadd.f32 0.0, %v3980
  %v3982 = vpop.f32.mrb[0].mxu0
  %3983 = vmatprep.mubr.f32.mxu0 0.0
  %3984 = vmatmul.mubr.f32.gmra.mrb[0].mxu0 %v1728
  %v3985 = vpop.f32.mrb[0].mxu0
  %v3986 = vadd.f32 0.0, %v3985
  %v3987 = vpop.f32.mrb[0].mxu0
  %3988 = vmatprep.mubr.f32.mxu0 0.0
  %3989 = vmatmul.mubr.f32.gmra.mrb[0].mxu0 %v1731
  %v3990 = vpop.f32.mrb[0].mxu0
  %v3991 = vadd.f32 0.0, %v3990
  %v3992 = vpop.f32.mrb[0].mxu0
  %3993 = vmatprep.mubr.f32.mxu0 0.0
  %3994 = vmatmul.mubr.f32.gmra.mrb[0].mxu0 %v1734
  %v3995 = vpop.f32.mrb[0].mxu0
  %v3996 = vadd.f32 0.0, %v3995
  %v3997 = vpop.f32.mrb[0].mxu0
  %3998 = vmatprep.mubr.f32.mxu0 0.0
  %3999 = vmatmul.mubr.f32.gmra.mrb[0].mxu0 %v1737
  %v4000 = vpop.f32.mrb[0].mxu0
  %v4001 = vadd.f32 0.0, %v4000
  %v4002 = vpop.f32.mrb[0].mxu0
  %4003 = vmatprep.mubr.f32.mxu0 0.0
  %4004 = vmatmul.mubr.f32.gmra.mrb[0].mxu0 %v1740
  %v4005 = vpop.f32.mrb[0].mxu0
  %v4006 = vadd.f32 0.0, %v4005
  %v4007 = vpop.f32.mrb[0].mxu0
  %4008 = vmatprep.mubr.f32.mxu0 0.0
  %4009 = vmatmul.mubr.f32.gmra.mrb[0].mxu0 %v1743
  %v4010 = vpop.f32.mrb[0].mxu0
  %v4011 = vadd.f32 0.0, %v4010
  %v4012 = vpop.f32.mrb[0].mxu0
  %4013 = vmatprep.mubr.f32.mxu0 0.0
  %4014 = vmatmul.mubr.f32.gmra.mrb[0].mxu0 %v1746
  %v4015 = vpop.f32.mrb[0].mxu0
  %v4016 = vadd.f32 0.0, %v4015
  %v4017 = vpop.f32.mrb[0].mxu0
  %4018 = vmatprep.mubr.f32.mxu0 0.0
  %4019 = vmatmul.mubr.f32.gmra.mrb[0].mxu0 %v1749
  %v4020 = vpop.f32.mrb[0].mxu0
  %v4021 = vadd.f32 0.0, %v4020
  %v4022 = vpop.f32.mrb[0].mxu0
  %4023 = vmatprep.mubr.f32.mxu0 0.0
  %4024 = vmatmul.mubr.f32.gmra.mrb[0].mxu0 %v1752
  %v4025 = vpop.f32.mrb[0].mxu0
  %v4026 = vadd.f32 0.0, %v4025
  %v4027 = vpop.f32.mrb[0].mxu0
  %4028 = vmatprep.mubr.f32.mxu0 0.0
  %4029 = vmatmul.mubr.f32.gmra.mrb[0].mxu0 %v1755
  %v4030 = vpop.f32.mrb[0].mxu0
  %v4031 = vadd.f32 0.0, %v4030
  %v4032 = vpop.f32.mrb[0].mxu0
  %4033 = vmatprep.mubr.f32.mxu0 0.0
  %4034 = vmatmul.mubr.f32.gmra.mrb[0].mxu0 %v1758
  %v4035 = vpop.f32.mrb[0].mxu0
  %v4036 = vadd.f32 0.0, %v4035
  %v4037 = vpop.f32.mrb[0].mxu0
  %4038 = vmatprep.mubr.f32.mxu0 0.0
  %4039 = vmatmul.mubr.f32.gmra.mrb[0].mxu0 %v1761
  %v4040 = vpop.f32.mrb[0].mxu0
  %v4041 = vadd.f32 0.0, %v4040
  %v4042 = vpop.f32.mrb[0].mxu0
  %4043 = vmatprep.mubr.f32.mxu0 0.0
  %4044 = vmatmul.mubr.f32.gmra.mrb[0].mxu0 %v1764
  %v4045 = vpop.f32.mrb[0].mxu0
  %v4046 = vadd.f32 0.0, %v4045
  %v4047 = vpop.f32.mrb[0].mxu0
  %4048 = vmatprep.mubr.f32.mxu0 0.0
  %4049 = vmatmul.mubr.f32.gmra.mrb[0].mxu0 %v1767
  %v4050 = vpop.f32.mrb[0].mxu0
  %v4051 = vadd.f32 0.0, %v4050
  %v4052 = vpop.f32.mrb[0].mxu0
  %4053 = vmatprep.mubr.f32.mxu0 0.0
  %4054 = vmatmul.mubr.f32.gmra.mrb[0].mxu0 %v1770
  %v4055 = vpop.f32.mrb[0].mxu0
  %v4056 = vadd.f32 0.0, %v4055
  %v4057 = vpop.f32.mrb[0].mxu0
  %4058 = vmatprep.mubr.f32.mxu0 0.0
  %4059 = vmatmul.mubr.f32.gmra.mrb[0].mxu0 %v1773
  %v4060 = vpop.f32.mrb[0].mxu0
  %v4061 = vadd.f32 0.0, %v4060
  %v4062 = vpop.f32.mrb[0].mxu0
  %4063 = vmatprep.mubr.f32.mxu0 0.0
  %4064 = vmatmul.mubr.f32.gmra.mrb[0].mxu0 %v1776
  %v4065 = vpop.f32.mrb[0].mxu0
  %v4066 = vadd.f32 0.0, %v4065
  %v4067 = vpop.f32.mrb[0].mxu0
  %4068 = vmatprep.mubr.f32.mxu0 0.0
  %4069 = vmatmul.mubr.f32.gmra.mrb[0].mxu0 %v1779
  %v4070 = vpop.f32.mrb[0].mxu0
  %v4071 = vadd.f32 0.0, %v4070
  %v4072 = vpop.f32.mrb[0].mxu0
  %4073 = vmatprep.mubr.f32.mxu0 0.0
  %4074 = vmatmul.mubr.f32.gmra.mrb[0].mxu0 %v1782
  %v4075 = vpop.f32.mrb[0].mxu0
  %v4076 = vadd.f32 0.0, %v4075
  %v4077 = vpop.f32.mrb[0].mxu0
  %4078 = vmatprep.mubr.f32.mxu0 0.0
  %4079 = vmatmul.mubr.f32.gmra.mrb[0].mxu0 %v1785
  %v4080 = vpop.f32.mrb[0].mxu0
  %v4081 = vadd.f32 0.0, %v4080
  %v4082 = vpop.f32.mrb[0].mxu0
  %4083 = vmatprep.mubr.f32.mxu0 0.0
  %4084 = vmatmul.mubr.f32.gmra.mrb[0].mxu0 %v1788
  %v4085 = vpop.f32.mrb[0].mxu0
  %v4086 = vadd.f32 0.0, %v4085
  %v4087 = vpop.f32.mrb[0].mxu0
  %4088 = vmatprep.mubr.f32.mxu0 0.0
  %4089 = vmatmul.mubr.f32.gmra.mrb[0].mxu0 %v1791
  %v4090 = vpop.f32.mrb[0].mxu0
  %v4091 = vadd.f32 0.0, %v4090
  %v4092 = vpop.f32.mrb[0].mxu0
  %4093 = vmatprep.mubr.f32.mxu0 0.0
  %4094 = vmatmul.mubr.f32.gmra.mrb[0].mxu0 %v1794
  %v4095 = vpop.f32.mrb[0].mxu0
  %v4096 = vadd.f32 0.0, %v4095
  %v4097 = vpop.f32.mrb[0].mxu0
  %4098 = vmatprep.mubr.f32.mxu0 0.0
  %4099 = vmatmul.mubr.f32.gmra.mrb[0].mxu0 %v1797
  %v4100 = vpop.f32.mrb[0].mxu0
  %v4101 = vadd.f32 0.0, %v4100
  %v4102 = vpop.f32.mrb[0].mxu0
  %4103 = vmatprep.mubr.f32.mxu0 0.0
  %4104 = vmatmul.mubr.f32.gmra.mrb[0].mxu0 %v1800
  %v4105 = vpop.f32.mrb[0].mxu0
  %v4106 = vadd.f32 0.0, %v4105
  %v4107 = vpop.f32.mrb[0].mxu0
  %4108 = vmatprep.mubr.f32.mxu0 0.0
  %4109 = vmatmul.mubr.f32.gmra.mrb[0].mxu0 %v1803
  %v4110 = vpop.f32.mrb[0].mxu0
  %v4111 = vadd.f32 0.0, %v4110
  %v4112 = vpop.f32.mrb[0].mxu0
  %4113 = vmatprep.mubr.f32.mxu0 0.0
  %4114 = vmatmul.mubr.f32.gmra.mrb[0].mxu0 %v1806
  %v4115 = vpop.f32.mrb[0].mxu0
  %v4116 = vadd.f32 0.0, %v4115
  %v4117 = vpop.f32.mrb[0].mxu0
  %4118 = vmatprep.mubr.f32.mxu0 0.0
  %4119 = vmatmul.mubr.f32.gmra.mrb[0].mxu0 %v1809
  %v4120 = vpop.f32.mrb[0].mxu0
  %v4121 = vadd.f32 0.0, %v4120
  %v4122 = vpop.f32.mrb[0].mxu0
  %4123 = vmatprep.mubr.f32.mxu0 0.0
  %4124 = vmatmul.mubr.f32.gmra.mrb[0].mxu0 %v1812
  %v4125 = vpop.f32.mrb[0].mxu0
  %v4126 = vadd.f32 0.0, %v4125
  %v4127 = vpop.f32.mrb[0].mxu0
  %4128 = vmatprep.mubr.f32.mxu0 0.0
  %4129 = vmatmul.mubr.f32.gmra.mrb[0].mxu0 %v1815
  %v4130 = vpop.f32.mrb[0].mxu0
  %v4131 = vadd.f32 0.0, %v4130
  %v4132 = vpop.f32.mrb[0].mxu0
  %4133 = vmatprep.mubr.f32.mxu0 0.0
  %4134 = vmatmul.mubr.f32.gmra.mrb[0].mxu0 %v1818
  %v4135 = vpop.f32.mrb[0].mxu0
  %v4136 = vadd.f32 0.0, %v4135
  %v4137 = vpop.f32.mrb[0].mxu0
  %4138 = vmatprep.mubr.f32.mxu0 0.0
  %4139 = vmatmul.mubr.f32.gmra.mrb[0].mxu0 %v1821
  %v4140 = vpop.f32.mrb[0].mxu0
  %v4141 = vadd.f32 0.0, %v4140
  %v4142 = vpop.f32.mrb[0].mxu0
  %4143 = vmatprep.mubr.f32.mxu0 0.0
  %4144 = vmatmul.mubr.f32.gmra.mrb[0].mxu0 %v1824
  %v4145 = vpop.f32.mrb[0].mxu0
  %v4146 = vadd.f32 0.0, %v4145
  %v4147 = vpop.f32.mrb[0].mxu0
  %4148 = vmatprep.mubr.f32.mxu0 0.0
  %4149 = vmatmul.mubr.f32.gmra.mrb[0].mxu0 %v1827
  %v4150 = vpop.f32.mrb[0].mxu0
  %v4151 = vadd.f32 0.0, %v4150
  %v4152 = vpop.f32.mrb[0].mxu0
  %4153 = vmatprep.mubr.f32.mxu0 0.0
  %4154 = vmatmul.mubr.f32.gmra.mrb[0].mxu0 %v1830
  %v4155 = vpop.f32.mrb[0].mxu0
  %v4156 = vadd.f32 0.0, %v4155
  %v4157 = vpop.f32.mrb[0].mxu0
  %4158 = vmatprep.mubr.f32.mxu0 0.0
  %4159 = vmatmul.mubr.f32.gmra.mrb[0].mxu0 %v1833
  %v4160 = vpop.f32.mrb[0].mxu0
  %v4161 = vadd.f32 0.0, %v4160
  %v4162 = vpop.f32.mrb[0].mxu0
  %4163 = vmatprep.mubr.f32.mxu0 0.0
  %4164 = vmatmul.mubr.f32.gmra.mrb[0].mxu0 %v1836
  %v4165 = vpop.f32.mrb[0].mxu0
  %v4166 = vadd.f32 0.0, %v4165
  %v4167 = vpop.f32.mrb[0].mxu0
  %4168 = vmatprep.mubr.f32.mxu0 0.0
  %4169 = vmatmul.mubr.f32.gmra.mrb[0].mxu0 %v1839
  %v4170 = vpop.f32.mrb[0].mxu0
  %v4171 = vadd.f32 0.0, %v4170
  %v4172 = vpop.f32.mrb[0].mxu0
  %4173 = vmatprep.mubr.f32.mxu0 0.0
  %4174 = vmatmul.mubr.f32.gmra.mrb[0].mxu0 %v1842
  %v4175 = vpop.f32.mrb[0].mxu0
  %v4176 = vadd.f32 0.0, %v4175
  %v4177 = vpop.f32.mrb[0].mxu0
  %4178 = vmatprep.mubr.f32.mxu0 0.0
  %4179 = vmatmul.mubr.f32.gmra.mrb[0].mxu0 %v1845
  %v4180 = vpop.f32.mrb[0].mxu0
  %v4181 = vadd.f32 0.0, %v4180
  %v4182 = vpop.f32.mrb[0].mxu0
  %4183 = vmatprep.mubr.f32.mxu0 0.0
  %4184 = vmatmul.mubr.f32.gmra.mrb[0].mxu0 %v1848
  %v4185 = vpop.f32.mrb[0].mxu0
  %v4186 = vadd.f32 0.0, %v4185
  %v4187 = vpop.f32.mrb[0].mxu0
  %4188 = vmatprep.mubr.f32.mxu0 0.0
  %4189 = vmatmul.mubr.f32.gmra.mrb[0].mxu0 %v1851
  %v4190 = vpop.f32.mrb[0].mxu0
  %v4191 = vadd.f32 0.0, %v4190
  %v4192 = vpop.f32.mrb[0].mxu0
  %4193 = vmatprep.mubr.f32.mxu0 0.0
  %4194 = vmatmul.mubr.f32.gmra.mrb[0].mxu0 %v1854
  %v4195 = vpop.f32.mrb[0].mxu0
  %v4196 = vadd.f32 0.0, %v4195
  %v4197 = vpop.f32.mrb[0].mxu0
  %4198 = vmatprep.mubr.f32.mxu0 0.0
  %4199 = vmatmul.mubr.f32.gmra.mrb[0].mxu0 %v1857
  %v4200 = vpop.f32.mrb[0].mxu0
  %v4201 = vadd.f32 0.0, %v4200
  %v4202 = vpop.f32.mrb[0].mxu0
  %4203 = vmatprep.mubr.f32.mxu0 0.0
  %4204 = vmatmul.mubr.f32.gmra.mrb[0].mxu0 %v1860
  %v4205 = vpop.f32.mrb[0].mxu0
  %v4206 = vadd.f32 0.0, %v4205
  %v4207 = vpop.f32.mrb[0].mxu0
  %4208 = vmatprep.mubr.f32.mxu0 0.0
  %4209 = vmatmul.mubr.f32.gmra.mrb[0].mxu0 %v1863
  %v4210 = vpop.f32.mrb[0].mxu0
  %v4211 = vadd.f32 0.0, %v4210
  %v4212 = vpop.f32.mrb[0].mxu0
  %4213 = vmatprep.mubr.f32.mxu0 0.0
  %4214 = vmatmul.mubr.f32.gmra.mrb[0].mxu0 %v1866
  %v4215 = vpop.f32.mrb[0].mxu0
  %v4216 = vadd.f32 0.0, %v4215
  %v4217 = vpop.f32.mrb[0].mxu0
  %4218 = vmatprep.mubr.f32.mxu0 0.0
  %4219 = vmatmul.mubr.f32.gmra.mrb[0].mxu0 %v1869
  %v4220 = vpop.f32.mrb[0].mxu0
  %v4221 = vadd.f32 0.0, %v4220
  %v4222 = vpop.f32.mrb[0].mxu0
  %4223 = vmatprep.mubr.f32.mxu0 0.0
  %4224 = vmatmul.mubr.f32.gmra.mrb[0].mxu0 %v1872
  %v4225 = vpop.f32.mrb[0].mxu0
  %v4226 = vadd.f32 0.0, %v4225
  %v4227 = vpop.f32.mrb[0].mxu0
  %4228 = vmatprep.mubr.f32.mxu0 0.0
  %4229 = vmatmul.mubr.f32.gmra.mrb[0].mxu0 %v1875
  %v4230 = vpop.f32.mrb[0].mxu0
  %v4231 = vadd.f32 0.0, %v4230
  %v4232 = vpop.f32.mrb[0].mxu0
  %4233 = vmatprep.mubr.f32.mxu0 0.0
  %4234 = vmatmul.mubr.f32.gmra.mrb[0].mxu0 %v1878
  %v4235 = vpop.f32.mrb[0].mxu0
  %v4236 = vadd.f32 0.0, %v4235
  %v4237 = vpop.f32.mrb[0].mxu0
  %4238 = vmatprep.mubr.f32.mxu0 0.0
  %4239 = vmatmul.mubr.f32.gmra.mrb[0].mxu0 %v1881
  %v4240 = vpop.f32.mrb[0].mxu0
  %v4241 = vadd.f32 0.0, %v4240
  %v4242 = vpop.f32.mrb[0].mxu0
  %4243 = vmatprep.mubr.f32.mxu0 0.0
  %4244 = vmatmul.mubr.f32.gmra.mrb[0].mxu0 %v1884
  %v4245 = vpop.f32.mrb[0].mxu0
  %v4246 = vadd.f32 0.0, %v4245
  %v4247 = vpop.f32.mrb[0].mxu0
  %4248 = vmatprep.mubr.f32.mxu0 0.0
  %4249 = vmatmul.mubr.f32.gmra.mrb[0].mxu0 %v1887
  %v4250 = vpop.f32.mrb[0].mxu0
  %v4251 = vadd.f32 0.0, %v4250
  %v4252 = vpop.f32.mrb[0].mxu0
  %4253 = vmatprep.mubr.f32.mxu0 0.0
  %4254 = vmatmul.mubr.f32.gmra.mrb[0].mxu0 %v1890
  %v4255 = vpop.f32.mrb[0].mxu0
  %v4256 = vadd.f32 0.0, %v4255
  %v4257 = vpop.f32.mrb[0].mxu0
  %4258 = vmatprep.mubr.f32.mxu0 0.0
  %4259 = vmatmul.mubr.f32.gmra.mrb[0].mxu0 %v1893
  %v4260 = vpop.f32.mrb[0].mxu0
  %v4261 = vadd.f32 0.0, %v4260
  %v4262 = vpop.f32.mrb[0].mxu0
  %4263 = vmatprep.mubr.f32.mxu0 0.0
  %4264 = vmatmul.mubr.f32.gmra.mrb[0].mxu0 %v1896
  %v4265 = vpop.f32.mrb[0].mxu0
  %v4266 = vadd.f32 0.0, %v4265
  %v4267 = vpop.f32.mrb[0].mxu0
  %4268 = vmatprep.mubr.f32.mxu0 0.0
  %4269 = vmatmul.mubr.f32.gmra.mrb[0].mxu0 %v1899
  %v4270 = vpop.f32.mrb[0].mxu0
  %v4271 = vadd.f32 0.0, %v4270
  %v4272 = vpop.f32.mrb[0].mxu0
  %4273 = vmatprep.mubr.f32.mxu0 0.0
  %4274 = vmatmul.mubr.f32.gmra.mrb[0].mxu0 %v1902
  %v4275 = vpop.f32.mrb[0].mxu0
  %v4276 = vadd.f32 0.0, %v4275
  %v4277 = vpop.f32.mrb[0].mxu0
  %4278 = vmatprep.mubr.f32.mxu0 0.0
  %4279 = vmatmul.mubr.f32.gmra.mrb[0].mxu0 %v1905
  %v4280 = vpop.f32.mrb[0].mxu0
  %v4281 = vadd.f32 0.0, %v4280
  %v4282 = vpop.f32.mrb[0].mxu0
  %4283 = vmatprep.mubr.f32.mxu0 0.0
  %4284 = vmatmul.mubr.f32.gmra.mrb[0].mxu0 %v1908
  %v4285 = vpop.f32.mrb[0].mxu0
  %v4286 = vadd.f32 0.0, %v4285
  %v4287 = vpop.f32.mrb[0].mxu0
  %4288 = vmatprep.mubr.f32.mxu0 0.0
  %4289 = vmatmul.mubr.f32.gmra.mrb[0].mxu0 %v1911
  %v4290 = vpop.f32.mrb[0].mxu0
  %v4291 = vadd.f32 0.0, %v4290
  %v4292 = vpop.f32.mrb[0].mxu0
  %4293 = vmatprep.mubr.f32.mxu0 0.0
  %4294 = vmatmul.mubr.f32.gmra.mrb[0].mxu0 %v1914
  %v4295 = vpop.f32.mrb[0].mxu0
  %v4296 = vadd.f32 0.0, %v4295
  %v4297 = vpop.f32.mrb[0].mxu0
  %4298 = vmatprep.mubr.f32.mxu0 0.0
  %4299 = vmatmul.mubr.f32.gmra.mrb[0].mxu0 %v1917
  %v4300 = vpop.f32.mrb[0].mxu0
  %v4301 = vadd.f32 0.0, %v4300
  %v4302 = vpop.f32.mrb[0].mxu0
  %4303 = vmatprep.mubr.f32.mxu0 0.0
  %4304 = vmatmul.mubr.f32.gmra.mrb[0].mxu0 %v1920
  %v4305 = vpop.f32.mrb[0].mxu0
  %v4306 = vadd.f32 0.0, %v4305
  %v4307 = vpop.f32.mrb[0].mxu0
  %4308 = vmatprep.mubr.f32.mxu0 0.0
  %4309 = vmatmul.mubr.f32.gmra.mrb[0].mxu0 %v1923
  %v4310 = vpop.f32.mrb[0].mxu0
  %v4311 = vadd.f32 0.0, %v4310
  %v4312 = vpop.f32.mrb[0].mxu0
  %4313 = vmatprep.mubr.f32.mxu0 0.0
  %4314 = vmatmul.mubr.f32.gmra.mrb[0].mxu0 %v1926
  %v4315 = vpop.f32.mrb[0].mxu0
  %v4316 = vadd.f32 0.0, %v4315
  %v4317 = vpop.f32.mrb[0].mxu0
  %4318 = vmatprep.mubr.f32.mxu0 0.0
  %4319 = vmatmul.mubr.f32.gmra.mrb[0].mxu0 %v1929
  %v4320 = vpop.f32.mrb[0].mxu0
  %v4321 = vadd.f32 0.0, %v4320
  %v4322 = vpop.f32.mrb[0].mxu0
  %4323 = vmatprep.mubr.f32.mxu0 0.0
  %4324 = vmatmul.mubr.f32.gmra.mrb[0].mxu0 %v1932
  %v4325 = vpop.f32.mrb[0].mxu0
  %v4326 = vadd.f32 0.0, %v4325
  %v4327 = vpop.f32.mrb[0].mxu0
  %4328 = vmatprep.mubr.f32.mxu0 0.0
  %4329 = vmatmul.mubr.f32.gmra.mrb[0].mxu0 %v1935
  %v4330 = vpop.f32.mrb[0].mxu0
  %v4331 = vadd.f32 0.0, %v4330
  %v4332 = vpop.f32.mrb[0].mxu0
  %4333 = vmatprep.mubr.f32.mxu0 0.0
  %4334 = vmatmul.mubr.f32.gmra.mrb[0].mxu0 %v1938
  %v4335 = vpop.f32.mrb[0].mxu0
  %v4336 = vadd.f32 0.0, %v4335
  %v4337 = vpop.f32.mrb[0].mxu0
  %4338 = vmatprep.mubr.f32.mxu0 0.0
  %4339 = vmatmul.mubr.f32.gmra.mrb[0].mxu0 %v1941
  %v4340 = vpop.f32.mrb[0].mxu0
  %v4341 = vadd.f32 0.0, %v4340
  %v4342 = vpop.f32.mrb[0].mxu0
  %4343 = vmatprep.mubr.f32.mxu0 0.0
  %4344 = vmatmul.mubr.f32.gmra.mrb[0].mxu0 %v1944
  %v4345 = vpop.f32.mrb[0].mxu0
  %v4346 = vadd.f32 0.0, %v4345
  %v4347 = vpop.f32.mrb[0].mxu0
  %4348 = vmatprep.mubr.f32.mxu0 0.0
  %4349 = vmatmul.mubr.f32.gmra.mrb[0].mxu0 %v1947
  %v4350 = vpop.f32.mrb[0].mxu0
  %v4351 = vadd.f32 0.0, %v4350
  %v4352 = vpop.f32.mrb[0].mxu0
  %4353 = vmatprep.mubr.f32.mxu0 0.0
  %4354 = vmatmul.mubr.f32.gmra.mrb[0].mxu0 %v1950
  %v4355 = vpop.f32.mrb[0].mxu0
  %v4356 = vadd.f32 0.0, %v4355
  %v4357 = vpop.f32.mrb[0].mxu0
  %4358 = vmatprep.mubr.f32.mxu0 0.0
  %4359 = vmatmul.mubr.f32.gmra.mrb[0].mxu0 %v1953
  %v4360 = vpop.f32.mrb[0].mxu0
  %v4361 = vadd.f32 0.0, %v4360
  %v4362 = vpop.f32.mrb[0].mxu0
  %4363 = vmatprep.mubr.f32.mxu0 0.0
  %4364 = vmatmul.mubr.f32.gmra.mrb[0].mxu0 %v1956
  %v4365 = vpop.f32.mrb[0].mxu0
  %v4366 = vadd.f32 0.0, %v4365
  %v4367 = vpop.f32.mrb[0].mxu0
  %4368 = vmatprep.mubr.f32.mxu0 0.0
  %4369 = vmatmul.mubr.f32.gmra.mrb[0].mxu0 %v1959
  %v4370 = vpop.f32.mrb[0].mxu0
  %v4371 = vadd.f32 0.0, %v4370
  %v4372 = vpop.f32.mrb[0].mxu0
  %4373 = vmatprep.mubr.f32.mxu0 0.0
  %4374 = vmatmul.mubr.f32.gmra.mrb[0].mxu0 %v1962
  %v4375 = vpop.f32.mrb[0].mxu0
  %v4376 = vadd.f32 0.0, %v4375
  %v4377 = vpop.f32.mrb[0].mxu0
  %4378 = vmatprep.mubr.f32.mxu0 0.0
  %4379 = vmatmul.mubr.f32.gmra.mrb[0].mxu0 %v1965
  %v4380 = vpop.f32.mrb[0].mxu0
  %v4381 = vadd.f32 0.0, %v4380
  %v4382 = vpop.f32.mrb[0].mxu0
  %4383 = vmatprep.mubr.f32.mxu0 0.0
  %4384 = vmatmul.mubr.f32.gmra.mrb[0].mxu0 %v1968
  %v4385 = vpop.f32.mrb[0].mxu0
  %v4386 = vadd.f32 0.0, %v4385
  %v4387 = vpop.f32.mrb[0].mxu0
  %4388 = vmatprep.mubr.f32.mxu0 0.0
  %4389 = vmatmul.mubr.f32.gmra.mrb[0].mxu0 %v1971
  %v4390 = vpop.f32.mrb[0].mxu0
  %v4391 = vadd.f32 0.0, %v4390
  %v4392 = vpop.f32.mrb[0].mxu0
  %4393 = vmatprep.mubr.f32.mxu0 0.0
  %4394 = vmatmul.mubr.f32.gmra.mrb[0].mxu0 %v1974
  %v4395 = vpop.f32.mrb[0].mxu0
  %v4396 = vadd.f32 0.0, %v4395
  %v4397 = vpop.f32.mrb[0].mxu0
  %4398 = vmatprep.mubr.f32.mxu0 0.0
  %4399 = vmatmul.mubr.f32.gmra.mrb[0].mxu0 %v1977
  %v4400 = vpop.f32.mrb[0].mxu0
  %v4401 = vadd.f32 0.0, %v4400
  %v4402 = vpop.f32.mrb[0].mxu0
  %4403 = vmatprep.mubr.f32.mxu0 0.0
  %4404 = vmatmul.mubr.f32.gmra.mrb[0].mxu0 %v1980
  %v4405 = vpop.f32.mrb[0].mxu0
  %v4406 = vadd.f32 0.0, %v4405
  %v4407 = vpop.f32.mrb[0].mxu0
  %4408 = vmatprep.mubr.f32.mxu0 0.0
  %4409 = vmatmul.mubr.f32.gmra.mrb[0].mxu0 %v1983
  %v4410 = vpop.f32.mrb[0].mxu0
  %v4411 = vadd.f32 0.0, %v4410
  %v4412 = vpop.f32.mrb[0].mxu0
  %4413 = vmatprep.mubr.f32.mxu0 0.0
  %4414 = vmatmul.mubr.f32.gmra.mrb[0].mxu0 %v1986
  %v4415 = vpop.f32.mrb[0].mxu0
  %v4416 = vadd.f32 0.0, %v4415
  %v4417 = vpop.f32.mrb[0].mxu0
  %4418 = vmatprep.mubr.f32.mxu0 0.0
  %4419 = vmatmul.mubr.f32.gmra.mrb[0].mxu0 %v1989
  %v4420 = vpop.f32.mrb[0].mxu0
  %v4421 = vadd.f32 0.0, %v4420
  %v4422 = vpop.f32.mrb[0].mxu0
  %4423 = vmatprep.mubr.f32.mxu0 0.0
  %4424 = vmatmul.mubr.f32.gmra.mrb[0].mxu0 %v1992
  %v4425 = vpop.f32.mrb[0].mxu0
  %v4426 = vadd.f32 0.0, %v4425
  %v4427 = vpop.f32.mrb[0].mxu0
  %4428 = vmatprep.mubr.f32.mxu0 0.0
  %4429 = vmatmul.mubr.f32.gmra.mrb[0].mxu0 %v1995
  %v4430 = vpop.f32.mrb[0].mxu0
  %v4431 = vadd.f32 0.0, %v4430
  %v4432 = vpop.f32.mrb[0].mxu0
  %4433 = vmatprep.mubr.f32.mxu0 0.0
  %4434 = vmatmul.mubr.f32.gmra.mrb[0].mxu0 %v1998
  %v4435 = vpop.f32.mrb[0].mxu0
  %v4436 = vadd.f32 0.0, %v4435
  %v4437 = vpop.f32.mrb[0].mxu0
  %4438 = vmatprep.mubr.f32.mxu0 0.0
  %4439 = vmatmul.mubr.f32.gmra.mrb[0].mxu0 %v2001
  %v4440 = vpop.f32.mrb[0].mxu0
  %v4441 = vadd.f32 0.0, %v4440
  %v4442 = vpop.f32.mrb[0].mxu0
  %4443 = vmatprep.mubr.f32.mxu0 0.0
  %4444 = vmatmul.mubr.f32.gmra.mrb[0].mxu0 %v2004
  %v4445 = vpop.f32.mrb[0].mxu0
  %v4446 = vadd.f32 0.0, %v4445
  %v4447 = vpop.f32.mrb[0].mxu0
  %4448 = vmatprep.mubr.f32.mxu0 0.0
  %4449 = vmatmul.mubr.f32.gmra.mrb[0].mxu0 %v2007
  %v4450 = vpop.f32.mrb[0].mxu0
  %v4451 = vadd.f32 0.0, %v4450
  %v4452 = vpop.f32.mrb[0].mxu0
  %4453 = vmatprep.mubr.f32.mxu0 0.0
  %4454 = vmatmul.mubr.f32.gmra.mrb[0].mxu0 %v2010
  %v4455 = vpop.f32.mrb[0].mxu0
  %v4456 = vadd.f32 0.0, %v4455
  %v4457 = vpop.f32.mrb[0].mxu0
  %4458 = vmatprep.mubr.f32.mxu0 0.0
  %4459 = vmatmul.mubr.f32.gmra.mrb[0].mxu0 %v2013
  %v4460 = vpop.f32.mrb[0].mxu0
  %v4461 = vadd.f32 0.0, %v4460
  %v4462 = vpop.f32.mrb[0].mxu0
  %4463 = vmatprep.mubr.f32.mxu0 0.0
  %4464 = vmatmul.mubr.f32.gmra.mrb[0].mxu0 %v2016
  %v4465 = vpop.f32.mrb[0].mxu0
  %v4466 = vadd.f32 0.0, %v4465
  %v4467 = vpop.f32.mrb[0].mxu0
  %4468 = vmatprep.mubr.f32.mxu0 0.0
  %4469 = vmatmul.mubr.f32.gmra.mrb[0].mxu0 %v2019
  %v4470 = vpop.f32.mrb[0].mxu0
  %v4471 = vadd.f32 0.0, %v4470
  %v4472 = vpop.f32.mrb[0].mxu0
  %4473 = vmatprep.mubr.f32.mxu0 0.0
  %4474 = vmatmul.mubr.f32.gmra.mrb[0].mxu0 %v2022
  %v4475 = vpop.f32.mrb[0].mxu0
  %v4476 = vadd.f32 0.0, %v4475
  %v4477 = vpop.f32.mrb[0].mxu0
  %4478 = vmatprep.mubr.f32.mxu0 0.0
  %4479 = vmatmul.mubr.f32.gmra.mrb[0].mxu0 %v2025
  %v4480 = vpop.f32.mrb[0].mxu0
  %v4481 = vadd.f32 0.0, %v4480
  %v4482 = vpop.f32.mrb[0].mxu0
  %4483 = vmatprep.mubr.f32.mxu0 0.0
  %4484 = vmatmul.mubr.f32.gmra.mrb[0].mxu0 %v2028
  %v4485 = vpop.f32.mrb[0].mxu0
  %v4486 = vadd.f32 0.0, %v4485
  %v4487 = vpop.f32.mrb[0].mxu0
  %4488 = vmatprep.mubr.f32.mxu0 0.0
  %4489 = vmatmul.mubr.f32.gmra.mrb[0].mxu0 %v2031
  %v4490 = vpop.f32.mrb[0].mxu0
  %v4491 = vadd.f32 0.0, %v4490
  %v4492 = vpop.f32.mrb[0].mxu0
  %4493 = vmatprep.mubr.f32.mxu0 0.0
  %4494 = vmatmul.mubr.f32.gmra.mrb[0].mxu0 %v2034
  %v4495 = vpop.f32.mrb[0].mxu0
  %v4496 = vadd.f32 0.0, %v4495
  %v4497 = vpop.f32.mrb[0].mxu0
  %4498 = vmatprep.mubr.f32.mxu0 0.0
  %4499 = vmatmul.mubr.f32.gmra.mrb[0].mxu0 %v2037
  %v4500 = vpop.f32.mrb[0].mxu0
  %v4501 = vadd.f32 0.0, %v4500
  %v4502 = vpop.f32.mrb[0].mxu0
  %4503 = vmatprep.mubr.f32.mxu0 0.0
  %4504 = vmatmul.mubr.f32.gmra.mrb[0].mxu0 %v2040
  %v4505 = vpop.f32.mrb[0].mxu0
  %v4506 = vadd.f32 0.0, %v4505
  %v4507 = vpop.f32.mrb[0].mxu0
  %4508 = vmatprep.mubr.f32.mxu0 0.0
  %4509 = vmatmul.mubr.f32.gmra.mrb[0].mxu0 %v2043
  %v4510 = vpop.f32.mrb[0].mxu0
  %v4511 = vadd.f32 0.0, %v4510
  %v4512 = vpop.f32.mrb[0].mxu0
  %4513 = vmatprep.mubr.f32.mxu0 0.0
  %4514 = vmatmul.mubr.f32.gmra.mrb[0].mxu0 %v2046
  %v4515 = vpop.f32.mrb[0].mxu0
  %v4516 = vadd.f32 0.0, %v4515
  %v4517 = vpop.f32.mrb[0].mxu0
  %4518 = vmatprep.mubr.f32.mxu0 0.0
  %4519 = vmatmul.mubr.f32.gmra.mrb[0].mxu0 %v2049
  %v4520 = vpop.f32.mrb[0].mxu0
  %v4521 = vadd.f32 0.0, %v4520
  %v4522 = vpop.f32.mrb[0].mxu0
  %4523 = vmatprep.mubr.f32.mxu0 0.0
  %4524 = vmatmul.mubr.f32.gmra.mrb[0].mxu0 %v2052
  %v4525 = vpop.f32.mrb[0].mxu0
  %v4526 = vadd.f32 0.0, %v4525
  %v4527 = vpop.f32.mrb[0].mxu0
  %4528 = vmatprep.mubr.f32.mxu0 0.0
  %4529 = vmatmul.mubr.f32.gmra.mrb[0].mxu0 %v2055
  %v4530 = vpop.f32.mrb[0].mxu0
  %v4531 = vadd.f32 0.0, %v4530
  %v4532 = vpop.f32.mrb[0].mxu0
  %4533 = vmatprep.mubr.f32.mxu0 0.0
  %4534 = vmatmul.mubr.f32.gmra.mrb[0].mxu0 %v2058
  %v4535 = vpop.f32.mrb[0].mxu0
  %v4536 = vadd.f32 0.0, %v4535
  %v4537 = vpop.f32.mrb[0].mxu0
  %4538 = vmatprep.mubr.f32.mxu0 0.0
  %4539 = vmatmul.mubr.f32.gmra.mrb[0].mxu0 %v2061
  %v4540 = vpop.f32.mrb[0].mxu0
  %v4541 = vadd.f32 0.0, %v4540
  %v4542 = vpop.f32.mrb[0].mxu0
  %4543 = vmatprep.mubr.f32.mxu0 0.0
  %4544 = vmatmul.mubr.f32.gmra.mrb[0].mxu0 %v2064
  %v4545 = vpop.f32.mrb[0].mxu0
  %v4546 = vadd.f32 0.0, %v4545
  %v4547 = vpop.f32.mrb[0].mxu0
  %4548 = vmatprep.mubr.f32.mxu0 0.0
  %4549 = vmatmul.mubr.f32.gmra.mrb[0].mxu0 %v2067
  %v4550 = vpop.f32.mrb[0].mxu0
  %v4551 = vadd.f32 0.0, %v4550
  %v4552 = vpop.f32.mrb[0].mxu0
  %4553 = vmatprep.mubr.f32.mxu0 0.0
  %4554 = vmatmul.mubr.f32.gmra.mrb[0].mxu0 %v2070
  %v4555 = vpop.f32.mrb[0].mxu0
  %v4556 = vadd.f32 0.0, %v4555
  %v4557 = vpop.f32.mrb[0].mxu0
  %4558 = vmatprep.mubr.f32.mxu0 0.0
  %4559 = vmatmul.mubr.f32.gmra.mrb[0].mxu0 %v2073
  %v4560 = vpop.f32.mrb[0].mxu0
  %v4561 = vadd.f32 0.0, %v4560
  %v4562 = vpop.f32.mrb[0].mxu0
  %4563 = vmatprep.mubr.f32.mxu0 0.0
  %4564 = vmatmul.mubr.f32.gmra.mrb[0].mxu0 %v2076
  %v4565 = vpop.f32.mrb[0].mxu0
  %v4566 = vadd.f32 0.0, %v4565
  %v4567 = vpop.f32.mrb[0].mxu0
  %4568 = vmatprep.mubr.f32.mxu0 0.0
  %4569 = vmatmul.mubr.f32.gmra.mrb[0].mxu0 %v2079
  %v4570 = vpop.f32.mrb[0].mxu0
  %v4571 = vadd.f32 0.0, %v4570
  %v4572 = vpop.f32.mrb[0].mxu0
  %4573 = vmatprep.mubr.f32.mxu0 0.0
  %4574 = vmatmul.mubr.f32.gmra.mrb[0].mxu0 %v2082
  %v4575 = vpop.f32.mrb[0].mxu0
  %v4576 = vadd.f32 0.0, %v4575
  %v4577 = vpop.f32.mrb[0].mxu0
  %4578 = vmatprep.mubr.f32.mxu0 0.0
  %4579 = vmatmul.mubr.f32.gmra.mrb[0].mxu0 %v2085
  %v4580 = vpop.f32.mrb[0].mxu0
  %v4581 = vadd.f32 0.0, %v4580
  %v4582 = vpop.f32.mrb[0].mxu0
  %4583 = vmatprep.mubr.f32.mxu0 0.0
  %4584 = vmatmul.mubr.f32.gmra.mrb[0].mxu0 %v2088
  %v4585 = vpop.f32.mrb[0].mxu0
  %v4586 = vadd.f32 0.0, %v4585
  %v4587 = vpop.f32.mrb[0].mxu0
  %4588 = vmatprep.mubr.f32.mxu0 0.0
  %4589 = vmatmul.mubr.f32.gmra.mrb[0].mxu0 %v2091
  %v4590 = vpop.f32.mrb[0].mxu0
  %v4591 = vadd.f32 0.0, %v4590
  %v4592 = vpop.f32.mrb[0].mxu0
  %4593 = vmatprep.mubr.f32.mxu0 0.0
  %4594 = vmatmul.mubr.f32.gmra.mrb[0].mxu0 %v2094
  %v4595 = vpop.f32.mrb[0].mxu0
  %v4596 = vadd.f32 0.0, %v4595
  %v4597 = vpop.f32.mrb[0].mxu0
  %4598 = vmatprep.mubr.f32.mxu0 0.0
  %4599 = vmatmul.mubr.f32.gmra.mrb[0].mxu0 %v2097
  %v4600 = vpop.f32.mrb[0].mxu0
  %v4601 = vadd.f32 0.0, %v4600
  %v4602 = vpop.f32.mrb[0].mxu0
  %4603 = vmatprep.mubr.f32.mxu0 0.0
  %4604 = vmatmul.mubr.f32.gmra.mrb[0].mxu0 %v2100
  %v4605 = vpop.f32.mrb[0].mxu0
  %v4606 = vadd.f32 0.0, %v4605
  %v4607 = vpop.f32.mrb[0].mxu0
  %4608 = vmatprep.mubr.f32.mxu0 0.0
  %4609 = vmatmul.mubr.f32.gmra.mrb[0].mxu0 %v2103
  %v4610 = vpop.f32.mrb[0].mxu0
  %v4611 = vadd.f32 0.0, %v4610
  %v4612 = vpop.f32.mrb[0].mxu0
  %4613 = vmatprep.mubr.f32.mxu0 0.0
  %4614 = vmatmul.mubr.f32.gmra.mrb[0].mxu0 %v2106
  %v4615 = vpop.f32.mrb[0].mxu0
  %v4616 = vadd.f32 0.0, %v4615
  %v4617 = vpop.f32.mrb[0].mxu0
  %4618 = vmatprep.mubr.f32.mxu0 0.0
  %4619 = vmatmul.mubr.f32.gmra.mrb[0].mxu0 %v2109
  %v4620 = vpop.f32.mrb[0].mxu0
  %v4621 = vadd.f32 0.0, %v4620
  %v4622 = vpop.f32.mrb[0].mxu0
  %4623 = vmatprep.mubr.f32.mxu0 0.0
  %4624 = vmatmul.mubr.f32.gmra.mrb[0].mxu0 %v2112
  %v4625 = vpop.f32.mrb[0].mxu0
  %v4626 = vadd.f32 0.0, %v4625
  %v4627 = vpop.f32.mrb[0].mxu0
  %4628 = vmatprep.mubr.f32.mxu0 0.0
  %4629 = vmatmul.mubr.f32.gmra.mrb[0].mxu0 %v2115
  %v4630 = vpop.f32.mrb[0].mxu0
  %v4631 = vadd.f32 0.0, %v4630
  %v4632 = vpop.f32.mrb[0].mxu0
  %4633 = vmatprep.mubr.f32.mxu0 0.0
  %4634 = vmatmul.mubr.f32.gmra.mrb[0].mxu0 %v2118
  %v4635 = vpop.f32.mrb[0].mxu0
  %v4636 = vadd.f32 0.0, %v4635
  %v4637 = vpop.f32.mrb[0].mxu0
  %4638 = vmatprep.mubr.f32.mxu0 0.0
  %4639 = vmatmul.mubr.f32.gmra.mrb[0].mxu0 %v2121
  %v4640 = vpop.f32.mrb[0].mxu0
  %v4641 = vadd.f32 0.0, %v4640
  %v4642 = vpop.f32.mrb[0].mxu0
  %4643 = vmatprep.mubr.f32.mxu0 0.0
  %4644 = vmatmul.mubr.f32.gmra.mrb[0].mxu0 %v2124
  %v4645 = vpop.f32.mrb[0].mxu0
  %v4646 = vadd.f32 0.0, %v4645
  %v4647 = vpop.f32.mrb[0].mxu0
  %4648 = vmatprep.mubr.f32.mxu0 0.0
  %4649 = vmatmul.mubr.f32.gmra.mrb[0].mxu0 %v2127
  %v4650 = vpop.f32.mrb[0].mxu0
  %v4651 = vadd.f32 0.0, %v4650
  %v4652 = vpop.f32.mrb[0].mxu0
  %4653 = vmatprep.mubr.f32.mxu0 0.0
  %4654 = vmatmul.mubr.f32.gmra.mrb[0].mxu0 %v2130
  %v4655 = vpop.f32.mrb[0].mxu0
  %v4656 = vadd.f32 0.0, %v4655
  %v4657 = vpop.f32.mrb[0].mxu0
  %4658 = vmatprep.mubr.f32.mxu0 0.0
  %4659 = vmatmul.mubr.f32.gmra.mrb[0].mxu0 %v2133
  %v4660 = vpop.f32.mrb[0].mxu0
  %v4661 = vadd.f32 0.0, %v4660
  %v4662 = vpop.f32.mrb[0].mxu0
  %4663 = vmatprep.mubr.f32.mxu0 0.0
  %4664 = vmatmul.mubr.f32.gmra.mrb[0].mxu0 %v2136
  %v4665 = vpop.f32.mrb[0].mxu0
  %v4666 = vadd.f32 0.0, %v4665
  %v4667 = vpop.f32.mrb[0].mxu0
  %4668 = vmatprep.mubr.f32.mxu0 0.0
  %4669 = vmatmul.mubr.f32.gmra.mrb[0].mxu0 %v2139
  %v4670 = vpop.f32.mrb[0].mxu0
  %v4671 = vadd.f32 0.0, %v4670
  %v4672 = vpop.f32.mrb[0].mxu0
  %4673 = vmatprep.mubr.f32.mxu0 0.0
  %4674 = vmatmul.mubr.f32.gmra.mrb[0].mxu0 %v2142
  %v4675 = vpop.f32.mrb[0].mxu0
  %v4676 = vadd.f32 0.0, %v4675
  %v4677 = vpop.f32.mrb[0].mxu0
  %4678 = vmatprep.mubr.f32.mxu0 0.0
  %4679 = vmatmul.mubr.f32.gmra.mrb[0].mxu0 %v2145
  %v4680 = vpop.f32.mrb[0].mxu0
  %v4681 = vadd.f32 0.0, %v4680
  %v4682 = vpop.f32.mrb[0].mxu0
  %4683 = vmatprep.mubr.f32.mxu0 0.0
  %4684 = vmatmul.mubr.f32.gmra.mrb[0].mxu0 %v2148
  %v4685 = vpop.f32.mrb[0].mxu0
  %v4686 = vadd.f32 0.0, %v4685
  %v4687 = vpop.f32.mrb[0].mxu0
  %4688 = vmatprep.mubr.f32.mxu0 0.0
  %4689 = vmatmul.mubr.f32.gmra.mrb[0].mxu0 %v2151
  %v4690 = vpop.f32.mrb[0].mxu0
  %v4691 = vadd.f32 0.0, %v4690
  %v4692 = vpop.f32.mrb[0].mxu0
  %4693 = vmatprep.mubr.f32.mxu0 0.0
  %4694 = vmatmul.mubr.f32.gmra.mrb[0].mxu0 %v2154
  %v4695 = vpop.f32.mrb[0].mxu0
  %v4696 = vadd.f32 0.0, %v4695
  %v4697 = vpop.f32.mrb[0].mxu0
  %4698 = vmatprep.mubr.f32.mxu0 0.0
  %4699 = vmatmul.mubr.f32.gmra.mrb[0].mxu0 %v2157
  %v4700 = vpop.f32.mrb[0].mxu0
  %v4701 = vadd.f32 0.0, %v4700
  %v4702 = vpop.f32.mrb[0].mxu0
  %4703 = vmatprep.mubr.f32.mxu0 0.0
  %4704 = vmatmul.mubr.f32.gmra.mrb[0].mxu0 %v2160
  %v4705 = vpop.f32.mrb[0].mxu0
  %v4706 = vadd.f32 0.0, %v4705
  %v4707 = vpop.f32.mrb[0].mxu0
  %4708 = vmatprep.mubr.f32.mxu0 0.0
  %4709 = vmatmul.mubr.f32.gmra.mrb[0].mxu0 %v2163
  %v4710 = vpop.f32.mrb[0].mxu0
  %v4711 = vadd.f32 0.0, %v4710
  %v4712 = vpop.f32.mrb[0].mxu0
  %4713 = vmatprep.mubr.f32.mxu0 0.0
  %4714 = vmatmul.mubr.f32.gmra.mrb[0].mxu0 %v2166
  %v4715 = vpop.f32.mrb[0].mxu0
  %v4716 = vadd.f32 0.0, %v4715
  %v4717 = vpop.f32.mrb[0].mxu0
  %4718 = vmatprep.mubr.f32.mxu0 0.0
  %4719 = vmatmul.mubr.f32.gmra.mrb[0].mxu0 %v2169
  %v4720 = vpop.f32.mrb[0].mxu0
  %v4721 = vadd.f32 0.0, %v4720
  %v4722 = vpop.f32.mrb[0].mxu0
  %4723 = vmatprep.mubr.f32.mxu0 0.0
  %4724 = vmatmul.mubr.f32.gmra.mrb[0].mxu0 %v2172
  %v4725 = vpop.f32.mrb[0].mxu0
  %v4726 = vadd.f32 0.0, %v4725
  %v4727 = vpop.f32.mrb[0].mxu0
  %4728 = vmatprep.mubr.f32.mxu0 0.0
  %4729 = vmatmul.mubr.f32.gmra.mrb[0].mxu0 %v2175
  %v4730 = vpop.f32.mrb[0].mxu0
  %v4731 = vadd.f32 0.0, %v4730
  %v4732 = vpop.f32.mrb[0].mxu0
  %4733 = vmatprep.mubr.f32.mxu0 0.0
  %4734 = vmatmul.mubr.f32.gmra.mrb[0].mxu0 %v2178
  %v4735 = vpop.f32.mrb[0].mxu0
  %v4736 = vadd.f32 0.0, %v4735
  %v4737 = vpop.f32.mrb[0].mxu0
  %4738 = vmatprep.mubr.f32.mxu0 0.0
  %4739 = vmatmul.mubr.f32.gmra.mrb[0].mxu0 %v2181
  %v4740 = vpop.f32.mrb[0].mxu0
  %v4741 = vadd.f32 0.0, %v4740
  %v4742 = vpop.f32.mrb[0].mxu0
  %4743 = vmatprep.mubr.f32.mxu0 0.0
  %4744 = vmatmul.mubr.f32.gmra.mrb[0].mxu0 %v2184
  %v4745 = vpop.f32.mrb[0].mxu0
  %v4746 = vadd.f32 0.0, %v4745
  %v4747 = vpop.f32.mrb[0].mxu0
  %4748 = vmatprep.mubr.f32.mxu0 0.0
  %4749 = vmatmul.mubr.f32.gmra.mrb[0].mxu0 %v2187
  %v4750 = vpop.f32.mrb[0].mxu0
  %v4751 = vadd.f32 0.0, %v4750
  %v4752 = vpop.f32.mrb[0].mxu0
  %4753 = vmatprep.mubr.f32.mxu0 0.0
  %4754 = vmatmul.mubr.f32.gmra.mrb[0].mxu0 %v2190
  %v4755 = vpop.f32.mrb[0].mxu0
  %v4756 = vadd.f32 0.0, %v4755
  %v4757 = vpop.f32.mrb[0].mxu0
  %4758 = vmatprep.mubr.f32.mxu0 0.0
  %4759 = vmatmul.mubr.f32.gmra.mrb[0].mxu0 %v2193
  %v4760 = vpop.f32.mrb[0].mxu0
  %v4761 = vadd.f32 0.0, %v4760
  %v4762 = vpop.f32.mrb[0].mxu0
  %4763 = vmatprep.mubr.f32.mxu0 0.0
  %4764 = vmatmul.mubr.f32.gmra.mrb[0].mxu0 %v2196
  %v4765 = vpop.f32.mrb[0].mxu0
  %v4766 = vadd.f32 0.0, %v4765
  %v4767 = vpop.f32.mrb[0].mxu0
  %4768 = vmatprep.mubr.f32.mxu0 0.0
  %4769 = vmatmul.mubr.f32.gmra.mrb[0].mxu0 %v2199
  %v4770 = vpop.f32.mrb[0].mxu0
  %v4771 = vadd.f32 0.0, %v4770
  %v4772 = vpop.f32.mrb[0].mxu0
  %4773 = vmatprep.mubr.f32.mxu0 0.0
  %4774 = vmatmul.mubr.f32.gmra.mrb[0].mxu0 %v2202
  %v4775 = vpop.f32.mrb[0].mxu0
  %v4776 = vadd.f32 0.0, %v4775
  %v4777 = vpop.f32.mrb[0].mxu0
  %4778 = vmatprep.mubr.f32.mxu0 0.0
  %4779 = vmatmul.mubr.f32.gmra.mrb[0].mxu0 %v2205
  %v4780 = vpop.f32.mrb[0].mxu0
  %v4781 = vadd.f32 0.0, %v4780
  %v4782 = vpop.f32.mrb[0].mxu0
  %4783 = vmatprep.mubr.f32.mxu0 0.0
  %4784 = vmatmul.mubr.f32.gmra.mrb[0].mxu0 %v2208
  %v4785 = vpop.f32.mrb[0].mxu0
  %v4786 = vadd.f32 0.0, %v4785
  %v4787 = vpop.f32.mrb[0].mxu0
  %4788 = vmatprep.mubr.f32.mxu0 0.0
  %4789 = vmatmul.mubr.f32.gmra.mrb[0].mxu0 %v2211
  %v4790 = vpop.f32.mrb[0].mxu0
  %v4791 = vadd.f32 0.0, %v4790
  %v4792 = vpop.f32.mrb[0].mxu0
  %4793 = vmatprep.mubr.f32.mxu0 0.0
  %4794 = vmatmul.mubr.f32.gmra.mrb[0].mxu0 %v2214
  %v4795 = vpop.f32.mrb[0].mxu0
  %v4796 = vadd.f32 0.0, %v4795
  %v4797 = vpop.f32.mrb[0].mxu0
  %4798 = vmatprep.mubr.f32.mxu0 0.0
  %4799 = vmatmul.mubr.f32.gmra.mrb[0].mxu0 %v2217
  %v4800 = vpop.f32.mrb[0].mxu0
  %v4801 = vadd.f32 0.0, %v4800
  %v4802 = vpop.f32.mrb[0].mxu0
  %4803 = vmatprep.mubr.f32.mxu0 0.0
  %4804 = vmatmul.mubr.f32.gmra.mrb[0].mxu0 %v2220
  %v4805 = vpop.f32.mrb[0].mxu0
  %v4806 = vadd.f32 0.0, %v4805
  %v4807 = vpop.f32.mrb[0].mxu0
  %4808 = vmatprep.mubr.f32.mxu0 0.0
  %4809 = vmatmul.mubr.f32.gmra.mrb[0].mxu0 %v2223
  %v4810 = vpop.f32.mrb[0].mxu0
  %v4811 = vadd.f32 0.0, %v4810
  %v4812 = vpop.f32.mrb[0].mxu0
  %4813 = vmatprep.mubr.f32.mxu0 0.0
  %4814 = vmatmul.mubr.f32.gmra.mrb[0].mxu0 %v2226
  %v4815 = vpop.f32.mrb[0].mxu0
  %v4816 = vadd.f32 0.0, %v4815
  %v4817 = vpop.f32.mrb[0].mxu0
  %4818 = vmatprep.mubr.f32.mxu0 0.0
  %4819 = vmatmul.mubr.f32.gmra.mrb[0].mxu0 %v2229
  %v4820 = vpop.f32.mrb[0].mxu0
  %v4821 = vadd.f32 0.0, %v4820
  %v4822 = vpop.f32.mrb[0].mxu0
  %4823 = vmatprep.mubr.f32.mxu0 0.0
  %4824 = vmatmul.mubr.f32.gmra.mrb[0].mxu0 %v2232
  %v4825 = vpop.f32.mrb[0].mxu0
  %v4826 = vadd.f32 0.0, %v4825
  %v4827 = vpop.f32.mrb[0].mxu0
  %4828 = vmatprep.mubr.f32.mxu0 0.0
  %4829 = vmatmul.mubr.f32.gmra.mrb[0].mxu0 %v2235
  %v4830 = vpop.f32.mrb[0].mxu0
  %v4831 = vadd.f32 0.0, %v4830
  %v4832 = vpop.f32.mrb[0].mxu0
  %4833 = vmatprep.mubr.f32.mxu0 0.0
  %4834 = vmatmul.mubr.f32.gmra.mrb[0].mxu0 %v2238
  %v4835 = vpop.f32.mrb[0].mxu0
  %v4836 = vadd.f32 0.0, %v4835
  %v4837 = vpop.f32.mrb[0].mxu0
  %4838 = vmatprep.mubr.f32.mxu0 0.0
  %4839 = vmatmul.mubr.f32.gmra.mrb[0].mxu0 %v2241
  %v4840 = vpop.f32.mrb[0].mxu0
  %v4841 = vadd.f32 0.0, %v4840
  %v4842 = vpop.f32.mrb[0].mxu0
  %4843 = vmatprep.mubr.f32.mxu0 0.0
  %4844 = vmatmul.mubr.f32.gmra.mrb[0].mxu0 %v2244
  %v4845 = vpop.f32.mrb[0].mxu0
  %v4846 = vadd.f32 0.0, %v4845
  %v4847 = vpop.f32.mrb[0].mxu0
  %4848 = vmatprep.mubr.f32.mxu0 0.0
  %4849 = vmatmul.mubr.f32.gmra.mrb[0].mxu0 %v2247
  %v4850 = vpop.f32.mrb[0].mxu0
  %v4851 = vadd.f32 0.0, %v4850
  %v4852 = vpop.f32.mrb[0].mxu0
  %4853 = vmatprep.mubr.f32.mxu0 0.0
  %4854 = vmatmul.mubr.f32.gmra.mrb[0].mxu0 %v2250
  %v4855 = vpop.f32.mrb[0].mxu0
  %v4856 = vadd.f32 0.0, %v4855
  %v4857 = vpop.f32.mrb[0].mxu0
  %4858 = vmatprep.mubr.f32.mxu0 0.0
  %4859 = vmatmul.mubr.f32.gmra.mrb[0].mxu0 %v2253
  %v4860 = vpop.f32.mrb[0].mxu0
  %v4861 = vadd.f32 0.0, %v4860
  %v4862 = vpop.f32.mrb[0].mxu0
  %4863 = vmatprep.mubr.f32.mxu0 0.0
  %4864 = vmatmul.mubr.f32.gmra.mrb[0].mxu0 %v2256
  %v4865 = vpop.f32.mrb[0].mxu0
  %v4866 = vadd.f32 0.0, %v4865
  %v4867 = vpop.f32.mrb[0].mxu0
  %4868 = vmatprep.mubr.f32.mxu0 0.0
  %4869 = vmatmul.mubr.f32.gmra.mrb[0].mxu0 %v2259
  %v4870 = vpop.f32.mrb[0].mxu0
  %v4871 = vadd.f32 0.0, %v4870
  %v4872 = vpop.f32.mrb[0].mxu0
  %4873 = vmatprep.mubr.f32.mxu0 0.0
  %4874 = vmatmul.mubr.f32.gmra.mrb[0].mxu0 %v2262
  %v4875 = vpop.f32.mrb[0].mxu0
  %v4876 = vadd.f32 0.0, %v4875
  %v4877 = vpop.f32.mrb[0].mxu0
  %4878 = vmatprep.mubr.f32.mxu0 0.0
  %4879 = vmatmul.mubr.f32.gmra.mrb[0].mxu0 %v2265
  %v4880 = vpop.f32.mrb[0].mxu0
  %v4881 = vadd.f32 0.0, %v4880
  %v4882 = vpop.f32.mrb[0].mxu0
  %4883 = vmatprep.mubr.f32.mxu0 0.0
  %4884 = vmatmul.mubr.f32.gmra.mrb[0].mxu0 %v2268
  %v4885 = vpop.f32.mrb[0].mxu0
  %v4886 = vadd.f32 0.0, %v4885
  %v4887 = vpop.f32.mrb[0].mxu0
  %4888 = vmatprep.mubr.f32.mxu0 0.0
  %4889 = vmatmul.mubr.f32.gmra.mrb[0].mxu0 %v2271
  %v4890 = vpop.f32.mrb[0].mxu0
  %v4891 = vadd.f32 0.0, %v4890
  %v4892 = vpop.f32.mrb[0].mxu0
  %4893 = vmatprep.mubr.f32.mxu0 0.0
  %4894 = vmatmul.mubr.f32.gmra.mrb[0].mxu0 %v2274
  %v4895 = vpop.f32.mrb[0].mxu0
  %v4896 = vadd.f32 0.0, %v4895
  %v4897 = vpop.f32.mrb[0].mxu0
  %4898 = vmatprep.mubr.f32.mxu0 0.0
  %4899 = vmatmul.mubr.f32.gmra.mrb[0].mxu0 %v2277
  %v4900 = vpop.f32.mrb[0].mxu0
  %v4901 = vadd.f32 0.0, %v4900
  %v4902 = vpop.f32.mrb[0].mxu0
  %4903 = vdwg.mxu0
  %v4904 = vld [vmem:[%s1] sm:$0xff]
  %v4905 = vld [vmem:[%s1 + $0x8] sm:$0xff]
  %v4906 = vld [vmem:[%s1 + $0x10] sm:$0xff]
  %v4907 = vld [vmem:[%s1 + $0x18] sm:$0xff]
  %v4908 = vld [vmem:[%s1 + $0x20] sm:$0xff]
  %v4909 = vld [vmem:[%s1 + $0x28] sm:$0xff]
  %v4910 = vld [vmem:[%s1 + $0x30] sm:$0xff]
  %v4911 = vld [vmem:[%s1 + $0x38] sm:$0xff]
  %v4912 = vadd.f32 %v2346, %v4904
  %v4913 = vadd.f32 %v2351, %v4905
  %v4914 = vadd.f32 %v2356, %v4906
  %v4915 = vadd.f32 %v2361, %v4907
  %v4916 = vadd.f32 %v2366, %v4908
  %v4917 = vadd.f32 %v2371, %v4909
  %v4918 = vadd.f32 %v2376, %v4910
  %v4919 = vadd.f32 %v2381, %v4911
  %v4920 = vadd.f32 %v2386, %v4904
  %v4921 = vadd.f32 %v2391, %v4905
  %v4922 = vadd.f32 %v2396, %v4906
  %v4923 = vadd.f32 %v2401, %v4907
  %v4924 = vadd.f32 %v2406, %v4908
  %v4925 = vadd.f32 %v2411, %v4909
  %v4926 = vadd.f32 %v2416, %v4910
  %v4927 = vadd.f32 %v2421, %v4911
  %v4928 = vadd.f32 %v2426, %v4904
  %v4929 = vadd.f32 %v2431, %v4905
  %v4930 = vadd.f32 %v2436, %v4906
  %v4931 = vadd.f32 %v2441, %v4907
  %v4932 = vadd.f32 %v2446, %v4908
  %v4933 = vadd.f32 %v2451, %v4909
  %v4934 = vadd.f32 %v2456, %v4910
  %v4935 = vadd.f32 %v2461, %v4911
  %v4936 = vadd.f32 %v2466, %v4904
  %v4937 = vadd.f32 %v2471, %v4905
  %v4938 = vadd.f32 %v2476, %v4906
  %v4939 = vadd.f32 %v2481, %v4907
  %v4940 = vadd.f32 %v2486, %v4908
  %v4941 = vadd.f32 %v2491, %v4909
  %v4942 = vadd.f32 %v2496, %v4910
  %v4943 = vadd.f32 %v2501, %v4911
  %v4944 = vadd.f32 %v2506, %v4904
  %v4945 = vadd.f32 %v2511, %v4905
  %v4946 = vadd.f32 %v2516, %v4906
  %v4947 = vadd.f32 %v2521, %v4907
  %v4948 = vadd.f32 %v2526, %v4908
  %v4949 = vadd.f32 %v2531, %v4909
  %v4950 = vadd.f32 %v2536, %v4910
  %v4951 = vadd.f32 %v2541, %v4911
  %v4952 = vadd.f32 %v2546, %v4904
  %v4953 = vadd.f32 %v2551, %v4905
  %v4954 = vadd.f32 %v2556, %v4906
  %v4955 = vadd.f32 %v2561, %v4907
  %v4956 = vadd.f32 %v2566, %v4908
  %v4957 = vadd.f32 %v2571, %v4909
  %v4958 = vadd.f32 %v2576, %v4910
  %v4959 = vadd.f32 %v2581, %v4911
  %v4960 = vadd.f32 %v2586, %v4904
  %v4961 = vadd.f32 %v2591, %v4905
  %v4962 = vadd.f32 %v2596, %v4906
  %v4963 = vadd.f32 %v2601, %v4907
  %v4964 = vadd.f32 %v2606, %v4908
  %v4965 = vadd.f32 %v2611, %v4909
  %v4966 = vadd.f32 %v2616, %v4910
  %v4967 = vadd.f32 %v2621, %v4911
  %v4968 = vadd.f32 %v2626, %v4904
  %v4969 = vadd.f32 %v2631, %v4905
  %v4970 = vadd.f32 %v2636, %v4906
  %v4971 = vadd.f32 %v2641, %v4907
  %v4972 = vadd.f32 %v2646, %v4908
  %v4973 = vadd.f32 %v2651, %v4909
  %v4974 = vadd.f32 %v2656, %v4910
  %v4975 = vadd.f32 %v2661, %v4911
  %v4976 = vadd.f32 %v2666, %v4904
  %v4977 = vadd.f32 %v2671, %v4905
  %v4978 = vadd.f32 %v2676, %v4906
  %v4979 = vadd.f32 %v2681, %v4907
  %v4980 = vadd.f32 %v2686, %v4908
  %v4981 = vadd.f32 %v2691, %v4909
  %v4982 = vadd.f32 %v2696, %v4910
  %v4983 = vadd.f32 %v2701, %v4911
  %v4984 = vadd.f32 %v2706, %v4904
  %v4985 = vadd.f32 %v2711, %v4905
  %v4986 = vadd.f32 %v2716, %v4906
  %v4987 = vadd.f32 %v2721, %v4907
  %v4988 = vadd.f32 %v2726, %v4908
  %v4989 = vadd.f32 %v2731, %v4909
  %v4990 = vadd.f32 %v2736, %v4910
  %v4991 = vadd.f32 %v2741, %v4911
  %v4992 = vadd.f32 %v2746, %v4904
  %v4993 = vadd.f32 %v2751, %v4905
  %v4994 = vadd.f32 %v2756, %v4906
  %v4995 = vadd.f32 %v2761, %v4907
  %v4996 = vadd.f32 %v2766, %v4908
  %v4997 = vadd.f32 %v2771, %v4909
  %v4998 = vadd.f32 %v2776, %v4910
  %v4999 = vadd.f32 %v2781, %v4911
  %v5000 = vadd.f32 %v2786, %v4904
  %v5001 = vadd.f32 %v2791, %v4905
  %v5002 = vadd.f32 %v2796, %v4906
  %v5003 = vadd.f32 %v2801, %v4907
  %v5004 = vadd.f32 %v2806, %v4908
  %v5005 = vadd.f32 %v2811, %v4909
  %v5006 = vadd.f32 %v2816, %v4910
  %v5007 = vadd.f32 %v2821, %v4911
  %v5008 = vadd.f32 %v2826, %v4904
  %v5009 = vadd.f32 %v2831, %v4905
  %v5010 = vadd.f32 %v2836, %v4906
  %v5011 = vadd.f32 %v2841, %v4907
  %v5012 = vadd.f32 %v2846, %v4908
  %v5013 = vadd.f32 %v2851, %v4909
  %v5014 = vadd.f32 %v2856, %v4910
  %v5015 = vadd.f32 %v2861, %v4911
  %v5016 = vadd.f32 %v2866, %v4904
  %v5017 = vadd.f32 %v2871, %v4905
  %v5018 = vadd.f32 %v2876, %v4906
  %v5019 = vadd.f32 %v2881, %v4907
  %v5020 = vadd.f32 %v2886, %v4908
  %v5021 = vadd.f32 %v2891, %v4909
  %v5022 = vadd.f32 %v2896, %v4910
  %v5023 = vadd.f32 %v2901, %v4911
  %v5024 = vadd.f32 %v2906, %v4904
  %v5025 = vadd.f32 %v2911, %v4905
  %v5026 = vadd.f32 %v2916, %v4906
  %v5027 = vadd.f32 %v2921, %v4907
  %v5028 = vadd.f32 %v2926, %v4908
  %v5029 = vadd.f32 %v2931, %v4909
  %v5030 = vadd.f32 %v2936, %v4910
  %v5031 = vadd.f32 %v2941, %v4911
  %v5032 = vadd.f32 %v2946, %v4904
  %v5033 = vadd.f32 %v2951, %v4905
  %v5034 = vadd.f32 %v2956, %v4906
  %v5035 = vadd.f32 %v2961, %v4907
  %v5036 = vadd.f32 %v2966, %v4908
  %v5037 = vadd.f32 %v2971, %v4909
  %v5038 = vadd.f32 %v2976, %v4910
  %v5039 = vadd.f32 %v2981, %v4911
  %v5040 = vadd.f32 %v2986, %v4904
  %v5041 = vadd.f32 %v2991, %v4905
  %v5042 = vadd.f32 %v2996, %v4906
  %v5043 = vadd.f32 %v3001, %v4907
  %v5044 = vadd.f32 %v3006, %v4908
  %v5045 = vadd.f32 %v3011, %v4909
  %v5046 = vadd.f32 %v3016, %v4910
  %v5047 = vadd.f32 %v3021, %v4911
  %v5048 = vadd.f32 %v3026, %v4904
  %v5049 = vadd.f32 %v3031, %v4905
  %v5050 = vadd.f32 %v3036, %v4906
  %v5051 = vadd.f32 %v3041, %v4907
  %v5052 = vadd.f32 %v3046, %v4908
  %v5053 = vadd.f32 %v3051, %v4909
  %v5054 = vadd.f32 %v3056, %v4910
  %v5055 = vadd.f32 %v3061, %v4911
  %v5056 = vadd.f32 %v3066, %v4904
  %v5057 = vadd.f32 %v3071, %v4905
  %v5058 = vadd.f32 %v3076, %v4906
  %v5059 = vadd.f32 %v3081, %v4907
  %v5060 = vadd.f32 %v3086, %v4908
  %v5061 = vadd.f32 %v3091, %v4909
  %v5062 = vadd.f32 %v3096, %v4910
  %v5063 = vadd.f32 %v3101, %v4911
  %v5064 = vadd.f32 %v3106, %v4904
  %v5065 = vadd.f32 %v3111, %v4905
  %v5066 = vadd.f32 %v3116, %v4906
  %v5067 = vadd.f32 %v3121, %v4907
  %v5068 = vadd.f32 %v3126, %v4908
  %v5069 = vadd.f32 %v3131, %v4909
  %v5070 = vadd.f32 %v3136, %v4910
  %v5071 = vadd.f32 %v3141, %v4911
  %v5072 = vadd.f32 %v3146, %v4904
  %v5073 = vadd.f32 %v3151, %v4905
  %v5074 = vadd.f32 %v3156, %v4906
  %v5075 = vadd.f32 %v3161, %v4907
  %v5076 = vadd.f32 %v3166, %v4908
  %v5077 = vadd.f32 %v3171, %v4909
  %v5078 = vadd.f32 %v3176, %v4910
  %v5079 = vadd.f32 %v3181, %v4911
  %v5080 = vadd.f32 %v3186, %v4904
  %v5081 = vadd.f32 %v3191, %v4905
  %v5082 = vadd.f32 %v3196, %v4906
  %v5083 = vadd.f32 %v3201, %v4907
  %v5084 = vadd.f32 %v3206, %v4908
  %v5085 = vadd.f32 %v3211, %v4909
  %v5086 = vadd.f32 %v3216, %v4910
  %v5087 = vadd.f32 %v3221, %v4911
  %v5088 = vadd.f32 %v3226, %v4904
  %v5089 = vadd.f32 %v3231, %v4905
  %v5090 = vadd.f32 %v3236, %v4906
  %v5091 = vadd.f32 %v3241, %v4907
  %v5092 = vadd.f32 %v3246, %v4908
  %v5093 = vadd.f32 %v3251, %v4909
  %v5094 = vadd.f32 %v3256, %v4910
  %v5095 = vadd.f32 %v3261, %v4911
  %v5096 = vadd.f32 %v3266, %v4904
  %v5097 = vadd.f32 %v3271, %v4905
  %v5098 = vadd.f32 %v3276, %v4906
  %v5099 = vadd.f32 %v3281, %v4907
  %v5100 = vadd.f32 %v3286, %v4908
  %v5101 = vadd.f32 %v3291, %v4909
  %v5102 = vadd.f32 %v3296, %v4910
  %v5103 = vadd.f32 %v3301, %v4911
  %v5104 = vadd.f32 %v3306, %v4904
  %v5105 = vadd.f32 %v3311, %v4905
  %v5106 = vadd.f32 %v3316, %v4906
  %v5107 = vadd.f32 %v3321, %v4907
  %v5108 = vadd.f32 %v3326, %v4908
  %v5109 = vadd.f32 %v3331, %v4909
  %v5110 = vadd.f32 %v3336, %v4910
  %v5111 = vadd.f32 %v3341, %v4911
  %v5112 = vadd.f32 %v3346, %v4904
  %v5113 = vadd.f32 %v3351, %v4905
  %v5114 = vadd.f32 %v3356, %v4906
  %v5115 = vadd.f32 %v3361, %v4907
  %v5116 = vadd.f32 %v3366, %v4908
  %v5117 = vadd.f32 %v3371, %v4909
  %v5118 = vadd.f32 %v3376, %v4910
  %v5119 = vadd.f32 %v3381, %v4911
  %v5120 = vadd.f32 %v3386, %v4904
  %v5121 = vadd.f32 %v3391, %v4905
  %v5122 = vadd.f32 %v3396, %v4906
  %v5123 = vadd.f32 %v3401, %v4907
  %v5124 = vadd.f32 %v3406, %v4908
  %v5125 = vadd.f32 %v3411, %v4909
  %v5126 = vadd.f32 %v3416, %v4910
  %v5127 = vadd.f32 %v3421, %v4911
  %v5128 = vadd.f32 %v3426, %v4904
  %v5129 = vadd.f32 %v3431, %v4905
  %v5130 = vadd.f32 %v3436, %v4906
  %v5131 = vadd.f32 %v3441, %v4907
  %v5132 = vadd.f32 %v3446, %v4908
  %v5133 = vadd.f32 %v3451, %v4909
  %v5134 = vadd.f32 %v3456, %v4910
  %v5135 = vadd.f32 %v3461, %v4911
  %v5136 = vadd.f32 %v3466, %v4904
  %v5137 = vadd.f32 %v3471, %v4905
  %v5138 = vadd.f32 %v3476, %v4906
  %v5139 = vadd.f32 %v3481, %v4907
  %v5140 = vadd.f32 %v3486, %v4908
  %v5141 = vadd.f32 %v3491, %v4909
  %v5142 = vadd.f32 %v3496, %v4910
  %v5143 = vadd.f32 %v3501, %v4911
  %v5144 = vadd.f32 %v3506, %v4904
  %v5145 = vadd.f32 %v3511, %v4905
  %v5146 = vadd.f32 %v3516, %v4906
  %v5147 = vadd.f32 %v3521, %v4907
  %v5148 = vadd.f32 %v3526, %v4908
  %v5149 = vadd.f32 %v3531, %v4909
  %v5150 = vadd.f32 %v3536, %v4910
  %v5151 = vadd.f32 %v3541, %v4911
  %v5152 = vadd.f32 %v3546, %v4904
  %v5153 = vadd.f32 %v3551, %v4905
  %v5154 = vadd.f32 %v3556, %v4906
  %v5155 = vadd.f32 %v3561, %v4907
  %v5156 = vadd.f32 %v3566, %v4908
  %v5157 = vadd.f32 %v3571, %v4909
  %v5158 = vadd.f32 %v3576, %v4910
  %v5159 = vadd.f32 %v3581, %v4911
  %v5160 = vadd.f32 %v3586, %v4904
  %v5161 = vadd.f32 %v3591, %v4905
  %v5162 = vadd.f32 %v3596, %v4906
  %v5163 = vadd.f32 %v3601, %v4907
  %v5164 = vadd.f32 %v3606, %v4908
  %v5165 = vadd.f32 %v3611, %v4909
  %v5166 = vadd.f32 %v3616, %v4910
  %v5167 = vadd.f32 %v3621, %v4911
  %v5168 = vadd.f32 %v3626, %v4904
  %v5169 = vadd.f32 %v3631, %v4905
  %v5170 = vadd.f32 %v3636, %v4906
  %v5171 = vadd.f32 %v3641, %v4907
  %v5172 = vadd.f32 %v3646, %v4908
  %v5173 = vadd.f32 %v3651, %v4909
  %v5174 = vadd.f32 %v3656, %v4910
  %v5175 = vadd.f32 %v3661, %v4911
  %v5176 = vadd.f32 %v3666, %v4904
  %v5177 = vadd.f32 %v3671, %v4905
  %v5178 = vadd.f32 %v3676, %v4906
  %v5179 = vadd.f32 %v3681, %v4907
  %v5180 = vadd.f32 %v3686, %v4908
  %v5181 = vadd.f32 %v3691, %v4909
  %v5182 = vadd.f32 %v3696, %v4910
  %v5183 = vadd.f32 %v3701, %v4911
  %v5184 = vadd.f32 %v3706, %v4904
  %v5185 = vadd.f32 %v3711, %v4905
  %v5186 = vadd.f32 %v3716, %v4906
  %v5187 = vadd.f32 %v3721, %v4907
  %v5188 = vadd.f32 %v3726, %v4908
  %v5189 = vadd.f32 %v3731, %v4909
  %v5190 = vadd.f32 %v3736, %v4910
  %v5191 = vadd.f32 %v3741, %v4911
  %v5192 = vadd.f32 %v3746, %v4904
  %v5193 = vadd.f32 %v3751, %v4905
  %v5194 = vadd.f32 %v3756, %v4906
  %v5195 = vadd.f32 %v3761, %v4907
  %v5196 = vadd.f32 %v3766, %v4908
  %v5197 = vadd.f32 %v3771, %v4909
  %v5198 = vadd.f32 %v3776, %v4910
  %v5199 = vadd.f32 %v3781, %v4911
  %v5200 = vadd.f32 %v3786, %v4904
  %v5201 = vadd.f32 %v3791, %v4905
  %v5202 = vadd.f32 %v3796, %v4906
  %v5203 = vadd.f32 %v3801, %v4907
  %v5204 = vadd.f32 %v3806, %v4908
  %v5205 = vadd.f32 %v3811, %v4909
  %v5206 = vadd.f32 %v3816, %v4910
  %v5207 = vadd.f32 %v3821, %v4911
  %v5208 = vadd.f32 %v3826, %v4904
  %v5209 = vadd.f32 %v3831, %v4905
  %v5210 = vadd.f32 %v3836, %v4906
  %v5211 = vadd.f32 %v3841, %v4907
  %v5212 = vadd.f32 %v3846, %v4908
  %v5213 = vadd.f32 %v3851, %v4909
  %v5214 = vadd.f32 %v3856, %v4910
  %v5215 = vadd.f32 %v3861, %v4911
  %v5216 = vadd.f32 %v3866, %v4904
  %v5217 = vadd.f32 %v3871, %v4905
  %v5218 = vadd.f32 %v3876, %v4906
  %v5219 = vadd.f32 %v3881, %v4907
  %v5220 = vadd.f32 %v3886, %v4908
  %v5221 = vadd.f32 %v3891, %v4909
  %v5222 = vadd.f32 %v3896, %v4910
  %v5223 = vadd.f32 %v3901, %v4911
  %v5224 = vadd.f32 %v3906, %v4904
  %v5225 = vadd.f32 %v3911, %v4905
  %v5226 = vadd.f32 %v3916, %v4906
  %v5227 = vadd.f32 %v3921, %v4907
  %v5228 = vadd.f32 %v3926, %v4908
  %v5229 = vadd.f32 %v3931, %v4909
  %v5230 = vadd.f32 %v3936, %v4910
  %v5231 = vadd.f32 %v3941, %v4911
  %v5232 = vadd.f32 %v3946, %v4904
  %v5233 = vadd.f32 %v3951, %v4905
  %v5234 = vadd.f32 %v3956, %v4906
  %v5235 = vadd.f32 %v3961, %v4907
  %v5236 = vadd.f32 %v3966, %v4908
  %v5237 = vadd.f32 %v3971, %v4909
  %v5238 = vadd.f32 %v3976, %v4910
  %v5239 = vadd.f32 %v3981, %v4911
  %v5240 = vadd.f32 %v3986, %v4904
  %v5241 = vadd.f32 %v3991, %v4905
  %v5242 = vadd.f32 %v3996, %v4906
  %v5243 = vadd.f32 %v4001, %v4907
  %v5244 = vadd.f32 %v4006, %v4908
  %v5245 = vadd.f32 %v4011, %v4909
  %v5246 = vadd.f32 %v4016, %v4910
  %v5247 = vadd.f32 %v4021, %v4911
  %v5248 = vadd.f32 %v4026, %v4904
  %v5249 = vadd.f32 %v4031, %v4905
  %v5250 = vadd.f32 %v4036, %v4906
  %v5251 = vadd.f32 %v4041, %v4907
  %v5252 = vadd.f32 %v4046, %v4908
  %v5253 = vadd.f32 %v4051, %v4909
  %v5254 = vadd.f32 %v4056, %v4910
  %v5255 = vadd.f32 %v4061, %v4911
  %v5256 = vadd.f32 %v4066, %v4904
  %v5257 = vadd.f32 %v4071, %v4905
  %v5258 = vadd.f32 %v4076, %v4906
  %v5259 = vadd.f32 %v4081, %v4907
  %v5260 = vadd.f32 %v4086, %v4908
  %v5261 = vadd.f32 %v4091, %v4909
  %v5262 = vadd.f32 %v4096, %v4910
  %v5263 = vadd.f32 %v4101, %v4911
  %v5264 = vadd.f32 %v4106, %v4904
  %v5265 = vadd.f32 %v4111, %v4905
  %v5266 = vadd.f32 %v4116, %v4906
  %v5267 = vadd.f32 %v4121, %v4907
  %v5268 = vadd.f32 %v4126, %v4908
  %v5269 = vadd.f32 %v4131, %v4909
  %v5270 = vadd.f32 %v4136, %v4910
  %v5271 = vadd.f32 %v4141, %v4911
  %v5272 = vadd.f32 %v4146, %v4904
  %v5273 = vadd.f32 %v4151, %v4905
  %v5274 = vadd.f32 %v4156, %v4906
  %v5275 = vadd.f32 %v4161, %v4907
  %v5276 = vadd.f32 %v4166, %v4908
  %v5277 = vadd.f32 %v4171, %v4909
  %v5278 = vadd.f32 %v4176, %v4910
  %v5279 = vadd.f32 %v4181, %v4911
  %v5280 = vadd.f32 %v4186, %v4904
  %v5281 = vadd.f32 %v4191, %v4905
  %v5282 = vadd.f32 %v4196, %v4906
  %v5283 = vadd.f32 %v4201, %v4907
  %v5284 = vadd.f32 %v4206, %v4908
  %v5285 = vadd.f32 %v4211, %v4909
  %v5286 = vadd.f32 %v4216, %v4910
  %v5287 = vadd.f32 %v4221, %v4911
  %v5288 = vadd.f32 %v4226, %v4904
  %v5289 = vadd.f32 %v4231, %v4905
  %v5290 = vadd.f32 %v4236, %v4906
  %v5291 = vadd.f32 %v4241, %v4907
  %v5292 = vadd.f32 %v4246, %v4908
  %v5293 = vadd.f32 %v4251, %v4909
  %v5294 = vadd.f32 %v4256, %v4910
  %v5295 = vadd.f32 %v4261, %v4911
  %v5296 = vadd.f32 %v4266, %v4904
  %v5297 = vadd.f32 %v4271, %v4905
  %v5298 = vadd.f32 %v4276, %v4906
  %v5299 = vadd.f32 %v4281, %v4907
  %v5300 = vadd.f32 %v4286, %v4908
  %v5301 = vadd.f32 %v4291, %v4909
  %v5302 = vadd.f32 %v4296, %v4910
  %v5303 = vadd.f32 %v4301, %v4911
  %v5304 = vadd.f32 %v4306, %v4904
  %v5305 = vadd.f32 %v4311, %v4905
  %v5306 = vadd.f32 %v4316, %v4906
  %v5307 = vadd.f32 %v4321, %v4907
  %v5308 = vadd.f32 %v4326, %v4908
  %v5309 = vadd.f32 %v4331, %v4909
  %v5310 = vadd.f32 %v4336, %v4910
  %v5311 = vadd.f32 %v4341, %v4911
  %v5312 = vadd.f32 %v4346, %v4904
  %v5313 = vadd.f32 %v4351, %v4905
  %v5314 = vadd.f32 %v4356, %v4906
  %v5315 = vadd.f32 %v4361, %v4907
  %v5316 = vadd.f32 %v4366, %v4908
  %v5317 = vadd.f32 %v4371, %v4909
  %v5318 = vadd.f32 %v4376, %v4910
  %v5319 = vadd.f32 %v4381, %v4911
  %v5320 = vadd.f32 %v4386, %v4904
  %v5321 = vadd.f32 %v4391, %v4905
  %v5322 = vadd.f32 %v4396, %v4906
  %v5323 = vadd.f32 %v4401, %v4907
  %v5324 = vadd.f32 %v4406, %v4908
  %v5325 = vadd.f32 %v4411, %v4909
  %v5326 = vadd.f32 %v4416, %v4910
  %v5327 = vadd.f32 %v4421, %v4911
  %v5328 = vadd.f32 %v4426, %v4904
  %v5329 = vadd.f32 %v4431, %v4905
  %v5330 = vadd.f32 %v4436, %v4906
  %v5331 = vadd.f32 %v4441, %v4907
  %v5332 = vadd.f32 %v4446, %v4908
  %v5333 = vadd.f32 %v4451, %v4909
  %v5334 = vadd.f32 %v4456, %v4910
  %v5335 = vadd.f32 %v4461, %v4911
  %v5336 = vadd.f32 %v4466, %v4904
  %v5337 = vadd.f32 %v4471, %v4905
  %v5338 = vadd.f32 %v4476, %v4906
  %v5339 = vadd.f32 %v4481, %v4907
  %v5340 = vadd.f32 %v4486, %v4908
  %v5341 = vadd.f32 %v4491, %v4909
  %v5342 = vadd.f32 %v4496, %v4910
  %v5343 = vadd.f32 %v4501, %v4911
  %v5344 = vadd.f32 %v4506, %v4904
  %v5345 = vadd.f32 %v4511, %v4905
  %v5346 = vadd.f32 %v4516, %v4906
  %v5347 = vadd.f32 %v4521, %v4907
  %v5348 = vadd.f32 %v4526, %v4908
  %v5349 = vadd.f32 %v4531, %v4909
  %v5350 = vadd.f32 %v4536, %v4910
  %v5351 = vadd.f32 %v4541, %v4911
  %v5352 = vadd.f32 %v4546, %v4904
  %v5353 = vadd.f32 %v4551, %v4905
  %v5354 = vadd.f32 %v4556, %v4906
  %v5355 = vadd.f32 %v4561, %v4907
  %v5356 = vadd.f32 %v4566, %v4908
  %v5357 = vadd.f32 %v4571, %v4909
  %v5358 = vadd.f32 %v4576, %v4910
  %v5359 = vadd.f32 %v4581, %v4911
  %v5360 = vadd.f32 %v4586, %v4904
  %v5361 = vadd.f32 %v4591, %v4905
  %v5362 = vadd.f32 %v4596, %v4906
  %v5363 = vadd.f32 %v4601, %v4907
  %v5364 = vadd.f32 %v4606, %v4908
  %v5365 = vadd.f32 %v4611, %v4909
  %v5366 = vadd.f32 %v4616, %v4910
  %v5367 = vadd.f32 %v4621, %v4911
  %v5368 = vadd.f32 %v4626, %v4904
  %v5369 = vadd.f32 %v4631, %v4905
  %v5370 = vadd.f32 %v4636, %v4906
  %v5371 = vadd.f32 %v4641, %v4907
  %v5372 = vadd.f32 %v4646, %v4908
  %v5373 = vadd.f32 %v4651, %v4909
  %v5374 = vadd.f32 %v4656, %v4910
  %v5375 = vadd.f32 %v4661, %v4911
  %v5376 = vadd.f32 %v4666, %v4904
  %v5377 = vadd.f32 %v4671, %v4905
  %v5378 = vadd.f32 %v4676, %v4906
  %v5379 = vadd.f32 %v4681, %v4907
  %v5380 = vadd.f32 %v4686, %v4908
  %v5381 = vadd.f32 %v4691, %v4909
  %v5382 = vadd.f32 %v4696, %v4910
  %v5383 = vadd.f32 %v4701, %v4911
  %v5384 = vadd.f32 %v4706, %v4904
  %v5385 = vadd.f32 %v4711, %v4905
  %v5386 = vadd.f32 %v4716, %v4906
  %v5387 = vadd.f32 %v4721, %v4907
  %v5388 = vadd.f32 %v4726, %v4908
  %v5389 = vadd.f32 %v4731, %v4909
  %v5390 = vadd.f32 %v4736, %v4910
  %v5391 = vadd.f32 %v4741, %v4911
  %v5392 = vadd.f32 %v4746, %v4904
  %v5393 = vadd.f32 %v4751, %v4905
  %v5394 = vadd.f32 %v4756, %v4906
  %v5395 = vadd.f32 %v4761, %v4907
  %v5396 = vadd.f32 %v4766, %v4908
  %v5397 = vadd.f32 %v4771, %v4909
  %v5398 = vadd.f32 %v4776, %v4910
  %v5399 = vadd.f32 %v4781, %v4911
  %v5400 = vadd.f32 %v4786, %v4904
  %v5401 = vadd.f32 %v4791, %v4905
  %v5402 = vadd.f32 %v4796, %v4906
  %v5403 = vadd.f32 %v4801, %v4907
  %v5404 = vadd.f32 %v4806, %v4908
  %v5405 = vadd.f32 %v4811, %v4909
  %v5406 = vadd.f32 %v4816, %v4910
  %v5407 = vadd.f32 %v4821, %v4911
  %v5408 = vadd.f32 %v4826, %v4904
  %v5409 = vadd.f32 %v4831, %v4905
  %v5410 = vadd.f32 %v4836, %v4906
  %v5411 = vadd.f32 %v4841, %v4907
  %v5412 = vadd.f32 %v4846, %v4908
  %v5413 = vadd.f32 %v4851, %v4909
  %v5414 = vadd.f32 %v4856, %v4910
  %v5415 = vadd.f32 %v4861, %v4911
  %v5416 = vadd.f32 %v4866, %v4904
  %v5417 = vadd.f32 %v4871, %v4905
  %v5418 = vadd.f32 %v4876, %v4906
  %v5419 = vadd.f32 %v4881, %v4907
  %v5420 = vadd.f32 %v4886, %v4908
  %v5421 = vadd.f32 %v4891, %v4909
  %v5422 = vadd.f32 %v4896, %v4910
  %v5423 = vadd.f32 %v4901, %v4911
  %v5424 = vld [vmem:[#allocation2] sm:$0xff]
  %v5425 = vld [vmem:[#allocation2 + $0x8] sm:$0xff]
  %v5426 = vld [vmem:[#allocation2 + $0x10] sm:$0xff]
  %v5427 = vld [vmem:[#allocation2 + $0x18] sm:$0xff]
  %v5428 = vld [vmem:[#allocation2 + $0x20] sm:$0xff]
  %v5429 = vld [vmem:[#allocation2 + $0x28] sm:$0xff]
  %v5430 = vld [vmem:[#allocation2 + $0x30] sm:$0xff]
  %v5431 = vld [vmem:[#allocation2 + $0x38] sm:$0xff]
  %v5440 = vcombine.high %v5424, %v5424
  %v5442 = vunpack.c.l.s4 1966171168
  %v5443 = vunpack.c.0.s8 %v5442
  %v5444 = vlaneseq
  %v5445 = vshrl.u32 %v5444, 7
  %v5446 = vsub.s32 %v5443, %v5445
  %v5447 = vrot.slane %v5424, %v5446
  %v5449 = vunpack.c.l.s4 1966171168
  %v5450 = vunpack.c.0.s8 %v5449
  %v5451 = vlaneseq
  %v5452 = vshrl.u32 %v5451, 7
  %v5453 = vsub.s32 %v5450, %v5452
  %v5454 = vrot.slane %v5440, %v5453
  %v5455 = vcombine.high %v5447, %v5447
  %v5456 = vcombine.high %v5454, %v5454
  %v5458 = vunpack.c.l.s4 1966171168
  %v5459 = vunpack.c.0.s8 %v5458
  %v5460 = vlaneseq
  %v5461 = vshrl.u32 %v5460, 7
  %v5462 = vsub.s32 %v5459, %v5461
  %v5463 = vrot.slane %v5447, %v5462
  %v5465 = vunpack.c.l.s4 1966171168
  %v5466 = vunpack.c.0.s8 %v5465
  %v5467 = vlaneseq
  %v5468 = vshrl.u32 %v5467, 7
  %v5469 = vsub.s32 %v5466, %v5468
  %v5470 = vrot.slane %v5454, %v5469
  %v5472 = vunpack.c.l.s4 1966171168
  %v5473 = vunpack.c.0.s8 %v5472
  %v5474 = vlaneseq
  %v5475 = vshrl.u32 %v5474, 7
  %v5476 = vsub.s32 %v5473, %v5475
  %v5477 = vrot.slane %v5455, %v5476
  %v5479 = vunpack.c.l.s4 1966171168
  %v5480 = vunpack.c.0.s8 %v5479
  %v5481 = vlaneseq
  %v5482 = vshrl.u32 %v5481, 7
  %v5483 = vsub.s32 %v5480, %v5482
  %v5484 = vrot.slane %v5456, %v5483
  %v5485 = vcombine.high %v5463, %v5463
  %v5486 = vcombine.high %v5470, %v5470
  %v5487 = vcombine.high %v5477, %v5477
  %v5488 = vcombine.high %v5484, %v5484
  %v5489 = vcombine.high %v5425, %v5425
  %v5491 = vunpack.c.l.s4 1966171168
  %v5492 = vunpack.c.0.s8 %v5491
  %v5493 = vlaneseq
  %v5494 = vshrl.u32 %v5493, 7
  %v5495 = vsub.s32 %v5492, %v5494
  %v5496 = vrot.slane %v5425, %v5495
  %v5498 = vunpack.c.l.s4 1966171168
  %v5499 = vunpack.c.0.s8 %v5498
  %v5500 = vlaneseq
  %v5501 = vshrl.u32 %v5500, 7
  %v5502 = vsub.s32 %v5499, %v5501
  %v5503 = vrot.slane %v5489, %v5502
  %v5504 = vcombine.high %v5496, %v5496
  %v5505 = vcombine.high %v5503, %v5503
  %v5507 = vunpack.c.l.s4 1966171168
  %v5508 = vunpack.c.0.s8 %v5507
  %v5509 = vlaneseq
  %v5510 = vshrl.u32 %v5509, 7
  %v5511 = vsub.s32 %v5508, %v5510
  %v5512 = vrot.slane %v5496, %v5511
  %v5514 = vunpack.c.l.s4 1966171168
  %v5515 = vunpack.c.0.s8 %v5514
  %v5516 = vlaneseq
  %v5517 = vshrl.u32 %v5516, 7
  %v5518 = vsub.s32 %v5515, %v5517
  %v5519 = vrot.slane %v5503, %v5518
  %v5521 = vunpack.c.l.s4 1966171168
  %v5522 = vunpack.c.0.s8 %v5521
  %v5523 = vlaneseq
  %v5524 = vshrl.u32 %v5523, 7
  %v5525 = vsub.s32 %v5522, %v5524
  %v5526 = vrot.slane %v5504, %v5525
  %v5528 = vunpack.c.l.s4 1966171168
  %v5529 = vunpack.c.0.s8 %v5528
  %v5530 = vlaneseq
  %v5531 = vshrl.u32 %v5530, 7
  %v5532 = vsub.s32 %v5529, %v5531
  %v5533 = vrot.slane %v5505, %v5532
  %v5534 = vcombine.high %v5512, %v5512
  %v5535 = vcombine.high %v5519, %v5519
  %v5536 = vcombine.high %v5526, %v5526
  %v5537 = vcombine.high %v5533, %v5533
  %v5538 = vcombine.high %v5426, %v5426
  %v5540 = vunpack.c.l.s4 1966171168
  %v5541 = vunpack.c.0.s8 %v5540
  %v5542 = vlaneseq
  %v5543 = vshrl.u32 %v5542, 7
  %v5544 = vsub.s32 %v5541, %v5543
  %v5545 = vrot.slane %v5426, %v5544
  %v5547 = vunpack.c.l.s4 1966171168
  %v5548 = vunpack.c.0.s8 %v5547
  %v5549 = vlaneseq
  %v5550 = vshrl.u32 %v5549, 7
  %v5551 = vsub.s32 %v5548, %v5550
  %v5552 = vrot.slane %v5538, %v5551
  %v5553 = vcombine.high %v5545, %v5545
  %v5554 = vcombine.high %v5552, %v5552
  %v5556 = vunpack.c.l.s4 1966171168
  %v5557 = vunpack.c.0.s8 %v5556
  %v5558 = vlaneseq
  %v5559 = vshrl.u32 %v5558, 7
  %v5560 = vsub.s32 %v5557, %v5559
  %v5561 = vrot.slane %v5545, %v5560
  %v5563 = vunpack.c.l.s4 1966171168
  %v5564 = vunpack.c.0.s8 %v5563
  %v5565 = vlaneseq
  %v5566 = vshrl.u32 %v5565, 7
  %v5567 = vsub.s32 %v5564, %v5566
  %v5568 = vrot.slane %v5552, %v5567
  %v5570 = vunpack.c.l.s4 1966171168
  %v5571 = vunpack.c.0.s8 %v5570
  %v5572 = vlaneseq
  %v5573 = vshrl.u32 %v5572, 7
  %v5574 = vsub.s32 %v5571, %v5573
  %v5575 = vrot.slane %v5553, %v5574
  %v5577 = vunpack.c.l.s4 1966171168
  %v5578 = vunpack.c.0.s8 %v5577
  %v5579 = vlaneseq
  %v5580 = vshrl.u32 %v5579, 7
  %v5581 = vsub.s32 %v5578, %v5580
  %v5582 = vrot.slane %v5554, %v5581
  %v5583 = vcombine.high %v5561, %v5561
  %v5584 = vcombine.high %v5568, %v5568
  %v5585 = vcombine.high %v5575, %v5575
  %v5586 = vcombine.high %v5582, %v5582
  %v5587 = vcombine.high %v5427, %v5427
  %v5589 = vunpack.c.l.s4 1966171168
  %v5590 = vunpack.c.0.s8 %v5589
  %v5591 = vlaneseq
  %v5592 = vshrl.u32 %v5591, 7
  %v5593 = vsub.s32 %v5590, %v5592
  %v5594 = vrot.slane %v5427, %v5593
  %v5596 = vunpack.c.l.s4 1966171168
  %v5597 = vunpack.c.0.s8 %v5596
  %v5598 = vlaneseq
  %v5599 = vshrl.u32 %v5598, 7
  %v5600 = vsub.s32 %v5597, %v5599
  %v5601 = vrot.slane %v5587, %v5600
  %v5602 = vcombine.high %v5594, %v5594
  %v5603 = vcombine.high %v5601, %v5601
  %v5605 = vunpack.c.l.s4 1966171168
  %v5606 = vunpack.c.0.s8 %v5605
  %v5607 = vlaneseq
  %v5608 = vshrl.u32 %v5607, 7
  %v5609 = vsub.s32 %v5606, %v5608
  %v5610 = vrot.slane %v5594, %v5609
  %v5612 = vunpack.c.l.s4 1966171168
  %v5613 = vunpack.c.0.s8 %v5612
  %v5614 = vlaneseq
  %v5615 = vshrl.u32 %v5614, 7
  %v5616 = vsub.s32 %v5613, %v5615
  %v5617 = vrot.slane %v5601, %v5616
  %v5619 = vunpack.c.l.s4 1966171168
  %v5620 = vunpack.c.0.s8 %v5619
  %v5621 = vlaneseq
  %v5622 = vshrl.u32 %v5621, 7
  %v5623 = vsub.s32 %v5620, %v5622
  %v5624 = vrot.slane %v5602, %v5623
  %v5626 = vunpack.c.l.s4 1966171168
  %v5627 = vunpack.c.0.s8 %v5626
  %v5628 = vlaneseq
  %v5629 = vshrl.u32 %v5628, 7
  %v5630 = vsub.s32 %v5627, %v5629
  %v5631 = vrot.slane %v5603, %v5630
  %v5632 = vcombine.high %v5610, %v5610
  %v5633 = vcombine.high %v5617, %v5617
  %v5634 = vcombine.high %v5624, %v5624
  %v5635 = vcombine.high %v5631, %v5631
  %v5636 = vcombine.high %v5428, %v5428
  %v5638 = vunpack.c.l.s4 1966171168
  %v5639 = vunpack.c.0.s8 %v5638
  %v5640 = vlaneseq
  %v5641 = vshrl.u32 %v5640, 7
  %v5642 = vsub.s32 %v5639, %v5641
  %v5643 = vrot.slane %v5428, %v5642
  %v5645 = vunpack.c.l.s4 1966171168
  %v5646 = vunpack.c.0.s8 %v5645
  %v5647 = vlaneseq
  %v5648 = vshrl.u32 %v5647, 7
  %v5649 = vsub.s32 %v5646, %v5648
  %v5650 = vrot.slane %v5636, %v5649
  %v5651 = vcombine.high %v5643, %v5643
  %v5652 = vcombine.high %v5650, %v5650
  %v5654 = vunpack.c.l.s4 1966171168
  %v5655 = vunpack.c.0.s8 %v5654
  %v5656 = vlaneseq
  %v5657 = vshrl.u32 %v5656, 7
  %v5658 = vsub.s32 %v5655, %v5657
  %v5659 = vrot.slane %v5643, %v5658
  %v5661 = vunpack.c.l.s4 1966171168
  %v5662 = vunpack.c.0.s8 %v5661
  %v5663 = vlaneseq
  %v5664 = vshrl.u32 %v5663, 7
  %v5665 = vsub.s32 %v5662, %v5664
  %v5666 = vrot.slane %v5650, %v5665
  %v5668 = vunpack.c.l.s4 1966171168
  %v5669 = vunpack.c.0.s8 %v5668
  %v5670 = vlaneseq
  %v5671 = vshrl.u32 %v5670, 7
  %v5672 = vsub.s32 %v5669, %v5671
  %v5673 = vrot.slane %v5651, %v5672
  %v5675 = vunpack.c.l.s4 1966171168
  %v5676 = vunpack.c.0.s8 %v5675
  %v5677 = vlaneseq
  %v5678 = vshrl.u32 %v5677, 7
  %v5679 = vsub.s32 %v5676, %v5678
  %v5680 = vrot.slane %v5652, %v5679
  %v5681 = vcombine.high %v5659, %v5659
  %v5682 = vcombine.high %v5666, %v5666
  %v5683 = vcombine.high %v5673, %v5673
  %v5684 = vcombine.high %v5680, %v5680
  %v5685 = vcombine.high %v5429, %v5429
  %v5687 = vunpack.c.l.s4 1966171168
  %v5688 = vunpack.c.0.s8 %v5687
  %v5689 = vlaneseq
  %v5690 = vshrl.u32 %v5689, 7
  %v5691 = vsub.s32 %v5688, %v5690
  %v5692 = vrot.slane %v5429, %v5691
  %v5694 = vunpack.c.l.s4 1966171168
  %v5695 = vunpack.c.0.s8 %v5694
  %v5696 = vlaneseq
  %v5697 = vshrl.u32 %v5696, 7
  %v5698 = vsub.s32 %v5695, %v5697
  %v5699 = vrot.slane %v5685, %v5698
  %v5700 = vcombine.high %v5692, %v5692
  %v5701 = vcombine.high %v5699, %v5699
  %v5703 = vunpack.c.l.s4 1966171168
  %v5704 = vunpack.c.0.s8 %v5703
  %v5705 = vlaneseq
  %v5706 = vshrl.u32 %v5705, 7
  %v5707 = vsub.s32 %v5704, %v5706
  %v5708 = vrot.slane %v5692, %v5707
  %v5710 = vunpack.c.l.s4 1966171168
  %v5711 = vunpack.c.0.s8 %v5710
  %v5712 = vlaneseq
  %v5713 = vshrl.u32 %v5712, 7
  %v5714 = vsub.s32 %v5711, %v5713
  %v5715 = vrot.slane %v5699, %v5714
  %v5717 = vunpack.c.l.s4 1966171168
  %v5718 = vunpack.c.0.s8 %v5717
  %v5719 = vlaneseq
  %v5720 = vshrl.u32 %v5719, 7
  %v5721 = vsub.s32 %v5718, %v5720
  %v5722 = vrot.slane %v5700, %v5721
  %v5724 = vunpack.c.l.s4 1966171168
  %v5725 = vunpack.c.0.s8 %v5724
  %v5726 = vlaneseq
  %v5727 = vshrl.u32 %v5726, 7
  %v5728 = vsub.s32 %v5725, %v5727
  %v5729 = vrot.slane %v5701, %v5728
  %v5730 = vcombine.high %v5708, %v5708
  %v5731 = vcombine.high %v5715, %v5715
  %v5732 = vcombine.high %v5722, %v5722
  %v5733 = vcombine.high %v5729, %v5729
  %v5734 = vcombine.high %v5430, %v5430
  %v5736 = vunpack.c.l.s4 1966171168
  %v5737 = vunpack.c.0.s8 %v5736
  %v5738 = vlaneseq
  %v5739 = vshrl.u32 %v5738, 7
  %v5740 = vsub.s32 %v5737, %v5739
  %v5741 = vrot.slane %v5430, %v5740
  %v5743 = vunpack.c.l.s4 1966171168
  %v5744 = vunpack.c.0.s8 %v5743
  %v5745 = vlaneseq
  %v5746 = vshrl.u32 %v5745, 7
  %v5747 = vsub.s32 %v5744, %v5746
  %v5748 = vrot.slane %v5734, %v5747
  %v5749 = vcombine.high %v5741, %v5741
  %v5750 = vcombine.high %v5748, %v5748
  %v5752 = vunpack.c.l.s4 1966171168
  %v5753 = vunpack.c.0.s8 %v5752
  %v5754 = vlaneseq
  %v5755 = vshrl.u32 %v5754, 7
  %v5756 = vsub.s32 %v5753, %v5755
  %v5757 = vrot.slane %v5741, %v5756
  %v5759 = vunpack.c.l.s4 1966171168
  %v5760 = vunpack.c.0.s8 %v5759
  %v5761 = vlaneseq
  %v5762 = vshrl.u32 %v5761, 7
  %v5763 = vsub.s32 %v5760, %v5762
  %v5764 = vrot.slane %v5748, %v5763
  %v5766 = vunpack.c.l.s4 1966171168
  %v5767 = vunpack.c.0.s8 %v5766
  %v5768 = vlaneseq
  %v5769 = vshrl.u32 %v5768, 7
  %v5770 = vsub.s32 %v5767, %v5769
  %v5771 = vrot.slane %v5749, %v5770
  %v5773 = vunpack.c.l.s4 1966171168
  %v5774 = vunpack.c.0.s8 %v5773
  %v5775 = vlaneseq
  %v5776 = vshrl.u32 %v5775, 7
  %v5777 = vsub.s32 %v5774, %v5776
  %v5778 = vrot.slane %v5750, %v5777
  %v5779 = vcombine.high %v5757, %v5757
  %v5780 = vcombine.high %v5764, %v5764
  %v5781 = vcombine.high %v5771, %v5771
  %v5782 = vcombine.high %v5778, %v5778
  %v5783 = vcombine.high %v5431, %v5431
  %v5785 = vunpack.c.l.s4 1966171168
  %v5786 = vunpack.c.0.s8 %v5785
  %v5787 = vlaneseq
  %v5788 = vshrl.u32 %v5787, 7
  %v5789 = vsub.s32 %v5786, %v5788
  %v5790 = vrot.slane %v5431, %v5789
  %v5792 = vunpack.c.l.s4 1966171168
  %v5793 = vunpack.c.0.s8 %v5792
  %v5794 = vlaneseq
  %v5795 = vshrl.u32 %v5794, 7
  %v5796 = vsub.s32 %v5793, %v5795
  %v5797 = vrot.slane %v5783, %v5796
  %v5798 = vcombine.high %v5790, %v5790
  %v5799 = vcombine.high %v5797, %v5797
  %v5801 = vunpack.c.l.s4 1966171168
  %v5802 = vunpack.c.0.s8 %v5801
  %v5803 = vlaneseq
  %v5804 = vshrl.u32 %v5803, 7
  %v5805 = vsub.s32 %v5802, %v5804
  %v5806 = vrot.slane %v5790, %v5805
  %v5808 = vunpack.c.l.s4 1966171168
  %v5809 = vunpack.c.0.s8 %v5808
  %v5810 = vlaneseq
  %v5811 = vshrl.u32 %v5810, 7
  %v5812 = vsub.s32 %v5809, %v5811
  %v5813 = vrot.slane %v5797, %v5812
  %v5815 = vunpack.c.l.s4 1966171168
  %v5816 = vunpack.c.0.s8 %v5815
  %v5817 = vlaneseq
  %v5818 = vshrl.u32 %v5817, 7
  %v5819 = vsub.s32 %v5816, %v5818
  %v5820 = vrot.slane %v5798, %v5819
  %v5822 = vunpack.c.l.s4 1966171168
  %v5823 = vunpack.c.0.s8 %v5822
  %v5824 = vlaneseq
  %v5825 = vshrl.u32 %v5824, 7
  %v5826 = vsub.s32 %v5823, %v5825
  %v5827 = vrot.slane %v5799, %v5826
  %v5828 = vcombine.high %v5806, %v5806
  %v5829 = vcombine.high %v5813, %v5813
  %v5830 = vcombine.high %v5820, %v5820
  %v5831 = vcombine.high %v5827, %v5827
  %v5832 = vlaneseq
  %v5833 = vshrl.u32 %v5832, 7
  %v5834 = vsub.s32 0, %v5833
  %v5835 = vrot.slane %v5463, %v5834
  %v5836 = vlaneseq
  %v5837 = vshrl.u32 %v5836, 7
  %v5838 = vsub.s32 0, %v5837
  %v5839 = vrot.slane %v5477, %v5838
  %v5840 = vlaneseq
  %v5841 = vshrl.u32 %v5840, 7
  %v5842 = vsub.s32 0, %v5841
  %v5843 = vrot.slane %v5485, %v5842
  %v5844 = vlaneseq
  %v5845 = vshrl.u32 %v5844, 7
  %v5846 = vsub.s32 0, %v5845
  %v5847 = vrot.slane %v5487, %v5846
  %v5848 = vlaneseq
  %v5849 = vshrl.u32 %v5848, 7
  %v5850 = vsub.s32 0, %v5849
  %v5851 = vrot.slane %v5470, %v5850
  %v5852 = vlaneseq
  %v5853 = vshrl.u32 %v5852, 7
  %v5854 = vsub.s32 0, %v5853
  %v5855 = vrot.slane %v5484, %v5854
  %v5856 = vlaneseq
  %v5857 = vshrl.u32 %v5856, 7
  %v5858 = vsub.s32 0, %v5857
  %v5859 = vrot.slane %v5486, %v5858
  %v5860 = vlaneseq
  %v5861 = vshrl.u32 %v5860, 7
  %v5862 = vsub.s32 0, %v5861
  %v5863 = vrot.slane %v5488, %v5862
  %v5864 = vlaneseq
  %v5865 = vshrl.u32 %v5864, 7
  %v5866 = vsub.s32 0, %v5865
  %v5867 = vrot.slane %v5512, %v5866
  %v5868 = vlaneseq
  %v5869 = vshrl.u32 %v5868, 7
  %v5870 = vsub.s32 0, %v5869
  %v5871 = vrot.slane %v5526, %v5870
  %v5872 = vlaneseq
  %v5873 = vshrl.u32 %v5872, 7
  %v5874 = vsub.s32 0, %v5873
  %v5875 = vrot.slane %v5534, %v5874
  %v5876 = vlaneseq
  %v5877 = vshrl.u32 %v5876, 7
  %v5878 = vsub.s32 0, %v5877
  %v5879 = vrot.slane %v5536, %v5878
  %v5880 = vlaneseq
  %v5881 = vshrl.u32 %v5880, 7
  %v5882 = vsub.s32 0, %v5881
  %v5883 = vrot.slane %v5519, %v5882
  %v5884 = vlaneseq
  %v5885 = vshrl.u32 %v5884, 7
  %v5886 = vsub.s32 0, %v5885
  %v5887 = vrot.slane %v5533, %v5886
  %v5888 = vlaneseq
  %v5889 = vshrl.u32 %v5888, 7
  %v5890 = vsub.s32 0, %v5889
  %v5891 = vrot.slane %v5535, %v5890
  %v5892 = vlaneseq
  %v5893 = vshrl.u32 %v5892, 7
  %v5894 = vsub.s32 0, %v5893
  %v5895 = vrot.slane %v5537, %v5894
  %v5896 = vlaneseq
  %v5897 = vshrl.u32 %v5896, 7
  %v5898 = vsub.s32 0, %v5897
  %v5899 = vrot.slane %v5561, %v5898
  %v5900 = vlaneseq
  %v5901 = vshrl.u32 %v5900, 7
  %v5902 = vsub.s32 0, %v5901
  %v5903 = vrot.slane %v5575, %v5902
  %v5904 = vlaneseq
  %v5905 = vshrl.u32 %v5904, 7
  %v5906 = vsub.s32 0, %v5905
  %v5907 = vrot.slane %v5583, %v5906
  %v5908 = vlaneseq
  %v5909 = vshrl.u32 %v5908, 7
  %v5910 = vsub.s32 0, %v5909
  %v5911 = vrot.slane %v5585, %v5910
  %v5912 = vlaneseq
  %v5913 = vshrl.u32 %v5912, 7
  %v5914 = vsub.s32 0, %v5913
  %v5915 = vrot.slane %v5568, %v5914
  %v5916 = vlaneseq
  %v5917 = vshrl.u32 %v5916, 7
  %v5918 = vsub.s32 0, %v5917
  %v5919 = vrot.slane %v5582, %v5918
  %v5920 = vlaneseq
  %v5921 = vshrl.u32 %v5920, 7
  %v5922 = vsub.s32 0, %v5921
  %v5923 = vrot.slane %v5584, %v5922
  %v5924 = vlaneseq
  %v5925 = vshrl.u32 %v5924, 7
  %v5926 = vsub.s32 0, %v5925
  %v5927 = vrot.slane %v5586, %v5926
  %v5928 = vlaneseq
  %v5929 = vshrl.u32 %v5928, 7
  %v5930 = vsub.s32 0, %v5929
  %v5931 = vrot.slane %v5610, %v5930
  %v5932 = vlaneseq
  %v5933 = vshrl.u32 %v5932, 7
  %v5934 = vsub.s32 0, %v5933
  %v5935 = vrot.slane %v5624, %v5934
  %v5936 = vlaneseq
  %v5937 = vshrl.u32 %v5936, 7
  %v5938 = vsub.s32 0, %v5937
  %v5939 = vrot.slane %v5632, %v5938
  %v5940 = vlaneseq
  %v5941 = vshrl.u32 %v5940, 7
  %v5942 = vsub.s32 0, %v5941
  %v5943 = vrot.slane %v5634, %v5942
  %v5944 = vlaneseq
  %v5945 = vshrl.u32 %v5944, 7
  %v5946 = vsub.s32 0, %v5945
  %v5947 = vrot.slane %v5617, %v5946
  %v5948 = vlaneseq
  %v5949 = vshrl.u32 %v5948, 7
  %v5950 = vsub.s32 0, %v5949
  %v5951 = vrot.slane %v5631, %v5950
  %v5952 = vlaneseq
  %v5953 = vshrl.u32 %v5952, 7
  %v5954 = vsub.s32 0, %v5953
  %v5955 = vrot.slane %v5633, %v5954
  %v5956 = vlaneseq
  %v5957 = vshrl.u32 %v5956, 7
  %v5958 = vsub.s32 0, %v5957
  %v5959 = vrot.slane %v5635, %v5958
  %v5960 = vlaneseq
  %v5961 = vshrl.u32 %v5960, 7
  %v5962 = vsub.s32 0, %v5961
  %v5963 = vrot.slane %v5659, %v5962
  %v5964 = vlaneseq
  %v5965 = vshrl.u32 %v5964, 7
  %v5966 = vsub.s32 0, %v5965
  %v5967 = vrot.slane %v5673, %v5966
  %v5968 = vlaneseq
  %v5969 = vshrl.u32 %v5968, 7
  %v5970 = vsub.s32 0, %v5969
  %v5971 = vrot.slane %v5681, %v5970
  %v5972 = vlaneseq
  %v5973 = vshrl.u32 %v5972, 7
  %v5974 = vsub.s32 0, %v5973
  %v5975 = vrot.slane %v5683, %v5974
  %v5976 = vlaneseq
  %v5977 = vshrl.u32 %v5976, 7
  %v5978 = vsub.s32 0, %v5977
  %v5979 = vrot.slane %v5666, %v5978
  %v5980 = vlaneseq
  %v5981 = vshrl.u32 %v5980, 7
  %v5982 = vsub.s32 0, %v5981
  %v5983 = vrot.slane %v5680, %v5982
  %v5984 = vlaneseq
  %v5985 = vshrl.u32 %v5984, 7
  %v5986 = vsub.s32 0, %v5985
  %v5987 = vrot.slane %v5682, %v5986
  %v5988 = vlaneseq
  %v5989 = vshrl.u32 %v5988, 7
  %v5990 = vsub.s32 0, %v5989
  %v5991 = vrot.slane %v5684, %v5990
  %v5992 = vlaneseq
  %v5993 = vshrl.u32 %v5992, 7
  %v5994 = vsub.s32 0, %v5993
  %v5995 = vrot.slane %v5708, %v5994
  %v5996 = vlaneseq
  %v5997 = vshrl.u32 %v5996, 7
  %v5998 = vsub.s32 0, %v5997
  %v5999 = vrot.slane %v5722, %v5998
  %v6000 = vlaneseq
  %v6001 = vshrl.u32 %v6000, 7
  %v6002 = vsub.s32 0, %v6001
  %v6003 = vrot.slane %v5730, %v6002
  %v6004 = vlaneseq
  %v6005 = vshrl.u32 %v6004, 7
  %v6006 = vsub.s32 0, %v6005
  %v6007 = vrot.slane %v5732, %v6006
  %v6008 = vlaneseq
  %v6009 = vshrl.u32 %v6008, 7
  %v6010 = vsub.s32 0, %v6009
  %v6011 = vrot.slane %v5715, %v6010
  %v6012 = vlaneseq
  %v6013 = vshrl.u32 %v6012, 7
  %v6014 = vsub.s32 0, %v6013
  %v6015 = vrot.slane %v5729, %v6014
  %v6016 = vlaneseq
  %v6017 = vshrl.u32 %v6016, 7
  %v6018 = vsub.s32 0, %v6017
  %v6019 = vrot.slane %v5731, %v6018
  %v6020 = vlaneseq
  %v6021 = vshrl.u32 %v6020, 7
  %v6022 = vsub.s32 0, %v6021
  %v6023 = vrot.slane %v5733, %v6022
  %v6024 = vlaneseq
  %v6025 = vshrl.u32 %v6024, 7
  %v6026 = vsub.s32 0, %v6025
  %v6027 = vrot.slane %v5757, %v6026
  %v6028 = vlaneseq
  %v6029 = vshrl.u32 %v6028, 7
  %v6030 = vsub.s32 0, %v6029
  %v6031 = vrot.slane %v5771, %v6030
  %v6032 = vlaneseq
  %v6033 = vshrl.u32 %v6032, 7
  %v6034 = vsub.s32 0, %v6033
  %v6035 = vrot.slane %v5779, %v6034
  %v6036 = vlaneseq
  %v6037 = vshrl.u32 %v6036, 7
  %v6038 = vsub.s32 0, %v6037
  %v6039 = vrot.slane %v5781, %v6038
  %v6040 = vlaneseq
  %v6041 = vshrl.u32 %v6040, 7
  %v6042 = vsub.s32 0, %v6041
  %v6043 = vrot.slane %v5764, %v6042
  %v6044 = vlaneseq
  %v6045 = vshrl.u32 %v6044, 7
  %v6046 = vsub.s32 0, %v6045
  %v6047 = vrot.slane %v5778, %v6046
  %v6048 = vlaneseq
  %v6049 = vshrl.u32 %v6048, 7
  %v6050 = vsub.s32 0, %v6049
  %v6051 = vrot.slane %v5780, %v6050
  %v6052 = vlaneseq
  %v6053 = vshrl.u32 %v6052, 7
  %v6054 = vsub.s32 0, %v6053
  %v6055 = vrot.slane %v5782, %v6054
  %v6056 = vlaneseq
  %v6057 = vshrl.u32 %v6056, 7
  %v6058 = vsub.s32 0, %v6057
  %v6059 = vrot.slane %v5806, %v6058
  %v6060 = vlaneseq
  %v6061 = vshrl.u32 %v6060, 7
  %v6062 = vsub.s32 0, %v6061
  %v6063 = vrot.slane %v5820, %v6062
  %v6064 = vlaneseq
  %v6065 = vshrl.u32 %v6064, 7
  %v6066 = vsub.s32 0, %v6065
  %v6067 = vrot.slane %v5828, %v6066
  %v6068 = vlaneseq
  %v6069 = vshrl.u32 %v6068, 7
  %v6070 = vsub.s32 0, %v6069
  %v6071 = vrot.slane %v5830, %v6070
  %v6072 = vlaneseq
  %v6073 = vshrl.u32 %v6072, 7
  %v6074 = vsub.s32 0, %v6073
  %v6075 = vrot.slane %v5813, %v6074
  %v6076 = vlaneseq
  %v6077 = vshrl.u32 %v6076, 7
  %v6078 = vsub.s32 0, %v6077
  %v6079 = vrot.slane %v5827, %v6078
  %v6080 = vlaneseq
  %v6081 = vshrl.u32 %v6080, 7
  %v6082 = vsub.s32 0, %v6081
  %v6083 = vrot.slane %v5829, %v6082
  %v6084 = vlaneseq
  %v6085 = vshrl.u32 %v6084, 7
  %v6086 = vsub.s32 0, %v6085
  %v6087 = vrot.slane %v5831, %v6086
  %v6152 = vadd.f32 %v4912, %v5835
  %v6153 = vadd.f32 %v4913, %v5835
  %v6154 = vadd.f32 %v4914, %v5835
  %v6155 = vadd.f32 %v4915, %v5835
  %v6156 = vadd.f32 %v4916, %v5835
  %v6157 = vadd.f32 %v4917, %v5835
  %v6158 = vadd.f32 %v4918, %v5835
  %v6159 = vadd.f32 %v4919, %v5835
  %v6160 = vadd.f32 %v4920, %v5839
  %v6161 = vadd.f32 %v4921, %v5839
  %v6162 = vadd.f32 %v4922, %v5839
  %v6163 = vadd.f32 %v4923, %v5839
  %v6164 = vadd.f32 %v4924, %v5839
  %v6165 = vadd.f32 %v4925, %v5839
  %v6166 = vadd.f32 %v4926, %v5839
  %v6167 = vadd.f32 %v4927, %v5839
  %v6168 = vadd.f32 %v4928, %v5843
  %v6169 = vadd.f32 %v4929, %v5843
  %v6170 = vadd.f32 %v4930, %v5843
  %v6171 = vadd.f32 %v4931, %v5843
  %v6172 = vadd.f32 %v4932, %v5843
  %v6173 = vadd.f32 %v4933, %v5843
  %v6174 = vadd.f32 %v4934, %v5843
  %v6175 = vadd.f32 %v4935, %v5843
  %v6176 = vadd.f32 %v4936, %v5847
  %v6177 = vadd.f32 %v4937, %v5847
  %v6178 = vadd.f32 %v4938, %v5847
  %v6179 = vadd.f32 %v4939, %v5847
  %v6180 = vadd.f32 %v4940, %v5847
  %v6181 = vadd.f32 %v4941, %v5847
  %v6182 = vadd.f32 %v4942, %v5847
  %v6183 = vadd.f32 %v4943, %v5847
  %v6184 = vadd.f32 %v4944, %v5851
  %v6185 = vadd.f32 %v4945, %v5851
  %v6186 = vadd.f32 %v4946, %v5851
  %v6187 = vadd.f32 %v4947, %v5851
  %v6188 = vadd.f32 %v4948, %v5851
  %v6189 = vadd.f32 %v4949, %v5851
  %v6190 = vadd.f32 %v4950, %v5851
  %v6191 = vadd.f32 %v4951, %v5851
  %v6192 = vadd.f32 %v4952, %v5855
  %v6193 = vadd.f32 %v4953, %v5855
  %v6194 = vadd.f32 %v4954, %v5855
  %v6195 = vadd.f32 %v4955, %v5855
  %v6196 = vadd.f32 %v4956, %v5855
  %v6197 = vadd.f32 %v4957, %v5855
  %v6198 = vadd.f32 %v4958, %v5855
  %v6199 = vadd.f32 %v4959, %v5855
  %v6200 = vadd.f32 %v4960, %v5859
  %v6201 = vadd.f32 %v4961, %v5859
  %v6202 = vadd.f32 %v4962, %v5859
  %v6203 = vadd.f32 %v4963, %v5859
  %v6204 = vadd.f32 %v4964, %v5859
  %v6205 = vadd.f32 %v4965, %v5859
  %v6206 = vadd.f32 %v4966, %v5859
  %v6207 = vadd.f32 %v4967, %v5859
  %v6208 = vadd.f32 %v4968, %v5863
  %v6209 = vadd.f32 %v4969, %v5863
  %v6210 = vadd.f32 %v4970, %v5863
  %v6211 = vadd.f32 %v4971, %v5863
  %v6212 = vadd.f32 %v4972, %v5863
  %v6213 = vadd.f32 %v4973, %v5863
  %v6214 = vadd.f32 %v4974, %v5863
  %v6215 = vadd.f32 %v4975, %v5863
  %v6216 = vadd.f32 %v4976, %v5867
  %v6217 = vadd.f32 %v4977, %v5867
  %v6218 = vadd.f32 %v4978, %v5867
  %v6219 = vadd.f32 %v4979, %v5867
  %v6220 = vadd.f32 %v4980, %v5867
  %v6221 = vadd.f32 %v4981, %v5867
  %v6222 = vadd.f32 %v4982, %v5867
  %v6223 = vadd.f32 %v4983, %v5867
  %v6224 = vadd.f32 %v4984, %v5871
  %v6225 = vadd.f32 %v4985, %v5871
  %v6226 = vadd.f32 %v4986, %v5871
  %v6227 = vadd.f32 %v4987, %v5871
  %v6228 = vadd.f32 %v4988, %v5871
  %v6229 = vadd.f32 %v4989, %v5871
  %v6230 = vadd.f32 %v4990, %v5871
  %v6231 = vadd.f32 %v4991, %v5871
  %v6232 = vadd.f32 %v4992, %v5875
  %v6233 = vadd.f32 %v4993, %v5875
  %v6234 = vadd.f32 %v4994, %v5875
  %v6235 = vadd.f32 %v4995, %v5875
  %v6236 = vadd.f32 %v4996, %v5875
  %v6237 = vadd.f32 %v4997, %v5875
  %v6238 = vadd.f32 %v4998, %v5875
  %v6239 = vadd.f32 %v4999, %v5875
  %v6240 = vadd.f32 %v5000, %v5879
  %v6241 = vadd.f32 %v5001, %v5879
  %v6242 = vadd.f32 %v5002, %v5879
  %v6243 = vadd.f32 %v5003, %v5879
  %v6244 = vadd.f32 %v5004, %v5879
  %v6245 = vadd.f32 %v5005, %v5879
  %v6246 = vadd.f32 %v5006, %v5879
  %v6247 = vadd.f32 %v5007, %v5879
  %v6248 = vadd.f32 %v5008, %v5883
  %v6249 = vadd.f32 %v5009, %v5883
  %v6250 = vadd.f32 %v5010, %v5883
  %v6251 = vadd.f32 %v5011, %v5883
  %v6252 = vadd.f32 %v5012, %v5883
  %v6253 = vadd.f32 %v5013, %v5883
  %v6254 = vadd.f32 %v5014, %v5883
  %v6255 = vadd.f32 %v5015, %v5883
  %v6256 = vadd.f32 %v5016, %v5887
  %v6257 = vadd.f32 %v5017, %v5887
  %v6258 = vadd.f32 %v5018, %v5887
  %v6259 = vadd.f32 %v5019, %v5887
  %v6260 = vadd.f32 %v5020, %v5887
  %v6261 = vadd.f32 %v5021, %v5887
  %v6262 = vadd.f32 %v5022, %v5887
  %v6263 = vadd.f32 %v5023, %v5887
  %v6264 = vadd.f32 %v5024, %v5891
  %v6265 = vadd.f32 %v5025, %v5891
  %v6266 = vadd.f32 %v5026, %v5891
  %v6267 = vadd.f32 %v5027, %v5891
  %v6268 = vadd.f32 %v5028, %v5891
  %v6269 = vadd.f32 %v5029, %v5891
  %v6270 = vadd.f32 %v5030, %v5891
  %v6271 = vadd.f32 %v5031, %v5891
  %v6272 = vadd.f32 %v5032, %v5895
  %v6273 = vadd.f32 %v5033, %v5895
  %v6274 = vadd.f32 %v5034, %v5895
  %v6275 = vadd.f32 %v5035, %v5895
  %v6276 = vadd.f32 %v5036, %v5895
  %v6277 = vadd.f32 %v5037, %v5895
  %v6278 = vadd.f32 %v5038, %v5895
  %v6279 = vadd.f32 %v5039, %v5895
  %v6280 = vadd.f32 %v5040, %v5899
  %v6281 = vadd.f32 %v5041, %v5899
  %v6282 = vadd.f32 %v5042, %v5899
  %v6283 = vadd.f32 %v5043, %v5899
  %v6284 = vadd.f32 %v5044, %v5899
  %v6285 = vadd.f32 %v5045, %v5899
  %v6286 = vadd.f32 %v5046, %v5899
  %v6287 = vadd.f32 %v5047, %v5899
  %v6288 = vadd.f32 %v5048, %v5903
  %v6289 = vadd.f32 %v5049, %v5903
  %v6290 = vadd.f32 %v5050, %v5903
  %v6291 = vadd.f32 %v5051, %v5903
  %v6292 = vadd.f32 %v5052, %v5903
  %v6293 = vadd.f32 %v5053, %v5903
  %v6294 = vadd.f32 %v5054, %v5903
  %v6295 = vadd.f32 %v5055, %v5903
  %v6296 = vadd.f32 %v5056, %v5907
  %v6297 = vadd.f32 %v5057, %v5907
  %v6298 = vadd.f32 %v5058, %v5907
  %v6299 = vadd.f32 %v5059, %v5907
  %v6300 = vadd.f32 %v5060, %v5907
  %v6301 = vadd.f32 %v5061, %v5907
  %v6302 = vadd.f32 %v5062, %v5907
  %v6303 = vadd.f32 %v5063, %v5907
  %v6304 = vadd.f32 %v5064, %v5911
  %v6305 = vadd.f32 %v5065, %v5911
  %v6306 = vadd.f32 %v5066, %v5911
  %v6307 = vadd.f32 %v5067, %v5911
  %v6308 = vadd.f32 %v5068, %v5911
  %v6309 = vadd.f32 %v5069, %v5911
  %v6310 = vadd.f32 %v5070, %v5911
  %v6311 = vadd.f32 %v5071, %v5911
  %v6312 = vadd.f32 %v5072, %v5915
  %v6313 = vadd.f32 %v5073, %v5915
  %v6314 = vadd.f32 %v5074, %v5915
  %v6315 = vadd.f32 %v5075, %v5915
  %v6316 = vadd.f32 %v5076, %v5915
  %v6317 = vadd.f32 %v5077, %v5915
  %v6318 = vadd.f32 %v5078, %v5915
  %v6319 = vadd.f32 %v5079, %v5915
  %v6320 = vadd.f32 %v5080, %v5919
  %v6321 = vadd.f32 %v5081, %v5919
  %v6322 = vadd.f32 %v5082, %v5919
  %v6323 = vadd.f32 %v5083, %v5919
  %v6324 = vadd.f32 %v5084, %v5919
  %v6325 = vadd.f32 %v5085, %v5919
  %v6326 = vadd.f32 %v5086, %v5919
  %v6327 = vadd.f32 %v5087, %v5919
  %v6328 = vadd.f32 %v5088, %v5923
  %v6329 = vadd.f32 %v5089, %v5923
  %v6330 = vadd.f32 %v5090, %v5923
  %v6331 = vadd.f32 %v5091, %v5923
  %v6332 = vadd.f32 %v5092, %v5923
  %v6333 = vadd.f32 %v5093, %v5923
  %v6334 = vadd.f32 %v5094, %v5923
  %v6335 = vadd.f32 %v5095, %v5923
  %v6336 = vadd.f32 %v5096, %v5927
  %v6337 = vadd.f32 %v5097, %v5927
  %v6338 = vadd.f32 %v5098, %v5927
  %v6339 = vadd.f32 %v5099, %v5927
  %v6340 = vadd.f32 %v5100, %v5927
  %v6341 = vadd.f32 %v5101, %v5927
  %v6342 = vadd.f32 %v5102, %v5927
  %v6343 = vadd.f32 %v5103, %v5927
  %v6344 = vadd.f32 %v5104, %v5931
  %v6345 = vadd.f32 %v5105, %v5931
  %v6346 = vadd.f32 %v5106, %v5931
  %v6347 = vadd.f32 %v5107, %v5931
  %v6348 = vadd.f32 %v5108, %v5931
  %v6349 = vadd.f32 %v5109, %v5931
  %v6350 = vadd.f32 %v5110, %v5931
  %v6351 = vadd.f32 %v5111, %v5931
  %v6352 = vadd.f32 %v5112, %v5935
  %v6353 = vadd.f32 %v5113, %v5935
  %v6354 = vadd.f32 %v5114, %v5935
  %v6355 = vadd.f32 %v5115, %v5935
  %v6356 = vadd.f32 %v5116, %v5935
  %v6357 = vadd.f32 %v5117, %v5935
  %v6358 = vadd.f32 %v5118, %v5935
  %v6359 = vadd.f32 %v5119, %v5935
  %v6360 = vadd.f32 %v5120, %v5939
  %v6361 = vadd.f32 %v5121, %v5939
  %v6362 = vadd.f32 %v5122, %v5939
  %v6363 = vadd.f32 %v5123, %v5939
  %v6364 = vadd.f32 %v5124, %v5939
  %v6365 = vadd.f32 %v5125, %v5939
  %v6366 = vadd.f32 %v5126, %v5939
  %v6367 = vadd.f32 %v5127, %v5939
  %v6368 = vadd.f32 %v5128, %v5943
  %v6369 = vadd.f32 %v5129, %v5943
  %v6370 = vadd.f32 %v5130, %v5943
  %v6371 = vadd.f32 %v5131, %v5943
  %v6372 = vadd.f32 %v5132, %v5943
  %v6373 = vadd.f32 %v5133, %v5943
  %v6374 = vadd.f32 %v5134, %v5943
  %v6375 = vadd.f32 %v5135, %v5943
  %v6376 = vadd.f32 %v5136, %v5947
  %v6377 = vadd.f32 %v5137, %v5947
  %v6378 = vadd.f32 %v5138, %v5947
  %v6379 = vadd.f32 %v5139, %v5947
  %v6380 = vadd.f32 %v5140, %v5947
  %v6381 = vadd.f32 %v5141, %v5947
  %v6382 = vadd.f32 %v5142, %v5947
  %v6383 = vadd.f32 %v5143, %v5947
  %v6384 = vadd.f32 %v5144, %v5951
  %v6385 = vadd.f32 %v5145, %v5951
  %v6386 = vadd.f32 %v5146, %v5951
  %v6387 = vadd.f32 %v5147, %v5951
  %v6388 = vadd.f32 %v5148, %v5951
  %v6389 = vadd.f32 %v5149, %v5951
  %v6390 = vadd.f32 %v5150, %v5951
  %v6391 = vadd.f32 %v5151, %v5951
  %v6392 = vadd.f32 %v5152, %v5955
  %v6393 = vadd.f32 %v5153, %v5955
  %v6394 = vadd.f32 %v5154, %v5955
  %v6395 = vadd.f32 %v5155, %v5955
  %v6396 = vadd.f32 %v5156, %v5955
  %v6397 = vadd.f32 %v5157, %v5955
  %v6398 = vadd.f32 %v5158, %v5955
  %v6399 = vadd.f32 %v5159, %v5955
  %v6400 = vadd.f32 %v5160, %v5959
  %v6401 = vadd.f32 %v5161, %v5959
  %v6402 = vadd.f32 %v5162, %v5959
  %v6403 = vadd.f32 %v5163, %v5959
  %v6404 = vadd.f32 %v5164, %v5959
  %v6405 = vadd.f32 %v5165, %v5959
  %v6406 = vadd.f32 %v5166, %v5959
  %v6407 = vadd.f32 %v5167, %v5959
  %v6408 = vadd.f32 %v5168, %v5963
  %v6409 = vadd.f32 %v5169, %v5963
  %v6410 = vadd.f32 %v5170, %v5963
  %v6411 = vadd.f32 %v5171, %v5963
  %v6412 = vadd.f32 %v5172, %v5963
  %v6413 = vadd.f32 %v5173, %v5963
  %v6414 = vadd.f32 %v5174, %v5963
  %v6415 = vadd.f32 %v5175, %v5963
  %v6416 = vadd.f32 %v5176, %v5967
  %v6417 = vadd.f32 %v5177, %v5967
  %v6418 = vadd.f32 %v5178, %v5967
  %v6419 = vadd.f32 %v5179, %v5967
  %v6420 = vadd.f32 %v5180, %v5967
  %v6421 = vadd.f32 %v5181, %v5967
  %v6422 = vadd.f32 %v5182, %v5967
  %v6423 = vadd.f32 %v5183, %v5967
  %v6424 = vadd.f32 %v5184, %v5971
  %v6425 = vadd.f32 %v5185, %v5971
  %v6426 = vadd.f32 %v5186, %v5971
  %v6427 = vadd.f32 %v5187, %v5971
  %v6428 = vadd.f32 %v5188, %v5971
  %v6429 = vadd.f32 %v5189, %v5971
  %v6430 = vadd.f32 %v5190, %v5971
  %v6431 = vadd.f32 %v5191, %v5971
  %v6432 = vadd.f32 %v5192, %v5975
  %v6433 = vadd.f32 %v5193, %v5975
  %v6434 = vadd.f32 %v5194, %v5975
  %v6435 = vadd.f32 %v5195, %v5975
  %v6436 = vadd.f32 %v5196, %v5975
  %v6437 = vadd.f32 %v5197, %v5975
  %v6438 = vadd.f32 %v5198, %v5975
  %v6439 = vadd.f32 %v5199, %v5975
  %v6440 = vadd.f32 %v5200, %v5979
  %v6441 = vadd.f32 %v5201, %v5979
  %v6442 = vadd.f32 %v5202, %v5979
  %v6443 = vadd.f32 %v5203, %v5979
  %v6444 = vadd.f32 %v5204, %v5979
  %v6445 = vadd.f32 %v5205, %v5979
  %v6446 = vadd.f32 %v5206, %v5979
  %v6447 = vadd.f32 %v5207, %v5979
  %v6448 = vadd.f32 %v5208, %v5983
  %v6449 = vadd.f32 %v5209, %v5983
  %v6450 = vadd.f32 %v5210, %v5983
  %v6451 = vadd.f32 %v5211, %v5983
  %v6452 = vadd.f32 %v5212, %v5983
  %v6453 = vadd.f32 %v5213, %v5983
  %v6454 = vadd.f32 %v5214, %v5983
  %v6455 = vadd.f32 %v5215, %v5983
  %v6456 = vadd.f32 %v5216, %v5987
  %v6457 = vadd.f32 %v5217, %v5987
  %v6458 = vadd.f32 %v5218, %v5987
  %v6459 = vadd.f32 %v5219, %v5987
  %v6460 = vadd.f32 %v5220, %v5987
  %v6461 = vadd.f32 %v5221, %v5987
  %v6462 = vadd.f32 %v5222, %v5987
  %v6463 = vadd.f32 %v5223, %v5987
  %v6464 = vadd.f32 %v5224, %v5991
  %v6465 = vadd.f32 %v5225, %v5991
  %v6466 = vadd.f32 %v5226, %v5991
  %v6467 = vadd.f32 %v5227, %v5991
  %v6468 = vadd.f32 %v5228, %v5991
  %v6469 = vadd.f32 %v5229, %v5991
  %v6470 = vadd.f32 %v5230, %v5991
  %v6471 = vadd.f32 %v5231, %v5991
  %v6472 = vadd.f32 %v5232, %v5995
  %v6473 = vadd.f32 %v5233, %v5995
  %v6474 = vadd.f32 %v5234, %v5995
  %v6475 = vadd.f32 %v5235, %v5995
  %v6476 = vadd.f32 %v5236, %v5995
  %v6477 = vadd.f32 %v5237, %v5995
  %v6478 = vadd.f32 %v5238, %v5995
  %v6479 = vadd.f32 %v5239, %v5995
  %v6480 = vadd.f32 %v5240, %v5999
  %v6481 = vadd.f32 %v5241, %v5999
  %v6482 = vadd.f32 %v5242, %v5999
  %v6483 = vadd.f32 %v5243, %v5999
  %v6484 = vadd.f32 %v5244, %v5999
  %v6485 = vadd.f32 %v5245, %v5999
  %v6486 = vadd.f32 %v5246, %v5999
  %v6487 = vadd.f32 %v5247, %v5999
  %v6488 = vadd.f32 %v5248, %v6003
  %v6489 = vadd.f32 %v5249, %v6003
  %v6490 = vadd.f32 %v5250, %v6003
  %v6491 = vadd.f32 %v5251, %v6003
  %v6492 = vadd.f32 %v5252, %v6003
  %v6493 = vadd.f32 %v5253, %v6003
  %v6494 = vadd.f32 %v5254, %v6003
  %v6495 = vadd.f32 %v5255, %v6003
  %v6496 = vadd.f32 %v5256, %v6007
  %v6497 = vadd.f32 %v5257, %v6007
  %v6498 = vadd.f32 %v5258, %v6007
  %v6499 = vadd.f32 %v5259, %v6007
  %v6500 = vadd.f32 %v5260, %v6007
  %v6501 = vadd.f32 %v5261, %v6007
  %v6502 = vadd.f32 %v5262, %v6007
  %v6503 = vadd.f32 %v5263, %v6007
  %v6504 = vadd.f32 %v5264, %v6011
  %v6505 = vadd.f32 %v5265, %v6011
  %v6506 = vadd.f32 %v5266, %v6011
  %v6507 = vadd.f32 %v5267, %v6011
  %v6508 = vadd.f32 %v5268, %v6011
  %v6509 = vadd.f32 %v5269, %v6011
  %v6510 = vadd.f32 %v5270, %v6011
  %v6511 = vadd.f32 %v5271, %v6011
  %v6512 = vadd.f32 %v5272, %v6015
  %v6513 = vadd.f32 %v5273, %v6015
  %v6514 = vadd.f32 %v5274, %v6015
  %v6515 = vadd.f32 %v5275, %v6015
  %v6516 = vadd.f32 %v5276, %v6015
  %v6517 = vadd.f32 %v5277, %v6015
  %v6518 = vadd.f32 %v5278, %v6015
  %v6519 = vadd.f32 %v5279, %v6015
  %v6520 = vadd.f32 %v5280, %v6019
  %v6521 = vadd.f32 %v5281, %v6019
  %v6522 = vadd.f32 %v5282, %v6019
  %v6523 = vadd.f32 %v5283, %v6019
  %v6524 = vadd.f32 %v5284, %v6019
  %v6525 = vadd.f32 %v5285, %v6019
  %v6526 = vadd.f32 %v5286, %v6019
  %v6527 = vadd.f32 %v5287, %v6019
  %v6528 = vadd.f32 %v5288, %v6023
  %v6529 = vadd.f32 %v5289, %v6023
  %v6530 = vadd.f32 %v5290, %v6023
  %v6531 = vadd.f32 %v5291, %v6023
  %v6532 = vadd.f32 %v5292, %v6023
  %v6533 = vadd.f32 %v5293, %v6023
  %v6534 = vadd.f32 %v5294, %v6023
  %v6535 = vadd.f32 %v5295, %v6023
  %v6536 = vadd.f32 %v5296, %v6027
  %v6537 = vadd.f32 %v5297, %v6027
  %v6538 = vadd.f32 %v5298, %v6027
  %v6539 = vadd.f32 %v5299, %v6027
  %v6540 = vadd.f32 %v5300, %v6027
  %v6541 = vadd.f32 %v5301, %v6027
  %v6542 = vadd.f32 %v5302, %v6027
  %v6543 = vadd.f32 %v5303, %v6027
  %v6544 = vadd.f32 %v5304, %v6031
  %v6545 = vadd.f32 %v5305, %v6031
  %v6546 = vadd.f32 %v5306, %v6031
  %v6547 = vadd.f32 %v5307, %v6031
  %v6548 = vadd.f32 %v5308, %v6031
  %v6549 = vadd.f32 %v5309, %v6031
  %v6550 = vadd.f32 %v5310, %v6031
  %v6551 = vadd.f32 %v5311, %v6031
  %v6552 = vadd.f32 %v5312, %v6035
  %v6553 = vadd.f32 %v5313, %v6035
  %v6554 = vadd.f32 %v5314, %v6035
  %v6555 = vadd.f32 %v5315, %v6035
  %v6556 = vadd.f32 %v5316, %v6035
  %v6557 = vadd.f32 %v5317, %v6035
  %v6558 = vadd.f32 %v5318, %v6035
  %v6559 = vadd.f32 %v5319, %v6035
  %v6560 = vadd.f32 %v5320, %v6039
  %v6561 = vadd.f32 %v5321, %v6039
  %v6562 = vadd.f32 %v5322, %v6039
  %v6563 = vadd.f32 %v5323, %v6039
  %v6564 = vadd.f32 %v5324, %v6039
  %v6565 = vadd.f32 %v5325, %v6039
  %v6566 = vadd.f32 %v5326, %v6039
  %v6567 = vadd.f32 %v5327, %v6039
  %v6568 = vadd.f32 %v5328, %v6043
  %v6569 = vadd.f32 %v5329, %v6043
  %v6570 = vadd.f32 %v5330, %v6043
  %v6571 = vadd.f32 %v5331, %v6043
  %v6572 = vadd.f32 %v5332, %v6043
  %v6573 = vadd.f32 %v5333, %v6043
  %v6574 = vadd.f32 %v5334, %v6043
  %v6575 = vadd.f32 %v5335, %v6043
  %v6576 = vadd.f32 %v5336, %v6047
  %v6577 = vadd.f32 %v5337, %v6047
  %v6578 = vadd.f32 %v5338, %v6047
  %v6579 = vadd.f32 %v5339, %v6047
  %v6580 = vadd.f32 %v5340, %v6047
  %v6581 = vadd.f32 %v5341, %v6047
  %v6582 = vadd.f32 %v5342, %v6047
  %v6583 = vadd.f32 %v5343, %v6047
  %v6584 = vadd.f32 %v5344, %v6051
  %v6585 = vadd.f32 %v5345, %v6051
  %v6586 = vadd.f32 %v5346, %v6051
  %v6587 = vadd.f32 %v5347, %v6051
  %v6588 = vadd.f32 %v5348, %v6051
  %v6589 = vadd.f32 %v5349, %v6051
  %v6590 = vadd.f32 %v5350, %v6051
  %v6591 = vadd.f32 %v5351, %v6051
  %v6592 = vadd.f32 %v5352, %v6055
  %v6593 = vadd.f32 %v5353, %v6055
  %v6594 = vadd.f32 %v5354, %v6055
  %v6595 = vadd.f32 %v5355, %v6055
  %v6596 = vadd.f32 %v5356, %v6055
  %v6597 = vadd.f32 %v5357, %v6055
  %v6598 = vadd.f32 %v5358, %v6055
  %v6599 = vadd.f32 %v5359, %v6055
  %v6600 = vadd.f32 %v5360, %v6059
  %v6601 = vadd.f32 %v5361, %v6059
  %v6602 = vadd.f32 %v5362, %v6059
  %v6603 = vadd.f32 %v5363, %v6059
  %v6604 = vadd.f32 %v5364, %v6059
  %v6605 = vadd.f32 %v5365, %v6059
  %v6606 = vadd.f32 %v5366, %v6059
  %v6607 = vadd.f32 %v5367, %v6059
  %v6608 = vadd.f32 %v5368, %v6063
  %v6609 = vadd.f32 %v5369, %v6063
  %v6610 = vadd.f32 %v5370, %v6063
  %v6611 = vadd.f32 %v5371, %v6063
  %v6612 = vadd.f32 %v5372, %v6063
  %v6613 = vadd.f32 %v5373, %v6063
  %v6614 = vadd.f32 %v5374, %v6063
  %v6615 = vadd.f32 %v5375, %v6063
  %v6616 = vadd.f32 %v5376, %v6067
  %v6617 = vadd.f32 %v5377, %v6067
  %v6618 = vadd.f32 %v5378, %v6067
  %v6619 = vadd.f32 %v5379, %v6067
  %v6620 = vadd.f32 %v5380, %v6067
  %v6621 = vadd.f32 %v5381, %v6067
  %v6622 = vadd.f32 %v5382, %v6067
  %v6623 = vadd.f32 %v5383, %v6067
  %v6624 = vadd.f32 %v5384, %v6071
  %v6625 = vadd.f32 %v5385, %v6071
  %v6626 = vadd.f32 %v5386, %v6071
  %v6627 = vadd.f32 %v5387, %v6071
  %v6628 = vadd.f32 %v5388, %v6071
  %v6629 = vadd.f32 %v5389, %v6071
  %v6630 = vadd.f32 %v5390, %v6071
  %v6631 = vadd.f32 %v5391, %v6071
  %v6632 = vadd.f32 %v5392, %v6075
  %v6633 = vadd.f32 %v5393, %v6075
  %v6634 = vadd.f32 %v5394, %v6075
  %v6635 = vadd.f32 %v5395, %v6075
  %v6636 = vadd.f32 %v5396, %v6075
  %v6637 = vadd.f32 %v5397, %v6075
  %v6638 = vadd.f32 %v5398, %v6075
  %v6639 = vadd.f32 %v5399, %v6075
  %v6640 = vadd.f32 %v5400, %v6079
  %v6641 = vadd.f32 %v5401, %v6079
  %v6642 = vadd.f32 %v5402, %v6079
  %v6643 = vadd.f32 %v5403, %v6079
  %v6644 = vadd.f32 %v5404, %v6079
  %v6645 = vadd.f32 %v5405, %v6079
  %v6646 = vadd.f32 %v5406, %v6079
  %v6647 = vadd.f32 %v5407, %v6079
  %v6648 = vadd.f32 %v5408, %v6083
  %v6649 = vadd.f32 %v5409, %v6083
  %v6650 = vadd.f32 %v5410, %v6083
  %v6651 = vadd.f32 %v5411, %v6083
  %v6652 = vadd.f32 %v5412, %v6083
  %v6653 = vadd.f32 %v5413, %v6083
  %v6654 = vadd.f32 %v5414, %v6083
  %v6655 = vadd.f32 %v5415, %v6083
  %v6656 = vadd.f32 %v5416, %v6087
  %v6657 = vadd.f32 %v5417, %v6087
  %v6658 = vadd.f32 %v5418, %v6087
  %v6659 = vadd.f32 %v5419, %v6087
  %v6660 = vadd.f32 %v5420, %v6087
  %v6661 = vadd.f32 %v5421, %v6087
  %v6662 = vadd.f32 %v5422, %v6087
  %v6663 = vadd.f32 %v5423, %v6087
  %v6664 = vld [vmem:[#allocation3] sm:$0xff]
  %v6665 = vld [vmem:[#allocation3 + $0x8] sm:$0xff]
  %v6666 = vld [vmem:[#allocation3 + $0x10] sm:$0xff]
  %v6667 = vld [vmem:[#allocation3 + $0x18] sm:$0xff]
  %v6668 = vld [vmem:[#allocation3 + $0x20] sm:$0xff]
  %v6669 = vld [vmem:[#allocation3 + $0x28] sm:$0xff]
  %v6670 = vld [vmem:[#allocation3 + $0x30] sm:$0xff]
  %v6671 = vld [vmem:[#allocation3 + $0x38] sm:$0xff]
  %vm6672 = vcmask 261120
  %v6673 = vsel %vm6672, %v6152, 0.0
  %v6674 = vsel %vm6672, %v6153, 0.0
  %v6675 = vadd.f32 %v6673, %v6674
  %v6676 = vsel %vm6672, %v6154, 0.0
  %v6677 = vadd.f32 %v6675, %v6676
  %v6678 = vsel %vm6672, %v6155, 0.0
  %v6679 = vadd.f32 %v6677, %v6678
  %v6680 = vsel %vm6672, %v6156, 0.0
  %v6681 = vadd.f32 %v6679, %v6680
  %v6682 = vsel %vm6672, %v6157, 0.0
  %v6683 = vadd.f32 %v6681, %v6682
  %v6684 = vsel %vm6672, %v6158, 0.0
  %v6685 = vadd.f32 %v6683, %v6684
  %v6686 = vsel %vm6672, %v6159, 0.0
  %v6687 = vadd.f32 %v6685, %v6686
  %v6688 = vrot.slane %v6687, 4
  %v6689 = vadd.f32 %v6687, %v6688
  %v6690 = vrot.slane %v6689, 2
  %v6691 = vadd.f32 %v6689, %v6690
  %v6692 = vrot.slane %v6691, 1
  %v6693 = vadd.f32 %v6691, %v6692
  %v6694 = vsel %vm6672, %v6160, 0.0
  %v6695 = vsel %vm6672, %v6161, 0.0
  %v6696 = vadd.f32 %v6694, %v6695
  %v6697 = vsel %vm6672, %v6162, 0.0
  %v6698 = vadd.f32 %v6696, %v6697
  %v6699 = vsel %vm6672, %v6163, 0.0
  %v6700 = vadd.f32 %v6698, %v6699
  %v6701 = vsel %vm6672, %v6164, 0.0
  %v6702 = vadd.f32 %v6700, %v6701
  %v6703 = vsel %vm6672, %v6165, 0.0
  %v6704 = vadd.f32 %v6702, %v6703
  %v6705 = vsel %vm6672, %v6166, 0.0
  %v6706 = vadd.f32 %v6704, %v6705
  %v6707 = vsel %vm6672, %v6167, 0.0
  %v6708 = vadd.f32 %v6706, %v6707
  %v6709 = vrot.slane %v6708, 4
  %v6710 = vadd.f32 %v6708, %v6709
  %v6711 = vrot.slane %v6710, 2
  %v6712 = vadd.f32 %v6710, %v6711
  %v6713 = vrot.slane %v6712, 1
  %v6714 = vadd.f32 %v6712, %v6713
  %v6715 = vsel %vm6672, %v6168, 0.0
  %v6716 = vsel %vm6672, %v6169, 0.0
  %v6717 = vadd.f32 %v6715, %v6716
  %v6718 = vsel %vm6672, %v6170, 0.0
  %v6719 = vadd.f32 %v6717, %v6718
  %v6720 = vsel %vm6672, %v6171, 0.0
  %v6721 = vadd.f32 %v6719, %v6720
  %v6722 = vsel %vm6672, %v6172, 0.0
  %v6723 = vadd.f32 %v6721, %v6722
  %v6724 = vsel %vm6672, %v6173, 0.0
  %v6725 = vadd.f32 %v6723, %v6724
  %v6726 = vsel %vm6672, %v6174, 0.0
  %v6727 = vadd.f32 %v6725, %v6726
  %v6728 = vsel %vm6672, %v6175, 0.0
  %v6729 = vadd.f32 %v6727, %v6728
  %v6730 = vrot.slane %v6729, 4
  %v6731 = vadd.f32 %v6729, %v6730
  %v6732 = vrot.slane %v6731, 2
  %v6733 = vadd.f32 %v6731, %v6732
  %v6734 = vrot.slane %v6733, 1
  %v6735 = vadd.f32 %v6733, %v6734
  %v6736 = vsel %vm6672, %v6176, 0.0
  %v6737 = vsel %vm6672, %v6177, 0.0
  %v6738 = vadd.f32 %v6736, %v6737
  %v6739 = vsel %vm6672, %v6178, 0.0
  %v6740 = vadd.f32 %v6738, %v6739
  %v6741 = vsel %vm6672, %v6179, 0.0
  %v6742 = vadd.f32 %v6740, %v6741
  %v6743 = vsel %vm6672, %v6180, 0.0
  %v6744 = vadd.f32 %v6742, %v6743
  %v6745 = vsel %vm6672, %v6181, 0.0
  %v6746 = vadd.f32 %v6744, %v6745
  %v6747 = vsel %vm6672, %v6182, 0.0
  %v6748 = vadd.f32 %v6746, %v6747
  %v6749 = vsel %vm6672, %v6183, 0.0
  %v6750 = vadd.f32 %v6748, %v6749
  %v6751 = vrot.slane %v6750, 4
  %v6752 = vadd.f32 %v6750, %v6751
  %v6753 = vrot.slane %v6752, 2
  %v6754 = vadd.f32 %v6752, %v6753
  %v6755 = vrot.slane %v6754, 1
  %v6756 = vadd.f32 %v6754, %v6755
  %v6757 = vsel %vm6672, %v6184, 0.0
  %v6758 = vsel %vm6672, %v6185, 0.0
  %v6759 = vadd.f32 %v6757, %v6758
  %v6760 = vsel %vm6672, %v6186, 0.0
  %v6761 = vadd.f32 %v6759, %v6760
  %v6762 = vsel %vm6672, %v6187, 0.0
  %v6763 = vadd.f32 %v6761, %v6762
  %v6764 = vsel %vm6672, %v6188, 0.0
  %v6765 = vadd.f32 %v6763, %v6764
  %v6766 = vsel %vm6672, %v6189, 0.0
  %v6767 = vadd.f32 %v6765, %v6766
  %v6768 = vsel %vm6672, %v6190, 0.0
  %v6769 = vadd.f32 %v6767, %v6768
  %v6770 = vsel %vm6672, %v6191, 0.0
  %v6771 = vadd.f32 %v6769, %v6770
  %v6772 = vrot.slane %v6771, 4
  %v6773 = vadd.f32 %v6771, %v6772
  %v6774 = vrot.slane %v6773, 2
  %v6775 = vadd.f32 %v6773, %v6774
  %v6776 = vrot.slane %v6775, 1
  %v6777 = vadd.f32 %v6775, %v6776
  %v6778 = vsel %vm6672, %v6192, 0.0
  %v6779 = vsel %vm6672, %v6193, 0.0
  %v6780 = vadd.f32 %v6778, %v6779
  %v6781 = vsel %vm6672, %v6194, 0.0
  %v6782 = vadd.f32 %v6780, %v6781
  %v6783 = vsel %vm6672, %v6195, 0.0
  %v6784 = vadd.f32 %v6782, %v6783
  %v6785 = vsel %vm6672, %v6196, 0.0
  %v6786 = vadd.f32 %v6784, %v6785
  %v6787 = vsel %vm6672, %v6197, 0.0
  %v6788 = vadd.f32 %v6786, %v6787
  %v6789 = vsel %vm6672, %v6198, 0.0
  %v6790 = vadd.f32 %v6788, %v6789
  %v6791 = vsel %vm6672, %v6199, 0.0
  %v6792 = vadd.f32 %v6790, %v6791
  %v6793 = vrot.slane %v6792, 4
  %v6794 = vadd.f32 %v6792, %v6793
  %v6795 = vrot.slane %v6794, 2
  %v6796 = vadd.f32 %v6794, %v6795
  %v6797 = vrot.slane %v6796, 1
  %v6798 = vadd.f32 %v6796, %v6797
  %v6799 = vsel %vm6672, %v6200, 0.0
  %v6800 = vsel %vm6672, %v6201, 0.0
  %v6801 = vadd.f32 %v6799, %v6800
  %v6802 = vsel %vm6672, %v6202, 0.0
  %v6803 = vadd.f32 %v6801, %v6802
  %v6804 = vsel %vm6672, %v6203, 0.0
  %v6805 = vadd.f32 %v6803, %v6804
  %v6806 = vsel %vm6672, %v6204, 0.0
  %v6807 = vadd.f32 %v6805, %v6806
  %v6808 = vsel %vm6672, %v6205, 0.0
  %v6809 = vadd.f32 %v6807, %v6808
  %v6810 = vsel %vm6672, %v6206, 0.0
  %v6811 = vadd.f32 %v6809, %v6810
  %v6812 = vsel %vm6672, %v6207, 0.0
  %v6813 = vadd.f32 %v6811, %v6812
  %v6814 = vrot.slane %v6813, 4
  %v6815 = vadd.f32 %v6813, %v6814
  %v6816 = vrot.slane %v6815, 2
  %v6817 = vadd.f32 %v6815, %v6816
  %v6818 = vrot.slane %v6817, 1
  %v6819 = vadd.f32 %v6817, %v6818
  %v6820 = vsel %vm6672, %v6208, 0.0
  %v6821 = vsel %vm6672, %v6209, 0.0
  %v6822 = vadd.f32 %v6820, %v6821
  %v6823 = vsel %vm6672, %v6210, 0.0
  %v6824 = vadd.f32 %v6822, %v6823
  %v6825 = vsel %vm6672, %v6211, 0.0
  %v6826 = vadd.f32 %v6824, %v6825
  %v6827 = vsel %vm6672, %v6212, 0.0
  %v6828 = vadd.f32 %v6826, %v6827
  %v6829 = vsel %vm6672, %v6213, 0.0
  %v6830 = vadd.f32 %v6828, %v6829
  %v6831 = vsel %vm6672, %v6214, 0.0
  %v6832 = vadd.f32 %v6830, %v6831
  %v6833 = vsel %vm6672, %v6215, 0.0
  %v6834 = vadd.f32 %v6832, %v6833
  %v6835 = vrot.slane %v6834, 4
  %v6836 = vadd.f32 %v6834, %v6835
  %v6837 = vrot.slane %v6836, 2
  %v6838 = vadd.f32 %v6836, %v6837
  %v6839 = vrot.slane %v6838, 1
  %v6840 = vadd.f32 %v6838, %v6839
  %v6841 = vsel %vm6672, %v6216, 0.0
  %v6842 = vsel %vm6672, %v6217, 0.0
  %v6843 = vadd.f32 %v6841, %v6842
  %v6844 = vsel %vm6672, %v6218, 0.0
  %v6845 = vadd.f32 %v6843, %v6844
  %v6846 = vsel %vm6672, %v6219, 0.0
  %v6847 = vadd.f32 %v6845, %v6846
  %v6848 = vsel %vm6672, %v6220, 0.0
  %v6849 = vadd.f32 %v6847, %v6848
  %v6850 = vsel %vm6672, %v6221, 0.0
  %v6851 = vadd.f32 %v6849, %v6850
  %v6852 = vsel %vm6672, %v6222, 0.0
  %v6853 = vadd.f32 %v6851, %v6852
  %v6854 = vsel %vm6672, %v6223, 0.0
  %v6855 = vadd.f32 %v6853, %v6854
  %v6856 = vrot.slane %v6855, 4
  %v6857 = vadd.f32 %v6855, %v6856
  %v6858 = vrot.slane %v6857, 2
  %v6859 = vadd.f32 %v6857, %v6858
  %v6860 = vrot.slane %v6859, 1
  %v6861 = vadd.f32 %v6859, %v6860
  %v6862 = vsel %vm6672, %v6224, 0.0
  %v6863 = vsel %vm6672, %v6225, 0.0
  %v6864 = vadd.f32 %v6862, %v6863
  %v6865 = vsel %vm6672, %v6226, 0.0
  %v6866 = vadd.f32 %v6864, %v6865
  %v6867 = vsel %vm6672, %v6227, 0.0
  %v6868 = vadd.f32 %v6866, %v6867
  %v6869 = vsel %vm6672, %v6228, 0.0
  %v6870 = vadd.f32 %v6868, %v6869
  %v6871 = vsel %vm6672, %v6229, 0.0
  %v6872 = vadd.f32 %v6870, %v6871
  %v6873 = vsel %vm6672, %v6230, 0.0
  %v6874 = vadd.f32 %v6872, %v6873
  %v6875 = vsel %vm6672, %v6231, 0.0
  %v6876 = vadd.f32 %v6874, %v6875
  %v6877 = vrot.slane %v6876, 4
  %v6878 = vadd.f32 %v6876, %v6877
  %v6879 = vrot.slane %v6878, 2
  %v6880 = vadd.f32 %v6878, %v6879
  %v6881 = vrot.slane %v6880, 1
  %v6882 = vadd.f32 %v6880, %v6881
  %v6883 = vsel %vm6672, %v6232, 0.0
  %v6884 = vsel %vm6672, %v6233, 0.0
  %v6885 = vadd.f32 %v6883, %v6884
  %v6886 = vsel %vm6672, %v6234, 0.0
  %v6887 = vadd.f32 %v6885, %v6886
  %v6888 = vsel %vm6672, %v6235, 0.0
  %v6889 = vadd.f32 %v6887, %v6888
  %v6890 = vsel %vm6672, %v6236, 0.0
  %v6891 = vadd.f32 %v6889, %v6890
  %v6892 = vsel %vm6672, %v6237, 0.0
  %v6893 = vadd.f32 %v6891, %v6892
  %v6894 = vsel %vm6672, %v6238, 0.0
  %v6895 = vadd.f32 %v6893, %v6894
  %v6896 = vsel %vm6672, %v6239, 0.0
  %v6897 = vadd.f32 %v6895, %v6896
  %v6898 = vrot.slane %v6897, 4
  %v6899 = vadd.f32 %v6897, %v6898
  %v6900 = vrot.slane %v6899, 2
  %v6901 = vadd.f32 %v6899, %v6900
  %v6902 = vrot.slane %v6901, 1
  %v6903 = vadd.f32 %v6901, %v6902
  %v6904 = vsel %vm6672, %v6240, 0.0
  %v6905 = vsel %vm6672, %v6241, 0.0
  %v6906 = vadd.f32 %v6904, %v6905
  %v6907 = vsel %vm6672, %v6242, 0.0
  %v6908 = vadd.f32 %v6906, %v6907
  %v6909 = vsel %vm6672, %v6243, 0.0
  %v6910 = vadd.f32 %v6908, %v6909
  %v6911 = vsel %vm6672, %v6244, 0.0
  %v6912 = vadd.f32 %v6910, %v6911
  %v6913 = vsel %vm6672, %v6245, 0.0
  %v6914 = vadd.f32 %v6912, %v6913
  %v6915 = vsel %vm6672, %v6246, 0.0
  %v6916 = vadd.f32 %v6914, %v6915
  %v6917 = vsel %vm6672, %v6247, 0.0
  %v6918 = vadd.f32 %v6916, %v6917
  %v6919 = vrot.slane %v6918, 4
  %v6920 = vadd.f32 %v6918, %v6919
  %v6921 = vrot.slane %v6920, 2
  %v6922 = vadd.f32 %v6920, %v6921
  %v6923 = vrot.slane %v6922, 1
  %v6924 = vadd.f32 %v6922, %v6923
  %v6925 = vsel %vm6672, %v6248, 0.0
  %v6926 = vsel %vm6672, %v6249, 0.0
  %v6927 = vadd.f32 %v6925, %v6926
  %v6928 = vsel %vm6672, %v6250, 0.0
  %v6929 = vadd.f32 %v6927, %v6928
  %v6930 = vsel %vm6672, %v6251, 0.0
  %v6931 = vadd.f32 %v6929, %v6930
  %v6932 = vsel %vm6672, %v6252, 0.0
  %v6933 = vadd.f32 %v6931, %v6932
  %v6934 = vsel %vm6672, %v6253, 0.0
  %v6935 = vadd.f32 %v6933, %v6934
  %v6936 = vsel %vm6672, %v6254, 0.0
  %v6937 = vadd.f32 %v6935, %v6936
  %v6938 = vsel %vm6672, %v6255, 0.0
  %v6939 = vadd.f32 %v6937, %v6938
  %v6940 = vrot.slane %v6939, 4
  %v6941 = vadd.f32 %v6939, %v6940
  %v6942 = vrot.slane %v6941, 2
  %v6943 = vadd.f32 %v6941, %v6942
  %v6944 = vrot.slane %v6943, 1
  %v6945 = vadd.f32 %v6943, %v6944
  %v6946 = vsel %vm6672, %v6256, 0.0
  %v6947 = vsel %vm6672, %v6257, 0.0
  %v6948 = vadd.f32 %v6946, %v6947
  %v6949 = vsel %vm6672, %v6258, 0.0
  %v6950 = vadd.f32 %v6948, %v6949
  %v6951 = vsel %vm6672, %v6259, 0.0
  %v6952 = vadd.f32 %v6950, %v6951
  %v6953 = vsel %vm6672, %v6260, 0.0
  %v6954 = vadd.f32 %v6952, %v6953
  %v6955 = vsel %vm6672, %v6261, 0.0
  %v6956 = vadd.f32 %v6954, %v6955
  %v6957 = vsel %vm6672, %v6262, 0.0
  %v6958 = vadd.f32 %v6956, %v6957
  %v6959 = vsel %vm6672, %v6263, 0.0
  %v6960 = vadd.f32 %v6958, %v6959
  %v6961 = vrot.slane %v6960, 4
  %v6962 = vadd.f32 %v6960, %v6961
  %v6963 = vrot.slane %v6962, 2
  %v6964 = vadd.f32 %v6962, %v6963
  %v6965 = vrot.slane %v6964, 1
  %v6966 = vadd.f32 %v6964, %v6965
  %v6967 = vsel %vm6672, %v6264, 0.0
  %v6968 = vsel %vm6672, %v6265, 0.0
  %v6969 = vadd.f32 %v6967, %v6968
  %v6970 = vsel %vm6672, %v6266, 0.0
  %v6971 = vadd.f32 %v6969, %v6970
  %v6972 = vsel %vm6672, %v6267, 0.0
  %v6973 = vadd.f32 %v6971, %v6972
  %v6974 = vsel %vm6672, %v6268, 0.0
  %v6975 = vadd.f32 %v6973, %v6974
  %v6976 = vsel %vm6672, %v6269, 0.0
  %v6977 = vadd.f32 %v6975, %v6976
  %v6978 = vsel %vm6672, %v6270, 0.0
  %v6979 = vadd.f32 %v6977, %v6978
  %v6980 = vsel %vm6672, %v6271, 0.0
  %v6981 = vadd.f32 %v6979, %v6980
  %v6982 = vrot.slane %v6981, 4
  %v6983 = vadd.f32 %v6981, %v6982
  %v6984 = vrot.slane %v6983, 2
  %v6985 = vadd.f32 %v6983, %v6984
  %v6986 = vrot.slane %v6985, 1
  %v6987 = vadd.f32 %v6985, %v6986
  %v6988 = vsel %vm6672, %v6272, 0.0
  %v6989 = vsel %vm6672, %v6273, 0.0
  %v6990 = vadd.f32 %v6988, %v6989
  %v6991 = vsel %vm6672, %v6274, 0.0
  %v6992 = vadd.f32 %v6990, %v6991
  %v6993 = vsel %vm6672, %v6275, 0.0
  %v6994 = vadd.f32 %v6992, %v6993
  %v6995 = vsel %vm6672, %v6276, 0.0
  %v6996 = vadd.f32 %v6994, %v6995
  %v6997 = vsel %vm6672, %v6277, 0.0
  %v6998 = vadd.f32 %v6996, %v6997
  %v6999 = vsel %vm6672, %v6278, 0.0
  %v7000 = vadd.f32 %v6998, %v6999
  %v7001 = vsel %vm6672, %v6279, 0.0
  %v7002 = vadd.f32 %v7000, %v7001
  %v7003 = vrot.slane %v7002, 4
  %v7004 = vadd.f32 %v7002, %v7003
  %v7005 = vrot.slane %v7004, 2
  %v7006 = vadd.f32 %v7004, %v7005
  %v7007 = vrot.slane %v7006, 1
  %v7008 = vadd.f32 %v7006, %v7007
  %v7009 = vsel %vm6672, %v6280, 0.0
  %v7010 = vsel %vm6672, %v6281, 0.0
  %v7011 = vadd.f32 %v7009, %v7010
  %v7012 = vsel %vm6672, %v6282, 0.0
  %v7013 = vadd.f32 %v7011, %v7012
  %v7014 = vsel %vm6672, %v6283, 0.0
  %v7015 = vadd.f32 %v7013, %v7014
  %v7016 = vsel %vm6672, %v6284, 0.0
  %v7017 = vadd.f32 %v7015, %v7016
  %v7018 = vsel %vm6672, %v6285, 0.0
  %v7019 = vadd.f32 %v7017, %v7018
  %v7020 = vsel %vm6672, %v6286, 0.0
  %v7021 = vadd.f32 %v7019, %v7020
  %v7022 = vsel %vm6672, %v6287, 0.0
  %v7023 = vadd.f32 %v7021, %v7022
  %v7024 = vrot.slane %v7023, 4
  %v7025 = vadd.f32 %v7023, %v7024
  %v7026 = vrot.slane %v7025, 2
  %v7027 = vadd.f32 %v7025, %v7026
  %v7028 = vrot.slane %v7027, 1
  %v7029 = vadd.f32 %v7027, %v7028
  %v7030 = vsel %vm6672, %v6288, 0.0
  %v7031 = vsel %vm6672, %v6289, 0.0
  %v7032 = vadd.f32 %v7030, %v7031
  %v7033 = vsel %vm6672, %v6290, 0.0
  %v7034 = vadd.f32 %v7032, %v7033
  %v7035 = vsel %vm6672, %v6291, 0.0
  %v7036 = vadd.f32 %v7034, %v7035
  %v7037 = vsel %vm6672, %v6292, 0.0
  %v7038 = vadd.f32 %v7036, %v7037
  %v7039 = vsel %vm6672, %v6293, 0.0
  %v7040 = vadd.f32 %v7038, %v7039
  %v7041 = vsel %vm6672, %v6294, 0.0
  %v7042 = vadd.f32 %v7040, %v7041
  %v7043 = vsel %vm6672, %v6295, 0.0
  %v7044 = vadd.f32 %v7042, %v7043
  %v7045 = vrot.slane %v7044, 4
  %v7046 = vadd.f32 %v7044, %v7045
  %v7047 = vrot.slane %v7046, 2
  %v7048 = vadd.f32 %v7046, %v7047
  %v7049 = vrot.slane %v7048, 1
  %v7050 = vadd.f32 %v7048, %v7049
  %v7051 = vsel %vm6672, %v6296, 0.0
  %v7052 = vsel %vm6672, %v6297, 0.0
  %v7053 = vadd.f32 %v7051, %v7052
  %v7054 = vsel %vm6672, %v6298, 0.0
  %v7055 = vadd.f32 %v7053, %v7054
  %v7056 = vsel %vm6672, %v6299, 0.0
  %v7057 = vadd.f32 %v7055, %v7056
  %v7058 = vsel %vm6672, %v6300, 0.0
  %v7059 = vadd.f32 %v7057, %v7058
  %v7060 = vsel %vm6672, %v6301, 0.0
  %v7061 = vadd.f32 %v7059, %v7060
  %v7062 = vsel %vm6672, %v6302, 0.0
  %v7063 = vadd.f32 %v7061, %v7062
  %v7064 = vsel %vm6672, %v6303, 0.0
  %v7065 = vadd.f32 %v7063, %v7064
  %v7066 = vrot.slane %v7065, 4
  %v7067 = vadd.f32 %v7065, %v7066
  %v7068 = vrot.slane %v7067, 2
  %v7069 = vadd.f32 %v7067, %v7068
  %v7070 = vrot.slane %v7069, 1
  %v7071 = vadd.f32 %v7069, %v7070
  %v7072 = vsel %vm6672, %v6304, 0.0
  %v7073 = vsel %vm6672, %v6305, 0.0
  %v7074 = vadd.f32 %v7072, %v7073
  %v7075 = vsel %vm6672, %v6306, 0.0
  %v7076 = vadd.f32 %v7074, %v7075
  %v7077 = vsel %vm6672, %v6307, 0.0
  %v7078 = vadd.f32 %v7076, %v7077
  %v7079 = vsel %vm6672, %v6308, 0.0
  %v7080 = vadd.f32 %v7078, %v7079
  %v7081 = vsel %vm6672, %v6309, 0.0
  %v7082 = vadd.f32 %v7080, %v7081
  %v7083 = vsel %vm6672, %v6310, 0.0
  %v7084 = vadd.f32 %v7082, %v7083
  %v7085 = vsel %vm6672, %v6311, 0.0
  %v7086 = vadd.f32 %v7084, %v7085
  %v7087 = vrot.slane %v7086, 4
  %v7088 = vadd.f32 %v7086, %v7087
  %v7089 = vrot.slane %v7088, 2
  %v7090 = vadd.f32 %v7088, %v7089
  %v7091 = vrot.slane %v7090, 1
  %v7092 = vadd.f32 %v7090, %v7091
  %v7093 = vsel %vm6672, %v6312, 0.0
  %v7094 = vsel %vm6672, %v6313, 0.0
  %v7095 = vadd.f32 %v7093, %v7094
  %v7096 = vsel %vm6672, %v6314, 0.0
  %v7097 = vadd.f32 %v7095, %v7096
  %v7098 = vsel %vm6672, %v6315, 0.0
  %v7099 = vadd.f32 %v7097, %v7098
  %v7100 = vsel %vm6672, %v6316, 0.0
  %v7101 = vadd.f32 %v7099, %v7100
  %v7102 = vsel %vm6672, %v6317, 0.0
  %v7103 = vadd.f32 %v7101, %v7102
  %v7104 = vsel %vm6672, %v6318, 0.0
  %v7105 = vadd.f32 %v7103, %v7104
  %v7106 = vsel %vm6672, %v6319, 0.0
  %v7107 = vadd.f32 %v7105, %v7106
  %v7108 = vrot.slane %v7107, 4
  %v7109 = vadd.f32 %v7107, %v7108
  %v7110 = vrot.slane %v7109, 2
  %v7111 = vadd.f32 %v7109, %v7110
  %v7112 = vrot.slane %v7111, 1
  %v7113 = vadd.f32 %v7111, %v7112
  %v7114 = vsel %vm6672, %v6320, 0.0
  %v7115 = vsel %vm6672, %v6321, 0.0
  %v7116 = vadd.f32 %v7114, %v7115
  %v7117 = vsel %vm6672, %v6322, 0.0
  %v7118 = vadd.f32 %v7116, %v7117
  %v7119 = vsel %vm6672, %v6323, 0.0
  %v7120 = vadd.f32 %v7118, %v7119
  %v7121 = vsel %vm6672, %v6324, 0.0
  %v7122 = vadd.f32 %v7120, %v7121
  %v7123 = vsel %vm6672, %v6325, 0.0
  %v7124 = vadd.f32 %v7122, %v7123
  %v7125 = vsel %vm6672, %v6326, 0.0
  %v7126 = vadd.f32 %v7124, %v7125
  %v7127 = vsel %vm6672, %v6327, 0.0
  %v7128 = vadd.f32 %v7126, %v7127
  %v7129 = vrot.slane %v7128, 4
  %v7130 = vadd.f32 %v7128, %v7129
  %v7131 = vrot.slane %v7130, 2
  %v7132 = vadd.f32 %v7130, %v7131
  %v7133 = vrot.slane %v7132, 1
  %v7134 = vadd.f32 %v7132, %v7133
  %v7135 = vsel %vm6672, %v6328, 0.0
  %v7136 = vsel %vm6672, %v6329, 0.0
  %v7137 = vadd.f32 %v7135, %v7136
  %v7138 = vsel %vm6672, %v6330, 0.0
  %v7139 = vadd.f32 %v7137, %v7138
  %v7140 = vsel %vm6672, %v6331, 0.0
  %v7141 = vadd.f32 %v7139, %v7140
  %v7142 = vsel %vm6672, %v6332, 0.0
  %v7143 = vadd.f32 %v7141, %v7142
  %v7144 = vsel %vm6672, %v6333, 0.0
  %v7145 = vadd.f32 %v7143, %v7144
  %v7146 = vsel %vm6672, %v6334, 0.0
  %v7147 = vadd.f32 %v7145, %v7146
  %v7148 = vsel %vm6672, %v6335, 0.0
  %v7149 = vadd.f32 %v7147, %v7148
  %v7150 = vrot.slane %v7149, 4
  %v7151 = vadd.f32 %v7149, %v7150
  %v7152 = vrot.slane %v7151, 2
  %v7153 = vadd.f32 %v7151, %v7152
  %v7154 = vrot.slane %v7153, 1
  %v7155 = vadd.f32 %v7153, %v7154
  %v7156 = vsel %vm6672, %v6336, 0.0
  %v7157 = vsel %vm6672, %v6337, 0.0
  %v7158 = vadd.f32 %v7156, %v7157
  %v7159 = vsel %vm6672, %v6338, 0.0
  %v7160 = vadd.f32 %v7158, %v7159
  %v7161 = vsel %vm6672, %v6339, 0.0
  %v7162 = vadd.f32 %v7160, %v7161
  %v7163 = vsel %vm6672, %v6340, 0.0
  %v7164 = vadd.f32 %v7162, %v7163
  %v7165 = vsel %vm6672, %v6341, 0.0
  %v7166 = vadd.f32 %v7164, %v7165
  %v7167 = vsel %vm6672, %v6342, 0.0
  %v7168 = vadd.f32 %v7166, %v7167
  %v7169 = vsel %vm6672, %v6343, 0.0
  %v7170 = vadd.f32 %v7168, %v7169
  %v7171 = vrot.slane %v7170, 4
  %v7172 = vadd.f32 %v7170, %v7171
  %v7173 = vrot.slane %v7172, 2
  %v7174 = vadd.f32 %v7172, %v7173
  %v7175 = vrot.slane %v7174, 1
  %v7176 = vadd.f32 %v7174, %v7175
  %v7177 = vsel %vm6672, %v6344, 0.0
  %v7178 = vsel %vm6672, %v6345, 0.0
  %v7179 = vadd.f32 %v7177, %v7178
  %v7180 = vsel %vm6672, %v6346, 0.0
  %v7181 = vadd.f32 %v7179, %v7180
  %v7182 = vsel %vm6672, %v6347, 0.0
  %v7183 = vadd.f32 %v7181, %v7182
  %v7184 = vsel %vm6672, %v6348, 0.0
  %v7185 = vadd.f32 %v7183, %v7184
  %v7186 = vsel %vm6672, %v6349, 0.0
  %v7187 = vadd.f32 %v7185, %v7186
  %v7188 = vsel %vm6672, %v6350, 0.0
  %v7189 = vadd.f32 %v7187, %v7188
  %v7190 = vsel %vm6672, %v6351, 0.0
  %v7191 = vadd.f32 %v7189, %v7190
  %v7192 = vrot.slane %v7191, 4
  %v7193 = vadd.f32 %v7191, %v7192
  %v7194 = vrot.slane %v7193, 2
  %v7195 = vadd.f32 %v7193, %v7194
  %v7196 = vrot.slane %v7195, 1
  %v7197 = vadd.f32 %v7195, %v7196
  %v7198 = vsel %vm6672, %v6352, 0.0
  %v7199 = vsel %vm6672, %v6353, 0.0
  %v7200 = vadd.f32 %v7198, %v7199
  %v7201 = vsel %vm6672, %v6354, 0.0
  %v7202 = vadd.f32 %v7200, %v7201
  %v7203 = vsel %vm6672, %v6355, 0.0
  %v7204 = vadd.f32 %v7202, %v7203
  %v7205 = vsel %vm6672, %v6356, 0.0
  %v7206 = vadd.f32 %v7204, %v7205
  %v7207 = vsel %vm6672, %v6357, 0.0
  %v7208 = vadd.f32 %v7206, %v7207
  %v7209 = vsel %vm6672, %v6358, 0.0
  %v7210 = vadd.f32 %v7208, %v7209
  %v7211 = vsel %vm6672, %v6359, 0.0
  %v7212 = vadd.f32 %v7210, %v7211
  %v7213 = vrot.slane %v7212, 4
  %v7214 = vadd.f32 %v7212, %v7213
  %v7215 = vrot.slane %v7214, 2
  %v7216 = vadd.f32 %v7214, %v7215
  %v7217 = vrot.slane %v7216, 1
  %v7218 = vadd.f32 %v7216, %v7217
  %v7219 = vsel %vm6672, %v6360, 0.0
  %v7220 = vsel %vm6672, %v6361, 0.0
  %v7221 = vadd.f32 %v7219, %v7220
  %v7222 = vsel %vm6672, %v6362, 0.0
  %v7223 = vadd.f32 %v7221, %v7222
  %v7224 = vsel %vm6672, %v6363, 0.0
  %v7225 = vadd.f32 %v7223, %v7224
  %v7226 = vsel %vm6672, %v6364, 0.0
  %v7227 = vadd.f32 %v7225, %v7226
  %v7228 = vsel %vm6672, %v6365, 0.0
  %v7229 = vadd.f32 %v7227, %v7228
  %v7230 = vsel %vm6672, %v6366, 0.0
  %v7231 = vadd.f32 %v7229, %v7230
  %v7232 = vsel %vm6672, %v6367, 0.0
  %v7233 = vadd.f32 %v7231, %v7232
  %v7234 = vrot.slane %v7233, 4
  %v7235 = vadd.f32 %v7233, %v7234
  %v7236 = vrot.slane %v7235, 2
  %v7237 = vadd.f32 %v7235, %v7236
  %v7238 = vrot.slane %v7237, 1
  %v7239 = vadd.f32 %v7237, %v7238
  %v7240 = vsel %vm6672, %v6368, 0.0
  %v7241 = vsel %vm6672, %v6369, 0.0
  %v7242 = vadd.f32 %v7240, %v7241
  %v7243 = vsel %vm6672, %v6370, 0.0
  %v7244 = vadd.f32 %v7242, %v7243
  %v7245 = vsel %vm6672, %v6371, 0.0
  %v7246 = vadd.f32 %v7244, %v7245
  %v7247 = vsel %vm6672, %v6372, 0.0
  %v7248 = vadd.f32 %v7246, %v7247
  %v7249 = vsel %vm6672, %v6373, 0.0
  %v7250 = vadd.f32 %v7248, %v7249
  %v7251 = vsel %vm6672, %v6374, 0.0
  %v7252 = vadd.f32 %v7250, %v7251
  %v7253 = vsel %vm6672, %v6375, 0.0
  %v7254 = vadd.f32 %v7252, %v7253
  %v7255 = vrot.slane %v7254, 4
  %v7256 = vadd.f32 %v7254, %v7255
  %v7257 = vrot.slane %v7256, 2
  %v7258 = vadd.f32 %v7256, %v7257
  %v7259 = vrot.slane %v7258, 1
  %v7260 = vadd.f32 %v7258, %v7259
  %v7261 = vsel %vm6672, %v6376, 0.0
  %v7262 = vsel %vm6672, %v6377, 0.0
  %v7263 = vadd.f32 %v7261, %v7262
  %v7264 = vsel %vm6672, %v6378, 0.0
  %v7265 = vadd.f32 %v7263, %v7264
  %v7266 = vsel %vm6672, %v6379, 0.0
  %v7267 = vadd.f32 %v7265, %v7266
  %v7268 = vsel %vm6672, %v6380, 0.0
  %v7269 = vadd.f32 %v7267, %v7268
  %v7270 = vsel %vm6672, %v6381, 0.0
  %v7271 = vadd.f32 %v7269, %v7270
  %v7272 = vsel %vm6672, %v6382, 0.0
  %v7273 = vadd.f32 %v7271, %v7272
  %v7274 = vsel %vm6672, %v6383, 0.0
  %v7275 = vadd.f32 %v7273, %v7274
  %v7276 = vrot.slane %v7275, 4
  %v7277 = vadd.f32 %v7275, %v7276
  %v7278 = vrot.slane %v7277, 2
  %v7279 = vadd.f32 %v7277, %v7278
  %v7280 = vrot.slane %v7279, 1
  %v7281 = vadd.f32 %v7279, %v7280
  %v7282 = vsel %vm6672, %v6384, 0.0
  %v7283 = vsel %vm6672, %v6385, 0.0
  %v7284 = vadd.f32 %v7282, %v7283
  %v7285 = vsel %vm6672, %v6386, 0.0
  %v7286 = vadd.f32 %v7284, %v7285
  %v7287 = vsel %vm6672, %v6387, 0.0
  %v7288 = vadd.f32 %v7286, %v7287
  %v7289 = vsel %vm6672, %v6388, 0.0
  %v7290 = vadd.f32 %v7288, %v7289
  %v7291 = vsel %vm6672, %v6389, 0.0
  %v7292 = vadd.f32 %v7290, %v7291
  %v7293 = vsel %vm6672, %v6390, 0.0
  %v7294 = vadd.f32 %v7292, %v7293
  %v7295 = vsel %vm6672, %v6391, 0.0
  %v7296 = vadd.f32 %v7294, %v7295
  %v7297 = vrot.slane %v7296, 4
  %v7298 = vadd.f32 %v7296, %v7297
  %v7299 = vrot.slane %v7298, 2
  %v7300 = vadd.f32 %v7298, %v7299
  %v7301 = vrot.slane %v7300, 1
  %v7302 = vadd.f32 %v7300, %v7301
  %v7303 = vsel %vm6672, %v6392, 0.0
  %v7304 = vsel %vm6672, %v6393, 0.0
  %v7305 = vadd.f32 %v7303, %v7304
  %v7306 = vsel %vm6672, %v6394, 0.0
  %v7307 = vadd.f32 %v7305, %v7306
  %v7308 = vsel %vm6672, %v6395, 0.0
  %v7309 = vadd.f32 %v7307, %v7308
  %v7310 = vsel %vm6672, %v6396, 0.0
  %v7311 = vadd.f32 %v7309, %v7310
  %v7312 = vsel %vm6672, %v6397, 0.0
  %v7313 = vadd.f32 %v7311, %v7312
  %v7314 = vsel %vm6672, %v6398, 0.0
  %v7315 = vadd.f32 %v7313, %v7314
  %v7316 = vsel %vm6672, %v6399, 0.0
  %v7317 = vadd.f32 %v7315, %v7316
  %v7318 = vrot.slane %v7317, 4
  %v7319 = vadd.f32 %v7317, %v7318
  %v7320 = vrot.slane %v7319, 2
  %v7321 = vadd.f32 %v7319, %v7320
  %v7322 = vrot.slane %v7321, 1
  %v7323 = vadd.f32 %v7321, %v7322
  %v7324 = vsel %vm6672, %v6400, 0.0
  %v7325 = vsel %vm6672, %v6401, 0.0
  %v7326 = vadd.f32 %v7324, %v7325
  %v7327 = vsel %vm6672, %v6402, 0.0
  %v7328 = vadd.f32 %v7326, %v7327
  %v7329 = vsel %vm6672, %v6403, 0.0
  %v7330 = vadd.f32 %v7328, %v7329
  %v7331 = vsel %vm6672, %v6404, 0.0
  %v7332 = vadd.f32 %v7330, %v7331
  %v7333 = vsel %vm6672, %v6405, 0.0
  %v7334 = vadd.f32 %v7332, %v7333
  %v7335 = vsel %vm6672, %v6406, 0.0
  %v7336 = vadd.f32 %v7334, %v7335
  %v7337 = vsel %vm6672, %v6407, 0.0
  %v7338 = vadd.f32 %v7336, %v7337
  %v7339 = vrot.slane %v7338, 4
  %v7340 = vadd.f32 %v7338, %v7339
  %v7341 = vrot.slane %v7340, 2
  %v7342 = vadd.f32 %v7340, %v7341
  %v7343 = vrot.slane %v7342, 1
  %v7344 = vadd.f32 %v7342, %v7343
  %v7345 = vsel %vm6672, %v6408, 0.0
  %v7346 = vsel %vm6672, %v6409, 0.0
  %v7347 = vadd.f32 %v7345, %v7346
  %v7348 = vsel %vm6672, %v6410, 0.0
  %v7349 = vadd.f32 %v7347, %v7348
  %v7350 = vsel %vm6672, %v6411, 0.0
  %v7351 = vadd.f32 %v7349, %v7350
  %v7352 = vsel %vm6672, %v6412, 0.0
  %v7353 = vadd.f32 %v7351, %v7352
  %v7354 = vsel %vm6672, %v6413, 0.0
  %v7355 = vadd.f32 %v7353, %v7354
  %v7356 = vsel %vm6672, %v6414, 0.0
  %v7357 = vadd.f32 %v7355, %v7356
  %v7358 = vsel %vm6672, %v6415, 0.0
  %v7359 = vadd.f32 %v7357, %v7358
  %v7360 = vrot.slane %v7359, 4
  %v7361 = vadd.f32 %v7359, %v7360
  %v7362 = vrot.slane %v7361, 2
  %v7363 = vadd.f32 %v7361, %v7362
  %v7364 = vrot.slane %v7363, 1
  %v7365 = vadd.f32 %v7363, %v7364
  %v7366 = vsel %vm6672, %v6416, 0.0
  %v7367 = vsel %vm6672, %v6417, 0.0
  %v7368 = vadd.f32 %v7366, %v7367
  %v7369 = vsel %vm6672, %v6418, 0.0
  %v7370 = vadd.f32 %v7368, %v7369
  %v7371 = vsel %vm6672, %v6419, 0.0
  %v7372 = vadd.f32 %v7370, %v7371
  %v7373 = vsel %vm6672, %v6420, 0.0
  %v7374 = vadd.f32 %v7372, %v7373
  %v7375 = vsel %vm6672, %v6421, 0.0
  %v7376 = vadd.f32 %v7374, %v7375
  %v7377 = vsel %vm6672, %v6422, 0.0
  %v7378 = vadd.f32 %v7376, %v7377
  %v7379 = vsel %vm6672, %v6423, 0.0
  %v7380 = vadd.f32 %v7378, %v7379
  %v7381 = vrot.slane %v7380, 4
  %v7382 = vadd.f32 %v7380, %v7381
  %v7383 = vrot.slane %v7382, 2
  %v7384 = vadd.f32 %v7382, %v7383
  %v7385 = vrot.slane %v7384, 1
  %v7386 = vadd.f32 %v7384, %v7385
  %v7387 = vsel %vm6672, %v6424, 0.0
  %v7388 = vsel %vm6672, %v6425, 0.0
  %v7389 = vadd.f32 %v7387, %v7388
  %v7390 = vsel %vm6672, %v6426, 0.0
  %v7391 = vadd.f32 %v7389, %v7390
  %v7392 = vsel %vm6672, %v6427, 0.0
  %v7393 = vadd.f32 %v7391, %v7392
  %v7394 = vsel %vm6672, %v6428, 0.0
  %v7395 = vadd.f32 %v7393, %v7394
  %v7396 = vsel %vm6672, %v6429, 0.0
  %v7397 = vadd.f32 %v7395, %v7396
  %v7398 = vsel %vm6672, %v6430, 0.0
  %v7399 = vadd.f32 %v7397, %v7398
  %v7400 = vsel %vm6672, %v6431, 0.0
  %v7401 = vadd.f32 %v7399, %v7400
  %v7402 = vrot.slane %v7401, 4
  %v7403 = vadd.f32 %v7401, %v7402
  %v7404 = vrot.slane %v7403, 2
  %v7405 = vadd.f32 %v7403, %v7404
  %v7406 = vrot.slane %v7405, 1
  %v7407 = vadd.f32 %v7405, %v7406
  %v7408 = vsel %vm6672, %v6432, 0.0
  %v7409 = vsel %vm6672, %v6433, 0.0
  %v7410 = vadd.f32 %v7408, %v7409
  %v7411 = vsel %vm6672, %v6434, 0.0
  %v7412 = vadd.f32 %v7410, %v7411
  %v7413 = vsel %vm6672, %v6435, 0.0
  %v7414 = vadd.f32 %v7412, %v7413
  %v7415 = vsel %vm6672, %v6436, 0.0
  %v7416 = vadd.f32 %v7414, %v7415
  %v7417 = vsel %vm6672, %v6437, 0.0
  %v7418 = vadd.f32 %v7416, %v7417
  %v7419 = vsel %vm6672, %v6438, 0.0
  %v7420 = vadd.f32 %v7418, %v7419
  %v7421 = vsel %vm6672, %v6439, 0.0
  %v7422 = vadd.f32 %v7420, %v7421
  %v7423 = vrot.slane %v7422, 4
  %v7424 = vadd.f32 %v7422, %v7423
  %v7425 = vrot.slane %v7424, 2
  %v7426 = vadd.f32 %v7424, %v7425
  %v7427 = vrot.slane %v7426, 1
  %v7428 = vadd.f32 %v7426, %v7427
  %v7429 = vsel %vm6672, %v6440, 0.0
  %v7430 = vsel %vm6672, %v6441, 0.0
  %v7431 = vadd.f32 %v7429, %v7430
  %v7432 = vsel %vm6672, %v6442, 0.0
  %v7433 = vadd.f32 %v7431, %v7432
  %v7434 = vsel %vm6672, %v6443, 0.0
  %v7435 = vadd.f32 %v7433, %v7434
  %v7436 = vsel %vm6672, %v6444, 0.0
  %v7437 = vadd.f32 %v7435, %v7436
  %v7438 = vsel %vm6672, %v6445, 0.0
  %v7439 = vadd.f32 %v7437, %v7438
  %v7440 = vsel %vm6672, %v6446, 0.0
  %v7441 = vadd.f32 %v7439, %v7440
  %v7442 = vsel %vm6672, %v6447, 0.0
  %v7443 = vadd.f32 %v7441, %v7442
  %v7444 = vrot.slane %v7443, 4
  %v7445 = vadd.f32 %v7443, %v7444
  %v7446 = vrot.slane %v7445, 2
  %v7447 = vadd.f32 %v7445, %v7446
  %v7448 = vrot.slane %v7447, 1
  %v7449 = vadd.f32 %v7447, %v7448
  %v7450 = vsel %vm6672, %v6448, 0.0
  %v7451 = vsel %vm6672, %v6449, 0.0
  %v7452 = vadd.f32 %v7450, %v7451
  %v7453 = vsel %vm6672, %v6450, 0.0
  %v7454 = vadd.f32 %v7452, %v7453
  %v7455 = vsel %vm6672, %v6451, 0.0
  %v7456 = vadd.f32 %v7454, %v7455
  %v7457 = vsel %vm6672, %v6452, 0.0
  %v7458 = vadd.f32 %v7456, %v7457
  %v7459 = vsel %vm6672, %v6453, 0.0
  %v7460 = vadd.f32 %v7458, %v7459
  %v7461 = vsel %vm6672, %v6454, 0.0
  %v7462 = vadd.f32 %v7460, %v7461
  %v7463 = vsel %vm6672, %v6455, 0.0
  %v7464 = vadd.f32 %v7462, %v7463
  %v7465 = vrot.slane %v7464, 4
  %v7466 = vadd.f32 %v7464, %v7465
  %v7467 = vrot.slane %v7466, 2
  %v7468 = vadd.f32 %v7466, %v7467
  %v7469 = vrot.slane %v7468, 1
  %v7470 = vadd.f32 %v7468, %v7469
  %v7471 = vsel %vm6672, %v6456, 0.0
  %v7472 = vsel %vm6672, %v6457, 0.0
  %v7473 = vadd.f32 %v7471, %v7472
  %v7474 = vsel %vm6672, %v6458, 0.0
  %v7475 = vadd.f32 %v7473, %v7474
  %v7476 = vsel %vm6672, %v6459, 0.0
  %v7477 = vadd.f32 %v7475, %v7476
  %v7478 = vsel %vm6672, %v6460, 0.0
  %v7479 = vadd.f32 %v7477, %v7478
  %v7480 = vsel %vm6672, %v6461, 0.0
  %v7481 = vadd.f32 %v7479, %v7480
  %v7482 = vsel %vm6672, %v6462, 0.0
  %v7483 = vadd.f32 %v7481, %v7482
  %v7484 = vsel %vm6672, %v6463, 0.0
  %v7485 = vadd.f32 %v7483, %v7484
  %v7486 = vrot.slane %v7485, 4
  %v7487 = vadd.f32 %v7485, %v7486
  %v7488 = vrot.slane %v7487, 2
  %v7489 = vadd.f32 %v7487, %v7488
  %v7490 = vrot.slane %v7489, 1
  %v7491 = vadd.f32 %v7489, %v7490
  %v7492 = vsel %vm6672, %v6464, 0.0
  %v7493 = vsel %vm6672, %v6465, 0.0
  %v7494 = vadd.f32 %v7492, %v7493
  %v7495 = vsel %vm6672, %v6466, 0.0
  %v7496 = vadd.f32 %v7494, %v7495
  %v7497 = vsel %vm6672, %v6467, 0.0
  %v7498 = vadd.f32 %v7496, %v7497
  %v7499 = vsel %vm6672, %v6468, 0.0
  %v7500 = vadd.f32 %v7498, %v7499
  %v7501 = vsel %vm6672, %v6469, 0.0
  %v7502 = vadd.f32 %v7500, %v7501
  %v7503 = vsel %vm6672, %v6470, 0.0
  %v7504 = vadd.f32 %v7502, %v7503
  %v7505 = vsel %vm6672, %v6471, 0.0
  %v7506 = vadd.f32 %v7504, %v7505
  %v7507 = vrot.slane %v7506, 4
  %v7508 = vadd.f32 %v7506, %v7507
  %v7509 = vrot.slane %v7508, 2
  %v7510 = vadd.f32 %v7508, %v7509
  %v7511 = vrot.slane %v7510, 1
  %v7512 = vadd.f32 %v7510, %v7511
  %v7513 = vsel %vm6672, %v6472, 0.0
  %v7514 = vsel %vm6672, %v6473, 0.0
  %v7515 = vadd.f32 %v7513, %v7514
  %v7516 = vsel %vm6672, %v6474, 0.0
  %v7517 = vadd.f32 %v7515, %v7516
  %v7518 = vsel %vm6672, %v6475, 0.0
  %v7519 = vadd.f32 %v7517, %v7518
  %v7520 = vsel %vm6672, %v6476, 0.0
  %v7521 = vadd.f32 %v7519, %v7520
  %v7522 = vsel %vm6672, %v6477, 0.0
  %v7523 = vadd.f32 %v7521, %v7522
  %v7524 = vsel %vm6672, %v6478, 0.0
  %v7525 = vadd.f32 %v7523, %v7524
  %v7526 = vsel %vm6672, %v6479, 0.0
  %v7527 = vadd.f32 %v7525, %v7526
  %v7528 = vrot.slane %v7527, 4
  %v7529 = vadd.f32 %v7527, %v7528
  %v7530 = vrot.slane %v7529, 2
  %v7531 = vadd.f32 %v7529, %v7530
  %v7532 = vrot.slane %v7531, 1
  %v7533 = vadd.f32 %v7531, %v7532
  %v7534 = vsel %vm6672, %v6480, 0.0
  %v7535 = vsel %vm6672, %v6481, 0.0
  %v7536 = vadd.f32 %v7534, %v7535
  %v7537 = vsel %vm6672, %v6482, 0.0
  %v7538 = vadd.f32 %v7536, %v7537
  %v7539 = vsel %vm6672, %v6483, 0.0
  %v7540 = vadd.f32 %v7538, %v7539
  %v7541 = vsel %vm6672, %v6484, 0.0
  %v7542 = vadd.f32 %v7540, %v7541
  %v7543 = vsel %vm6672, %v6485, 0.0
  %v7544 = vadd.f32 %v7542, %v7543
  %v7545 = vsel %vm6672, %v6486, 0.0
  %v7546 = vadd.f32 %v7544, %v7545
  %v7547 = vsel %vm6672, %v6487, 0.0
  %v7548 = vadd.f32 %v7546, %v7547
  %v7549 = vrot.slane %v7548, 4
  %v7550 = vadd.f32 %v7548, %v7549
  %v7551 = vrot.slane %v7550, 2
  %v7552 = vadd.f32 %v7550, %v7551
  %v7553 = vrot.slane %v7552, 1
  %v7554 = vadd.f32 %v7552, %v7553
  %v7555 = vsel %vm6672, %v6488, 0.0
  %v7556 = vsel %vm6672, %v6489, 0.0
  %v7557 = vadd.f32 %v7555, %v7556
  %v7558 = vsel %vm6672, %v6490, 0.0
  %v7559 = vadd.f32 %v7557, %v7558
  %v7560 = vsel %vm6672, %v6491, 0.0
  %v7561 = vadd.f32 %v7559, %v7560
  %v7562 = vsel %vm6672, %v6492, 0.0
  %v7563 = vadd.f32 %v7561, %v7562
  %v7564 = vsel %vm6672, %v6493, 0.0
  %v7565 = vadd.f32 %v7563, %v7564
  %v7566 = vsel %vm6672, %v6494, 0.0
  %v7567 = vadd.f32 %v7565, %v7566
  %v7568 = vsel %vm6672, %v6495, 0.0
  %v7569 = vadd.f32 %v7567, %v7568
  %v7570 = vrot.slane %v7569, 4
  %v7571 = vadd.f32 %v7569, %v7570
  %v7572 = vrot.slane %v7571, 2
  %v7573 = vadd.f32 %v7571, %v7572
  %v7574 = vrot.slane %v7573, 1
  %v7575 = vadd.f32 %v7573, %v7574
  %v7576 = vsel %vm6672, %v6496, 0.0
  %v7577 = vsel %vm6672, %v6497, 0.0
  %v7578 = vadd.f32 %v7576, %v7577
  %v7579 = vsel %vm6672, %v6498, 0.0
  %v7580 = vadd.f32 %v7578, %v7579
  %v7581 = vsel %vm6672, %v6499, 0.0
  %v7582 = vadd.f32 %v7580, %v7581
  %v7583 = vsel %vm6672, %v6500, 0.0
  %v7584 = vadd.f32 %v7582, %v7583
  %v7585 = vsel %vm6672, %v6501, 0.0
  %v7586 = vadd.f32 %v7584, %v7585
  %v7587 = vsel %vm6672, %v6502, 0.0
  %v7588 = vadd.f32 %v7586, %v7587
  %v7589 = vsel %vm6672, %v6503, 0.0
  %v7590 = vadd.f32 %v7588, %v7589
  %v7591 = vrot.slane %v7590, 4
  %v7592 = vadd.f32 %v7590, %v7591
  %v7593 = vrot.slane %v7592, 2
  %v7594 = vadd.f32 %v7592, %v7593
  %v7595 = vrot.slane %v7594, 1
  %v7596 = vadd.f32 %v7594, %v7595
  %v7597 = vsel %vm6672, %v6504, 0.0
  %v7598 = vsel %vm6672, %v6505, 0.0
  %v7599 = vadd.f32 %v7597, %v7598
  %v7600 = vsel %vm6672, %v6506, 0.0
  %v7601 = vadd.f32 %v7599, %v7600
  %v7602 = vsel %vm6672, %v6507, 0.0
  %v7603 = vadd.f32 %v7601, %v7602
  %v7604 = vsel %vm6672, %v6508, 0.0
  %v7605 = vadd.f32 %v7603, %v7604
  %v7606 = vsel %vm6672, %v6509, 0.0
  %v7607 = vadd.f32 %v7605, %v7606
  %v7608 = vsel %vm6672, %v6510, 0.0
  %v7609 = vadd.f32 %v7607, %v7608
  %v7610 = vsel %vm6672, %v6511, 0.0
  %v7611 = vadd.f32 %v7609, %v7610
  %v7612 = vrot.slane %v7611, 4
  %v7613 = vadd.f32 %v7611, %v7612
  %v7614 = vrot.slane %v7613, 2
  %v7615 = vadd.f32 %v7613, %v7614
  %v7616 = vrot.slane %v7615, 1
  %v7617 = vadd.f32 %v7615, %v7616
  %v7618 = vsel %vm6672, %v6512, 0.0
  %v7619 = vsel %vm6672, %v6513, 0.0
  %v7620 = vadd.f32 %v7618, %v7619
  %v7621 = vsel %vm6672, %v6514, 0.0
  %v7622 = vadd.f32 %v7620, %v7621
  %v7623 = vsel %vm6672, %v6515, 0.0
  %v7624 = vadd.f32 %v7622, %v7623
  %v7625 = vsel %vm6672, %v6516, 0.0
  %v7626 = vadd.f32 %v7624, %v7625
  %v7627 = vsel %vm6672, %v6517, 0.0
  %v7628 = vadd.f32 %v7626, %v7627
  %v7629 = vsel %vm6672, %v6518, 0.0
  %v7630 = vadd.f32 %v7628, %v7629
  %v7631 = vsel %vm6672, %v6519, 0.0
  %v7632 = vadd.f32 %v7630, %v7631
  %v7633 = vrot.slane %v7632, 4
  %v7634 = vadd.f32 %v7632, %v7633
  %v7635 = vrot.slane %v7634, 2
  %v7636 = vadd.f32 %v7634, %v7635
  %v7637 = vrot.slane %v7636, 1
  %v7638 = vadd.f32 %v7636, %v7637
  %v7639 = vsel %vm6672, %v6520, 0.0
  %v7640 = vsel %vm6672, %v6521, 0.0
  %v7641 = vadd.f32 %v7639, %v7640
  %v7642 = vsel %vm6672, %v6522, 0.0
  %v7643 = vadd.f32 %v7641, %v7642
  %v7644 = vsel %vm6672, %v6523, 0.0
  %v7645 = vadd.f32 %v7643, %v7644
  %v7646 = vsel %vm6672, %v6524, 0.0
  %v7647 = vadd.f32 %v7645, %v7646
  %v7648 = vsel %vm6672, %v6525, 0.0
  %v7649 = vadd.f32 %v7647, %v7648
  %v7650 = vsel %vm6672, %v6526, 0.0
  %v7651 = vadd.f32 %v7649, %v7650
  %v7652 = vsel %vm6672, %v6527, 0.0
  %v7653 = vadd.f32 %v7651, %v7652
  %v7654 = vrot.slane %v7653, 4
  %v7655 = vadd.f32 %v7653, %v7654
  %v7656 = vrot.slane %v7655, 2
  %v7657 = vadd.f32 %v7655, %v7656
  %v7658 = vrot.slane %v7657, 1
  %v7659 = vadd.f32 %v7657, %v7658
  %v7660 = vsel %vm6672, %v6528, 0.0
  %v7661 = vsel %vm6672, %v6529, 0.0
  %v7662 = vadd.f32 %v7660, %v7661
  %v7663 = vsel %vm6672, %v6530, 0.0
  %v7664 = vadd.f32 %v7662, %v7663
  %v7665 = vsel %vm6672, %v6531, 0.0
  %v7666 = vadd.f32 %v7664, %v7665
  %v7667 = vsel %vm6672, %v6532, 0.0
  %v7668 = vadd.f32 %v7666, %v7667
  %v7669 = vsel %vm6672, %v6533, 0.0
  %v7670 = vadd.f32 %v7668, %v7669
  %v7671 = vsel %vm6672, %v6534, 0.0
  %v7672 = vadd.f32 %v7670, %v7671
  %v7673 = vsel %vm6672, %v6535, 0.0
  %v7674 = vadd.f32 %v7672, %v7673
  %v7675 = vrot.slane %v7674, 4
  %v7676 = vadd.f32 %v7674, %v7675
  %v7677 = vrot.slane %v7676, 2
  %v7678 = vadd.f32 %v7676, %v7677
  %v7679 = vrot.slane %v7678, 1
  %v7680 = vadd.f32 %v7678, %v7679
  %v7681 = vsel %vm6672, %v6536, 0.0
  %v7682 = vsel %vm6672, %v6537, 0.0
  %v7683 = vadd.f32 %v7681, %v7682
  %v7684 = vsel %vm6672, %v6538, 0.0
  %v7685 = vadd.f32 %v7683, %v7684
  %v7686 = vsel %vm6672, %v6539, 0.0
  %v7687 = vadd.f32 %v7685, %v7686
  %v7688 = vsel %vm6672, %v6540, 0.0
  %v7689 = vadd.f32 %v7687, %v7688
  %v7690 = vsel %vm6672, %v6541, 0.0
  %v7691 = vadd.f32 %v7689, %v7690
  %v7692 = vsel %vm6672, %v6542, 0.0
  %v7693 = vadd.f32 %v7691, %v7692
  %v7694 = vsel %vm6672, %v6543, 0.0
  %v7695 = vadd.f32 %v7693, %v7694
  %v7696 = vrot.slane %v7695, 4
  %v7697 = vadd.f32 %v7695, %v7696
  %v7698 = vrot.slane %v7697, 2
  %v7699 = vadd.f32 %v7697, %v7698
  %v7700 = vrot.slane %v7699, 1
  %v7701 = vadd.f32 %v7699, %v7700
  %v7702 = vsel %vm6672, %v6544, 0.0
  %v7703 = vsel %vm6672, %v6545, 0.0
  %v7704 = vadd.f32 %v7702, %v7703
  %v7705 = vsel %vm6672, %v6546, 0.0
  %v7706 = vadd.f32 %v7704, %v7705
  %v7707 = vsel %vm6672, %v6547, 0.0
  %v7708 = vadd.f32 %v7706, %v7707
  %v7709 = vsel %vm6672, %v6548, 0.0
  %v7710 = vadd.f32 %v7708, %v7709
  %v7711 = vsel %vm6672, %v6549, 0.0
  %v7712 = vadd.f32 %v7710, %v7711
  %v7713 = vsel %vm6672, %v6550, 0.0
  %v7714 = vadd.f32 %v7712, %v7713
  %v7715 = vsel %vm6672, %v6551, 0.0
  %v7716 = vadd.f32 %v7714, %v7715
  %v7717 = vrot.slane %v7716, 4
  %v7718 = vadd.f32 %v7716, %v7717
  %v7719 = vrot.slane %v7718, 2
  %v7720 = vadd.f32 %v7718, %v7719
  %v7721 = vrot.slane %v7720, 1
  %v7722 = vadd.f32 %v7720, %v7721
  %v7723 = vsel %vm6672, %v6552, 0.0
  %v7724 = vsel %vm6672, %v6553, 0.0
  %v7725 = vadd.f32 %v7723, %v7724
  %v7726 = vsel %vm6672, %v6554, 0.0
  %v7727 = vadd.f32 %v7725, %v7726
  %v7728 = vsel %vm6672, %v6555, 0.0
  %v7729 = vadd.f32 %v7727, %v7728
  %v7730 = vsel %vm6672, %v6556, 0.0
  %v7731 = vadd.f32 %v7729, %v7730
  %v7732 = vsel %vm6672, %v6557, 0.0
  %v7733 = vadd.f32 %v7731, %v7732
  %v7734 = vsel %vm6672, %v6558, 0.0
  %v7735 = vadd.f32 %v7733, %v7734
  %v7736 = vsel %vm6672, %v6559, 0.0
  %v7737 = vadd.f32 %v7735, %v7736
  %v7738 = vrot.slane %v7737, 4
  %v7739 = vadd.f32 %v7737, %v7738
  %v7740 = vrot.slane %v7739, 2
  %v7741 = vadd.f32 %v7739, %v7740
  %v7742 = vrot.slane %v7741, 1
  %v7743 = vadd.f32 %v7741, %v7742
  %v7744 = vsel %vm6672, %v6560, 0.0
  %v7745 = vsel %vm6672, %v6561, 0.0
  %v7746 = vadd.f32 %v7744, %v7745
  %v7747 = vsel %vm6672, %v6562, 0.0
  %v7748 = vadd.f32 %v7746, %v7747
  %v7749 = vsel %vm6672, %v6563, 0.0
  %v7750 = vadd.f32 %v7748, %v7749
  %v7751 = vsel %vm6672, %v6564, 0.0
  %v7752 = vadd.f32 %v7750, %v7751
  %v7753 = vsel %vm6672, %v6565, 0.0
  %v7754 = vadd.f32 %v7752, %v7753
  %v7755 = vsel %vm6672, %v6566, 0.0
  %v7756 = vadd.f32 %v7754, %v7755
  %v7757 = vsel %vm6672, %v6567, 0.0
  %v7758 = vadd.f32 %v7756, %v7757
  %v7759 = vrot.slane %v7758, 4
  %v7760 = vadd.f32 %v7758, %v7759
  %v7761 = vrot.slane %v7760, 2
  %v7762 = vadd.f32 %v7760, %v7761
  %v7763 = vrot.slane %v7762, 1
  %v7764 = vadd.f32 %v7762, %v7763
  %v7765 = vsel %vm6672, %v6568, 0.0
  %v7766 = vsel %vm6672, %v6569, 0.0
  %v7767 = vadd.f32 %v7765, %v7766
  %v7768 = vsel %vm6672, %v6570, 0.0
  %v7769 = vadd.f32 %v7767, %v7768
  %v7770 = vsel %vm6672, %v6571, 0.0
  %v7771 = vadd.f32 %v7769, %v7770
  %v7772 = vsel %vm6672, %v6572, 0.0
  %v7773 = vadd.f32 %v7771, %v7772
  %v7774 = vsel %vm6672, %v6573, 0.0
  %v7775 = vadd.f32 %v7773, %v7774
  %v7776 = vsel %vm6672, %v6574, 0.0
  %v7777 = vadd.f32 %v7775, %v7776
  %v7778 = vsel %vm6672, %v6575, 0.0
  %v7779 = vadd.f32 %v7777, %v7778
  %v7780 = vrot.slane %v7779, 4
  %v7781 = vadd.f32 %v7779, %v7780
  %v7782 = vrot.slane %v7781, 2
  %v7783 = vadd.f32 %v7781, %v7782
  %v7784 = vrot.slane %v7783, 1
  %v7785 = vadd.f32 %v7783, %v7784
  %v7786 = vsel %vm6672, %v6576, 0.0
  %v7787 = vsel %vm6672, %v6577, 0.0
  %v7788 = vadd.f32 %v7786, %v7787
  %v7789 = vsel %vm6672, %v6578, 0.0
  %v7790 = vadd.f32 %v7788, %v7789
  %v7791 = vsel %vm6672, %v6579, 0.0
  %v7792 = vadd.f32 %v7790, %v7791
  %v7793 = vsel %vm6672, %v6580, 0.0
  %v7794 = vadd.f32 %v7792, %v7793
  %v7795 = vsel %vm6672, %v6581, 0.0
  %v7796 = vadd.f32 %v7794, %v7795
  %v7797 = vsel %vm6672, %v6582, 0.0
  %v7798 = vadd.f32 %v7796, %v7797
  %v7799 = vsel %vm6672, %v6583, 0.0
  %v7800 = vadd.f32 %v7798, %v7799
  %v7801 = vrot.slane %v7800, 4
  %v7802 = vadd.f32 %v7800, %v7801
  %v7803 = vrot.slane %v7802, 2
  %v7804 = vadd.f32 %v7802, %v7803
  %v7805 = vrot.slane %v7804, 1
  %v7806 = vadd.f32 %v7804, %v7805
  %v7807 = vsel %vm6672, %v6584, 0.0
  %v7808 = vsel %vm6672, %v6585, 0.0
  %v7809 = vadd.f32 %v7807, %v7808
  %v7810 = vsel %vm6672, %v6586, 0.0
  %v7811 = vadd.f32 %v7809, %v7810
  %v7812 = vsel %vm6672, %v6587, 0.0
  %v7813 = vadd.f32 %v7811, %v7812
  %v7814 = vsel %vm6672, %v6588, 0.0
  %v7815 = vadd.f32 %v7813, %v7814
  %v7816 = vsel %vm6672, %v6589, 0.0
  %v7817 = vadd.f32 %v7815, %v7816
  %v7818 = vsel %vm6672, %v6590, 0.0
  %v7819 = vadd.f32 %v7817, %v7818
  %v7820 = vsel %vm6672, %v6591, 0.0
  %v7821 = vadd.f32 %v7819, %v7820
  %v7822 = vrot.slane %v7821, 4
  %v7823 = vadd.f32 %v7821, %v7822
  %v7824 = vrot.slane %v7823, 2
  %v7825 = vadd.f32 %v7823, %v7824
  %v7826 = vrot.slane %v7825, 1
  %v7827 = vadd.f32 %v7825, %v7826
  %v7828 = vsel %vm6672, %v6592, 0.0
  %v7829 = vsel %vm6672, %v6593, 0.0
  %v7830 = vadd.f32 %v7828, %v7829
  %v7831 = vsel %vm6672, %v6594, 0.0
  %v7832 = vadd.f32 %v7830, %v7831
  %v7833 = vsel %vm6672, %v6595, 0.0
  %v7834 = vadd.f32 %v7832, %v7833
  %v7835 = vsel %vm6672, %v6596, 0.0
  %v7836 = vadd.f32 %v7834, %v7835
  %v7837 = vsel %vm6672, %v6597, 0.0
  %v7838 = vadd.f32 %v7836, %v7837
  %v7839 = vsel %vm6672, %v6598, 0.0
  %v7840 = vadd.f32 %v7838, %v7839
  %v7841 = vsel %vm6672, %v6599, 0.0
  %v7842 = vadd.f32 %v7840, %v7841
  %v7843 = vrot.slane %v7842, 4
  %v7844 = vadd.f32 %v7842, %v7843
  %v7845 = vrot.slane %v7844, 2
  %v7846 = vadd.f32 %v7844, %v7845
  %v7847 = vrot.slane %v7846, 1
  %v7848 = vadd.f32 %v7846, %v7847
  %v7849 = vsel %vm6672, %v6600, 0.0
  %v7850 = vsel %vm6672, %v6601, 0.0
  %v7851 = vadd.f32 %v7849, %v7850
  %v7852 = vsel %vm6672, %v6602, 0.0
  %v7853 = vadd.f32 %v7851, %v7852
  %v7854 = vsel %vm6672, %v6603, 0.0
  %v7855 = vadd.f32 %v7853, %v7854
  %v7856 = vsel %vm6672, %v6604, 0.0
  %v7857 = vadd.f32 %v7855, %v7856
  %v7858 = vsel %vm6672, %v6605, 0.0
  %v7859 = vadd.f32 %v7857, %v7858
  %v7860 = vsel %vm6672, %v6606, 0.0
  %v7861 = vadd.f32 %v7859, %v7860
  %v7862 = vsel %vm6672, %v6607, 0.0
  %v7863 = vadd.f32 %v7861, %v7862
  %v7864 = vrot.slane %v7863, 4
  %v7865 = vadd.f32 %v7863, %v7864
  %v7866 = vrot.slane %v7865, 2
  %v7867 = vadd.f32 %v7865, %v7866
  %v7868 = vrot.slane %v7867, 1
  %v7869 = vadd.f32 %v7867, %v7868
  %v7870 = vsel %vm6672, %v6608, 0.0
  %v7871 = vsel %vm6672, %v6609, 0.0
  %v7872 = vadd.f32 %v7870, %v7871
  %v7873 = vsel %vm6672, %v6610, 0.0
  %v7874 = vadd.f32 %v7872, %v7873
  %v7875 = vsel %vm6672, %v6611, 0.0
  %v7876 = vadd.f32 %v7874, %v7875
  %v7877 = vsel %vm6672, %v6612, 0.0
  %v7878 = vadd.f32 %v7876, %v7877
  %v7879 = vsel %vm6672, %v6613, 0.0
  %v7880 = vadd.f32 %v7878, %v7879
  %v7881 = vsel %vm6672, %v6614, 0.0
  %v7882 = vadd.f32 %v7880, %v7881
  %v7883 = vsel %vm6672, %v6615, 0.0
  %v7884 = vadd.f32 %v7882, %v7883
  %v7885 = vrot.slane %v7884, 4
  %v7886 = vadd.f32 %v7884, %v7885
  %v7887 = vrot.slane %v7886, 2
  %v7888 = vadd.f32 %v7886, %v7887
  %v7889 = vrot.slane %v7888, 1
  %v7890 = vadd.f32 %v7888, %v7889
  %v7891 = vsel %vm6672, %v6616, 0.0
  %v7892 = vsel %vm6672, %v6617, 0.0
  %v7893 = vadd.f32 %v7891, %v7892
  %v7894 = vsel %vm6672, %v6618, 0.0
  %v7895 = vadd.f32 %v7893, %v7894
  %v7896 = vsel %vm6672, %v6619, 0.0
  %v7897 = vadd.f32 %v7895, %v7896
  %v7898 = vsel %vm6672, %v6620, 0.0
  %v7899 = vadd.f32 %v7897, %v7898
  %v7900 = vsel %vm6672, %v6621, 0.0
  %v7901 = vadd.f32 %v7899, %v7900
  %v7902 = vsel %vm6672, %v6622, 0.0
  %v7903 = vadd.f32 %v7901, %v7902
  %v7904 = vsel %vm6672, %v6623, 0.0
  %v7905 = vadd.f32 %v7903, %v7904
  %v7906 = vrot.slane %v7905, 4
  %v7907 = vadd.f32 %v7905, %v7906
  %v7908 = vrot.slane %v7907, 2
  %v7909 = vadd.f32 %v7907, %v7908
  %v7910 = vrot.slane %v7909, 1
  %v7911 = vadd.f32 %v7909, %v7910
  %v7912 = vsel %vm6672, %v6624, 0.0
  %v7913 = vsel %vm6672, %v6625, 0.0
  %v7914 = vadd.f32 %v7912, %v7913
  %v7915 = vsel %vm6672, %v6626, 0.0
  %v7916 = vadd.f32 %v7914, %v7915
  %v7917 = vsel %vm6672, %v6627, 0.0
  %v7918 = vadd.f32 %v7916, %v7917
  %v7919 = vsel %vm6672, %v6628, 0.0
  %v7920 = vadd.f32 %v7918, %v7919
  %v7921 = vsel %vm6672, %v6629, 0.0
  %v7922 = vadd.f32 %v7920, %v7921
  %v7923 = vsel %vm6672, %v6630, 0.0
  %v7924 = vadd.f32 %v7922, %v7923
  %v7925 = vsel %vm6672, %v6631, 0.0
  %v7926 = vadd.f32 %v7924, %v7925
  %v7927 = vrot.slane %v7926, 4
  %v7928 = vadd.f32 %v7926, %v7927
  %v7929 = vrot.slane %v7928, 2
  %v7930 = vadd.f32 %v7928, %v7929
  %v7931 = vrot.slane %v7930, 1
  %v7932 = vadd.f32 %v7930, %v7931
  %v7933 = vsel %vm6672, %v6632, 0.0
  %v7934 = vsel %vm6672, %v6633, 0.0
  %v7935 = vadd.f32 %v7933, %v7934
  %v7936 = vsel %vm6672, %v6634, 0.0
  %v7937 = vadd.f32 %v7935, %v7936
  %v7938 = vsel %vm6672, %v6635, 0.0
  %v7939 = vadd.f32 %v7937, %v7938
  %v7940 = vsel %vm6672, %v6636, 0.0
  %v7941 = vadd.f32 %v7939, %v7940
  %v7942 = vsel %vm6672, %v6637, 0.0
  %v7943 = vadd.f32 %v7941, %v7942
  %v7944 = vsel %vm6672, %v6638, 0.0
  %v7945 = vadd.f32 %v7943, %v7944
  %v7946 = vsel %vm6672, %v6639, 0.0
  %v7947 = vadd.f32 %v7945, %v7946
  %v7948 = vrot.slane %v7947, 4
  %v7949 = vadd.f32 %v7947, %v7948
  %v7950 = vrot.slane %v7949, 2
  %v7951 = vadd.f32 %v7949, %v7950
  %v7952 = vrot.slane %v7951, 1
  %v7953 = vadd.f32 %v7951, %v7952
  %v7954 = vsel %vm6672, %v6640, 0.0
  %v7955 = vsel %vm6672, %v6641, 0.0
  %v7956 = vadd.f32 %v7954, %v7955
  %v7957 = vsel %vm6672, %v6642, 0.0
  %v7958 = vadd.f32 %v7956, %v7957
  %v7959 = vsel %vm6672, %v6643, 0.0
  %v7960 = vadd.f32 %v7958, %v7959
  %v7961 = vsel %vm6672, %v6644, 0.0
  %v7962 = vadd.f32 %v7960, %v7961
  %v7963 = vsel %vm6672, %v6645, 0.0
  %v7964 = vadd.f32 %v7962, %v7963
  %v7965 = vsel %vm6672, %v6646, 0.0
  %v7966 = vadd.f32 %v7964, %v7965
  %v7967 = vsel %vm6672, %v6647, 0.0
  %v7968 = vadd.f32 %v7966, %v7967
  %v7969 = vrot.slane %v7968, 4
  %v7970 = vadd.f32 %v7968, %v7969
  %v7971 = vrot.slane %v7970, 2
  %v7972 = vadd.f32 %v7970, %v7971
  %v7973 = vrot.slane %v7972, 1
  %v7974 = vadd.f32 %v7972, %v7973
  %v7975 = vsel %vm6672, %v6648, 0.0
  %v7976 = vsel %vm6672, %v6649, 0.0
  %v7977 = vadd.f32 %v7975, %v7976
  %v7978 = vsel %vm6672, %v6650, 0.0
  %v7979 = vadd.f32 %v7977, %v7978
  %v7980 = vsel %vm6672, %v6651, 0.0
  %v7981 = vadd.f32 %v7979, %v7980
  %v7982 = vsel %vm6672, %v6652, 0.0
  %v7983 = vadd.f32 %v7981, %v7982
  %v7984 = vsel %vm6672, %v6653, 0.0
  %v7985 = vadd.f32 %v7983, %v7984
  %v7986 = vsel %vm6672, %v6654, 0.0
  %v7987 = vadd.f32 %v7985, %v7986
  %v7988 = vsel %vm6672, %v6655, 0.0
  %v7989 = vadd.f32 %v7987, %v7988
  %v7990 = vrot.slane %v7989, 4
  %v7991 = vadd.f32 %v7989, %v7990
  %v7992 = vrot.slane %v7991, 2
  %v7993 = vadd.f32 %v7991, %v7992
  %v7994 = vrot.slane %v7993, 1
  %v7995 = vadd.f32 %v7993, %v7994
  %v7996 = vsel %vm6672, %v6656, 0.0
  %v7997 = vsel %vm6672, %v6657, 0.0
  %v7998 = vadd.f32 %v7996, %v7997
  %v7999 = vsel %vm6672, %v6658, 0.0
  %v8000 = vadd.f32 %v7998, %v7999
  %v8001 = vsel %vm6672, %v6659, 0.0
  %v8002 = vadd.f32 %v8000, %v8001
  %v8003 = vsel %vm6672, %v6660, 0.0
  %v8004 = vadd.f32 %v8002, %v8003
  %v8005 = vsel %vm6672, %v6661, 0.0
  %v8006 = vadd.f32 %v8004, %v8005
  %v8007 = vsel %vm6672, %v6662, 0.0
  %v8008 = vadd.f32 %v8006, %v8007
  %v8009 = vsel %vm6672, %v6663, 0.0
  %v8010 = vadd.f32 %v8008, %v8009
  %v8011 = vrot.slane %v8010, 4
  %v8012 = vadd.f32 %v8010, %v8011
  %v8013 = vrot.slane %v8012, 2
  %v8014 = vadd.f32 %v8012, %v8013
  %v8015 = vrot.slane %v8014, 1
  %v8016 = vadd.f32 %v8014, %v8015
  %vm8081 = vcmask 1041409
  %v8082 = vsel %vm8081, %v6714, %v6693
  %vm8083 = vcmask 1042434
  %v8084 = vsel %vm8083, %v6735, %v8082
  %vm8085 = vcmask 1043459
  %v8086 = vsel %vm8085, %v6756, %v8084
  %vm8087 = vcmask 1044484
  %v8088 = vsel %vm8087, %v6777, %v8086
  %vm8089 = vcmask 1045509
  %v8090 = vsel %vm8089, %v6798, %v8088
  %vm8091 = vcmask 1046534
  %v8092 = vsel %vm8091, %v6819, %v8090
  %vm8093 = vcmask 1047559
  %v8094 = vsel %vm8093, %v6840, %v8092
  %v8095 = vsel %vm8081, %v6882, %v6861
  %v8096 = vsel %vm8083, %v6903, %v8095
  %v8097 = vsel %vm8085, %v6924, %v8096
  %v8098 = vsel %vm8087, %v6945, %v8097
  %v8099 = vsel %vm8089, %v6966, %v8098
  %v8100 = vsel %vm8091, %v6987, %v8099
  %v8101 = vsel %vm8093, %v7008, %v8100
  %v8102 = vsel %vm8081, %v7050, %v7029
  %v8103 = vsel %vm8083, %v7071, %v8102
  %v8104 = vsel %vm8085, %v7092, %v8103
  %v8105 = vsel %vm8087, %v7113, %v8104
  %v8106 = vsel %vm8089, %v7134, %v8105
  %v8107 = vsel %vm8091, %v7155, %v8106
  %v8108 = vsel %vm8093, %v7176, %v8107
  %v8109 = vsel %vm8081, %v7218, %v7197
  %v8110 = vsel %vm8083, %v7239, %v8109
  %v8111 = vsel %vm8085, %v7260, %v8110
  %v8112 = vsel %vm8087, %v7281, %v8111
  %v8113 = vsel %vm8089, %v7302, %v8112
  %v8114 = vsel %vm8091, %v7323, %v8113
  %v8115 = vsel %vm8093, %v7344, %v8114
  %v8116 = vsel %vm8081, %v7386, %v7365
  %v8117 = vsel %vm8083, %v7407, %v8116
  %v8118 = vsel %vm8085, %v7428, %v8117
  %v8119 = vsel %vm8087, %v7449, %v8118
  %v8120 = vsel %vm8089, %v7470, %v8119
  %v8121 = vsel %vm8091, %v7491, %v8120
  %v8122 = vsel %vm8093, %v7512, %v8121
  %v8123 = vsel %vm8081, %v7554, %v7533
  %v8124 = vsel %vm8083, %v7575, %v8123
  %v8125 = vsel %vm8085, %v7596, %v8124
  %v8126 = vsel %vm8087, %v7617, %v8125
  %v8127 = vsel %vm8089, %v7638, %v8126
  %v8128 = vsel %vm8091, %v7659, %v8127
  %v8129 = vsel %vm8093, %v7680, %v8128
  %v8130 = vsel %vm8081, %v7722, %v7701
  %v8131 = vsel %vm8083, %v7743, %v8130
  %v8132 = vsel %vm8085, %v7764, %v8131
  %v8133 = vsel %vm8087, %v7785, %v8132
  %v8134 = vsel %vm8089, %v7806, %v8133
  %v8135 = vsel %vm8091, %v7827, %v8134
  %v8136 = vsel %vm8093, %v7848, %v8135
  %v8137 = vsel %vm8081, %v7890, %v7869
  %v8138 = vsel %vm8083, %v7911, %v8137
  %v8139 = vsel %vm8085, %v7932, %v8138
  %v8140 = vsel %vm8087, %v7953, %v8139
  %v8141 = vsel %vm8089, %v7974, %v8140
  %v8142 = vsel %vm8091, %v7995, %v8141
  %v8143 = vsel %vm8093, %v8016, %v8142
  %v8152 = vadd.f32 %v6664, %v8094
  %v8153 = vadd.f32 %v6665, %v8101
  %v8154 = vadd.f32 %v6666, %v8108
  %v8155 = vadd.f32 %v6667, %v8115
  %v8156 = vadd.f32 %v6668, %v8122
  %v8157 = vadd.f32 %v6669, %v8129
  %v8158 = vadd.f32 %v6670, %v8136
  %v8159 = vadd.f32 %v6671, %v8143
  %8160 = vst.msk [vmem:[#allocation3] sm:$0xff] %vm6672, %v8152
  %8161 = vst.msk [vmem:[#allocation3 + $0x8] sm:$0xff] %vm6672, %v8153
  %8162 = vst.msk [vmem:[#allocation3 + $0x10] sm:$0xff] %vm6672, %v8154
  %8163 = vst.msk [vmem:[#allocation3 + $0x18] sm:$0xff] %vm6672, %v8155
  %8164 = vst.msk [vmem:[#allocation3 + $0x20] sm:$0xff] %vm6672, %v8156
  %8165 = vst.msk [vmem:[#allocation3 + $0x28] sm:$0xff] %vm6672, %v8157
  %8166 = vst.msk [vmem:[#allocation3 + $0x30] sm:$0xff] %vm6672, %v8158
  %8167 = vst.msk [vmem:[#allocation3 + $0x38] sm:$0xff] %vm6672, %v8159
  %v8168 = vld [vmem:[#allocation4] sm:$0xff]
  %v8169 = vld [vmem:[#allocation4 + $0x8] sm:$0xff]
  %v8170 = vld [vmem:[#allocation4 + $0x10] sm:$0xff]
  %v8171 = vld [vmem:[#allocation4 + $0x18] sm:$0xff]
  %v8172 = vld [vmem:[#allocation4 + $0x20] sm:$0xff]
  %v8173 = vld [vmem:[#allocation4 + $0x28] sm:$0xff]
  %v8174 = vld [vmem:[#allocation4 + $0x30] sm:$0xff]
  %v8175 = vld [vmem:[#allocation4 + $0x38] sm:$0xff]
  %v8176 = vmul.f32 %v6152, %v6152
  %v8177 = vmul.f32 %v6153, %v6153
  %v8178 = vmul.f32 %v6154, %v6154
  %v8179 = vmul.f32 %v6155, %v6155
  %v8180 = vmul.f32 %v6156, %v6156
  %v8181 = vmul.f32 %v6157, %v6157
  %v8182 = vmul.f32 %v6158, %v6158
  %v8183 = vmul.f32 %v6159, %v6159
  %v8184 = vmul.f32 %v6160, %v6160
  %v8185 = vmul.f32 %v6161, %v6161
  %v8186 = vmul.f32 %v6162, %v6162
  %v8187 = vmul.f32 %v6163, %v6163
  %v8188 = vmul.f32 %v6164, %v6164
  %v8189 = vmul.f32 %v6165, %v6165
  %v8190 = vmul.f32 %v6166, %v6166
  %v8191 = vmul.f32 %v6167, %v6167
  %v8192 = vmul.f32 %v6168, %v6168
  %v8193 = vmul.f32 %v6169, %v6169
  %v8194 = vmul.f32 %v6170, %v6170
  %v8195 = vmul.f32 %v6171, %v6171
  %v8196 = vmul.f32 %v6172, %v6172
  %v8197 = vmul.f32 %v6173, %v6173
  %v8198 = vmul.f32 %v6174, %v6174
  %v8199 = vmul.f32 %v6175, %v6175
  %v8200 = vmul.f32 %v6176, %v6176
  %v8201 = vmul.f32 %v6177, %v6177
  %v8202 = vmul.f32 %v6178, %v6178
  %v8203 = vmul.f32 %v6179, %v6179
  %v8204 = vmul.f32 %v6180, %v6180
  %v8205 = vmul.f32 %v6181, %v6181
  %v8206 = vmul.f32 %v6182, %v6182
  %v8207 = vmul.f32 %v6183, %v6183
  %v8208 = vmul.f32 %v6184, %v6184
  %v8209 = vmul.f32 %v6185, %v6185
  %v8210 = vmul.f32 %v6186, %v6186
  %v8211 = vmul.f32 %v6187, %v6187
  %v8212 = vmul.f32 %v6188, %v6188
  %v8213 = vmul.f32 %v6189, %v6189
  %v8214 = vmul.f32 %v6190, %v6190
  %v8215 = vmul.f32 %v6191, %v6191
  %v8216 = vmul.f32 %v6192, %v6192
  %v8217 = vmul.f32 %v6193, %v6193
  %v8218 = vmul.f32 %v6194, %v6194
  %v8219 = vmul.f32 %v6195, %v6195
  %v8220 = vmul.f32 %v6196, %v6196
  %v8221 = vmul.f32 %v6197, %v6197
  %v8222 = vmul.f32 %v6198, %v6198
  %v8223 = vmul.f32 %v6199, %v6199
  %v8224 = vmul.f32 %v6200, %v6200
  %v8225 = vmul.f32 %v6201, %v6201
  %v8226 = vmul.f32 %v6202, %v6202
  %v8227 = vmul.f32 %v6203, %v6203
  %v8228 = vmul.f32 %v6204, %v6204
  %v8229 = vmul.f32 %v6205, %v6205
  %v8230 = vmul.f32 %v6206, %v6206
  %v8231 = vmul.f32 %v6207, %v6207
  %v8232 = vmul.f32 %v6208, %v6208
  %v8233 = vmul.f32 %v6209, %v6209
  %v8234 = vmul.f32 %v6210, %v6210
  %v8235 = vmul.f32 %v6211, %v6211
  %v8236 = vmul.f32 %v6212, %v6212
  %v8237 = vmul.f32 %v6213, %v6213
  %v8238 = vmul.f32 %v6214, %v6214
  %v8239 = vmul.f32 %v6215, %v6215
  %v8240 = vmul.f32 %v6216, %v6216
  %v8241 = vmul.f32 %v6217, %v6217
  %v8242 = vmul.f32 %v6218, %v6218
  %v8243 = vmul.f32 %v6219, %v6219
  %v8244 = vmul.f32 %v6220, %v6220
  %v8245 = vmul.f32 %v6221, %v6221
  %v8246 = vmul.f32 %v6222, %v6222
  %v8247 = vmul.f32 %v6223, %v6223
  %v8248 = vmul.f32 %v6224, %v6224
  %v8249 = vmul.f32 %v6225, %v6225
  %v8250 = vmul.f32 %v6226, %v6226
  %v8251 = vmul.f32 %v6227, %v6227
  %v8252 = vmul.f32 %v6228, %v6228
  %v8253 = vmul.f32 %v6229, %v6229
  %v8254 = vmul.f32 %v6230, %v6230
  %v8255 = vmul.f32 %v6231, %v6231
  %v8256 = vmul.f32 %v6232, %v6232
  %v8257 = vmul.f32 %v6233, %v6233
  %v8258 = vmul.f32 %v6234, %v6234
  %v8259 = vmul.f32 %v6235, %v6235
  %v8260 = vmul.f32 %v6236, %v6236
  %v8261 = vmul.f32 %v6237, %v6237
  %v8262 = vmul.f32 %v6238, %v6238
  %v8263 = vmul.f32 %v6239, %v6239
  %v8264 = vmul.f32 %v6240, %v6240
  %v8265 = vmul.f32 %v6241, %v6241
  %v8266 = vmul.f32 %v6242, %v6242
  %v8267 = vmul.f32 %v6243, %v6243
  %v8268 = vmul.f32 %v6244, %v6244
  %v8269 = vmul.f32 %v6245, %v6245
  %v8270 = vmul.f32 %v6246, %v6246
  %v8271 = vmul.f32 %v6247, %v6247
  %v8272 = vmul.f32 %v6248, %v6248
  %v8273 = vmul.f32 %v6249, %v6249
  %v8274 = vmul.f32 %v6250, %v6250
  %v8275 = vmul.f32 %v6251, %v6251
  %v8276 = vmul.f32 %v6252, %v6252
  %v8277 = vmul.f32 %v6253, %v6253
  %v8278 = vmul.f32 %v6254, %v6254
  %v8279 = vmul.f32 %v6255, %v6255
  %v8280 = vmul.f32 %v6256, %v6256
  %v8281 = vmul.f32 %v6257, %v6257
  %v8282 = vmul.f32 %v6258, %v6258
  %v8283 = vmul.f32 %v6259, %v6259
  %v8284 = vmul.f32 %v6260, %v6260
  %v8285 = vmul.f32 %v6261, %v6261
  %v8286 = vmul.f32 %v6262, %v6262
  %v8287 = vmul.f32 %v6263, %v6263
  %v8288 = vmul.f32 %v6264, %v6264
  %v8289 = vmul.f32 %v6265, %v6265
  %v8290 = vmul.f32 %v6266, %v6266
  %v8291 = vmul.f32 %v6267, %v6267
  %v8292 = vmul.f32 %v6268, %v6268
  %v8293 = vmul.f32 %v6269, %v6269
  %v8294 = vmul.f32 %v6270, %v6270
  %v8295 = vmul.f32 %v6271, %v6271
  %v8296 = vmul.f32 %v6272, %v6272
  %v8297 = vmul.f32 %v6273, %v6273
  %v8298 = vmul.f32 %v6274, %v6274
  %v8299 = vmul.f32 %v6275, %v6275
  %v8300 = vmul.f32 %v6276, %v6276
  %v8301 = vmul.f32 %v6277, %v6277
  %v8302 = vmul.f32 %v6278, %v6278
  %v8303 = vmul.f32 %v6279, %v6279
  %v8304 = vmul.f32 %v6280, %v6280
  %v8305 = vmul.f32 %v6281, %v6281
  %v8306 = vmul.f32 %v6282, %v6282
  %v8307 = vmul.f32 %v6283, %v6283
  %v8308 = vmul.f32 %v6284, %v6284
  %v8309 = vmul.f32 %v6285, %v6285
  %v8310 = vmul.f32 %v6286, %v6286
  %v8311 = vmul.f32 %v6287, %v6287
  %v8312 = vmul.f32 %v6288, %v6288
  %v8313 = vmul.f32 %v6289, %v6289
  %v8314 = vmul.f32 %v6290, %v6290
  %v8315 = vmul.f32 %v6291, %v6291
  %v8316 = vmul.f32 %v6292, %v6292
  %v8317 = vmul.f32 %v6293, %v6293
  %v8318 = vmul.f32 %v6294, %v6294
  %v8319 = vmul.f32 %v6295, %v6295
  %v8320 = vmul.f32 %v6296, %v6296
  %v8321 = vmul.f32 %v6297, %v6297
  %v8322 = vmul.f32 %v6298, %v6298
  %v8323 = vmul.f32 %v6299, %v6299
  %v8324 = vmul.f32 %v6300, %v6300
  %v8325 = vmul.f32 %v6301, %v6301
  %v8326 = vmul.f32 %v6302, %v6302
  %v8327 = vmul.f32 %v6303, %v6303
  %v8328 = vmul.f32 %v6304, %v6304
  %v8329 = vmul.f32 %v6305, %v6305
  %v8330 = vmul.f32 %v6306, %v6306
  %v8331 = vmul.f32 %v6307, %v6307
  %v8332 = vmul.f32 %v6308, %v6308
  %v8333 = vmul.f32 %v6309, %v6309
  %v8334 = vmul.f32 %v6310, %v6310
  %v8335 = vmul.f32 %v6311, %v6311
  %v8336 = vmul.f32 %v6312, %v6312
  %v8337 = vmul.f32 %v6313, %v6313
  %v8338 = vmul.f32 %v6314, %v6314
  %v8339 = vmul.f32 %v6315, %v6315
  %v8340 = vmul.f32 %v6316, %v6316
  %v8341 = vmul.f32 %v6317, %v6317
  %v8342 = vmul.f32 %v6318, %v6318
  %v8343 = vmul.f32 %v6319, %v6319
  %v8344 = vmul.f32 %v6320, %v6320
  %v8345 = vmul.f32 %v6321, %v6321
  %v8346 = vmul.f32 %v6322, %v6322
  %v8347 = vmul.f32 %v6323, %v6323
  %v8348 = vmul.f32 %v6324, %v6324
  %v8349 = vmul.f32 %v6325, %v6325
  %v8350 = vmul.f32 %v6326, %v6326
  %v8351 = vmul.f32 %v6327, %v6327
  %v8352 = vmul.f32 %v6328, %v6328
  %v8353 = vmul.f32 %v6329, %v6329
  %v8354 = vmul.f32 %v6330, %v6330
  %v8355 = vmul.f32 %v6331, %v6331
  %v8356 = vmul.f32 %v6332, %v6332
  %v8357 = vmul.f32 %v6333, %v6333
  %v8358 = vmul.f32 %v6334, %v6334
  %v8359 = vmul.f32 %v6335, %v6335
  %v8360 = vmul.f32 %v6336, %v6336
  %v8361 = vmul.f32 %v6337, %v6337
  %v8362 = vmul.f32 %v6338, %v6338
  %v8363 = vmul.f32 %v6339, %v6339
  %v8364 = vmul.f32 %v6340, %v6340
  %v8365 = vmul.f32 %v6341, %v6341
  %v8366 = vmul.f32 %v6342, %v6342
  %v8367 = vmul.f32 %v6343, %v6343
  %v8368 = vmul.f32 %v6344, %v6344
  %v8369 = vmul.f32 %v6345, %v6345
  %v8370 = vmul.f32 %v6346, %v6346
  %v8371 = vmul.f32 %v6347, %v6347
  %v8372 = vmul.f32 %v6348, %v6348
  %v8373 = vmul.f32 %v6349, %v6349
  %v8374 = vmul.f32 %v6350, %v6350
  %v8375 = vmul.f32 %v6351, %v6351
  %v8376 = vmul.f32 %v6352, %v6352
  %v8377 = vmul.f32 %v6353, %v6353
  %v8378 = vmul.f32 %v6354, %v6354
  %v8379 = vmul.f32 %v6355, %v6355
  %v8380 = vmul.f32 %v6356, %v6356
  %v8381 = vmul.f32 %v6357, %v6357
  %v8382 = vmul.f32 %v6358, %v6358
  %v8383 = vmul.f32 %v6359, %v6359
  %v8384 = vmul.f32 %v6360, %v6360
  %v8385 = vmul.f32 %v6361, %v6361
  %v8386 = vmul.f32 %v6362, %v6362
  %v8387 = vmul.f32 %v6363, %v6363
  %v8388 = vmul.f32 %v6364, %v6364
  %v8389 = vmul.f32 %v6365, %v6365
  %v8390 = vmul.f32 %v6366, %v6366
  %v8391 = vmul.f32 %v6367, %v6367
  %v8392 = vmul.f32 %v6368, %v6368
  %v8393 = vmul.f32 %v6369, %v6369
  %v8394 = vmul.f32 %v6370, %v6370
  %v8395 = vmul.f32 %v6371, %v6371
  %v8396 = vmul.f32 %v6372, %v6372
  %v8397 = vmul.f32 %v6373, %v6373
  %v8398 = vmul.f32 %v6374, %v6374
  %v8399 = vmul.f32 %v6375, %v6375
  %v8400 = vmul.f32 %v6376, %v6376
  %v8401 = vmul.f32 %v6377, %v6377
  %v8402 = vmul.f32 %v6378, %v6378
  %v8403 = vmul.f32 %v6379, %v6379
  %v8404 = vmul.f32 %v6380, %v6380
  %v8405 = vmul.f32 %v6381, %v6381
  %v8406 = vmul.f32 %v6382, %v6382
  %v8407 = vmul.f32 %v6383, %v6383
  %v8408 = vmul.f32 %v6384, %v6384
  %v8409 = vmul.f32 %v6385, %v6385
  %v8410 = vmul.f32 %v6386, %v6386
  %v8411 = vmul.f32 %v6387, %v6387
  %v8412 = vmul.f32 %v6388, %v6388
  %v8413 = vmul.f32 %v6389, %v6389
  %v8414 = vmul.f32 %v6390, %v6390
  %v8415 = vmul.f32 %v6391, %v6391
  %v8416 = vmul.f32 %v6392, %v6392
  %v8417 = vmul.f32 %v6393, %v6393
  %v8418 = vmul.f32 %v6394, %v6394
  %v8419 = vmul.f32 %v6395, %v6395
  %v8420 = vmul.f32 %v6396, %v6396
  %v8421 = vmul.f32 %v6397, %v6397
  %v8422 = vmul.f32 %v6398, %v6398
  %v8423 = vmul.f32 %v6399, %v6399
  %v8424 = vmul.f32 %v6400, %v6400
  %v8425 = vmul.f32 %v6401, %v6401
  %v8426 = vmul.f32 %v6402, %v6402
  %v8427 = vmul.f32 %v6403, %v6403
  %v8428 = vmul.f32 %v6404, %v6404
  %v8429 = vmul.f32 %v6405, %v6405
  %v8430 = vmul.f32 %v6406, %v6406
  %v8431 = vmul.f32 %v6407, %v6407
  %v8432 = vmul.f32 %v6408, %v6408
  %v8433 = vmul.f32 %v6409, %v6409
  %v8434 = vmul.f32 %v6410, %v6410
  %v8435 = vmul.f32 %v6411, %v6411
  %v8436 = vmul.f32 %v6412, %v6412
  %v8437 = vmul.f32 %v6413, %v6413
  %v8438 = vmul.f32 %v6414, %v6414
  %v8439 = vmul.f32 %v6415, %v6415
  %v8440 = vmul.f32 %v6416, %v6416
  %v8441 = vmul.f32 %v6417, %v6417
  %v8442 = vmul.f32 %v6418, %v6418
  %v8443 = vmul.f32 %v6419, %v6419
  %v8444 = vmul.f32 %v6420, %v6420
  %v8445 = vmul.f32 %v6421, %v6421
  %v8446 = vmul.f32 %v6422, %v6422
  %v8447 = vmul.f32 %v6423, %v6423
  %v8448 = vmul.f32 %v6424, %v6424
  %v8449 = vmul.f32 %v6425, %v6425
  %v8450 = vmul.f32 %v6426, %v6426
  %v8451 = vmul.f32 %v6427, %v6427
  %v8452 = vmul.f32 %v6428, %v6428
  %v8453 = vmul.f32 %v6429, %v6429
  %v8454 = vmul.f32 %v6430, %v6430
  %v8455 = vmul.f32 %v6431, %v6431
  %v8456 = vmul.f32 %v6432, %v6432
  %v8457 = vmul.f32 %v6433, %v6433
  %v8458 = vmul.f32 %v6434, %v6434
  %v8459 = vmul.f32 %v6435, %v6435
  %v8460 = vmul.f32 %v6436, %v6436
  %v8461 = vmul.f32 %v6437, %v6437
  %v8462 = vmul.f32 %v6438, %v6438
  %v8463 = vmul.f32 %v6439, %v6439
  %v8464 = vmul.f32 %v6440, %v6440
  %v8465 = vmul.f32 %v6441, %v6441
  %v8466 = vmul.f32 %v6442, %v6442
  %v8467 = vmul.f32 %v6443, %v6443
  %v8468 = vmul.f32 %v6444, %v6444
  %v8469 = vmul.f32 %v6445, %v6445
  %v8470 = vmul.f32 %v6446, %v6446
  %v8471 = vmul.f32 %v6447, %v6447
  %v8472 = vmul.f32 %v6448, %v6448
  %v8473 = vmul.f32 %v6449, %v6449
  %v8474 = vmul.f32 %v6450, %v6450
  %v8475 = vmul.f32 %v6451, %v6451
  %v8476 = vmul.f32 %v6452, %v6452
  %v8477 = vmul.f32 %v6453, %v6453
  %v8478 = vmul.f32 %v6454, %v6454
  %v8479 = vmul.f32 %v6455, %v6455
  %v8480 = vmul.f32 %v6456, %v6456
  %v8481 = vmul.f32 %v6457, %v6457
  %v8482 = vmul.f32 %v6458, %v6458
  %v8483 = vmul.f32 %v6459, %v6459
  %v8484 = vmul.f32 %v6460, %v6460
  %v8485 = vmul.f32 %v6461, %v6461
  %v8486 = vmul.f32 %v6462, %v6462
  %v8487 = vmul.f32 %v6463, %v6463
  %v8488 = vmul.f32 %v6464, %v6464
  %v8489 = vmul.f32 %v6465, %v6465
  %v8490 = vmul.f32 %v6466, %v6466
  %v8491 = vmul.f32 %v6467, %v6467
  %v8492 = vmul.f32 %v6468, %v6468
  %v8493 = vmul.f32 %v6469, %v6469
  %v8494 = vmul.f32 %v6470, %v6470
  %v8495 = vmul.f32 %v6471, %v6471
  %v8496 = vmul.f32 %v6472, %v6472
  %v8497 = vmul.f32 %v6473, %v6473
  %v8498 = vmul.f32 %v6474, %v6474
  %v8499 = vmul.f32 %v6475, %v6475
  %v8500 = vmul.f32 %v6476, %v6476
  %v8501 = vmul.f32 %v6477, %v6477
  %v8502 = vmul.f32 %v6478, %v6478
  %v8503 = vmul.f32 %v6479, %v6479
  %v8504 = vmul.f32 %v6480, %v6480
  %v8505 = vmul.f32 %v6481, %v6481
  %v8506 = vmul.f32 %v6482, %v6482
  %v8507 = vmul.f32 %v6483, %v6483
  %v8508 = vmul.f32 %v6484, %v6484
  %v8509 = vmul.f32 %v6485, %v6485
  %v8510 = vmul.f32 %v6486, %v6486
  %v8511 = vmul.f32 %v6487, %v6487
  %v8512 = vmul.f32 %v6488, %v6488
  %v8513 = vmul.f32 %v6489, %v6489
  %v8514 = vmul.f32 %v6490, %v6490
  %v8515 = vmul.f32 %v6491, %v6491
  %v8516 = vmul.f32 %v6492, %v6492
  %v8517 = vmul.f32 %v6493, %v6493
  %v8518 = vmul.f32 %v6494, %v6494
  %v8519 = vmul.f32 %v6495, %v6495
  %v8520 = vmul.f32 %v6496, %v6496
  %v8521 = vmul.f32 %v6497, %v6497
  %v8522 = vmul.f32 %v6498, %v6498
  %v8523 = vmul.f32 %v6499, %v6499
  %v8524 = vmul.f32 %v6500, %v6500
  %v8525 = vmul.f32 %v6501, %v6501
  %v8526 = vmul.f32 %v6502, %v6502
  %v8527 = vmul.f32 %v6503, %v6503
  %v8528 = vmul.f32 %v6504, %v6504
  %v8529 = vmul.f32 %v6505, %v6505
  %v8530 = vmul.f32 %v6506, %v6506
  %v8531 = vmul.f32 %v6507, %v6507
  %v8532 = vmul.f32 %v6508, %v6508
  %v8533 = vmul.f32 %v6509, %v6509
  %v8534 = vmul.f32 %v6510, %v6510
  %v8535 = vmul.f32 %v6511, %v6511
  %v8536 = vmul.f32 %v6512, %v6512
  %v8537 = vmul.f32 %v6513, %v6513
  %v8538 = vmul.f32 %v6514, %v6514
  %v8539 = vmul.f32 %v6515, %v6515
  %v8540 = vmul.f32 %v6516, %v6516
  %v8541 = vmul.f32 %v6517, %v6517
  %v8542 = vmul.f32 %v6518, %v6518
  %v8543 = vmul.f32 %v6519, %v6519
  %v8544 = vmul.f32 %v6520, %v6520
  %v8545 = vmul.f32 %v6521, %v6521
  %v8546 = vmul.f32 %v6522, %v6522
  %v8547 = vmul.f32 %v6523, %v6523
  %v8548 = vmul.f32 %v6524, %v6524
  %v8549 = vmul.f32 %v6525, %v6525
  %v8550 = vmul.f32 %v6526, %v6526
  %v8551 = vmul.f32 %v6527, %v6527
  %v8552 = vmul.f32 %v6528, %v6528
  %v8553 = vmul.f32 %v6529, %v6529
  %v8554 = vmul.f32 %v6530, %v6530
  %v8555 = vmul.f32 %v6531, %v6531
  %v8556 = vmul.f32 %v6532, %v6532
  %v8557 = vmul.f32 %v6533, %v6533
  %v8558 = vmul.f32 %v6534, %v6534
  %v8559 = vmul.f32 %v6535, %v6535
  %v8560 = vmul.f32 %v6536, %v6536
  %v8561 = vmul.f32 %v6537, %v6537
  %v8562 = vmul.f32 %v6538, %v6538
  %v8563 = vmul.f32 %v6539, %v6539
  %v8564 = vmul.f32 %v6540, %v6540
  %v8565 = vmul.f32 %v6541, %v6541
  %v8566 = vmul.f32 %v6542, %v6542
  %v8567 = vmul.f32 %v6543, %v6543
  %v8568 = vmul.f32 %v6544, %v6544
  %v8569 = vmul.f32 %v6545, %v6545
  %v8570 = vmul.f32 %v6546, %v6546
  %v8571 = vmul.f32 %v6547, %v6547
  %v8572 = vmul.f32 %v6548, %v6548
  %v8573 = vmul.f32 %v6549, %v6549
  %v8574 = vmul.f32 %v6550, %v6550
  %v8575 = vmul.f32 %v6551, %v6551
  %v8576 = vmul.f32 %v6552, %v6552
  %v8577 = vmul.f32 %v6553, %v6553
  %v8578 = vmul.f32 %v6554, %v6554
  %v8579 = vmul.f32 %v6555, %v6555
  %v8580 = vmul.f32 %v6556, %v6556
  %v8581 = vmul.f32 %v6557, %v6557
  %v8582 = vmul.f32 %v6558, %v6558
  %v8583 = vmul.f32 %v6559, %v6559
  %v8584 = vmul.f32 %v6560, %v6560
  %v8585 = vmul.f32 %v6561, %v6561
  %v8586 = vmul.f32 %v6562, %v6562
  %v8587 = vmul.f32 %v6563, %v6563
  %v8588 = vmul.f32 %v6564, %v6564
  %v8589 = vmul.f32 %v6565, %v6565
  %v8590 = vmul.f32 %v6566, %v6566
  %v8591 = vmul.f32 %v6567, %v6567
  %v8592 = vmul.f32 %v6568, %v6568
  %v8593 = vmul.f32 %v6569, %v6569
  %v8594 = vmul.f32 %v6570, %v6570
  %v8595 = vmul.f32 %v6571, %v6571
  %v8596 = vmul.f32 %v6572, %v6572
  %v8597 = vmul.f32 %v6573, %v6573
  %v8598 = vmul.f32 %v6574, %v6574
  %v8599 = vmul.f32 %v6575, %v6575
  %v8600 = vmul.f32 %v6576, %v6576
  %v8601 = vmul.f32 %v6577, %v6577
  %v8602 = vmul.f32 %v6578, %v6578
  %v8603 = vmul.f32 %v6579, %v6579
  %v8604 = vmul.f32 %v6580, %v6580
  %v8605 = vmul.f32 %v6581, %v6581
  %v8606 = vmul.f32 %v6582, %v6582
  %v8607 = vmul.f32 %v6583, %v6583
  %v8608 = vmul.f32 %v6584, %v6584
  %v8609 = vmul.f32 %v6585, %v6585
  %v8610 = vmul.f32 %v6586, %v6586
  %v8611 = vmul.f32 %v6587, %v6587
  %v8612 = vmul.f32 %v6588, %v6588
  %v8613 = vmul.f32 %v6589, %v6589
  %v8614 = vmul.f32 %v6590, %v6590
  %v8615 = vmul.f32 %v6591, %v6591
  %v8616 = vmul.f32 %v6592, %v6592
  %v8617 = vmul.f32 %v6593, %v6593
  %v8618 = vmul.f32 %v6594, %v6594
  %v8619 = vmul.f32 %v6595, %v6595
  %v8620 = vmul.f32 %v6596, %v6596
  %v8621 = vmul.f32 %v6597, %v6597
  %v8622 = vmul.f32 %v6598, %v6598
  %v8623 = vmul.f32 %v6599, %v6599
  %v8624 = vmul.f32 %v6600, %v6600
  %v8625 = vmul.f32 %v6601, %v6601
  %v8626 = vmul.f32 %v6602, %v6602
  %v8627 = vmul.f32 %v6603, %v6603
  %v8628 = vmul.f32 %v6604, %v6604
  %v8629 = vmul.f32 %v6605, %v6605
  %v8630 = vmul.f32 %v6606, %v6606
  %v8631 = vmul.f32 %v6607, %v6607
  %v8632 = vmul.f32 %v6608, %v6608
  %v8633 = vmul.f32 %v6609, %v6609
  %v8634 = vmul.f32 %v6610, %v6610
  %v8635 = vmul.f32 %v6611, %v6611
  %v8636 = vmul.f32 %v6612, %v6612
  %v8637 = vmul.f32 %v6613, %v6613
  %v8638 = vmul.f32 %v6614, %v6614
  %v8639 = vmul.f32 %v6615, %v6615
  %v8640 = vmul.f32 %v6616, %v6616
  %v8641 = vmul.f32 %v6617, %v6617
  %v8642 = vmul.f32 %v6618, %v6618
  %v8643 = vmul.f32 %v6619, %v6619
  %v8644 = vmul.f32 %v6620, %v6620
  %v8645 = vmul.f32 %v6621, %v6621
  %v8646 = vmul.f32 %v6622, %v6622
  %v8647 = vmul.f32 %v6623, %v6623
  %v8648 = vmul.f32 %v6624, %v6624
  %v8649 = vmul.f32 %v6625, %v6625
  %v8650 = vmul.f32 %v6626, %v6626
  %v8651 = vmul.f32 %v6627, %v6627
  %v8652 = vmul.f32 %v6628, %v6628
  %v8653 = vmul.f32 %v6629, %v6629
  %v8654 = vmul.f32 %v6630, %v6630
  %v8655 = vmul.f32 %v6631, %v6631
  %v8656 = vmul.f32 %v6632, %v6632
  %v8657 = vmul.f32 %v6633, %v6633
  %v8658 = vmul.f32 %v6634, %v6634
  %v8659 = vmul.f32 %v6635, %v6635
  %v8660 = vmul.f32 %v6636, %v6636
  %v8661 = vmul.f32 %v6637, %v6637
  %v8662 = vmul.f32 %v6638, %v6638
  %v8663 = vmul.f32 %v6639, %v6639
  %v8664 = vmul.f32 %v6640, %v6640
  %v8665 = vmul.f32 %v6641, %v6641
  %v8666 = vmul.f32 %v6642, %v6642
  %v8667 = vmul.f32 %v6643, %v6643
  %v8668 = vmul.f32 %v6644, %v6644
  %v8669 = vmul.f32 %v6645, %v6645
  %v8670 = vmul.f32 %v6646, %v6646
  %v8671 = vmul.f32 %v6647, %v6647
  %v8672 = vmul.f32 %v6648, %v6648
  %v8673 = vmul.f32 %v6649, %v6649
  %v8674 = vmul.f32 %v6650, %v6650
  %v8675 = vmul.f32 %v6651, %v6651
  %v8676 = vmul.f32 %v6652, %v6652
  %v8677 = vmul.f32 %v6653, %v6653
  %v8678 = vmul.f32 %v6654, %v6654
  %v8679 = vmul.f32 %v6655, %v6655
  %v8680 = vmul.f32 %v6656, %v6656
  %v8681 = vmul.f32 %v6657, %v6657
  %v8682 = vmul.f32 %v6658, %v6658
  %v8683 = vmul.f32 %v6659, %v6659
  %v8684 = vmul.f32 %v6660, %v6660
  %v8685 = vmul.f32 %v6661, %v6661
  %v8686 = vmul.f32 %v6662, %v6662
  %v8687 = vmul.f32 %v6663, %v6663
  %v8688 = vsel %vm6672, %v8176, 0.0
  %v8689 = vsel %vm6672, %v8177, 0.0
  %v8690 = vadd.f32 %v8688, %v8689
  %v8691 = vsel %vm6672, %v8178, 0.0
  %v8692 = vadd.f32 %v8690, %v8691
  %v8693 = vsel %vm6672, %v8179, 0.0
  %v8694 = vadd.f32 %v8692, %v8693
  %v8695 = vsel %vm6672, %v8180, 0.0
  %v8696 = vadd.f32 %v8694, %v8695
  %v8697 = vsel %vm6672, %v8181, 0.0
  %v8698 = vadd.f32 %v8696, %v8697
  %v8699 = vsel %vm6672, %v8182, 0.0
  %v8700 = vadd.f32 %v8698, %v8699
  %v8701 = vsel %vm6672, %v8183, 0.0
  %v8702 = vadd.f32 %v8700, %v8701
  %v8703 = vrot.slane %v8702, 4
  %v8704 = vadd.f32 %v8702, %v8703
  %v8705 = vrot.slane %v8704, 2
  %v8706 = vadd.f32 %v8704, %v8705
  %v8707 = vrot.slane %v8706, 1
  %v8708 = vadd.f32 %v8706, %v8707
  %v8709 = vsel %vm6672, %v8184, 0.0
  %v8710 = vsel %vm6672, %v8185, 0.0
  %v8711 = vadd.f32 %v8709, %v8710
  %v8712 = vsel %vm6672, %v8186, 0.0
  %v8713 = vadd.f32 %v8711, %v8712
  %v8714 = vsel %vm6672, %v8187, 0.0
  %v8715 = vadd.f32 %v8713, %v8714
  %v8716 = vsel %vm6672, %v8188, 0.0
  %v8717 = vadd.f32 %v8715, %v8716
  %v8718 = vsel %vm6672, %v8189, 0.0
  %v8719 = vadd.f32 %v8717, %v8718
  %v8720 = vsel %vm6672, %v8190, 0.0
  %v8721 = vadd.f32 %v8719, %v8720
  %v8722 = vsel %vm6672, %v8191, 0.0
  %v8723 = vadd.f32 %v8721, %v8722
  %v8724 = vrot.slane %v8723, 4
  %v8725 = vadd.f32 %v8723, %v8724
  %v8726 = vrot.slane %v8725, 2
  %v8727 = vadd.f32 %v8725, %v8726
  %v8728 = vrot.slane %v8727, 1
  %v8729 = vadd.f32 %v8727, %v8728
  %v8730 = vsel %vm6672, %v8192, 0.0
  %v8731 = vsel %vm6672, %v8193, 0.0
  %v8732 = vadd.f32 %v8730, %v8731
  %v8733 = vsel %vm6672, %v8194, 0.0
  %v8734 = vadd.f32 %v8732, %v8733
  %v8735 = vsel %vm6672, %v8195, 0.0
  %v8736 = vadd.f32 %v8734, %v8735
  %v8737 = vsel %vm6672, %v8196, 0.0
  %v8738 = vadd.f32 %v8736, %v8737
  %v8739 = vsel %vm6672, %v8197, 0.0
  %v8740 = vadd.f32 %v8738, %v8739
  %v8741 = vsel %vm6672, %v8198, 0.0
  %v8742 = vadd.f32 %v8740, %v8741
  %v8743 = vsel %vm6672, %v8199, 0.0
  %v8744 = vadd.f32 %v8742, %v8743
  %v8745 = vrot.slane %v8744, 4
  %v8746 = vadd.f32 %v8744, %v8745
  %v8747 = vrot.slane %v8746, 2
  %v8748 = vadd.f32 %v8746, %v8747
  %v8749 = vrot.slane %v8748, 1
  %v8750 = vadd.f32 %v8748, %v8749
  %v8751 = vsel %vm6672, %v8200, 0.0
  %v8752 = vsel %vm6672, %v8201, 0.0
  %v8753 = vadd.f32 %v8751, %v8752
  %v8754 = vsel %vm6672, %v8202, 0.0
  %v8755 = vadd.f32 %v8753, %v8754
  %v8756 = vsel %vm6672, %v8203, 0.0
  %v8757 = vadd.f32 %v8755, %v8756
  %v8758 = vsel %vm6672, %v8204, 0.0
  %v8759 = vadd.f32 %v8757, %v8758
  %v8760 = vsel %vm6672, %v8205, 0.0
  %v8761 = vadd.f32 %v8759, %v8760
  %v8762 = vsel %vm6672, %v8206, 0.0
  %v8763 = vadd.f32 %v8761, %v8762
  %v8764 = vsel %vm6672, %v8207, 0.0
  %v8765 = vadd.f32 %v8763, %v8764
  %v8766 = vrot.slane %v8765, 4
  %v8767 = vadd.f32 %v8765, %v8766
  %v8768 = vrot.slane %v8767, 2
  %v8769 = vadd.f32 %v8767, %v8768
  %v8770 = vrot.slane %v8769, 1
  %v8771 = vadd.f32 %v8769, %v8770
  %v8772 = vsel %vm6672, %v8208, 0.0
  %v8773 = vsel %vm6672, %v8209, 0.0
  %v8774 = vadd.f32 %v8772, %v8773
  %v8775 = vsel %vm6672, %v8210, 0.0
  %v8776 = vadd.f32 %v8774, %v8775
  %v8777 = vsel %vm6672, %v8211, 0.0
  %v8778 = vadd.f32 %v8776, %v8777
  %v8779 = vsel %vm6672, %v8212, 0.0
  %v8780 = vadd.f32 %v8778, %v8779
  %v8781 = vsel %vm6672, %v8213, 0.0
  %v8782 = vadd.f32 %v8780, %v8781
  %v8783 = vsel %vm6672, %v8214, 0.0
  %v8784 = vadd.f32 %v8782, %v8783
  %v8785 = vsel %vm6672, %v8215, 0.0
  %v8786 = vadd.f32 %v8784, %v8785
  %v8787 = vrot.slane %v8786, 4
  %v8788 = vadd.f32 %v8786, %v8787
  %v8789 = vrot.slane %v8788, 2
  %v8790 = vadd.f32 %v8788, %v8789
  %v8791 = vrot.slane %v8790, 1
  %v8792 = vadd.f32 %v8790, %v8791
  %v8793 = vsel %vm6672, %v8216, 0.0
  %v8794 = vsel %vm6672, %v8217, 0.0
  %v8795 = vadd.f32 %v8793, %v8794
  %v8796 = vsel %vm6672, %v8218, 0.0
  %v8797 = vadd.f32 %v8795, %v8796
  %v8798 = vsel %vm6672, %v8219, 0.0
  %v8799 = vadd.f32 %v8797, %v8798
  %v8800 = vsel %vm6672, %v8220, 0.0
  %v8801 = vadd.f32 %v8799, %v8800
  %v8802 = vsel %vm6672, %v8221, 0.0
  %v8803 = vadd.f32 %v8801, %v8802
  %v8804 = vsel %vm6672, %v8222, 0.0
  %v8805 = vadd.f32 %v8803, %v8804
  %v8806 = vsel %vm6672, %v8223, 0.0
  %v8807 = vadd.f32 %v8805, %v8806
  %v8808 = vrot.slane %v8807, 4
  %v8809 = vadd.f32 %v8807, %v8808
  %v8810 = vrot.slane %v8809, 2
  %v8811 = vadd.f32 %v8809, %v8810
  %v8812 = vrot.slane %v8811, 1
  %v8813 = vadd.f32 %v8811, %v8812
  %v8814 = vsel %vm6672, %v8224, 0.0
  %v8815 = vsel %vm6672, %v8225, 0.0
  %v8816 = vadd.f32 %v8814, %v8815
  %v8817 = vsel %vm6672, %v8226, 0.0
  %v8818 = vadd.f32 %v8816, %v8817
  %v8819 = vsel %vm6672, %v8227, 0.0
  %v8820 = vadd.f32 %v8818, %v8819
  %v8821 = vsel %vm6672, %v8228, 0.0
  %v8822 = vadd.f32 %v8820, %v8821
  %v8823 = vsel %vm6672, %v8229, 0.0
  %v8824 = vadd.f32 %v8822, %v8823
  %v8825 = vsel %vm6672, %v8230, 0.0
  %v8826 = vadd.f32 %v8824, %v8825
  %v8827 = vsel %vm6672, %v8231, 0.0
  %v8828 = vadd.f32 %v8826, %v8827
  %v8829 = vrot.slane %v8828, 4
  %v8830 = vadd.f32 %v8828, %v8829
  %v8831 = vrot.slane %v8830, 2
  %v8832 = vadd.f32 %v8830, %v8831
  %v8833 = vrot.slane %v8832, 1
  %v8834 = vadd.f32 %v8832, %v8833
  %v8835 = vsel %vm6672, %v8232, 0.0
  %v8836 = vsel %vm6672, %v8233, 0.0
  %v8837 = vadd.f32 %v8835, %v8836
  %v8838 = vsel %vm6672, %v8234, 0.0
  %v8839 = vadd.f32 %v8837, %v8838
  %v8840 = vsel %vm6672, %v8235, 0.0
  %v8841 = vadd.f32 %v8839, %v8840
  %v8842 = vsel %vm6672, %v8236, 0.0
  %v8843 = vadd.f32 %v8841, %v8842
  %v8844 = vsel %vm6672, %v8237, 0.0
  %v8845 = vadd.f32 %v8843, %v8844
  %v8846 = vsel %vm6672, %v8238, 0.0
  %v8847 = vadd.f32 %v8845, %v8846
  %v8848 = vsel %vm6672, %v8239, 0.0
  %v8849 = vadd.f32 %v8847, %v8848
  %v8850 = vrot.slane %v8849, 4
  %v8851 = vadd.f32 %v8849, %v8850
  %v8852 = vrot.slane %v8851, 2
  %v8853 = vadd.f32 %v8851, %v8852
  %v8854 = vrot.slane %v8853, 1
  %v8855 = vadd.f32 %v8853, %v8854
  %v8856 = vsel %vm6672, %v8240, 0.0
  %v8857 = vsel %vm6672, %v8241, 0.0
  %v8858 = vadd.f32 %v8856, %v8857
  %v8859 = vsel %vm6672, %v8242, 0.0
  %v8860 = vadd.f32 %v8858, %v8859
  %v8861 = vsel %vm6672, %v8243, 0.0
  %v8862 = vadd.f32 %v8860, %v8861
  %v8863 = vsel %vm6672, %v8244, 0.0
  %v8864 = vadd.f32 %v8862, %v8863
  %v8865 = vsel %vm6672, %v8245, 0.0
  %v8866 = vadd.f32 %v8864, %v8865
  %v8867 = vsel %vm6672, %v8246, 0.0
  %v8868 = vadd.f32 %v8866, %v8867
  %v8869 = vsel %vm6672, %v8247, 0.0
  %v8870 = vadd.f32 %v8868, %v8869
  %v8871 = vrot.slane %v8870, 4
  %v8872 = vadd.f32 %v8870, %v8871
  %v8873 = vrot.slane %v8872, 2
  %v8874 = vadd.f32 %v8872, %v8873
  %v8875 = vrot.slane %v8874, 1
  %v8876 = vadd.f32 %v8874, %v8875
  %v8877 = vsel %vm6672, %v8248, 0.0
  %v8878 = vsel %vm6672, %v8249, 0.0
  %v8879 = vadd.f32 %v8877, %v8878
  %v8880 = vsel %vm6672, %v8250, 0.0
  %v8881 = vadd.f32 %v8879, %v8880
  %v8882 = vsel %vm6672, %v8251, 0.0
  %v8883 = vadd.f32 %v8881, %v8882
  %v8884 = vsel %vm6672, %v8252, 0.0
  %v8885 = vadd.f32 %v8883, %v8884
  %v8886 = vsel %vm6672, %v8253, 0.0
  %v8887 = vadd.f32 %v8885, %v8886
  %v8888 = vsel %vm6672, %v8254, 0.0
  %v8889 = vadd.f32 %v8887, %v8888
  %v8890 = vsel %vm6672, %v8255, 0.0
  %v8891 = vadd.f32 %v8889, %v8890
  %v8892 = vrot.slane %v8891, 4
  %v8893 = vadd.f32 %v8891, %v8892
  %v8894 = vrot.slane %v8893, 2
  %v8895 = vadd.f32 %v8893, %v8894
  %v8896 = vrot.slane %v8895, 1
  %v8897 = vadd.f32 %v8895, %v8896
  %v8898 = vsel %vm6672, %v8256, 0.0
  %v8899 = vsel %vm6672, %v8257, 0.0
  %v8900 = vadd.f32 %v8898, %v8899
  %v8901 = vsel %vm6672, %v8258, 0.0
  %v8902 = vadd.f32 %v8900, %v8901
  %v8903 = vsel %vm6672, %v8259, 0.0
  %v8904 = vadd.f32 %v8902, %v8903
  %v8905 = vsel %vm6672, %v8260, 0.0
  %v8906 = vadd.f32 %v8904, %v8905
  %v8907 = vsel %vm6672, %v8261, 0.0
  %v8908 = vadd.f32 %v8906, %v8907
  %v8909 = vsel %vm6672, %v8262, 0.0
  %v8910 = vadd.f32 %v8908, %v8909
  %v8911 = vsel %vm6672, %v8263, 0.0
  %v8912 = vadd.f32 %v8910, %v8911
  %v8913 = vrot.slane %v8912, 4
  %v8914 = vadd.f32 %v8912, %v8913
  %v8915 = vrot.slane %v8914, 2
  %v8916 = vadd.f32 %v8914, %v8915
  %v8917 = vrot.slane %v8916, 1
  %v8918 = vadd.f32 %v8916, %v8917
  %v8919 = vsel %vm6672, %v8264, 0.0
  %v8920 = vsel %vm6672, %v8265, 0.0
  %v8921 = vadd.f32 %v8919, %v8920
  %v8922 = vsel %vm6672, %v8266, 0.0
  %v8923 = vadd.f32 %v8921, %v8922
  %v8924 = vsel %vm6672, %v8267, 0.0
  %v8925 = vadd.f32 %v8923, %v8924
  %v8926 = vsel %vm6672, %v8268, 0.0
  %v8927 = vadd.f32 %v8925, %v8926
  %v8928 = vsel %vm6672, %v8269, 0.0
  %v8929 = vadd.f32 %v8927, %v8928
  %v8930 = vsel %vm6672, %v8270, 0.0
  %v8931 = vadd.f32 %v8929, %v8930
  %v8932 = vsel %vm6672, %v8271, 0.0
  %v8933 = vadd.f32 %v8931, %v8932
  %v8934 = vrot.slane %v8933, 4
  %v8935 = vadd.f32 %v8933, %v8934
  %v8936 = vrot.slane %v8935, 2
  %v8937 = vadd.f32 %v8935, %v8936
  %v8938 = vrot.slane %v8937, 1
  %v8939 = vadd.f32 %v8937, %v8938
  %v8940 = vsel %vm6672, %v8272, 0.0
  %v8941 = vsel %vm6672, %v8273, 0.0
  %v8942 = vadd.f32 %v8940, %v8941
  %v8943 = vsel %vm6672, %v8274, 0.0
  %v8944 = vadd.f32 %v8942, %v8943
  %v8945 = vsel %vm6672, %v8275, 0.0
  %v8946 = vadd.f32 %v8944, %v8945
  %v8947 = vsel %vm6672, %v8276, 0.0
  %v8948 = vadd.f32 %v8946, %v8947
  %v8949 = vsel %vm6672, %v8277, 0.0
  %v8950 = vadd.f32 %v8948, %v8949
  %v8951 = vsel %vm6672, %v8278, 0.0
  %v8952 = vadd.f32 %v8950, %v8951
  %v8953 = vsel %vm6672, %v8279, 0.0
  %v8954 = vadd.f32 %v8952, %v8953
  %v8955 = vrot.slane %v8954, 4
  %v8956 = vadd.f32 %v8954, %v8955
  %v8957 = vrot.slane %v8956, 2
  %v8958 = vadd.f32 %v8956, %v8957
  %v8959 = vrot.slane %v8958, 1
  %v8960 = vadd.f32 %v8958, %v8959
  %v8961 = vsel %vm6672, %v8280, 0.0
  %v8962 = vsel %vm6672, %v8281, 0.0
  %v8963 = vadd.f32 %v8961, %v8962
  %v8964 = vsel %vm6672, %v8282, 0.0
  %v8965 = vadd.f32 %v8963, %v8964
  %v8966 = vsel %vm6672, %v8283, 0.0
  %v8967 = vadd.f32 %v8965, %v8966
  %v8968 = vsel %vm6672, %v8284, 0.0
  %v8969 = vadd.f32 %v8967, %v8968
  %v8970 = vsel %vm6672, %v8285, 0.0
  %v8971 = vadd.f32 %v8969, %v8970
  %v8972 = vsel %vm6672, %v8286, 0.0
  %v8973 = vadd.f32 %v8971, %v8972
  %v8974 = vsel %vm6672, %v8287, 0.0
  %v8975 = vadd.f32 %v8973, %v8974
  %v8976 = vrot.slane %v8975, 4
  %v8977 = vadd.f32 %v8975, %v8976
  %v8978 = vrot.slane %v8977, 2
  %v8979 = vadd.f32 %v8977, %v8978
  %v8980 = vrot.slane %v8979, 1
  %v8981 = vadd.f32 %v8979, %v8980
  %v8982 = vsel %vm6672, %v8288, 0.0
  %v8983 = vsel %vm6672, %v8289, 0.0
  %v8984 = vadd.f32 %v8982, %v8983
  %v8985 = vsel %vm6672, %v8290, 0.0
  %v8986 = vadd.f32 %v8984, %v8985
  %v8987 = vsel %vm6672, %v8291, 0.0
  %v8988 = vadd.f32 %v8986, %v8987
  %v8989 = vsel %vm6672, %v8292, 0.0
  %v8990 = vadd.f32 %v8988, %v8989
  %v8991 = vsel %vm6672, %v8293, 0.0
  %v8992 = vadd.f32 %v8990, %v8991
  %v8993 = vsel %vm6672, %v8294, 0.0
  %v8994 = vadd.f32 %v8992, %v8993
  %v8995 = vsel %vm6672, %v8295, 0.0
  %v8996 = vadd.f32 %v8994, %v8995
  %v8997 = vrot.slane %v8996, 4
  %v8998 = vadd.f32 %v8996, %v8997
  %v8999 = vrot.slane %v8998, 2
  %v9000 = vadd.f32 %v8998, %v8999
  %v9001 = vrot.slane %v9000, 1
  %v9002 = vadd.f32 %v9000, %v9001
  %v9003 = vsel %vm6672, %v8296, 0.0
  %v9004 = vsel %vm6672, %v8297, 0.0
  %v9005 = vadd.f32 %v9003, %v9004
  %v9006 = vsel %vm6672, %v8298, 0.0
  %v9007 = vadd.f32 %v9005, %v9006
  %v9008 = vsel %vm6672, %v8299, 0.0
  %v9009 = vadd.f32 %v9007, %v9008
  %v9010 = vsel %vm6672, %v8300, 0.0
  %v9011 = vadd.f32 %v9009, %v9010
  %v9012 = vsel %vm6672, %v8301, 0.0
  %v9013 = vadd.f32 %v9011, %v9012
  %v9014 = vsel %vm6672, %v8302, 0.0
  %v9015 = vadd.f32 %v9013, %v9014
  %v9016 = vsel %vm6672, %v8303, 0.0
  %v9017 = vadd.f32 %v9015, %v9016
  %v9018 = vrot.slane %v9017, 4
  %v9019 = vadd.f32 %v9017, %v9018
  %v9020 = vrot.slane %v9019, 2
  %v9021 = vadd.f32 %v9019, %v9020
  %v9022 = vrot.slane %v9021, 1
  %v9023 = vadd.f32 %v9021, %v9022
  %v9024 = vsel %vm6672, %v8304, 0.0
  %v9025 = vsel %vm6672, %v8305, 0.0
  %v9026 = vadd.f32 %v9024, %v9025
  %v9027 = vsel %vm6672, %v8306, 0.0
  %v9028 = vadd.f32 %v9026, %v9027
  %v9029 = vsel %vm6672, %v8307, 0.0
  %v9030 = vadd.f32 %v9028, %v9029
  %v9031 = vsel %vm6672, %v8308, 0.0
  %v9032 = vadd.f32 %v9030, %v9031
  %v9033 = vsel %vm6672, %v8309, 0.0
  %v9034 = vadd.f32 %v9032, %v9033
  %v9035 = vsel %vm6672, %v8310, 0.0
  %v9036 = vadd.f32 %v9034, %v9035
  %v9037 = vsel %vm6672, %v8311, 0.0
  %v9038 = vadd.f32 %v9036, %v9037
  %v9039 = vrot.slane %v9038, 4
  %v9040 = vadd.f32 %v9038, %v9039
  %v9041 = vrot.slane %v9040, 2
  %v9042 = vadd.f32 %v9040, %v9041
  %v9043 = vrot.slane %v9042, 1
  %v9044 = vadd.f32 %v9042, %v9043
  %v9045 = vsel %vm6672, %v8312, 0.0
  %v9046 = vsel %vm6672, %v8313, 0.0
  %v9047 = vadd.f32 %v9045, %v9046
  %v9048 = vsel %vm6672, %v8314, 0.0
  %v9049 = vadd.f32 %v9047, %v9048
  %v9050 = vsel %vm6672, %v8315, 0.0
  %v9051 = vadd.f32 %v9049, %v9050
  %v9052 = vsel %vm6672, %v8316, 0.0
  %v9053 = vadd.f32 %v9051, %v9052
  %v9054 = vsel %vm6672, %v8317, 0.0
  %v9055 = vadd.f32 %v9053, %v9054
  %v9056 = vsel %vm6672, %v8318, 0.0
  %v9057 = vadd.f32 %v9055, %v9056
  %v9058 = vsel %vm6672, %v8319, 0.0
  %v9059 = vadd.f32 %v9057, %v9058
  %v9060 = vrot.slane %v9059, 4
  %v9061 = vadd.f32 %v9059, %v9060
  %v9062 = vrot.slane %v9061, 2
  %v9063 = vadd.f32 %v9061, %v9062
  %v9064 = vrot.slane %v9063, 1
  %v9065 = vadd.f32 %v9063, %v9064
  %v9066 = vsel %vm6672, %v8320, 0.0
  %v9067 = vsel %vm6672, %v8321, 0.0
  %v9068 = vadd.f32 %v9066, %v9067
  %v9069 = vsel %vm6672, %v8322, 0.0
  %v9070 = vadd.f32 %v9068, %v9069
  %v9071 = vsel %vm6672, %v8323, 0.0
  %v9072 = vadd.f32 %v9070, %v9071
  %v9073 = vsel %vm6672, %v8324, 0.0
  %v9074 = vadd.f32 %v9072, %v9073
  %v9075 = vsel %vm6672, %v8325, 0.0
  %v9076 = vadd.f32 %v9074, %v9075
  %v9077 = vsel %vm6672, %v8326, 0.0
  %v9078 = vadd.f32 %v9076, %v9077
  %v9079 = vsel %vm6672, %v8327, 0.0
  %v9080 = vadd.f32 %v9078, %v9079
  %v9081 = vrot.slane %v9080, 4
  %v9082 = vadd.f32 %v9080, %v9081
  %v9083 = vrot.slane %v9082, 2
  %v9084 = vadd.f32 %v9082, %v9083
  %v9085 = vrot.slane %v9084, 1
  %v9086 = vadd.f32 %v9084, %v9085
  %v9087 = vsel %vm6672, %v8328, 0.0
  %v9088 = vsel %vm6672, %v8329, 0.0
  %v9089 = vadd.f32 %v9087, %v9088
  %v9090 = vsel %vm6672, %v8330, 0.0
  %v9091 = vadd.f32 %v9089, %v9090
  %v9092 = vsel %vm6672, %v8331, 0.0
  %v9093 = vadd.f32 %v9091, %v9092
  %v9094 = vsel %vm6672, %v8332, 0.0
  %v9095 = vadd.f32 %v9093, %v9094
  %v9096 = vsel %vm6672, %v8333, 0.0
  %v9097 = vadd.f32 %v9095, %v9096
  %v9098 = vsel %vm6672, %v8334, 0.0
  %v9099 = vadd.f32 %v9097, %v9098
  %v9100 = vsel %vm6672, %v8335, 0.0
  %v9101 = vadd.f32 %v9099, %v9100
  %v9102 = vrot.slane %v9101, 4
  %v9103 = vadd.f32 %v9101, %v9102
  %v9104 = vrot.slane %v9103, 2
  %v9105 = vadd.f32 %v9103, %v9104
  %v9106 = vrot.slane %v9105, 1
  %v9107 = vadd.f32 %v9105, %v9106
  %v9108 = vsel %vm6672, %v8336, 0.0
  %v9109 = vsel %vm6672, %v8337, 0.0
  %v9110 = vadd.f32 %v9108, %v9109
  %v9111 = vsel %vm6672, %v8338, 0.0
  %v9112 = vadd.f32 %v9110, %v9111
  %v9113 = vsel %vm6672, %v8339, 0.0
  %v9114 = vadd.f32 %v9112, %v9113
  %v9115 = vsel %vm6672, %v8340, 0.0
  %v9116 = vadd.f32 %v9114, %v9115
  %v9117 = vsel %vm6672, %v8341, 0.0
  %v9118 = vadd.f32 %v9116, %v9117
  %v9119 = vsel %vm6672, %v8342, 0.0
  %v9120 = vadd.f32 %v9118, %v9119
  %v9121 = vsel %vm6672, %v8343, 0.0
  %v9122 = vadd.f32 %v9120, %v9121
  %v9123 = vrot.slane %v9122, 4
  %v9124 = vadd.f32 %v9122, %v9123
  %v9125 = vrot.slane %v9124, 2
  %v9126 = vadd.f32 %v9124, %v9125
  %v9127 = vrot.slane %v9126, 1
  %v9128 = vadd.f32 %v9126, %v9127
  %v9129 = vsel %vm6672, %v8344, 0.0
  %v9130 = vsel %vm6672, %v8345, 0.0
  %v9131 = vadd.f32 %v9129, %v9130
  %v9132 = vsel %vm6672, %v8346, 0.0
  %v9133 = vadd.f32 %v9131, %v9132
  %v9134 = vsel %vm6672, %v8347, 0.0
  %v9135 = vadd.f32 %v9133, %v9134
  %v9136 = vsel %vm6672, %v8348, 0.0
  %v9137 = vadd.f32 %v9135, %v9136
  %v9138 = vsel %vm6672, %v8349, 0.0
  %v9139 = vadd.f32 %v9137, %v9138
  %v9140 = vsel %vm6672, %v8350, 0.0
  %v9141 = vadd.f32 %v9139, %v9140
  %v9142 = vsel %vm6672, %v8351, 0.0
  %v9143 = vadd.f32 %v9141, %v9142
  %v9144 = vrot.slane %v9143, 4
  %v9145 = vadd.f32 %v9143, %v9144
  %v9146 = vrot.slane %v9145, 2
  %v9147 = vadd.f32 %v9145, %v9146
  %v9148 = vrot.slane %v9147, 1
  %v9149 = vadd.f32 %v9147, %v9148
  %v9150 = vsel %vm6672, %v8352, 0.0
  %v9151 = vsel %vm6672, %v8353, 0.0
  %v9152 = vadd.f32 %v9150, %v9151
  %v9153 = vsel %vm6672, %v8354, 0.0
  %v9154 = vadd.f32 %v9152, %v9153
  %v9155 = vsel %vm6672, %v8355, 0.0
  %v9156 = vadd.f32 %v9154, %v9155
  %v9157 = vsel %vm6672, %v8356, 0.0
  %v9158 = vadd.f32 %v9156, %v9157
  %v9159 = vsel %vm6672, %v8357, 0.0
  %v9160 = vadd.f32 %v9158, %v9159
  %v9161 = vsel %vm6672, %v8358, 0.0
  %v9162 = vadd.f32 %v9160, %v9161
  %v9163 = vsel %vm6672, %v8359, 0.0
  %v9164 = vadd.f32 %v9162, %v9163
  %v9165 = vrot.slane %v9164, 4
  %v9166 = vadd.f32 %v9164, %v9165
  %v9167 = vrot.slane %v9166, 2
  %v9168 = vadd.f32 %v9166, %v9167
  %v9169 = vrot.slane %v9168, 1
  %v9170 = vadd.f32 %v9168, %v9169
  %v9171 = vsel %vm6672, %v8360, 0.0
  %v9172 = vsel %vm6672, %v8361, 0.0
  %v9173 = vadd.f32 %v9171, %v9172
  %v9174 = vsel %vm6672, %v8362, 0.0
  %v9175 = vadd.f32 %v9173, %v9174
  %v9176 = vsel %vm6672, %v8363, 0.0
  %v9177 = vadd.f32 %v9175, %v9176
  %v9178 = vsel %vm6672, %v8364, 0.0
  %v9179 = vadd.f32 %v9177, %v9178
  %v9180 = vsel %vm6672, %v8365, 0.0
  %v9181 = vadd.f32 %v9179, %v9180
  %v9182 = vsel %vm6672, %v8366, 0.0
  %v9183 = vadd.f32 %v9181, %v9182
  %v9184 = vsel %vm6672, %v8367, 0.0
  %v9185 = vadd.f32 %v9183, %v9184
  %v9186 = vrot.slane %v9185, 4
  %v9187 = vadd.f32 %v9185, %v9186
  %v9188 = vrot.slane %v9187, 2
  %v9189 = vadd.f32 %v9187, %v9188
  %v9190 = vrot.slane %v9189, 1
  %v9191 = vadd.f32 %v9189, %v9190
  %v9192 = vsel %vm6672, %v8368, 0.0
  %v9193 = vsel %vm6672, %v8369, 0.0
  %v9194 = vadd.f32 %v9192, %v9193
  %v9195 = vsel %vm6672, %v8370, 0.0
  %v9196 = vadd.f32 %v9194, %v9195
  %v9197 = vsel %vm6672, %v8371, 0.0
  %v9198 = vadd.f32 %v9196, %v9197
  %v9199 = vsel %vm6672, %v8372, 0.0
  %v9200 = vadd.f32 %v9198, %v9199
  %v9201 = vsel %vm6672, %v8373, 0.0
  %v9202 = vadd.f32 %v9200, %v9201
  %v9203 = vsel %vm6672, %v8374, 0.0
  %v9204 = vadd.f32 %v9202, %v9203
  %v9205 = vsel %vm6672, %v8375, 0.0
  %v9206 = vadd.f32 %v9204, %v9205
  %v9207 = vrot.slane %v9206, 4
  %v9208 = vadd.f32 %v9206, %v9207
  %v9209 = vrot.slane %v9208, 2
  %v9210 = vadd.f32 %v9208, %v9209
  %v9211 = vrot.slane %v9210, 1
  %v9212 = vadd.f32 %v9210, %v9211
  %v9213 = vsel %vm6672, %v8376, 0.0
  %v9214 = vsel %vm6672, %v8377, 0.0
  %v9215 = vadd.f32 %v9213, %v9214
  %v9216 = vsel %vm6672, %v8378, 0.0
  %v9217 = vadd.f32 %v9215, %v9216
  %v9218 = vsel %vm6672, %v8379, 0.0
  %v9219 = vadd.f32 %v9217, %v9218
  %v9220 = vsel %vm6672, %v8380, 0.0
  %v9221 = vadd.f32 %v9219, %v9220
  %v9222 = vsel %vm6672, %v8381, 0.0
  %v9223 = vadd.f32 %v9221, %v9222
  %v9224 = vsel %vm6672, %v8382, 0.0
  %v9225 = vadd.f32 %v9223, %v9224
  %v9226 = vsel %vm6672, %v8383, 0.0
  %v9227 = vadd.f32 %v9225, %v9226
  %v9228 = vrot.slane %v9227, 4
  %v9229 = vadd.f32 %v9227, %v9228
  %v9230 = vrot.slane %v9229, 2
  %v9231 = vadd.f32 %v9229, %v9230
  %v9232 = vrot.slane %v9231, 1
  %v9233 = vadd.f32 %v9231, %v9232
  %v9234 = vsel %vm6672, %v8384, 0.0
  %v9235 = vsel %vm6672, %v8385, 0.0
  %v9236 = vadd.f32 %v9234, %v9235
  %v9237 = vsel %vm6672, %v8386, 0.0
  %v9238 = vadd.f32 %v9236, %v9237
  %v9239 = vsel %vm6672, %v8387, 0.0
  %v9240 = vadd.f32 %v9238, %v9239
  %v9241 = vsel %vm6672, %v8388, 0.0
  %v9242 = vadd.f32 %v9240, %v9241
  %v9243 = vsel %vm6672, %v8389, 0.0
  %v9244 = vadd.f32 %v9242, %v9243
  %v9245 = vsel %vm6672, %v8390, 0.0
  %v9246 = vadd.f32 %v9244, %v9245
  %v9247 = vsel %vm6672, %v8391, 0.0
  %v9248 = vadd.f32 %v9246, %v9247
  %v9249 = vrot.slane %v9248, 4
  %v9250 = vadd.f32 %v9248, %v9249
  %v9251 = vrot.slane %v9250, 2
  %v9252 = vadd.f32 %v9250, %v9251
  %v9253 = vrot.slane %v9252, 1
  %v9254 = vadd.f32 %v9252, %v9253
  %v9255 = vsel %vm6672, %v8392, 0.0
  %v9256 = vsel %vm6672, %v8393, 0.0
  %v9257 = vadd.f32 %v9255, %v9256
  %v9258 = vsel %vm6672, %v8394, 0.0
  %v9259 = vadd.f32 %v9257, %v9258
  %v9260 = vsel %vm6672, %v8395, 0.0
  %v9261 = vadd.f32 %v9259, %v9260
  %v9262 = vsel %vm6672, %v8396, 0.0
  %v9263 = vadd.f32 %v9261, %v9262
  %v9264 = vsel %vm6672, %v8397, 0.0
  %v9265 = vadd.f32 %v9263, %v9264
  %v9266 = vsel %vm6672, %v8398, 0.0
  %v9267 = vadd.f32 %v9265, %v9266
  %v9268 = vsel %vm6672, %v8399, 0.0
  %v9269 = vadd.f32 %v9267, %v9268
  %v9270 = vrot.slane %v9269, 4
  %v9271 = vadd.f32 %v9269, %v9270
  %v9272 = vrot.slane %v9271, 2
  %v9273 = vadd.f32 %v9271, %v9272
  %v9274 = vrot.slane %v9273, 1
  %v9275 = vadd.f32 %v9273, %v9274
  %v9276 = vsel %vm6672, %v8400, 0.0
  %v9277 = vsel %vm6672, %v8401, 0.0
  %v9278 = vadd.f32 %v9276, %v9277
  %v9279 = vsel %vm6672, %v8402, 0.0
  %v9280 = vadd.f32 %v9278, %v9279
  %v9281 = vsel %vm6672, %v8403, 0.0
  %v9282 = vadd.f32 %v9280, %v9281
  %v9283 = vsel %vm6672, %v8404, 0.0
  %v9284 = vadd.f32 %v9282, %v9283
  %v9285 = vsel %vm6672, %v8405, 0.0
  %v9286 = vadd.f32 %v9284, %v9285
  %v9287 = vsel %vm6672, %v8406, 0.0
  %v9288 = vadd.f32 %v9286, %v9287
  %v9289 = vsel %vm6672, %v8407, 0.0
  %v9290 = vadd.f32 %v9288, %v9289
  %v9291 = vrot.slane %v9290, 4
  %v9292 = vadd.f32 %v9290, %v9291
  %v9293 = vrot.slane %v9292, 2
  %v9294 = vadd.f32 %v9292, %v9293
  %v9295 = vrot.slane %v9294, 1
  %v9296 = vadd.f32 %v9294, %v9295
  %v9297 = vsel %vm6672, %v8408, 0.0
  %v9298 = vsel %vm6672, %v8409, 0.0
  %v9299 = vadd.f32 %v9297, %v9298
  %v9300 = vsel %vm6672, %v8410, 0.0
  %v9301 = vadd.f32 %v9299, %v9300
  %v9302 = vsel %vm6672, %v8411, 0.0
  %v9303 = vadd.f32 %v9301, %v9302
  %v9304 = vsel %vm6672, %v8412, 0.0
  %v9305 = vadd.f32 %v9303, %v9304
  %v9306 = vsel %vm6672, %v8413, 0.0
  %v9307 = vadd.f32 %v9305, %v9306
  %v9308 = vsel %vm6672, %v8414, 0.0
  %v9309 = vadd.f32 %v9307, %v9308
  %v9310 = vsel %vm6672, %v8415, 0.0
  %v9311 = vadd.f32 %v9309, %v9310
  %v9312 = vrot.slane %v9311, 4
  %v9313 = vadd.f32 %v9311, %v9312
  %v9314 = vrot.slane %v9313, 2
  %v9315 = vadd.f32 %v9313, %v9314
  %v9316 = vrot.slane %v9315, 1
  %v9317 = vadd.f32 %v9315, %v9316
  %v9318 = vsel %vm6672, %v8416, 0.0
  %v9319 = vsel %vm6672, %v8417, 0.0
  %v9320 = vadd.f32 %v9318, %v9319
  %v9321 = vsel %vm6672, %v8418, 0.0
  %v9322 = vadd.f32 %v9320, %v9321
  %v9323 = vsel %vm6672, %v8419, 0.0
  %v9324 = vadd.f32 %v9322, %v9323
  %v9325 = vsel %vm6672, %v8420, 0.0
  %v9326 = vadd.f32 %v9324, %v9325
  %v9327 = vsel %vm6672, %v8421, 0.0
  %v9328 = vadd.f32 %v9326, %v9327
  %v9329 = vsel %vm6672, %v8422, 0.0
  %v9330 = vadd.f32 %v9328, %v9329
  %v9331 = vsel %vm6672, %v8423, 0.0
  %v9332 = vadd.f32 %v9330, %v9331
  %v9333 = vrot.slane %v9332, 4
  %v9334 = vadd.f32 %v9332, %v9333
  %v9335 = vrot.slane %v9334, 2
  %v9336 = vadd.f32 %v9334, %v9335
  %v9337 = vrot.slane %v9336, 1
  %v9338 = vadd.f32 %v9336, %v9337
  %v9339 = vsel %vm6672, %v8424, 0.0
  %v9340 = vsel %vm6672, %v8425, 0.0
  %v9341 = vadd.f32 %v9339, %v9340
  %v9342 = vsel %vm6672, %v8426, 0.0
  %v9343 = vadd.f32 %v9341, %v9342
  %v9344 = vsel %vm6672, %v8427, 0.0
  %v9345 = vadd.f32 %v9343, %v9344
  %v9346 = vsel %vm6672, %v8428, 0.0
  %v9347 = vadd.f32 %v9345, %v9346
  %v9348 = vsel %vm6672, %v8429, 0.0
  %v9349 = vadd.f32 %v9347, %v9348
  %v9350 = vsel %vm6672, %v8430, 0.0
  %v9351 = vadd.f32 %v9349, %v9350
  %v9352 = vsel %vm6672, %v8431, 0.0
  %v9353 = vadd.f32 %v9351, %v9352
  %v9354 = vrot.slane %v9353, 4
  %v9355 = vadd.f32 %v9353, %v9354
  %v9356 = vrot.slane %v9355, 2
  %v9357 = vadd.f32 %v9355, %v9356
  %v9358 = vrot.slane %v9357, 1
  %v9359 = vadd.f32 %v9357, %v9358
  %v9360 = vsel %vm6672, %v8432, 0.0
  %v9361 = vsel %vm6672, %v8433, 0.0
  %v9362 = vadd.f32 %v9360, %v9361
  %v9363 = vsel %vm6672, %v8434, 0.0
  %v9364 = vadd.f32 %v9362, %v9363
  %v9365 = vsel %vm6672, %v8435, 0.0
  %v9366 = vadd.f32 %v9364, %v9365
  %v9367 = vsel %vm6672, %v8436, 0.0
  %v9368 = vadd.f32 %v9366, %v9367
  %v9369 = vsel %vm6672, %v8437, 0.0
  %v9370 = vadd.f32 %v9368, %v9369
  %v9371 = vsel %vm6672, %v8438, 0.0
  %v9372 = vadd.f32 %v9370, %v9371
  %v9373 = vsel %vm6672, %v8439, 0.0
  %v9374 = vadd.f32 %v9372, %v9373
  %v9375 = vrot.slane %v9374, 4
  %v9376 = vadd.f32 %v9374, %v9375
  %v9377 = vrot.slane %v9376, 2
  %v9378 = vadd.f32 %v9376, %v9377
  %v9379 = vrot.slane %v9378, 1
  %v9380 = vadd.f32 %v9378, %v9379
  %v9381 = vsel %vm6672, %v8440, 0.0
  %v9382 = vsel %vm6672, %v8441, 0.0
  %v9383 = vadd.f32 %v9381, %v9382
  %v9384 = vsel %vm6672, %v8442, 0.0
  %v9385 = vadd.f32 %v9383, %v9384
  %v9386 = vsel %vm6672, %v8443, 0.0
  %v9387 = vadd.f32 %v9385, %v9386
  %v9388 = vsel %vm6672, %v8444, 0.0
  %v9389 = vadd.f32 %v9387, %v9388
  %v9390 = vsel %vm6672, %v8445, 0.0
  %v9391 = vadd.f32 %v9389, %v9390
  %v9392 = vsel %vm6672, %v8446, 0.0
  %v9393 = vadd.f32 %v9391, %v9392
  %v9394 = vsel %vm6672, %v8447, 0.0
  %v9395 = vadd.f32 %v9393, %v9394
  %v9396 = vrot.slane %v9395, 4
  %v9397 = vadd.f32 %v9395, %v9396
  %v9398 = vrot.slane %v9397, 2
  %v9399 = vadd.f32 %v9397, %v9398
  %v9400 = vrot.slane %v9399, 1
  %v9401 = vadd.f32 %v9399, %v9400
  %v9402 = vsel %vm6672, %v8448, 0.0
  %v9403 = vsel %vm6672, %v8449, 0.0
  %v9404 = vadd.f32 %v9402, %v9403
  %v9405 = vsel %vm6672, %v8450, 0.0
  %v9406 = vadd.f32 %v9404, %v9405
  %v9407 = vsel %vm6672, %v8451, 0.0
  %v9408 = vadd.f32 %v9406, %v9407
  %v9409 = vsel %vm6672, %v8452, 0.0
  %v9410 = vadd.f32 %v9408, %v9409
  %v9411 = vsel %vm6672, %v8453, 0.0
  %v9412 = vadd.f32 %v9410, %v9411
  %v9413 = vsel %vm6672, %v8454, 0.0
  %v9414 = vadd.f32 %v9412, %v9413
  %v9415 = vsel %vm6672, %v8455, 0.0
  %v9416 = vadd.f32 %v9414, %v9415
  %v9417 = vrot.slane %v9416, 4
  %v9418 = vadd.f32 %v9416, %v9417
  %v9419 = vrot.slane %v9418, 2
  %v9420 = vadd.f32 %v9418, %v9419
  %v9421 = vrot.slane %v9420, 1
  %v9422 = vadd.f32 %v9420, %v9421
  %v9423 = vsel %vm6672, %v8456, 0.0
  %v9424 = vsel %vm6672, %v8457, 0.0
  %v9425 = vadd.f32 %v9423, %v9424
  %v9426 = vsel %vm6672, %v8458, 0.0
  %v9427 = vadd.f32 %v9425, %v9426
  %v9428 = vsel %vm6672, %v8459, 0.0
  %v9429 = vadd.f32 %v9427, %v9428
  %v9430 = vsel %vm6672, %v8460, 0.0
  %v9431 = vadd.f32 %v9429, %v9430
  %v9432 = vsel %vm6672, %v8461, 0.0
  %v9433 = vadd.f32 %v9431, %v9432
  %v9434 = vsel %vm6672, %v8462, 0.0
  %v9435 = vadd.f32 %v9433, %v9434
  %v9436 = vsel %vm6672, %v8463, 0.0
  %v9437 = vadd.f32 %v9435, %v9436
  %v9438 = vrot.slane %v9437, 4
  %v9439 = vadd.f32 %v9437, %v9438
  %v9440 = vrot.slane %v9439, 2
  %v9441 = vadd.f32 %v9439, %v9440
  %v9442 = vrot.slane %v9441, 1
  %v9443 = vadd.f32 %v9441, %v9442
  %v9444 = vsel %vm6672, %v8464, 0.0
  %v9445 = vsel %vm6672, %v8465, 0.0
  %v9446 = vadd.f32 %v9444, %v9445
  %v9447 = vsel %vm6672, %v8466, 0.0
  %v9448 = vadd.f32 %v9446, %v9447
  %v9449 = vsel %vm6672, %v8467, 0.0
  %v9450 = vadd.f32 %v9448, %v9449
  %v9451 = vsel %vm6672, %v8468, 0.0
  %v9452 = vadd.f32 %v9450, %v9451
  %v9453 = vsel %vm6672, %v8469, 0.0
  %v9454 = vadd.f32 %v9452, %v9453
  %v9455 = vsel %vm6672, %v8470, 0.0
  %v9456 = vadd.f32 %v9454, %v9455
  %v9457 = vsel %vm6672, %v8471, 0.0
  %v9458 = vadd.f32 %v9456, %v9457
  %v9459 = vrot.slane %v9458, 4
  %v9460 = vadd.f32 %v9458, %v9459
  %v9461 = vrot.slane %v9460, 2
  %v9462 = vadd.f32 %v9460, %v9461
  %v9463 = vrot.slane %v9462, 1
  %v9464 = vadd.f32 %v9462, %v9463
  %v9465 = vsel %vm6672, %v8472, 0.0
  %v9466 = vsel %vm6672, %v8473, 0.0
  %v9467 = vadd.f32 %v9465, %v9466
  %v9468 = vsel %vm6672, %v8474, 0.0
  %v9469 = vadd.f32 %v9467, %v9468
  %v9470 = vsel %vm6672, %v8475, 0.0
  %v9471 = vadd.f32 %v9469, %v9470
  %v9472 = vsel %vm6672, %v8476, 0.0
  %v9473 = vadd.f32 %v9471, %v9472
  %v9474 = vsel %vm6672, %v8477, 0.0
  %v9475 = vadd.f32 %v9473, %v9474
  %v9476 = vsel %vm6672, %v8478, 0.0
  %v9477 = vadd.f32 %v9475, %v9476
  %v9478 = vsel %vm6672, %v8479, 0.0
  %v9479 = vadd.f32 %v9477, %v9478
  %v9480 = vrot.slane %v9479, 4
  %v9481 = vadd.f32 %v9479, %v9480
  %v9482 = vrot.slane %v9481, 2
  %v9483 = vadd.f32 %v9481, %v9482
  %v9484 = vrot.slane %v9483, 1
  %v9485 = vadd.f32 %v9483, %v9484
  %v9486 = vsel %vm6672, %v8480, 0.0
  %v9487 = vsel %vm6672, %v8481, 0.0
  %v9488 = vadd.f32 %v9486, %v9487
  %v9489 = vsel %vm6672, %v8482, 0.0
  %v9490 = vadd.f32 %v9488, %v9489
  %v9491 = vsel %vm6672, %v8483, 0.0
  %v9492 = vadd.f32 %v9490, %v9491
  %v9493 = vsel %vm6672, %v8484, 0.0
  %v9494 = vadd.f32 %v9492, %v9493
  %v9495 = vsel %vm6672, %v8485, 0.0
  %v9496 = vadd.f32 %v9494, %v9495
  %v9497 = vsel %vm6672, %v8486, 0.0
  %v9498 = vadd.f32 %v9496, %v9497
  %v9499 = vsel %vm6672, %v8487, 0.0
  %v9500 = vadd.f32 %v9498, %v9499
  %v9501 = vrot.slane %v9500, 4
  %v9502 = vadd.f32 %v9500, %v9501
  %v9503 = vrot.slane %v9502, 2
  %v9504 = vadd.f32 %v9502, %v9503
  %v9505 = vrot.slane %v9504, 1
  %v9506 = vadd.f32 %v9504, %v9505
  %v9507 = vsel %vm6672, %v8488, 0.0
  %v9508 = vsel %vm6672, %v8489, 0.0
  %v9509 = vadd.f32 %v9507, %v9508
  %v9510 = vsel %vm6672, %v8490, 0.0
  %v9511 = vadd.f32 %v9509, %v9510
  %v9512 = vsel %vm6672, %v8491, 0.0
  %v9513 = vadd.f32 %v9511, %v9512
  %v9514 = vsel %vm6672, %v8492, 0.0
  %v9515 = vadd.f32 %v9513, %v9514
  %v9516 = vsel %vm6672, %v8493, 0.0
  %v9517 = vadd.f32 %v9515, %v9516
  %v9518 = vsel %vm6672, %v8494, 0.0
  %v9519 = vadd.f32 %v9517, %v9518
  %v9520 = vsel %vm6672, %v8495, 0.0
  %v9521 = vadd.f32 %v9519, %v9520
  %v9522 = vrot.slane %v9521, 4
  %v9523 = vadd.f32 %v9521, %v9522
  %v9524 = vrot.slane %v9523, 2
  %v9525 = vadd.f32 %v9523, %v9524
  %v9526 = vrot.slane %v9525, 1
  %v9527 = vadd.f32 %v9525, %v9526
  %v9528 = vsel %vm6672, %v8496, 0.0
  %v9529 = vsel %vm6672, %v8497, 0.0
  %v9530 = vadd.f32 %v9528, %v9529
  %v9531 = vsel %vm6672, %v8498, 0.0
  %v9532 = vadd.f32 %v9530, %v9531
  %v9533 = vsel %vm6672, %v8499, 0.0
  %v9534 = vadd.f32 %v9532, %v9533
  %v9535 = vsel %vm6672, %v8500, 0.0
  %v9536 = vadd.f32 %v9534, %v9535
  %v9537 = vsel %vm6672, %v8501, 0.0
  %v9538 = vadd.f32 %v9536, %v9537
  %v9539 = vsel %vm6672, %v8502, 0.0
  %v9540 = vadd.f32 %v9538, %v9539
  %v9541 = vsel %vm6672, %v8503, 0.0
  %v9542 = vadd.f32 %v9540, %v9541
  %v9543 = vrot.slane %v9542, 4
  %v9544 = vadd.f32 %v9542, %v9543
  %v9545 = vrot.slane %v9544, 2
  %v9546 = vadd.f32 %v9544, %v9545
  %v9547 = vrot.slane %v9546, 1
  %v9548 = vadd.f32 %v9546, %v9547
  %v9549 = vsel %vm6672, %v8504, 0.0
  %v9550 = vsel %vm6672, %v8505, 0.0
  %v9551 = vadd.f32 %v9549, %v9550
  %v9552 = vsel %vm6672, %v8506, 0.0
  %v9553 = vadd.f32 %v9551, %v9552
  %v9554 = vsel %vm6672, %v8507, 0.0
  %v9555 = vadd.f32 %v9553, %v9554
  %v9556 = vsel %vm6672, %v8508, 0.0
  %v9557 = vadd.f32 %v9555, %v9556
  %v9558 = vsel %vm6672, %v8509, 0.0
  %v9559 = vadd.f32 %v9557, %v9558
  %v9560 = vsel %vm6672, %v8510, 0.0
  %v9561 = vadd.f32 %v9559, %v9560
  %v9562 = vsel %vm6672, %v8511, 0.0
  %v9563 = vadd.f32 %v9561, %v9562
  %v9564 = vrot.slane %v9563, 4
  %v9565 = vadd.f32 %v9563, %v9564
  %v9566 = vrot.slane %v9565, 2
  %v9567 = vadd.f32 %v9565, %v9566
  %v9568 = vrot.slane %v9567, 1
  %v9569 = vadd.f32 %v9567, %v9568
  %v9570 = vsel %vm6672, %v8512, 0.0
  %v9571 = vsel %vm6672, %v8513, 0.0
  %v9572 = vadd.f32 %v9570, %v9571
  %v9573 = vsel %vm6672, %v8514, 0.0
  %v9574 = vadd.f32 %v9572, %v9573
  %v9575 = vsel %vm6672, %v8515, 0.0
  %v9576 = vadd.f32 %v9574, %v9575
  %v9577 = vsel %vm6672, %v8516, 0.0
  %v9578 = vadd.f32 %v9576, %v9577
  %v9579 = vsel %vm6672, %v8517, 0.0
  %v9580 = vadd.f32 %v9578, %v9579
  %v9581 = vsel %vm6672, %v8518, 0.0
  %v9582 = vadd.f32 %v9580, %v9581
  %v9583 = vsel %vm6672, %v8519, 0.0
  %v9584 = vadd.f32 %v9582, %v9583
  %v9585 = vrot.slane %v9584, 4
  %v9586 = vadd.f32 %v9584, %v9585
  %v9587 = vrot.slane %v9586, 2
  %v9588 = vadd.f32 %v9586, %v9587
  %v9589 = vrot.slane %v9588, 1
  %v9590 = vadd.f32 %v9588, %v9589
  %v9591 = vsel %vm6672, %v8520, 0.0
  %v9592 = vsel %vm6672, %v8521, 0.0
  %v9593 = vadd.f32 %v9591, %v9592
  %v9594 = vsel %vm6672, %v8522, 0.0
  %v9595 = vadd.f32 %v9593, %v9594
  %v9596 = vsel %vm6672, %v8523, 0.0
  %v9597 = vadd.f32 %v9595, %v9596
  %v9598 = vsel %vm6672, %v8524, 0.0
  %v9599 = vadd.f32 %v9597, %v9598
  %v9600 = vsel %vm6672, %v8525, 0.0
  %v9601 = vadd.f32 %v9599, %v9600
  %v9602 = vsel %vm6672, %v8526, 0.0
  %v9603 = vadd.f32 %v9601, %v9602
  %v9604 = vsel %vm6672, %v8527, 0.0
  %v9605 = vadd.f32 %v9603, %v9604
  %v9606 = vrot.slane %v9605, 4
  %v9607 = vadd.f32 %v9605, %v9606
  %v9608 = vrot.slane %v9607, 2
  %v9609 = vadd.f32 %v9607, %v9608
  %v9610 = vrot.slane %v9609, 1
  %v9611 = vadd.f32 %v9609, %v9610
  %v9612 = vsel %vm6672, %v8528, 0.0
  %v9613 = vsel %vm6672, %v8529, 0.0
  %v9614 = vadd.f32 %v9612, %v9613
  %v9615 = vsel %vm6672, %v8530, 0.0
  %v9616 = vadd.f32 %v9614, %v9615
  %v9617 = vsel %vm6672, %v8531, 0.0
  %v9618 = vadd.f32 %v9616, %v9617
  %v9619 = vsel %vm6672, %v8532, 0.0
  %v9620 = vadd.f32 %v9618, %v9619
  %v9621 = vsel %vm6672, %v8533, 0.0
  %v9622 = vadd.f32 %v9620, %v9621
  %v9623 = vsel %vm6672, %v8534, 0.0
  %v9624 = vadd.f32 %v9622, %v9623
  %v9625 = vsel %vm6672, %v8535, 0.0
  %v9626 = vadd.f32 %v9624, %v9625
  %v9627 = vrot.slane %v9626, 4
  %v9628 = vadd.f32 %v9626, %v9627
  %v9629 = vrot.slane %v9628, 2
  %v9630 = vadd.f32 %v9628, %v9629
  %v9631 = vrot.slane %v9630, 1
  %v9632 = vadd.f32 %v9630, %v9631
  %v9633 = vsel %vm6672, %v8536, 0.0
  %v9634 = vsel %vm6672, %v8537, 0.0
  %v9635 = vadd.f32 %v9633, %v9634
  %v9636 = vsel %vm6672, %v8538, 0.0
  %v9637 = vadd.f32 %v9635, %v9636
  %v9638 = vsel %vm6672, %v8539, 0.0
  %v9639 = vadd.f32 %v9637, %v9638
  %v9640 = vsel %vm6672, %v8540, 0.0
  %v9641 = vadd.f32 %v9639, %v9640
  %v9642 = vsel %vm6672, %v8541, 0.0
  %v9643 = vadd.f32 %v9641, %v9642
  %v9644 = vsel %vm6672, %v8542, 0.0
  %v9645 = vadd.f32 %v9643, %v9644
  %v9646 = vsel %vm6672, %v8543, 0.0
  %v9647 = vadd.f32 %v9645, %v9646
  %v9648 = vrot.slane %v9647, 4
  %v9649 = vadd.f32 %v9647, %v9648
  %v9650 = vrot.slane %v9649, 2
  %v9651 = vadd.f32 %v9649, %v9650
  %v9652 = vrot.slane %v9651, 1
  %v9653 = vadd.f32 %v9651, %v9652
  %v9654 = vsel %vm6672, %v8544, 0.0
  %v9655 = vsel %vm6672, %v8545, 0.0
  %v9656 = vadd.f32 %v9654, %v9655
  %v9657 = vsel %vm6672, %v8546, 0.0
  %v9658 = vadd.f32 %v9656, %v9657
  %v9659 = vsel %vm6672, %v8547, 0.0
  %v9660 = vadd.f32 %v9658, %v9659
  %v9661 = vsel %vm6672, %v8548, 0.0
  %v9662 = vadd.f32 %v9660, %v9661
  %v9663 = vsel %vm6672, %v8549, 0.0
  %v9664 = vadd.f32 %v9662, %v9663
  %v9665 = vsel %vm6672, %v8550, 0.0
  %v9666 = vadd.f32 %v9664, %v9665
  %v9667 = vsel %vm6672, %v8551, 0.0
  %v9668 = vadd.f32 %v9666, %v9667
  %v9669 = vrot.slane %v9668, 4
  %v9670 = vadd.f32 %v9668, %v9669
  %v9671 = vrot.slane %v9670, 2
  %v9672 = vadd.f32 %v9670, %v9671
  %v9673 = vrot.slane %v9672, 1
  %v9674 = vadd.f32 %v9672, %v9673
  %v9675 = vsel %vm6672, %v8552, 0.0
  %v9676 = vsel %vm6672, %v8553, 0.0
  %v9677 = vadd.f32 %v9675, %v9676
  %v9678 = vsel %vm6672, %v8554, 0.0
  %v9679 = vadd.f32 %v9677, %v9678
  %v9680 = vsel %vm6672, %v8555, 0.0
  %v9681 = vadd.f32 %v9679, %v9680
  %v9682 = vsel %vm6672, %v8556, 0.0
  %v9683 = vadd.f32 %v9681, %v9682
  %v9684 = vsel %vm6672, %v8557, 0.0
  %v9685 = vadd.f32 %v9683, %v9684
  %v9686 = vsel %vm6672, %v8558, 0.0
  %v9687 = vadd.f32 %v9685, %v9686
  %v9688 = vsel %vm6672, %v8559, 0.0
  %v9689 = vadd.f32 %v9687, %v9688
  %v9690 = vrot.slane %v9689, 4
  %v9691 = vadd.f32 %v9689, %v9690
  %v9692 = vrot.slane %v9691, 2
  %v9693 = vadd.f32 %v9691, %v9692
  %v9694 = vrot.slane %v9693, 1
  %v9695 = vadd.f32 %v9693, %v9694
  %v9696 = vsel %vm6672, %v8560, 0.0
  %v9697 = vsel %vm6672, %v8561, 0.0
  %v9698 = vadd.f32 %v9696, %v9697
  %v9699 = vsel %vm6672, %v8562, 0.0
  %v9700 = vadd.f32 %v9698, %v9699
  %v9701 = vsel %vm6672, %v8563, 0.0
  %v9702 = vadd.f32 %v9700, %v9701
  %v9703 = vsel %vm6672, %v8564, 0.0
  %v9704 = vadd.f32 %v9702, %v9703
  %v9705 = vsel %vm6672, %v8565, 0.0
  %v9706 = vadd.f32 %v9704, %v9705
  %v9707 = vsel %vm6672, %v8566, 0.0
  %v9708 = vadd.f32 %v9706, %v9707
  %v9709 = vsel %vm6672, %v8567, 0.0
  %v9710 = vadd.f32 %v9708, %v9709
  %v9711 = vrot.slane %v9710, 4
  %v9712 = vadd.f32 %v9710, %v9711
  %v9713 = vrot.slane %v9712, 2
  %v9714 = vadd.f32 %v9712, %v9713
  %v9715 = vrot.slane %v9714, 1
  %v9716 = vadd.f32 %v9714, %v9715
  %v9717 = vsel %vm6672, %v8568, 0.0
  %v9718 = vsel %vm6672, %v8569, 0.0
  %v9719 = vadd.f32 %v9717, %v9718
  %v9720 = vsel %vm6672, %v8570, 0.0
  %v9721 = vadd.f32 %v9719, %v9720
  %v9722 = vsel %vm6672, %v8571, 0.0
  %v9723 = vadd.f32 %v9721, %v9722
  %v9724 = vsel %vm6672, %v8572, 0.0
  %v9725 = vadd.f32 %v9723, %v9724
  %v9726 = vsel %vm6672, %v8573, 0.0
  %v9727 = vadd.f32 %v9725, %v9726
  %v9728 = vsel %vm6672, %v8574, 0.0
  %v9729 = vadd.f32 %v9727, %v9728
  %v9730 = vsel %vm6672, %v8575, 0.0
  %v9731 = vadd.f32 %v9729, %v9730
  %v9732 = vrot.slane %v9731, 4
  %v9733 = vadd.f32 %v9731, %v9732
  %v9734 = vrot.slane %v9733, 2
  %v9735 = vadd.f32 %v9733, %v9734
  %v9736 = vrot.slane %v9735, 1
  %v9737 = vadd.f32 %v9735, %v9736
  %v9738 = vsel %vm6672, %v8576, 0.0
  %v9739 = vsel %vm6672, %v8577, 0.0
  %v9740 = vadd.f32 %v9738, %v9739
  %v9741 = vsel %vm6672, %v8578, 0.0
  %v9742 = vadd.f32 %v9740, %v9741
  %v9743 = vsel %vm6672, %v8579, 0.0
  %v9744 = vadd.f32 %v9742, %v9743
  %v9745 = vsel %vm6672, %v8580, 0.0
  %v9746 = vadd.f32 %v9744, %v9745
  %v9747 = vsel %vm6672, %v8581, 0.0
  %v9748 = vadd.f32 %v9746, %v9747
  %v9749 = vsel %vm6672, %v8582, 0.0
  %v9750 = vadd.f32 %v9748, %v9749
  %v9751 = vsel %vm6672, %v8583, 0.0
  %v9752 = vadd.f32 %v9750, %v9751
  %v9753 = vrot.slane %v9752, 4
  %v9754 = vadd.f32 %v9752, %v9753
  %v9755 = vrot.slane %v9754, 2
  %v9756 = vadd.f32 %v9754, %v9755
  %v9757 = vrot.slane %v9756, 1
  %v9758 = vadd.f32 %v9756, %v9757
  %v9759 = vsel %vm6672, %v8584, 0.0
  %v9760 = vsel %vm6672, %v8585, 0.0
  %v9761 = vadd.f32 %v9759, %v9760
  %v9762 = vsel %vm6672, %v8586, 0.0
  %v9763 = vadd.f32 %v9761, %v9762
  %v9764 = vsel %vm6672, %v8587, 0.0
  %v9765 = vadd.f32 %v9763, %v9764
  %v9766 = vsel %vm6672, %v8588, 0.0
  %v9767 = vadd.f32 %v9765, %v9766
  %v9768 = vsel %vm6672, %v8589, 0.0
  %v9769 = vadd.f32 %v9767, %v9768
  %v9770 = vsel %vm6672, %v8590, 0.0
  %v9771 = vadd.f32 %v9769, %v9770
  %v9772 = vsel %vm6672, %v8591, 0.0
  %v9773 = vadd.f32 %v9771, %v9772
  %v9774 = vrot.slane %v9773, 4
  %v9775 = vadd.f32 %v9773, %v9774
  %v9776 = vrot.slane %v9775, 2
  %v9777 = vadd.f32 %v9775, %v9776
  %v9778 = vrot.slane %v9777, 1
  %v9779 = vadd.f32 %v9777, %v9778
  %v9780 = vsel %vm6672, %v8592, 0.0
  %v9781 = vsel %vm6672, %v8593, 0.0
  %v9782 = vadd.f32 %v9780, %v9781
  %v9783 = vsel %vm6672, %v8594, 0.0
  %v9784 = vadd.f32 %v9782, %v9783
  %v9785 = vsel %vm6672, %v8595, 0.0
  %v9786 = vadd.f32 %v9784, %v9785
  %v9787 = vsel %vm6672, %v8596, 0.0
  %v9788 = vadd.f32 %v9786, %v9787
  %v9789 = vsel %vm6672, %v8597, 0.0
  %v9790 = vadd.f32 %v9788, %v9789
  %v9791 = vsel %vm6672, %v8598, 0.0
  %v9792 = vadd.f32 %v9790, %v9791
  %v9793 = vsel %vm6672, %v8599, 0.0
  %v9794 = vadd.f32 %v9792, %v9793
  %v9795 = vrot.slane %v9794, 4
  %v9796 = vadd.f32 %v9794, %v9795
  %v9797 = vrot.slane %v9796, 2
  %v9798 = vadd.f32 %v9796, %v9797
  %v9799 = vrot.slane %v9798, 1
  %v9800 = vadd.f32 %v9798, %v9799
  %v9801 = vsel %vm6672, %v8600, 0.0
  %v9802 = vsel %vm6672, %v8601, 0.0
  %v9803 = vadd.f32 %v9801, %v9802
  %v9804 = vsel %vm6672, %v8602, 0.0
  %v9805 = vadd.f32 %v9803, %v9804
  %v9806 = vsel %vm6672, %v8603, 0.0
  %v9807 = vadd.f32 %v9805, %v9806
  %v9808 = vsel %vm6672, %v8604, 0.0
  %v9809 = vadd.f32 %v9807, %v9808
  %v9810 = vsel %vm6672, %v8605, 0.0
  %v9811 = vadd.f32 %v9809, %v9810
  %v9812 = vsel %vm6672, %v8606, 0.0
  %v9813 = vadd.f32 %v9811, %v9812
  %v9814 = vsel %vm6672, %v8607, 0.0
  %v9815 = vadd.f32 %v9813, %v9814
  %v9816 = vrot.slane %v9815, 4
  %v9817 = vadd.f32 %v9815, %v9816
  %v9818 = vrot.slane %v9817, 2
  %v9819 = vadd.f32 %v9817, %v9818
  %v9820 = vrot.slane %v9819, 1
  %v9821 = vadd.f32 %v9819, %v9820
  %v9822 = vsel %vm6672, %v8608, 0.0
  %v9823 = vsel %vm6672, %v8609, 0.0
  %v9824 = vadd.f32 %v9822, %v9823
  %v9825 = vsel %vm6672, %v8610, 0.0
  %v9826 = vadd.f32 %v9824, %v9825
  %v9827 = vsel %vm6672, %v8611, 0.0
  %v9828 = vadd.f32 %v9826, %v9827
  %v9829 = vsel %vm6672, %v8612, 0.0
  %v9830 = vadd.f32 %v9828, %v9829
  %v9831 = vsel %vm6672, %v8613, 0.0
  %v9832 = vadd.f32 %v9830, %v9831
  %v9833 = vsel %vm6672, %v8614, 0.0
  %v9834 = vadd.f32 %v9832, %v9833
  %v9835 = vsel %vm6672, %v8615, 0.0
  %v9836 = vadd.f32 %v9834, %v9835
  %v9837 = vrot.slane %v9836, 4
  %v9838 = vadd.f32 %v9836, %v9837
  %v9839 = vrot.slane %v9838, 2
  %v9840 = vadd.f32 %v9838, %v9839
  %v9841 = vrot.slane %v9840, 1
  %v9842 = vadd.f32 %v9840, %v9841
  %v9843 = vsel %vm6672, %v8616, 0.0
  %v9844 = vsel %vm6672, %v8617, 0.0
  %v9845 = vadd.f32 %v9843, %v9844
  %v9846 = vsel %vm6672, %v8618, 0.0
  %v9847 = vadd.f32 %v9845, %v9846
  %v9848 = vsel %vm6672, %v8619, 0.0
  %v9849 = vadd.f32 %v9847, %v9848
  %v9850 = vsel %vm6672, %v8620, 0.0
  %v9851 = vadd.f32 %v9849, %v9850
  %v9852 = vsel %vm6672, %v8621, 0.0
  %v9853 = vadd.f32 %v9851, %v9852
  %v9854 = vsel %vm6672, %v8622, 0.0
  %v9855 = vadd.f32 %v9853, %v9854
  %v9856 = vsel %vm6672, %v8623, 0.0
  %v9857 = vadd.f32 %v9855, %v9856
  %v9858 = vrot.slane %v9857, 4
  %v9859 = vadd.f32 %v9857, %v9858
  %v9860 = vrot.slane %v9859, 2
  %v9861 = vadd.f32 %v9859, %v9860
  %v9862 = vrot.slane %v9861, 1
  %v9863 = vadd.f32 %v9861, %v9862
  %v9864 = vsel %vm6672, %v8624, 0.0
  %v9865 = vsel %vm6672, %v8625, 0.0
  %v9866 = vadd.f32 %v9864, %v9865
  %v9867 = vsel %vm6672, %v8626, 0.0
  %v9868 = vadd.f32 %v9866, %v9867
  %v9869 = vsel %vm6672, %v8627, 0.0
  %v9870 = vadd.f32 %v9868, %v9869
  %v9871 = vsel %vm6672, %v8628, 0.0
  %v9872 = vadd.f32 %v9870, %v9871
  %v9873 = vsel %vm6672, %v8629, 0.0
  %v9874 = vadd.f32 %v9872, %v9873
  %v9875 = vsel %vm6672, %v8630, 0.0
  %v9876 = vadd.f32 %v9874, %v9875
  %v9877 = vsel %vm6672, %v8631, 0.0
  %v9878 = vadd.f32 %v9876, %v9877
  %v9879 = vrot.slane %v9878, 4
  %v9880 = vadd.f32 %v9878, %v9879
  %v9881 = vrot.slane %v9880, 2
  %v9882 = vadd.f32 %v9880, %v9881
  %v9883 = vrot.slane %v9882, 1
  %v9884 = vadd.f32 %v9882, %v9883
  %v9885 = vsel %vm6672, %v8632, 0.0
  %v9886 = vsel %vm6672, %v8633, 0.0
  %v9887 = vadd.f32 %v9885, %v9886
  %v9888 = vsel %vm6672, %v8634, 0.0
  %v9889 = vadd.f32 %v9887, %v9888
  %v9890 = vsel %vm6672, %v8635, 0.0
  %v9891 = vadd.f32 %v9889, %v9890
  %v9892 = vsel %vm6672, %v8636, 0.0
  %v9893 = vadd.f32 %v9891, %v9892
  %v9894 = vsel %vm6672, %v8637, 0.0
  %v9895 = vadd.f32 %v9893, %v9894
  %v9896 = vsel %vm6672, %v8638, 0.0
  %v9897 = vadd.f32 %v9895, %v9896
  %v9898 = vsel %vm6672, %v8639, 0.0
  %v9899 = vadd.f32 %v9897, %v9898
  %v9900 = vrot.slane %v9899, 4
  %v9901 = vadd.f32 %v9899, %v9900
  %v9902 = vrot.slane %v9901, 2
  %v9903 = vadd.f32 %v9901, %v9902
  %v9904 = vrot.slane %v9903, 1
  %v9905 = vadd.f32 %v9903, %v9904
  %v9906 = vsel %vm6672, %v8640, 0.0
  %v9907 = vsel %vm6672, %v8641, 0.0
  %v9908 = vadd.f32 %v9906, %v9907
  %v9909 = vsel %vm6672, %v8642, 0.0
  %v9910 = vadd.f32 %v9908, %v9909
  %v9911 = vsel %vm6672, %v8643, 0.0
  %v9912 = vadd.f32 %v9910, %v9911
  %v9913 = vsel %vm6672, %v8644, 0.0
  %v9914 = vadd.f32 %v9912, %v9913
  %v9915 = vsel %vm6672, %v8645, 0.0
  %v9916 = vadd.f32 %v9914, %v9915
  %v9917 = vsel %vm6672, %v8646, 0.0
  %v9918 = vadd.f32 %v9916, %v9917
  %v9919 = vsel %vm6672, %v8647, 0.0
  %v9920 = vadd.f32 %v9918, %v9919
  %v9921 = vrot.slane %v9920, 4
  %v9922 = vadd.f32 %v9920, %v9921
  %v9923 = vrot.slane %v9922, 2
  %v9924 = vadd.f32 %v9922, %v9923
  %v9925 = vrot.slane %v9924, 1
  %v9926 = vadd.f32 %v9924, %v9925
  %v9927 = vsel %vm6672, %v8648, 0.0
  %v9928 = vsel %vm6672, %v8649, 0.0
  %v9929 = vadd.f32 %v9927, %v9928
  %v9930 = vsel %vm6672, %v8650, 0.0
  %v9931 = vadd.f32 %v9929, %v9930
  %v9932 = vsel %vm6672, %v8651, 0.0
  %v9933 = vadd.f32 %v9931, %v9932
  %v9934 = vsel %vm6672, %v8652, 0.0
  %v9935 = vadd.f32 %v9933, %v9934
  %v9936 = vsel %vm6672, %v8653, 0.0
  %v9937 = vadd.f32 %v9935, %v9936
  %v9938 = vsel %vm6672, %v8654, 0.0
  %v9939 = vadd.f32 %v9937, %v9938
  %v9940 = vsel %vm6672, %v8655, 0.0
  %v9941 = vadd.f32 %v9939, %v9940
  %v9942 = vrot.slane %v9941, 4
  %v9943 = vadd.f32 %v9941, %v9942
  %v9944 = vrot.slane %v9943, 2
  %v9945 = vadd.f32 %v9943, %v9944
  %v9946 = vrot.slane %v9945, 1
  %v9947 = vadd.f32 %v9945, %v9946
  %v9948 = vsel %vm6672, %v8656, 0.0
  %v9949 = vsel %vm6672, %v8657, 0.0
  %v9950 = vadd.f32 %v9948, %v9949
  %v9951 = vsel %vm6672, %v8658, 0.0
  %v9952 = vadd.f32 %v9950, %v9951
  %v9953 = vsel %vm6672, %v8659, 0.0
  %v9954 = vadd.f32 %v9952, %v9953
  %v9955 = vsel %vm6672, %v8660, 0.0
  %v9956 = vadd.f32 %v9954, %v9955
  %v9957 = vsel %vm6672, %v8661, 0.0
  %v9958 = vadd.f32 %v9956, %v9957
  %v9959 = vsel %vm6672, %v8662, 0.0
  %v9960 = vadd.f32 %v9958, %v9959
  %v9961 = vsel %vm6672, %v8663, 0.0
  %v9962 = vadd.f32 %v9960, %v9961
  %v9963 = vrot.slane %v9962, 4
  %v9964 = vadd.f32 %v9962, %v9963
  %v9965 = vrot.slane %v9964, 2
  %v9966 = vadd.f32 %v9964, %v9965
  %v9967 = vrot.slane %v9966, 1
  %v9968 = vadd.f32 %v9966, %v9967
  %v9969 = vsel %vm6672, %v8664, 0.0
  %v9970 = vsel %vm6672, %v8665, 0.0
  %v9971 = vadd.f32 %v9969, %v9970
  %v9972 = vsel %vm6672, %v8666, 0.0
  %v9973 = vadd.f32 %v9971, %v9972
  %v9974 = vsel %vm6672, %v8667, 0.0
  %v9975 = vadd.f32 %v9973, %v9974
  %v9976 = vsel %vm6672, %v8668, 0.0
  %v9977 = vadd.f32 %v9975, %v9976
  %v9978 = vsel %vm6672, %v8669, 0.0
  %v9979 = vadd.f32 %v9977, %v9978
  %v9980 = vsel %vm6672, %v8670, 0.0
  %v9981 = vadd.f32 %v9979, %v9980
  %v9982 = vsel %vm6672, %v8671, 0.0
  %v9983 = vadd.f32 %v9981, %v9982
  %v9984 = vrot.slane %v9983, 4
  %v9985 = vadd.f32 %v9983, %v9984
  %v9986 = vrot.slane %v9985, 2
  %v9987 = vadd.f32 %v9985, %v9986
  %v9988 = vrot.slane %v9987, 1
  %v9989 = vadd.f32 %v9987, %v9988
  %v9990 = vsel %vm6672, %v8672, 0.0
  %v9991 = vsel %vm6672, %v8673, 0.0
  %v9992 = vadd.f32 %v9990, %v9991
  %v9993 = vsel %vm6672, %v8674, 0.0
  %v9994 = vadd.f32 %v9992, %v9993
  %v9995 = vsel %vm6672, %v8675, 0.0
  %v9996 = vadd.f32 %v9994, %v9995
  %v9997 = vsel %vm6672, %v8676, 0.0
  %v9998 = vadd.f32 %v9996, %v9997
  %v9999 = vsel %vm6672, %v8677, 0.0
  %v10000 = vadd.f32 %v9998, %v9999
  %v10001 = vsel %vm6672, %v8678, 0.0
  %v10002 = vadd.f32 %v10000, %v10001
  %v10003 = vsel %vm6672, %v8679, 0.0
  %v10004 = vadd.f32 %v10002, %v10003
  %v10005 = vrot.slane %v10004, 4
  %v10006 = vadd.f32 %v10004, %v10005
  %v10007 = vrot.slane %v10006, 2
  %v10008 = vadd.f32 %v10006, %v10007
  %v10009 = vrot.slane %v10008, 1
  %v10010 = vadd.f32 %v10008, %v10009
  %v10011 = vsel %vm6672, %v8680, 0.0
  %v10012 = vsel %vm6672, %v8681, 0.0
  %v10013 = vadd.f32 %v10011, %v10012
  %v10014 = vsel %vm6672, %v8682, 0.0
  %v10015 = vadd.f32 %v10013, %v10014
  %v10016 = vsel %vm6672, %v8683, 0.0
  %v10017 = vadd.f32 %v10015, %v10016
  %v10018 = vsel %vm6672, %v8684, 0.0
  %v10019 = vadd.f32 %v10017, %v10018
  %v10020 = vsel %vm6672, %v8685, 0.0
  %v10021 = vadd.f32 %v10019, %v10020
  %v10022 = vsel %vm6672, %v8686, 0.0
  %v10023 = vadd.f32 %v10021, %v10022
  %v10024 = vsel %vm6672, %v8687, 0.0
  %v10025 = vadd.f32 %v10023, %v10024
  %v10026 = vrot.slane %v10025, 4
  %v10027 = vadd.f32 %v10025, %v10026
  %v10028 = vrot.slane %v10027, 2
  %v10029 = vadd.f32 %v10027, %v10028
  %v10030 = vrot.slane %v10029, 1
  %v10031 = vadd.f32 %v10029, %v10030
  %v10096 = vsel %vm8081, %v8729, %v8708
  %v10097 = vsel %vm8083, %v8750, %v10096
  %v10098 = vsel %vm8085, %v8771, %v10097
  %v10099 = vsel %vm8087, %v8792, %v10098
  %v10100 = vsel %vm8089, %v8813, %v10099
  %v10101 = vsel %vm8091, %v8834, %v10100
  %v10102 = vsel %vm8093, %v8855, %v10101
  %v10103 = vsel %vm8081, %v8897, %v8876
  %v10104 = vsel %vm8083, %v8918, %v10103
  %v10105 = vsel %vm8085, %v8939, %v10104
  %v10106 = vsel %vm8087, %v8960, %v10105
  %v10107 = vsel %vm8089, %v8981, %v10106
  %v10108 = vsel %vm8091, %v9002, %v10107
  %v10109 = vsel %vm8093, %v9023, %v10108
  %v10110 = vsel %vm8081, %v9065, %v9044
  %v10111 = vsel %vm8083, %v9086, %v10110
  %v10112 = vsel %vm8085, %v9107, %v10111
  %v10113 = vsel %vm8087, %v9128, %v10112
  %v10114 = vsel %vm8089, %v9149, %v10113
  %v10115 = vsel %vm8091, %v9170, %v10114
  %v10116 = vsel %vm8093, %v9191, %v10115
  %v10117 = vsel %vm8081, %v9233, %v9212
  %v10118 = vsel %vm8083, %v9254, %v10117
  %v10119 = vsel %vm8085, %v9275, %v10118
  %v10120 = vsel %vm8087, %v9296, %v10119
  %v10121 = vsel %vm8089, %v9317, %v10120
  %v10122 = vsel %vm8091, %v9338, %v10121
  %v10123 = vsel %vm8093, %v9359, %v10122
  %v10124 = vsel %vm8081, %v9401, %v9380
  %v10125 = vsel %vm8083, %v9422, %v10124
  %v10126 = vsel %vm8085, %v9443, %v10125
  %v10127 = vsel %vm8087, %v9464, %v10126
  %v10128 = vsel %vm8089, %v9485, %v10127
  %v10129 = vsel %vm8091, %v9506, %v10128
  %v10130 = vsel %vm8093, %v9527, %v10129
  %v10131 = vsel %vm8081, %v9569, %v9548
  %v10132 = vsel %vm8083, %v9590, %v10131
  %v10133 = vsel %vm8085, %v9611, %v10132
  %v10134 = vsel %vm8087, %v9632, %v10133
  %v10135 = vsel %vm8089, %v9653, %v10134
  %v10136 = vsel %vm8091, %v9674, %v10135
  %v10137 = vsel %vm8093, %v9695, %v10136
  %v10138 = vsel %vm8081, %v9737, %v9716
  %v10139 = vsel %vm8083, %v9758, %v10138
  %v10140 = vsel %vm8085, %v9779, %v10139
  %v10141 = vsel %vm8087, %v9800, %v10140
  %v10142 = vsel %vm8089, %v9821, %v10141
  %v10143 = vsel %vm8091, %v9842, %v10142
  %v10144 = vsel %vm8093, %v9863, %v10143
  %v10145 = vsel %vm8081, %v9905, %v9884
  %v10146 = vsel %vm8083, %v9926, %v10145
  %v10147 = vsel %vm8085, %v9947, %v10146
  %v10148 = vsel %vm8087, %v9968, %v10147
  %v10149 = vsel %vm8089, %v9989, %v10148
  %v10150 = vsel %vm8091, %v10010, %v10149
  %v10151 = vsel %vm8093, %v10031, %v10150
  %v10160 = vadd.f32 %v8168, %v10102
  %v10161 = vadd.f32 %v8169, %v10109
  %v10162 = vadd.f32 %v8170, %v10116
  %v10163 = vadd.f32 %v8171, %v10123
  %v10164 = vadd.f32 %v8172, %v10130
  %v10165 = vadd.f32 %v8173, %v10137
  %v10166 = vadd.f32 %v8174, %v10144
  %v10167 = vadd.f32 %v8175, %v10151
  %10168 = vst.msk [vmem:[#allocation4] sm:$0xff] %vm6672, %v10160
  %10169 = vst.msk [vmem:[#allocation4 + $0x8] sm:$0xff] %vm6672, %v10161
  %10170 = vst.msk [vmem:[#allocation4 + $0x10] sm:$0xff] %vm6672, %v10162
  %10171 = vst.msk [vmem:[#allocation4 + $0x18] sm:$0xff] %vm6672, %v10163
  %10172 = vst.msk [vmem:[#allocation4 + $0x20] sm:$0xff] %vm6672, %v10164
  %10173 = vst.msk [vmem:[#allocation4 + $0x28] sm:$0xff] %vm6672, %v10165
  %10174 = vst.msk [vmem:[#allocation4 + $0x30] sm:$0xff] %vm6672, %v10166
  %10175 = vst.msk [vmem:[#allocation4 + $0x38] sm:$0xff] %vm6672, %v10167
  %v10176 = vld [vmem:[#allocation5] sm:$0xff]
  %v10177 = vld [vmem:[#allocation5 + $0x8] sm:$0xff]
  %v10178 = vld [vmem:[#allocation5 + $0x10] sm:$0xff]
  %v10179 = vld [vmem:[#allocation5 + $0x18] sm:$0xff]
  %v10180 = vld [vmem:[#allocation5 + $0x20] sm:$0xff]
  %v10181 = vld [vmem:[#allocation5 + $0x28] sm:$0xff]
  %v10182 = vld [vmem:[#allocation5 + $0x30] sm:$0xff]
  %v10183 = vld [vmem:[#allocation5 + $0x38] sm:$0xff]
  %v10184 = vsel %vm6672, %v6152, -inf
  %v10185 = vsel %vm6672, %v6153, -inf
  %v10186 = vmax.f32 %v10184, %v10185
  %v10187 = vsel %vm6672, %v6154, -inf
  %v10188 = vmax.f32 %v10186, %v10187
  %v10189 = vsel %vm6672, %v6155, -inf
  %v10190 = vmax.f32 %v10188, %v10189
  %v10191 = vsel %vm6672, %v6156, -inf
  %v10192 = vmax.f32 %v10190, %v10191
  %v10193 = vsel %vm6672, %v6157, -inf
  %v10194 = vmax.f32 %v10192, %v10193
  %v10195 = vsel %vm6672, %v6158, -inf
  %v10196 = vmax.f32 %v10194, %v10195
  %v10197 = vsel %vm6672, %v6159, -inf
  %v10198 = vmax.f32 %v10196, %v10197
  %v10199 = vrot.slane %v10198, 4
  %v10200 = vmax.f32 %v10198, %v10199
  %v10201 = vrot.slane %v10200, 2
  %v10202 = vmax.f32 %v10200, %v10201
  %v10203 = vrot.slane %v10202, 1
  %v10204 = vmax.f32 %v10202, %v10203
  %v10205 = vsel %vm6672, %v6160, -inf
  %v10206 = vsel %vm6672, %v6161, -inf
  %v10207 = vmax.f32 %v10205, %v10206
  %v10208 = vsel %vm6672, %v6162, -inf
  %v10209 = vmax.f32 %v10207, %v10208
  %v10210 = vsel %vm6672, %v6163, -inf
  %v10211 = vmax.f32 %v10209, %v10210
  %v10212 = vsel %vm6672, %v6164, -inf
  %v10213 = vmax.f32 %v10211, %v10212
  %v10214 = vsel %vm6672, %v6165, -inf
  %v10215 = vmax.f32 %v10213, %v10214
  %v10216 = vsel %vm6672, %v6166, -inf
  %v10217 = vmax.f32 %v10215, %v10216
  %v10218 = vsel %vm6672, %v6167, -inf
  %v10219 = vmax.f32 %v10217, %v10218
  %v10220 = vrot.slane %v10219, 4
  %v10221 = vmax.f32 %v10219, %v10220
  %v10222 = vrot.slane %v10221, 2
  %v10223 = vmax.f32 %v10221, %v10222
  %v10224 = vrot.slane %v10223, 1
  %v10225 = vmax.f32 %v10223, %v10224
  %v10226 = vsel %vm6672, %v6168, -inf
  %v10227 = vsel %vm6672, %v6169, -inf
  %v10228 = vmax.f32 %v10226, %v10227
  %v10229 = vsel %vm6672, %v6170, -inf
  %v10230 = vmax.f32 %v10228, %v10229
  %v10231 = vsel %vm6672, %v6171, -inf
  %v10232 = vmax.f32 %v10230, %v10231
  %v10233 = vsel %vm6672, %v6172, -inf
  %v10234 = vmax.f32 %v10232, %v10233
  %v10235 = vsel %vm6672, %v6173, -inf
  %v10236 = vmax.f32 %v10234, %v10235
  %v10237 = vsel %vm6672, %v6174, -inf
  %v10238 = vmax.f32 %v10236, %v10237
  %v10239 = vsel %vm6672, %v6175, -inf
  %v10240 = vmax.f32 %v10238, %v10239
  %v10241 = vrot.slane %v10240, 4
  %v10242 = vmax.f32 %v10240, %v10241
  %v10243 = vrot.slane %v10242, 2
  %v10244 = vmax.f32 %v10242, %v10243
  %v10245 = vrot.slane %v10244, 1
  %v10246 = vmax.f32 %v10244, %v10245
  %v10247 = vsel %vm6672, %v6176, -inf
  %v10248 = vsel %vm6672, %v6177, -inf
  %v10249 = vmax.f32 %v10247, %v10248
  %v10250 = vsel %vm6672, %v6178, -inf
  %v10251 = vmax.f32 %v10249, %v10250
  %v10252 = vsel %vm6672, %v6179, -inf
  %v10253 = vmax.f32 %v10251, %v10252
  %v10254 = vsel %vm6672, %v6180, -inf
  %v10255 = vmax.f32 %v10253, %v10254
  %v10256 = vsel %vm6672, %v6181, -inf
  %v10257 = vmax.f32 %v10255, %v10256
  %v10258 = vsel %vm6672, %v6182, -inf
  %v10259 = vmax.f32 %v10257, %v10258
  %v10260 = vsel %vm6672, %v6183, -inf
  %v10261 = vmax.f32 %v10259, %v10260
  %v10262 = vrot.slane %v10261, 4
  %v10263 = vmax.f32 %v10261, %v10262
  %v10264 = vrot.slane %v10263, 2
  %v10265 = vmax.f32 %v10263, %v10264
  %v10266 = vrot.slane %v10265, 1
  %v10267 = vmax.f32 %v10265, %v10266
  %v10268 = vsel %vm6672, %v6184, -inf
  %v10269 = vsel %vm6672, %v6185, -inf
  %v10270 = vmax.f32 %v10268, %v10269
  %v10271 = vsel %vm6672, %v6186, -inf
  %v10272 = vmax.f32 %v10270, %v10271
  %v10273 = vsel %vm6672, %v6187, -inf
  %v10274 = vmax.f32 %v10272, %v10273
  %v10275 = vsel %vm6672, %v6188, -inf
  %v10276 = vmax.f32 %v10274, %v10275
  %v10277 = vsel %vm6672, %v6189, -inf
  %v10278 = vmax.f32 %v10276, %v10277
  %v10279 = vsel %vm6672, %v6190, -inf
  %v10280 = vmax.f32 %v10278, %v10279
  %v10281 = vsel %vm6672, %v6191, -inf
  %v10282 = vmax.f32 %v10280, %v10281
  %v10283 = vrot.slane %v10282, 4
  %v10284 = vmax.f32 %v10282, %v10283
  %v10285 = vrot.slane %v10284, 2
  %v10286 = vmax.f32 %v10284, %v10285
  %v10287 = vrot.slane %v10286, 1
  %v10288 = vmax.f32 %v10286, %v10287
  %v10289 = vsel %vm6672, %v6192, -inf
  %v10290 = vsel %vm6672, %v6193, -inf
  %v10291 = vmax.f32 %v10289, %v10290
  %v10292 = vsel %vm6672, %v6194, -inf
  %v10293 = vmax.f32 %v10291, %v10292
  %v10294 = vsel %vm6672, %v6195, -inf
  %v10295 = vmax.f32 %v10293, %v10294
  %v10296 = vsel %vm6672, %v6196, -inf
  %v10297 = vmax.f32 %v10295, %v10296
  %v10298 = vsel %vm6672, %v6197, -inf
  %v10299 = vmax.f32 %v10297, %v10298
  %v10300 = vsel %vm6672, %v6198, -inf
  %v10301 = vmax.f32 %v10299, %v10300
  %v10302 = vsel %vm6672, %v6199, -inf
  %v10303 = vmax.f32 %v10301, %v10302
  %v10304 = vrot.slane %v10303, 4
  %v10305 = vmax.f32 %v10303, %v10304
  %v10306 = vrot.slane %v10305, 2
  %v10307 = vmax.f32 %v10305, %v10306
  %v10308 = vrot.slane %v10307, 1
  %v10309 = vmax.f32 %v10307, %v10308
  %v10310 = vsel %vm6672, %v6200, -inf
  %v10311 = vsel %vm6672, %v6201, -inf
  %v10312 = vmax.f32 %v10310, %v10311
  %v10313 = vsel %vm6672, %v6202, -inf
  %v10314 = vmax.f32 %v10312, %v10313
  %v10315 = vsel %vm6672, %v6203, -inf
  %v10316 = vmax.f32 %v10314, %v10315
  %v10317 = vsel %vm6672, %v6204, -inf
  %v10318 = vmax.f32 %v10316, %v10317
  %v10319 = vsel %vm6672, %v6205, -inf
  %v10320 = vmax.f32 %v10318, %v10319
  %v10321 = vsel %vm6672, %v6206, -inf
  %v10322 = vmax.f32 %v10320, %v10321
  %v10323 = vsel %vm6672, %v6207, -inf
  %v10324 = vmax.f32 %v10322, %v10323
  %v10325 = vrot.slane %v10324, 4
  %v10326 = vmax.f32 %v10324, %v10325
  %v10327 = vrot.slane %v10326, 2
  %v10328 = vmax.f32 %v10326, %v10327
  %v10329 = vrot.slane %v10328, 1
  %v10330 = vmax.f32 %v10328, %v10329
  %v10331 = vsel %vm6672, %v6208, -inf
  %v10332 = vsel %vm6672, %v6209, -inf
  %v10333 = vmax.f32 %v10331, %v10332
  %v10334 = vsel %vm6672, %v6210, -inf
  %v10335 = vmax.f32 %v10333, %v10334
  %v10336 = vsel %vm6672, %v6211, -inf
  %v10337 = vmax.f32 %v10335, %v10336
  %v10338 = vsel %vm6672, %v6212, -inf
  %v10339 = vmax.f32 %v10337, %v10338
  %v10340 = vsel %vm6672, %v6213, -inf
  %v10341 = vmax.f32 %v10339, %v10340
  %v10342 = vsel %vm6672, %v6214, -inf
  %v10343 = vmax.f32 %v10341, %v10342
  %v10344 = vsel %vm6672, %v6215, -inf
  %v10345 = vmax.f32 %v10343, %v10344
  %v10346 = vrot.slane %v10345, 4
  %v10347 = vmax.f32 %v10345, %v10346
  %v10348 = vrot.slane %v10347, 2
  %v10349 = vmax.f32 %v10347, %v10348
  %v10350 = vrot.slane %v10349, 1
  %v10351 = vmax.f32 %v10349, %v10350
  %v10352 = vsel %vm6672, %v6216, -inf
  %v10353 = vsel %vm6672, %v6217, -inf
  %v10354 = vmax.f32 %v10352, %v10353
  %v10355 = vsel %vm6672, %v6218, -inf
  %v10356 = vmax.f32 %v10354, %v10355
  %v10357 = vsel %vm6672, %v6219, -inf
  %v10358 = vmax.f32 %v10356, %v10357
  %v10359 = vsel %vm6672, %v6220, -inf
  %v10360 = vmax.f32 %v10358, %v10359
  %v10361 = vsel %vm6672, %v6221, -inf
  %v10362 = vmax.f32 %v10360, %v10361
  %v10363 = vsel %vm6672, %v6222, -inf
  %v10364 = vmax.f32 %v10362, %v10363
  %v10365 = vsel %vm6672, %v6223, -inf
  %v10366 = vmax.f32 %v10364, %v10365
  %v10367 = vrot.slane %v10366, 4
  %v10368 = vmax.f32 %v10366, %v10367
  %v10369 = vrot.slane %v10368, 2
  %v10370 = vmax.f32 %v10368, %v10369
  %v10371 = vrot.slane %v10370, 1
  %v10372 = vmax.f32 %v10370, %v10371
  %v10373 = vsel %vm6672, %v6224, -inf
  %v10374 = vsel %vm6672, %v6225, -inf
  %v10375 = vmax.f32 %v10373, %v10374
  %v10376 = vsel %vm6672, %v6226, -inf
  %v10377 = vmax.f32 %v10375, %v10376
  %v10378 = vsel %vm6672, %v6227, -inf
  %v10379 = vmax.f32 %v10377, %v10378
  %v10380 = vsel %vm6672, %v6228, -inf
  %v10381 = vmax.f32 %v10379, %v10380
  %v10382 = vsel %vm6672, %v6229, -inf
  %v10383 = vmax.f32 %v10381, %v10382
  %v10384 = vsel %vm6672, %v6230, -inf
  %v10385 = vmax.f32 %v10383, %v10384
  %v10386 = vsel %vm6672, %v6231, -inf
  %v10387 = vmax.f32 %v10385, %v10386
  %v10388 = vrot.slane %v10387, 4
  %v10389 = vmax.f32 %v10387, %v10388
  %v10390 = vrot.slane %v10389, 2
  %v10391 = vmax.f32 %v10389, %v10390
  %v10392 = vrot.slane %v10391, 1
  %v10393 = vmax.f32 %v10391, %v10392
  %v10394 = vsel %vm6672, %v6232, -inf
  %v10395 = vsel %vm6672, %v6233, -inf
  %v10396 = vmax.f32 %v10394, %v10395
  %v10397 = vsel %vm6672, %v6234, -inf
  %v10398 = vmax.f32 %v10396, %v10397
  %v10399 = vsel %vm6672, %v6235, -inf
  %v10400 = vmax.f32 %v10398, %v10399
  %v10401 = vsel %vm6672, %v6236, -inf
  %v10402 = vmax.f32 %v10400, %v10401
  %v10403 = vsel %vm6672, %v6237, -inf
  %v10404 = vmax.f32 %v10402, %v10403
  %v10405 = vsel %vm6672, %v6238, -inf
  %v10406 = vmax.f32 %v10404, %v10405
  %v10407 = vsel %vm6672, %v6239, -inf
  %v10408 = vmax.f32 %v10406, %v10407
  %v10409 = vrot.slane %v10408, 4
  %v10410 = vmax.f32 %v10408, %v10409
  %v10411 = vrot.slane %v10410, 2
  %v10412 = vmax.f32 %v10410, %v10411
  %v10413 = vrot.slane %v10412, 1
  %v10414 = vmax.f32 %v10412, %v10413
  %v10415 = vsel %vm6672, %v6240, -inf
  %v10416 = vsel %vm6672, %v6241, -inf
  %v10417 = vmax.f32 %v10415, %v10416
  %v10418 = vsel %vm6672, %v6242, -inf
  %v10419 = vmax.f32 %v10417, %v10418
  %v10420 = vsel %vm6672, %v6243, -inf
  %v10421 = vmax.f32 %v10419, %v10420
  %v10422 = vsel %vm6672, %v6244, -inf
  %v10423 = vmax.f32 %v10421, %v10422
  %v10424 = vsel %vm6672, %v6245, -inf
  %v10425 = vmax.f32 %v10423, %v10424
  %v10426 = vsel %vm6672, %v6246, -inf
  %v10427 = vmax.f32 %v10425, %v10426
  %v10428 = vsel %vm6672, %v6247, -inf
  %v10429 = vmax.f32 %v10427, %v10428
  %v10430 = vrot.slane %v10429, 4
  %v10431 = vmax.f32 %v10429, %v10430
  %v10432 = vrot.slane %v10431, 2
  %v10433 = vmax.f32 %v10431, %v10432
  %v10434 = vrot.slane %v10433, 1
  %v10435 = vmax.f32 %v10433, %v10434
  %v10436 = vsel %vm6672, %v6248, -inf
  %v10437 = vsel %vm6672, %v6249, -inf
  %v10438 = vmax.f32 %v10436, %v10437
  %v10439 = vsel %vm6672, %v6250, -inf
  %v10440 = vmax.f32 %v10438, %v10439
  %v10441 = vsel %vm6672, %v6251, -inf
  %v10442 = vmax.f32 %v10440, %v10441
  %v10443 = vsel %vm6672, %v6252, -inf
  %v10444 = vmax.f32 %v10442, %v10443
  %v10445 = vsel %vm6672, %v6253, -inf
  %v10446 = vmax.f32 %v10444, %v10445
  %v10447 = vsel %vm6672, %v6254, -inf
  %v10448 = vmax.f32 %v10446, %v10447
  %v10449 = vsel %vm6672, %v6255, -inf
  %v10450 = vmax.f32 %v10448, %v10449
  %v10451 = vrot.slane %v10450, 4
  %v10452 = vmax.f32 %v10450, %v10451
  %v10453 = vrot.slane %v10452, 2
  %v10454 = vmax.f32 %v10452, %v10453
  %v10455 = vrot.slane %v10454, 1
  %v10456 = vmax.f32 %v10454, %v10455
  %v10457 = vsel %vm6672, %v6256, -inf
  %v10458 = vsel %vm6672, %v6257, -inf
  %v10459 = vmax.f32 %v10457, %v10458
  %v10460 = vsel %vm6672, %v6258, -inf
  %v10461 = vmax.f32 %v10459, %v10460
  %v10462 = vsel %vm6672, %v6259, -inf
  %v10463 = vmax.f32 %v10461, %v10462
  %v10464 = vsel %vm6672, %v6260, -inf
  %v10465 = vmax.f32 %v10463, %v10464
  %v10466 = vsel %vm6672, %v6261, -inf
  %v10467 = vmax.f32 %v10465, %v10466
  %v10468 = vsel %vm6672, %v6262, -inf
  %v10469 = vmax.f32 %v10467, %v10468
  %v10470 = vsel %vm6672, %v6263, -inf
  %v10471 = vmax.f32 %v10469, %v10470
  %v10472 = vrot.slane %v10471, 4
  %v10473 = vmax.f32 %v10471, %v10472
  %v10474 = vrot.slane %v10473, 2
  %v10475 = vmax.f32 %v10473, %v10474
  %v10476 = vrot.slane %v10475, 1
  %v10477 = vmax.f32 %v10475, %v10476
  %v10478 = vsel %vm6672, %v6264, -inf
  %v10479 = vsel %vm6672, %v6265, -inf
  %v10480 = vmax.f32 %v10478, %v10479
  %v10481 = vsel %vm6672, %v6266, -inf
  %v10482 = vmax.f32 %v10480, %v10481
  %v10483 = vsel %vm6672, %v6267, -inf
  %v10484 = vmax.f32 %v10482, %v10483
  %v10485 = vsel %vm6672, %v6268, -inf
  %v10486 = vmax.f32 %v10484, %v10485
  %v10487 = vsel %vm6672, %v6269, -inf
  %v10488 = vmax.f32 %v10486, %v10487
  %v10489 = vsel %vm6672, %v6270, -inf
  %v10490 = vmax.f32 %v10488, %v10489
  %v10491 = vsel %vm6672, %v6271, -inf
  %v10492 = vmax.f32 %v10490, %v10491
  %v10493 = vrot.slane %v10492, 4
  %v10494 = vmax.f32 %v10492, %v10493
  %v10495 = vrot.slane %v10494, 2
  %v10496 = vmax.f32 %v10494, %v10495
  %v10497 = vrot.slane %v10496, 1
  %v10498 = vmax.f32 %v10496, %v10497
  %v10499 = vsel %vm6672, %v6272, -inf
  %v10500 = vsel %vm6672, %v6273, -inf
  %v10501 = vmax.f32 %v10499, %v10500
  %v10502 = vsel %vm6672, %v6274, -inf
  %v10503 = vmax.f32 %v10501, %v10502
  %v10504 = vsel %vm6672, %v6275, -inf
  %v10505 = vmax.f32 %v10503, %v10504
  %v10506 = vsel %vm6672, %v6276, -inf
  %v10507 = vmax.f32 %v10505, %v10506
  %v10508 = vsel %vm6672, %v6277, -inf
  %v10509 = vmax.f32 %v10507, %v10508
  %v10510 = vsel %vm6672, %v6278, -inf
  %v10511 = vmax.f32 %v10509, %v10510
  %v10512 = vsel %vm6672, %v6279, -inf
  %v10513 = vmax.f32 %v10511, %v10512
  %v10514 = vrot.slane %v10513, 4
  %v10515 = vmax.f32 %v10513, %v10514
  %v10516 = vrot.slane %v10515, 2
  %v10517 = vmax.f32 %v10515, %v10516
  %v10518 = vrot.slane %v10517, 1
  %v10519 = vmax.f32 %v10517, %v10518
  %v10520 = vsel %vm6672, %v6280, -inf
  %v10521 = vsel %vm6672, %v6281, -inf
  %v10522 = vmax.f32 %v10520, %v10521
  %v10523 = vsel %vm6672, %v6282, -inf
  %v10524 = vmax.f32 %v10522, %v10523
  %v10525 = vsel %vm6672, %v6283, -inf
  %v10526 = vmax.f32 %v10524, %v10525
  %v10527 = vsel %vm6672, %v6284, -inf
  %v10528 = vmax.f32 %v10526, %v10527
  %v10529 = vsel %vm6672, %v6285, -inf
  %v10530 = vmax.f32 %v10528, %v10529
  %v10531 = vsel %vm6672, %v6286, -inf
  %v10532 = vmax.f32 %v10530, %v10531
  %v10533 = vsel %vm6672, %v6287, -inf
  %v10534 = vmax.f32 %v10532, %v10533
  %v10535 = vrot.slane %v10534, 4
  %v10536 = vmax.f32 %v10534, %v10535
  %v10537 = vrot.slane %v10536, 2
  %v10538 = vmax.f32 %v10536, %v10537
  %v10539 = vrot.slane %v10538, 1
  %v10540 = vmax.f32 %v10538, %v10539
  %v10541 = vsel %vm6672, %v6288, -inf
  %v10542 = vsel %vm6672, %v6289, -inf
  %v10543 = vmax.f32 %v10541, %v10542
  %v10544 = vsel %vm6672, %v6290, -inf
  %v10545 = vmax.f32 %v10543, %v10544
  %v10546 = vsel %vm6672, %v6291, -inf
  %v10547 = vmax.f32 %v10545, %v10546
  %v10548 = vsel %vm6672, %v6292, -inf
  %v10549 = vmax.f32 %v10547, %v10548
  %v10550 = vsel %vm6672, %v6293, -inf
  %v10551 = vmax.f32 %v10549, %v10550
  %v10552 = vsel %vm6672, %v6294, -inf
  %v10553 = vmax.f32 %v10551, %v10552
  %v10554 = vsel %vm6672, %v6295, -inf
  %v10555 = vmax.f32 %v10553, %v10554
  %v10556 = vrot.slane %v10555, 4
  %v10557 = vmax.f32 %v10555, %v10556
  %v10558 = vrot.slane %v10557, 2
  %v10559 = vmax.f32 %v10557, %v10558
  %v10560 = vrot.slane %v10559, 1
  %v10561 = vmax.f32 %v10559, %v10560
  %v10562 = vsel %vm6672, %v6296, -inf
  %v10563 = vsel %vm6672, %v6297, -inf
  %v10564 = vmax.f32 %v10562, %v10563
  %v10565 = vsel %vm6672, %v6298, -inf
  %v10566 = vmax.f32 %v10564, %v10565
  %v10567 = vsel %vm6672, %v6299, -inf
  %v10568 = vmax.f32 %v10566, %v10567
  %v10569 = vsel %vm6672, %v6300, -inf
  %v10570 = vmax.f32 %v10568, %v10569
  %v10571 = vsel %vm6672, %v6301, -inf
  %v10572 = vmax.f32 %v10570, %v10571
  %v10573 = vsel %vm6672, %v6302, -inf
  %v10574 = vmax.f32 %v10572, %v10573
  %v10575 = vsel %vm6672, %v6303, -inf
  %v10576 = vmax.f32 %v10574, %v10575
  %v10577 = vrot.slane %v10576, 4
  %v10578 = vmax.f32 %v10576, %v10577
  %v10579 = vrot.slane %v10578, 2
  %v10580 = vmax.f32 %v10578, %v10579
  %v10581 = vrot.slane %v10580, 1
  %v10582 = vmax.f32 %v10580, %v10581
  %v10583 = vsel %vm6672, %v6304, -inf
  %v10584 = vsel %vm6672, %v6305, -inf
  %v10585 = vmax.f32 %v10583, %v10584
  %v10586 = vsel %vm6672, %v6306, -inf
  %v10587 = vmax.f32 %v10585, %v10586
  %v10588 = vsel %vm6672, %v6307, -inf
  %v10589 = vmax.f32 %v10587, %v10588
  %v10590 = vsel %vm6672, %v6308, -inf
  %v10591 = vmax.f32 %v10589, %v10590
  %v10592 = vsel %vm6672, %v6309, -inf
  %v10593 = vmax.f32 %v10591, %v10592
  %v10594 = vsel %vm6672, %v6310, -inf
  %v10595 = vmax.f32 %v10593, %v10594
  %v10596 = vsel %vm6672, %v6311, -inf
  %v10597 = vmax.f32 %v10595, %v10596
  %v10598 = vrot.slane %v10597, 4
  %v10599 = vmax.f32 %v10597, %v10598
  %v10600 = vrot.slane %v10599, 2
  %v10601 = vmax.f32 %v10599, %v10600
  %v10602 = vrot.slane %v10601, 1
  %v10603 = vmax.f32 %v10601, %v10602
  %v10604 = vsel %vm6672, %v6312, -inf
  %v10605 = vsel %vm6672, %v6313, -inf
  %v10606 = vmax.f32 %v10604, %v10605
  %v10607 = vsel %vm6672, %v6314, -inf
  %v10608 = vmax.f32 %v10606, %v10607
  %v10609 = vsel %vm6672, %v6315, -inf
  %v10610 = vmax.f32 %v10608, %v10609
  %v10611 = vsel %vm6672, %v6316, -inf
  %v10612 = vmax.f32 %v10610, %v10611
  %v10613 = vsel %vm6672, %v6317, -inf
  %v10614 = vmax.f32 %v10612, %v10613
  %v10615 = vsel %vm6672, %v6318, -inf
  %v10616 = vmax.f32 %v10614, %v10615
  %v10617 = vsel %vm6672, %v6319, -inf
  %v10618 = vmax.f32 %v10616, %v10617
  %v10619 = vrot.slane %v10618, 4
  %v10620 = vmax.f32 %v10618, %v10619
  %v10621 = vrot.slane %v10620, 2
  %v10622 = vmax.f32 %v10620, %v10621
  %v10623 = vrot.slane %v10622, 1
  %v10624 = vmax.f32 %v10622, %v10623
  %v10625 = vsel %vm6672, %v6320, -inf
  %v10626 = vsel %vm6672, %v6321, -inf
  %v10627 = vmax.f32 %v10625, %v10626
  %v10628 = vsel %vm6672, %v6322, -inf
  %v10629 = vmax.f32 %v10627, %v10628
  %v10630 = vsel %vm6672, %v6323, -inf
  %v10631 = vmax.f32 %v10629, %v10630
  %v10632 = vsel %vm6672, %v6324, -inf
  %v10633 = vmax.f32 %v10631, %v10632
  %v10634 = vsel %vm6672, %v6325, -inf
  %v10635 = vmax.f32 %v10633, %v10634
  %v10636 = vsel %vm6672, %v6326, -inf
  %v10637 = vmax.f32 %v10635, %v10636
  %v10638 = vsel %vm6672, %v6327, -inf
  %v10639 = vmax.f32 %v10637, %v10638
  %v10640 = vrot.slane %v10639, 4
  %v10641 = vmax.f32 %v10639, %v10640
  %v10642 = vrot.slane %v10641, 2
  %v10643 = vmax.f32 %v10641, %v10642
  %v10644 = vrot.slane %v10643, 1
  %v10645 = vmax.f32 %v10643, %v10644
  %v10646 = vsel %vm6672, %v6328, -inf
  %v10647 = vsel %vm6672, %v6329, -inf
  %v10648 = vmax.f32 %v10646, %v10647
  %v10649 = vsel %vm6672, %v6330, -inf
  %v10650 = vmax.f32 %v10648, %v10649
  %v10651 = vsel %vm6672, %v6331, -inf
  %v10652 = vmax.f32 %v10650, %v10651
  %v10653 = vsel %vm6672, %v6332, -inf
  %v10654 = vmax.f32 %v10652, %v10653
  %v10655 = vsel %vm6672, %v6333, -inf
  %v10656 = vmax.f32 %v10654, %v10655
  %v10657 = vsel %vm6672, %v6334, -inf
  %v10658 = vmax.f32 %v10656, %v10657
  %v10659 = vsel %vm6672, %v6335, -inf
  %v10660 = vmax.f32 %v10658, %v10659
  %v10661 = vrot.slane %v10660, 4
  %v10662 = vmax.f32 %v10660, %v10661
  %v10663 = vrot.slane %v10662, 2
  %v10664 = vmax.f32 %v10662, %v10663
  %v10665 = vrot.slane %v10664, 1
  %v10666 = vmax.f32 %v10664, %v10665
  %v10667 = vsel %vm6672, %v6336, -inf
  %v10668 = vsel %vm6672, %v6337, -inf
  %v10669 = vmax.f32 %v10667, %v10668
  %v10670 = vsel %vm6672, %v6338, -inf
  %v10671 = vmax.f32 %v10669, %v10670
  %v10672 = vsel %vm6672, %v6339, -inf
  %v10673 = vmax.f32 %v10671, %v10672
  %v10674 = vsel %vm6672, %v6340, -inf
  %v10675 = vmax.f32 %v10673, %v10674
  %v10676 = vsel %vm6672, %v6341, -inf
  %v10677 = vmax.f32 %v10675, %v10676
  %v10678 = vsel %vm6672, %v6342, -inf
  %v10679 = vmax.f32 %v10677, %v10678
  %v10680 = vsel %vm6672, %v6343, -inf
  %v10681 = vmax.f32 %v10679, %v10680
  %v10682 = vrot.slane %v10681, 4
  %v10683 = vmax.f32 %v10681, %v10682
  %v10684 = vrot.slane %v10683, 2
  %v10685 = vmax.f32 %v10683, %v10684
  %v10686 = vrot.slane %v10685, 1
  %v10687 = vmax.f32 %v10685, %v10686
  %v10688 = vsel %vm6672, %v6344, -inf
  %v10689 = vsel %vm6672, %v6345, -inf
  %v10690 = vmax.f32 %v10688, %v10689
  %v10691 = vsel %vm6672, %v6346, -inf
  %v10692 = vmax.f32 %v10690, %v10691
  %v10693 = vsel %vm6672, %v6347, -inf
  %v10694 = vmax.f32 %v10692, %v10693
  %v10695 = vsel %vm6672, %v6348, -inf
  %v10696 = vmax.f32 %v10694, %v10695
  %v10697 = vsel %vm6672, %v6349, -inf
  %v10698 = vmax.f32 %v10696, %v10697
  %v10699 = vsel %vm6672, %v6350, -inf
  %v10700 = vmax.f32 %v10698, %v10699
  %v10701 = vsel %vm6672, %v6351, -inf
  %v10702 = vmax.f32 %v10700, %v10701
  %v10703 = vrot.slane %v10702, 4
  %v10704 = vmax.f32 %v10702, %v10703
  %v10705 = vrot.slane %v10704, 2
  %v10706 = vmax.f32 %v10704, %v10705
  %v10707 = vrot.slane %v10706, 1
  %v10708 = vmax.f32 %v10706, %v10707
  %v10709 = vsel %vm6672, %v6352, -inf
  %v10710 = vsel %vm6672, %v6353, -inf
  %v10711 = vmax.f32 %v10709, %v10710
  %v10712 = vsel %vm6672, %v6354, -inf
  %v10713 = vmax.f32 %v10711, %v10712
  %v10714 = vsel %vm6672, %v6355, -inf
  %v10715 = vmax.f32 %v10713, %v10714
  %v10716 = vsel %vm6672, %v6356, -inf
  %v10717 = vmax.f32 %v10715, %v10716
  %v10718 = vsel %vm6672, %v6357, -inf
  %v10719 = vmax.f32 %v10717, %v10718
  %v10720 = vsel %vm6672, %v6358, -inf
  %v10721 = vmax.f32 %v10719, %v10720
  %v10722 = vsel %vm6672, %v6359, -inf
  %v10723 = vmax.f32 %v10721, %v10722
  %v10724 = vrot.slane %v10723, 4
  %v10725 = vmax.f32 %v10723, %v10724
  %v10726 = vrot.slane %v10725, 2
  %v10727 = vmax.f32 %v10725, %v10726
  %v10728 = vrot.slane %v10727, 1
  %v10729 = vmax.f32 %v10727, %v10728
  %v10730 = vsel %vm6672, %v6360, -inf
  %v10731 = vsel %vm6672, %v6361, -inf
  %v10732 = vmax.f32 %v10730, %v10731
  %v10733 = vsel %vm6672, %v6362, -inf
  %v10734 = vmax.f32 %v10732, %v10733
  %v10735 = vsel %vm6672, %v6363, -inf
  %v10736 = vmax.f32 %v10734, %v10735
  %v10737 = vsel %vm6672, %v6364, -inf
  %v10738 = vmax.f32 %v10736, %v10737
  %v10739 = vsel %vm6672, %v6365, -inf
  %v10740 = vmax.f32 %v10738, %v10739
  %v10741 = vsel %vm6672, %v6366, -inf
  %v10742 = vmax.f32 %v10740, %v10741
  %v10743 = vsel %vm6672, %v6367, -inf
  %v10744 = vmax.f32 %v10742, %v10743
  %v10745 = vrot.slane %v10744, 4
  %v10746 = vmax.f32 %v10744, %v10745
  %v10747 = vrot.slane %v10746, 2
  %v10748 = vmax.f32 %v10746, %v10747
  %v10749 = vrot.slane %v10748, 1
  %v10750 = vmax.f32 %v10748, %v10749
  %v10751 = vsel %vm6672, %v6368, -inf
  %v10752 = vsel %vm6672, %v6369, -inf
  %v10753 = vmax.f32 %v10751, %v10752
  %v10754 = vsel %vm6672, %v6370, -inf
  %v10755 = vmax.f32 %v10753, %v10754
  %v10756 = vsel %vm6672, %v6371, -inf
  %v10757 = vmax.f32 %v10755, %v10756
  %v10758 = vsel %vm6672, %v6372, -inf
  %v10759 = vmax.f32 %v10757, %v10758
  %v10760 = vsel %vm6672, %v6373, -inf
  %v10761 = vmax.f32 %v10759, %v10760
  %v10762 = vsel %vm6672, %v6374, -inf
  %v10763 = vmax.f32 %v10761, %v10762
  %v10764 = vsel %vm6672, %v6375, -inf
  %v10765 = vmax.f32 %v10763, %v10764
  %v10766 = vrot.slane %v10765, 4
  %v10767 = vmax.f32 %v10765, %v10766
  %v10768 = vrot.slane %v10767, 2
  %v10769 = vmax.f32 %v10767, %v10768
  %v10770 = vrot.slane %v10769, 1
  %v10771 = vmax.f32 %v10769, %v10770
  %v10772 = vsel %vm6672, %v6376, -inf
  %v10773 = vsel %vm6672, %v6377, -inf
  %v10774 = vmax.f32 %v10772, %v10773
  %v10775 = vsel %vm6672, %v6378, -inf
  %v10776 = vmax.f32 %v10774, %v10775
  %v10777 = vsel %vm6672, %v6379, -inf
  %v10778 = vmax.f32 %v10776, %v10777
  %v10779 = vsel %vm6672, %v6380, -inf
  %v10780 = vmax.f32 %v10778, %v10779
  %v10781 = vsel %vm6672, %v6381, -inf
  %v10782 = vmax.f32 %v10780, %v10781
  %v10783 = vsel %vm6672, %v6382, -inf
  %v10784 = vmax.f32 %v10782, %v10783
  %v10785 = vsel %vm6672, %v6383, -inf
  %v10786 = vmax.f32 %v10784, %v10785
  %v10787 = vrot.slane %v10786, 4
  %v10788 = vmax.f32 %v10786, %v10787
  %v10789 = vrot.slane %v10788, 2
  %v10790 = vmax.f32 %v10788, %v10789
  %v10791 = vrot.slane %v10790, 1
  %v10792 = vmax.f32 %v10790, %v10791
  %v10793 = vsel %vm6672, %v6384, -inf
  %v10794 = vsel %vm6672, %v6385, -inf
  %v10795 = vmax.f32 %v10793, %v10794
  %v10796 = vsel %vm6672, %v6386, -inf
  %v10797 = vmax.f32 %v10795, %v10796
  %v10798 = vsel %vm6672, %v6387, -inf
  %v10799 = vmax.f32 %v10797, %v10798
  %v10800 = vsel %vm6672, %v6388, -inf
  %v10801 = vmax.f32 %v10799, %v10800
  %v10802 = vsel %vm6672, %v6389, -inf
  %v10803 = vmax.f32 %v10801, %v10802
  %v10804 = vsel %vm6672, %v6390, -inf
  %v10805 = vmax.f32 %v10803, %v10804
  %v10806 = vsel %vm6672, %v6391, -inf
  %v10807 = vmax.f32 %v10805, %v10806
  %v10808 = vrot.slane %v10807, 4
  %v10809 = vmax.f32 %v10807, %v10808
  %v10810 = vrot.slane %v10809, 2
  %v10811 = vmax.f32 %v10809, %v10810
  %v10812 = vrot.slane %v10811, 1
  %v10813 = vmax.f32 %v10811, %v10812
  %v10814 = vsel %vm6672, %v6392, -inf
  %v10815 = vsel %vm6672, %v6393, -inf
  %v10816 = vmax.f32 %v10814, %v10815
  %v10817 = vsel %vm6672, %v6394, -inf
  %v10818 = vmax.f32 %v10816, %v10817
  %v10819 = vsel %vm6672, %v6395, -inf
  %v10820 = vmax.f32 %v10818, %v10819
  %v10821 = vsel %vm6672, %v6396, -inf
  %v10822 = vmax.f32 %v10820, %v10821
  %v10823 = vsel %vm6672, %v6397, -inf
  %v10824 = vmax.f32 %v10822, %v10823
  %v10825 = vsel %vm6672, %v6398, -inf
  %v10826 = vmax.f32 %v10824, %v10825
  %v10827 = vsel %vm6672, %v6399, -inf
  %v10828 = vmax.f32 %v10826, %v10827
  %v10829 = vrot.slane %v10828, 4
  %v10830 = vmax.f32 %v10828, %v10829
  %v10831 = vrot.slane %v10830, 2
  %v10832 = vmax.f32 %v10830, %v10831
  %v10833 = vrot.slane %v10832, 1
  %v10834 = vmax.f32 %v10832, %v10833
  %v10835 = vsel %vm6672, %v6400, -inf
  %v10836 = vsel %vm6672, %v6401, -inf
  %v10837 = vmax.f32 %v10835, %v10836
  %v10838 = vsel %vm6672, %v6402, -inf
  %v10839 = vmax.f32 %v10837, %v10838
  %v10840 = vsel %vm6672, %v6403, -inf
  %v10841 = vmax.f32 %v10839, %v10840
  %v10842 = vsel %vm6672, %v6404, -inf
  %v10843 = vmax.f32 %v10841, %v10842
  %v10844 = vsel %vm6672, %v6405, -inf
  %v10845 = vmax.f32 %v10843, %v10844
  %v10846 = vsel %vm6672, %v6406, -inf
  %v10847 = vmax.f32 %v10845, %v10846
  %v10848 = vsel %vm6672, %v6407, -inf
  %v10849 = vmax.f32 %v10847, %v10848
  %v10850 = vrot.slane %v10849, 4
  %v10851 = vmax.f32 %v10849, %v10850
  %v10852 = vrot.slane %v10851, 2
  %v10853 = vmax.f32 %v10851, %v10852
  %v10854 = vrot.slane %v10853, 1
  %v10855 = vmax.f32 %v10853, %v10854
  %v10856 = vsel %vm6672, %v6408, -inf
  %v10857 = vsel %vm6672, %v6409, -inf
  %v10858 = vmax.f32 %v10856, %v10857
  %v10859 = vsel %vm6672, %v6410, -inf
  %v10860 = vmax.f32 %v10858, %v10859
  %v10861 = vsel %vm6672, %v6411, -inf
  %v10862 = vmax.f32 %v10860, %v10861
  %v10863 = vsel %vm6672, %v6412, -inf
  %v10864 = vmax.f32 %v10862, %v10863
  %v10865 = vsel %vm6672, %v6413, -inf
  %v10866 = vmax.f32 %v10864, %v10865
  %v10867 = vsel %vm6672, %v6414, -inf
  %v10868 = vmax.f32 %v10866, %v10867
  %v10869 = vsel %vm6672, %v6415, -inf
  %v10870 = vmax.f32 %v10868, %v10869
  %v10871 = vrot.slane %v10870, 4
  %v10872 = vmax.f32 %v10870, %v10871
  %v10873 = vrot.slane %v10872, 2
  %v10874 = vmax.f32 %v10872, %v10873
  %v10875 = vrot.slane %v10874, 1
  %v10876 = vmax.f32 %v10874, %v10875
  %v10877 = vsel %vm6672, %v6416, -inf
  %v10878 = vsel %vm6672, %v6417, -inf
  %v10879 = vmax.f32 %v10877, %v10878
  %v10880 = vsel %vm6672, %v6418, -inf
  %v10881 = vmax.f32 %v10879, %v10880
  %v10882 = vsel %vm6672, %v6419, -inf
  %v10883 = vmax.f32 %v10881, %v10882
  %v10884 = vsel %vm6672, %v6420, -inf
  %v10885 = vmax.f32 %v10883, %v10884
  %v10886 = vsel %vm6672, %v6421, -inf
  %v10887 = vmax.f32 %v10885, %v10886
  %v10888 = vsel %vm6672, %v6422, -inf
  %v10889 = vmax.f32 %v10887, %v10888
  %v10890 = vsel %vm6672, %v6423, -inf
  %v10891 = vmax.f32 %v10889, %v10890
  %v10892 = vrot.slane %v10891, 4
  %v10893 = vmax.f32 %v10891, %v10892
  %v10894 = vrot.slane %v10893, 2
  %v10895 = vmax.f32 %v10893, %v10894
  %v10896 = vrot.slane %v10895, 1
  %v10897 = vmax.f32 %v10895, %v10896
  %v10898 = vsel %vm6672, %v6424, -inf
  %v10899 = vsel %vm6672, %v6425, -inf
  %v10900 = vmax.f32 %v10898, %v10899
  %v10901 = vsel %vm6672, %v6426, -inf
  %v10902 = vmax.f32 %v10900, %v10901
  %v10903 = vsel %vm6672, %v6427, -inf
  %v10904 = vmax.f32 %v10902, %v10903
  %v10905 = vsel %vm6672, %v6428, -inf
  %v10906 = vmax.f32 %v10904, %v10905
  %v10907 = vsel %vm6672, %v6429, -inf
  %v10908 = vmax.f32 %v10906, %v10907
  %v10909 = vsel %vm6672, %v6430, -inf
  %v10910 = vmax.f32 %v10908, %v10909
  %v10911 = vsel %vm6672, %v6431, -inf
  %v10912 = vmax.f32 %v10910, %v10911
  %v10913 = vrot.slane %v10912, 4
  %v10914 = vmax.f32 %v10912, %v10913
  %v10915 = vrot.slane %v10914, 2
  %v10916 = vmax.f32 %v10914, %v10915
  %v10917 = vrot.slane %v10916, 1
  %v10918 = vmax.f32 %v10916, %v10917
  %v10919 = vsel %vm6672, %v6432, -inf
  %v10920 = vsel %vm6672, %v6433, -inf
  %v10921 = vmax.f32 %v10919, %v10920
  %v10922 = vsel %vm6672, %v6434, -inf
  %v10923 = vmax.f32 %v10921, %v10922
  %v10924 = vsel %vm6672, %v6435, -inf
  %v10925 = vmax.f32 %v10923, %v10924
  %v10926 = vsel %vm6672, %v6436, -inf
  %v10927 = vmax.f32 %v10925, %v10926
  %v10928 = vsel %vm6672, %v6437, -inf
  %v10929 = vmax.f32 %v10927, %v10928
  %v10930 = vsel %vm6672, %v6438, -inf
  %v10931 = vmax.f32 %v10929, %v10930
  %v10932 = vsel %vm6672, %v6439, -inf
  %v10933 = vmax.f32 %v10931, %v10932
  %v10934 = vrot.slane %v10933, 4
  %v10935 = vmax.f32 %v10933, %v10934
  %v10936 = vrot.slane %v10935, 2
  %v10937 = vmax.f32 %v10935, %v10936
  %v10938 = vrot.slane %v10937, 1
  %v10939 = vmax.f32 %v10937, %v10938
  %v10940 = vsel %vm6672, %v6440, -inf
  %v10941 = vsel %vm6672, %v6441, -inf
  %v10942 = vmax.f32 %v10940, %v10941
  %v10943 = vsel %vm6672, %v6442, -inf
  %v10944 = vmax.f32 %v10942, %v10943
  %v10945 = vsel %vm6672, %v6443, -inf
  %v10946 = vmax.f32 %v10944, %v10945
  %v10947 = vsel %vm6672, %v6444, -inf
  %v10948 = vmax.f32 %v10946, %v10947
  %v10949 = vsel %vm6672, %v6445, -inf
  %v10950 = vmax.f32 %v10948, %v10949
  %v10951 = vsel %vm6672, %v6446, -inf
  %v10952 = vmax.f32 %v10950, %v10951
  %v10953 = vsel %vm6672, %v6447, -inf
  %v10954 = vmax.f32 %v10952, %v10953
  %v10955 = vrot.slane %v10954, 4
  %v10956 = vmax.f32 %v10954, %v10955
  %v10957 = vrot.slane %v10956, 2
  %v10958 = vmax.f32 %v10956, %v10957
  %v10959 = vrot.slane %v10958, 1
  %v10960 = vmax.f32 %v10958, %v10959
  %v10961 = vsel %vm6672, %v6448, -inf
  %v10962 = vsel %vm6672, %v6449, -inf
  %v10963 = vmax.f32 %v10961, %v10962
  %v10964 = vsel %vm6672, %v6450, -inf
  %v10965 = vmax.f32 %v10963, %v10964
  %v10966 = vsel %vm6672, %v6451, -inf
  %v10967 = vmax.f32 %v10965, %v10966
  %v10968 = vsel %vm6672, %v6452, -inf
  %v10969 = vmax.f32 %v10967, %v10968
  %v10970 = vsel %vm6672, %v6453, -inf
  %v10971 = vmax.f32 %v10969, %v10970
  %v10972 = vsel %vm6672, %v6454, -inf
  %v10973 = vmax.f32 %v10971, %v10972
  %v10974 = vsel %vm6672, %v6455, -inf
  %v10975 = vmax.f32 %v10973, %v10974
  %v10976 = vrot.slane %v10975, 4
  %v10977 = vmax.f32 %v10975, %v10976
  %v10978 = vrot.slane %v10977, 2
  %v10979 = vmax.f32 %v10977, %v10978
  %v10980 = vrot.slane %v10979, 1
  %v10981 = vmax.f32 %v10979, %v10980
  %v10982 = vsel %vm6672, %v6456, -inf
  %v10983 = vsel %vm6672, %v6457, -inf
  %v10984 = vmax.f32 %v10982, %v10983
  %v10985 = vsel %vm6672, %v6458, -inf
  %v10986 = vmax.f32 %v10984, %v10985
  %v10987 = vsel %vm6672, %v6459, -inf
  %v10988 = vmax.f32 %v10986, %v10987
  %v10989 = vsel %vm6672, %v6460, -inf
  %v10990 = vmax.f32 %v10988, %v10989
  %v10991 = vsel %vm6672, %v6461, -inf
  %v10992 = vmax.f32 %v10990, %v10991
  %v10993 = vsel %vm6672, %v6462, -inf
  %v10994 = vmax.f32 %v10992, %v10993
  %v10995 = vsel %vm6672, %v6463, -inf
  %v10996 = vmax.f32 %v10994, %v10995
  %v10997 = vrot.slane %v10996, 4
  %v10998 = vmax.f32 %v10996, %v10997
  %v10999 = vrot.slane %v10998, 2
  %v11000 = vmax.f32 %v10998, %v10999
  %v11001 = vrot.slane %v11000, 1
  %v11002 = vmax.f32 %v11000, %v11001
  %v11003 = vsel %vm6672, %v6464, -inf
  %v11004 = vsel %vm6672, %v6465, -inf
  %v11005 = vmax.f32 %v11003, %v11004
  %v11006 = vsel %vm6672, %v6466, -inf
  %v11007 = vmax.f32 %v11005, %v11006
  %v11008 = vsel %vm6672, %v6467, -inf
  %v11009 = vmax.f32 %v11007, %v11008
  %v11010 = vsel %vm6672, %v6468, -inf
  %v11011 = vmax.f32 %v11009, %v11010
  %v11012 = vsel %vm6672, %v6469, -inf
  %v11013 = vmax.f32 %v11011, %v11012
  %v11014 = vsel %vm6672, %v6470, -inf
  %v11015 = vmax.f32 %v11013, %v11014
  %v11016 = vsel %vm6672, %v6471, -inf
  %v11017 = vmax.f32 %v11015, %v11016
  %v11018 = vrot.slane %v11017, 4
  %v11019 = vmax.f32 %v11017, %v11018
  %v11020 = vrot.slane %v11019, 2
  %v11021 = vmax.f32 %v11019, %v11020
  %v11022 = vrot.slane %v11021, 1
  %v11023 = vmax.f32 %v11021, %v11022
  %v11024 = vsel %vm6672, %v6472, -inf
  %v11025 = vsel %vm6672, %v6473, -inf
  %v11026 = vmax.f32 %v11024, %v11025
  %v11027 = vsel %vm6672, %v6474, -inf
  %v11028 = vmax.f32 %v11026, %v11027
  %v11029 = vsel %vm6672, %v6475, -inf
  %v11030 = vmax.f32 %v11028, %v11029
  %v11031 = vsel %vm6672, %v6476, -inf
  %v11032 = vmax.f32 %v11030, %v11031
  %v11033 = vsel %vm6672, %v6477, -inf
  %v11034 = vmax.f32 %v11032, %v11033
  %v11035 = vsel %vm6672, %v6478, -inf
  %v11036 = vmax.f32 %v11034, %v11035
  %v11037 = vsel %vm6672, %v6479, -inf
  %v11038 = vmax.f32 %v11036, %v11037
  %v11039 = vrot.slane %v11038, 4
  %v11040 = vmax.f32 %v11038, %v11039
  %v11041 = vrot.slane %v11040, 2
  %v11042 = vmax.f32 %v11040, %v11041
  %v11043 = vrot.slane %v11042, 1
  %v11044 = vmax.f32 %v11042, %v11043
  %v11045 = vsel %vm6672, %v6480, -inf
  %v11046 = vsel %vm6672, %v6481, -inf
  %v11047 = vmax.f32 %v11045, %v11046
  %v11048 = vsel %vm6672, %v6482, -inf
  %v11049 = vmax.f32 %v11047, %v11048
  %v11050 = vsel %vm6672, %v6483, -inf
  %v11051 = vmax.f32 %v11049, %v11050
  %v11052 = vsel %vm6672, %v6484, -inf
  %v11053 = vmax.f32 %v11051, %v11052
  %v11054 = vsel %vm6672, %v6485, -inf
  %v11055 = vmax.f32 %v11053, %v11054
  %v11056 = vsel %vm6672, %v6486, -inf
  %v11057 = vmax.f32 %v11055, %v11056
  %v11058 = vsel %vm6672, %v6487, -inf
  %v11059 = vmax.f32 %v11057, %v11058
  %v11060 = vrot.slane %v11059, 4
  %v11061 = vmax.f32 %v11059, %v11060
  %v11062 = vrot.slane %v11061, 2
  %v11063 = vmax.f32 %v11061, %v11062
  %v11064 = vrot.slane %v11063, 1
  %v11065 = vmax.f32 %v11063, %v11064
  %v11066 = vsel %vm6672, %v6488, -inf
  %v11067 = vsel %vm6672, %v6489, -inf
  %v11068 = vmax.f32 %v11066, %v11067
  %v11069 = vsel %vm6672, %v6490, -inf
  %v11070 = vmax.f32 %v11068, %v11069
  %v11071 = vsel %vm6672, %v6491, -inf
  %v11072 = vmax.f32 %v11070, %v11071
  %v11073 = vsel %vm6672, %v6492, -inf
  %v11074 = vmax.f32 %v11072, %v11073
  %v11075 = vsel %vm6672, %v6493, -inf
  %v11076 = vmax.f32 %v11074, %v11075
  %v11077 = vsel %vm6672, %v6494, -inf
  %v11078 = vmax.f32 %v11076, %v11077
  %v11079 = vsel %vm6672, %v6495, -inf
  %v11080 = vmax.f32 %v11078, %v11079
  %v11081 = vrot.slane %v11080, 4
  %v11082 = vmax.f32 %v11080, %v11081
  %v11083 = vrot.slane %v11082, 2
  %v11084 = vmax.f32 %v11082, %v11083
  %v11085 = vrot.slane %v11084, 1
  %v11086 = vmax.f32 %v11084, %v11085
  %v11087 = vsel %vm6672, %v6496, -inf
  %v11088 = vsel %vm6672, %v6497, -inf
  %v11089 = vmax.f32 %v11087, %v11088
  %v11090 = vsel %vm6672, %v6498, -inf
  %v11091 = vmax.f32 %v11089, %v11090
  %v11092 = vsel %vm6672, %v6499, -inf
  %v11093 = vmax.f32 %v11091, %v11092
  %v11094 = vsel %vm6672, %v6500, -inf
  %v11095 = vmax.f32 %v11093, %v11094
  %v11096 = vsel %vm6672, %v6501, -inf
  %v11097 = vmax.f32 %v11095, %v11096
  %v11098 = vsel %vm6672, %v6502, -inf
  %v11099 = vmax.f32 %v11097, %v11098
  %v11100 = vsel %vm6672, %v6503, -inf
  %v11101 = vmax.f32 %v11099, %v11100
  %v11102 = vrot.slane %v11101, 4
  %v11103 = vmax.f32 %v11101, %v11102
  %v11104 = vrot.slane %v11103, 2
  %v11105 = vmax.f32 %v11103, %v11104
  %v11106 = vrot.slane %v11105, 1
  %v11107 = vmax.f32 %v11105, %v11106
  %v11108 = vsel %vm6672, %v6504, -inf
  %v11109 = vsel %vm6672, %v6505, -inf
  %v11110 = vmax.f32 %v11108, %v11109
  %v11111 = vsel %vm6672, %v6506, -inf
  %v11112 = vmax.f32 %v11110, %v11111
  %v11113 = vsel %vm6672, %v6507, -inf
  %v11114 = vmax.f32 %v11112, %v11113
  %v11115 = vsel %vm6672, %v6508, -inf
  %v11116 = vmax.f32 %v11114, %v11115
  %v11117 = vsel %vm6672, %v6509, -inf
  %v11118 = vmax.f32 %v11116, %v11117
  %v11119 = vsel %vm6672, %v6510, -inf
  %v11120 = vmax.f32 %v11118, %v11119
  %v11121 = vsel %vm6672, %v6511, -inf
  %v11122 = vmax.f32 %v11120, %v11121
  %v11123 = vrot.slane %v11122, 4
  %v11124 = vmax.f32 %v11122, %v11123
  %v11125 = vrot.slane %v11124, 2
  %v11126 = vmax.f32 %v11124, %v11125
  %v11127 = vrot.slane %v11126, 1
  %v11128 = vmax.f32 %v11126, %v11127
  %v11129 = vsel %vm6672, %v6512, -inf
  %v11130 = vsel %vm6672, %v6513, -inf
  %v11131 = vmax.f32 %v11129, %v11130
  %v11132 = vsel %vm6672, %v6514, -inf
  %v11133 = vmax.f32 %v11131, %v11132
  %v11134 = vsel %vm6672, %v6515, -inf
  %v11135 = vmax.f32 %v11133, %v11134
  %v11136 = vsel %vm6672, %v6516, -inf
  %v11137 = vmax.f32 %v11135, %v11136
  %v11138 = vsel %vm6672, %v6517, -inf
  %v11139 = vmax.f32 %v11137, %v11138
  %v11140 = vsel %vm6672, %v6518, -inf
  %v11141 = vmax.f32 %v11139, %v11140
  %v11142 = vsel %vm6672, %v6519, -inf
  %v11143 = vmax.f32 %v11141, %v11142
  %v11144 = vrot.slane %v11143, 4
  %v11145 = vmax.f32 %v11143, %v11144
  %v11146 = vrot.slane %v11145, 2
  %v11147 = vmax.f32 %v11145, %v11146
  %v11148 = vrot.slane %v11147, 1
  %v11149 = vmax.f32 %v11147, %v11148
  %v11150 = vsel %vm6672, %v6520, -inf
  %v11151 = vsel %vm6672, %v6521, -inf
  %v11152 = vmax.f32 %v11150, %v11151
  %v11153 = vsel %vm6672, %v6522, -inf
  %v11154 = vmax.f32 %v11152, %v11153
  %v11155 = vsel %vm6672, %v6523, -inf
  %v11156 = vmax.f32 %v11154, %v11155
  %v11157 = vsel %vm6672, %v6524, -inf
  %v11158 = vmax.f32 %v11156, %v11157
  %v11159 = vsel %vm6672, %v6525, -inf
  %v11160 = vmax.f32 %v11158, %v11159
  %v11161 = vsel %vm6672, %v6526, -inf
  %v11162 = vmax.f32 %v11160, %v11161
  %v11163 = vsel %vm6672, %v6527, -inf
  %v11164 = vmax.f32 %v11162, %v11163
  %v11165 = vrot.slane %v11164, 4
  %v11166 = vmax.f32 %v11164, %v11165
  %v11167 = vrot.slane %v11166, 2
  %v11168 = vmax.f32 %v11166, %v11167
  %v11169 = vrot.slane %v11168, 1
  %v11170 = vmax.f32 %v11168, %v11169
  %v11171 = vsel %vm6672, %v6528, -inf
  %v11172 = vsel %vm6672, %v6529, -inf
  %v11173 = vmax.f32 %v11171, %v11172
  %v11174 = vsel %vm6672, %v6530, -inf
  %v11175 = vmax.f32 %v11173, %v11174
  %v11176 = vsel %vm6672, %v6531, -inf
  %v11177 = vmax.f32 %v11175, %v11176
  %v11178 = vsel %vm6672, %v6532, -inf
  %v11179 = vmax.f32 %v11177, %v11178
  %v11180 = vsel %vm6672, %v6533, -inf
  %v11181 = vmax.f32 %v11179, %v11180
  %v11182 = vsel %vm6672, %v6534, -inf
  %v11183 = vmax.f32 %v11181, %v11182
  %v11184 = vsel %vm6672, %v6535, -inf
  %v11185 = vmax.f32 %v11183, %v11184
  %v11186 = vrot.slane %v11185, 4
  %v11187 = vmax.f32 %v11185, %v11186
  %v11188 = vrot.slane %v11187, 2
  %v11189 = vmax.f32 %v11187, %v11188
  %v11190 = vrot.slane %v11189, 1
  %v11191 = vmax.f32 %v11189, %v11190
  %v11192 = vsel %vm6672, %v6536, -inf
  %v11193 = vsel %vm6672, %v6537, -inf
  %v11194 = vmax.f32 %v11192, %v11193
  %v11195 = vsel %vm6672, %v6538, -inf
  %v11196 = vmax.f32 %v11194, %v11195
  %v11197 = vsel %vm6672, %v6539, -inf
  %v11198 = vmax.f32 %v11196, %v11197
  %v11199 = vsel %vm6672, %v6540, -inf
  %v11200 = vmax.f32 %v11198, %v11199
  %v11201 = vsel %vm6672, %v6541, -inf
  %v11202 = vmax.f32 %v11200, %v11201
  %v11203 = vsel %vm6672, %v6542, -inf
  %v11204 = vmax.f32 %v11202, %v11203
  %v11205 = vsel %vm6672, %v6543, -inf
  %v11206 = vmax.f32 %v11204, %v11205
  %v11207 = vrot.slane %v11206, 4
  %v11208 = vmax.f32 %v11206, %v11207
  %v11209 = vrot.slane %v11208, 2
  %v11210 = vmax.f32 %v11208, %v11209
  %v11211 = vrot.slane %v11210, 1
  %v11212 = vmax.f32 %v11210, %v11211
  %v11213 = vsel %vm6672, %v6544, -inf
  %v11214 = vsel %vm6672, %v6545, -inf
  %v11215 = vmax.f32 %v11213, %v11214
  %v11216 = vsel %vm6672, %v6546, -inf
  %v11217 = vmax.f32 %v11215, %v11216
  %v11218 = vsel %vm6672, %v6547, -inf
  %v11219 = vmax.f32 %v11217, %v11218
  %v11220 = vsel %vm6672, %v6548, -inf
  %v11221 = vmax.f32 %v11219, %v11220
  %v11222 = vsel %vm6672, %v6549, -inf
  %v11223 = vmax.f32 %v11221, %v11222
  %v11224 = vsel %vm6672, %v6550, -inf
  %v11225 = vmax.f32 %v11223, %v11224
  %v11226 = vsel %vm6672, %v6551, -inf
  %v11227 = vmax.f32 %v11225, %v11226
  %v11228 = vrot.slane %v11227, 4
  %v11229 = vmax.f32 %v11227, %v11228
  %v11230 = vrot.slane %v11229, 2
  %v11231 = vmax.f32 %v11229, %v11230
  %v11232 = vrot.slane %v11231, 1
  %v11233 = vmax.f32 %v11231, %v11232
  %v11234 = vsel %vm6672, %v6552, -inf
  %v11235 = vsel %vm6672, %v6553, -inf
  %v11236 = vmax.f32 %v11234, %v11235
  %v11237 = vsel %vm6672, %v6554, -inf
  %v11238 = vmax.f32 %v11236, %v11237
  %v11239 = vsel %vm6672, %v6555, -inf
  %v11240 = vmax.f32 %v11238, %v11239
  %v11241 = vsel %vm6672, %v6556, -inf
  %v11242 = vmax.f32 %v11240, %v11241
  %v11243 = vsel %vm6672, %v6557, -inf
  %v11244 = vmax.f32 %v11242, %v11243
  %v11245 = vsel %vm6672, %v6558, -inf
  %v11246 = vmax.f32 %v11244, %v11245
  %v11247 = vsel %vm6672, %v6559, -inf
  %v11248 = vmax.f32 %v11246, %v11247
  %v11249 = vrot.slane %v11248, 4
  %v11250 = vmax.f32 %v11248, %v11249
  %v11251 = vrot.slane %v11250, 2
  %v11252 = vmax.f32 %v11250, %v11251
  %v11253 = vrot.slane %v11252, 1
  %v11254 = vmax.f32 %v11252, %v11253
  %v11255 = vsel %vm6672, %v6560, -inf
  %v11256 = vsel %vm6672, %v6561, -inf
  %v11257 = vmax.f32 %v11255, %v11256
  %v11258 = vsel %vm6672, %v6562, -inf
  %v11259 = vmax.f32 %v11257, %v11258
  %v11260 = vsel %vm6672, %v6563, -inf
  %v11261 = vmax.f32 %v11259, %v11260
  %v11262 = vsel %vm6672, %v6564, -inf
  %v11263 = vmax.f32 %v11261, %v11262
  %v11264 = vsel %vm6672, %v6565, -inf
  %v11265 = vmax.f32 %v11263, %v11264
  %v11266 = vsel %vm6672, %v6566, -inf
  %v11267 = vmax.f32 %v11265, %v11266
  %v11268 = vsel %vm6672, %v6567, -inf
  %v11269 = vmax.f32 %v11267, %v11268
  %v11270 = vrot.slane %v11269, 4
  %v11271 = vmax.f32 %v11269, %v11270
  %v11272 = vrot.slane %v11271, 2
  %v11273 = vmax.f32 %v11271, %v11272
  %v11274 = vrot.slane %v11273, 1
  %v11275 = vmax.f32 %v11273, %v11274
  %v11276 = vsel %vm6672, %v6568, -inf
  %v11277 = vsel %vm6672, %v6569, -inf
  %v11278 = vmax.f32 %v11276, %v11277
  %v11279 = vsel %vm6672, %v6570, -inf
  %v11280 = vmax.f32 %v11278, %v11279
  %v11281 = vsel %vm6672, %v6571, -inf
  %v11282 = vmax.f32 %v11280, %v11281
  %v11283 = vsel %vm6672, %v6572, -inf
  %v11284 = vmax.f32 %v11282, %v11283
  %v11285 = vsel %vm6672, %v6573, -inf
  %v11286 = vmax.f32 %v11284, %v11285
  %v11287 = vsel %vm6672, %v6574, -inf
  %v11288 = vmax.f32 %v11286, %v11287
  %v11289 = vsel %vm6672, %v6575, -inf
  %v11290 = vmax.f32 %v11288, %v11289
  %v11291 = vrot.slane %v11290, 4
  %v11292 = vmax.f32 %v11290, %v11291
  %v11293 = vrot.slane %v11292, 2
  %v11294 = vmax.f32 %v11292, %v11293
  %v11295 = vrot.slane %v11294, 1
  %v11296 = vmax.f32 %v11294, %v11295
  %v11297 = vsel %vm6672, %v6576, -inf
  %v11298 = vsel %vm6672, %v6577, -inf
  %v11299 = vmax.f32 %v11297, %v11298
  %v11300 = vsel %vm6672, %v6578, -inf
  %v11301 = vmax.f32 %v11299, %v11300
  %v11302 = vsel %vm6672, %v6579, -inf
  %v11303 = vmax.f32 %v11301, %v11302
  %v11304 = vsel %vm6672, %v6580, -inf
  %v11305 = vmax.f32 %v11303, %v11304
  %v11306 = vsel %vm6672, %v6581, -inf
  %v11307 = vmax.f32 %v11305, %v11306
  %v11308 = vsel %vm6672, %v6582, -inf
  %v11309 = vmax.f32 %v11307, %v11308
  %v11310 = vsel %vm6672, %v6583, -inf
  %v11311 = vmax.f32 %v11309, %v11310
  %v11312 = vrot.slane %v11311, 4
  %v11313 = vmax.f32 %v11311, %v11312
  %v11314 = vrot.slane %v11313, 2
  %v11315 = vmax.f32 %v11313, %v11314
  %v11316 = vrot.slane %v11315, 1
  %v11317 = vmax.f32 %v11315, %v11316
  %v11318 = vsel %vm6672, %v6584, -inf
  %v11319 = vsel %vm6672, %v6585, -inf
  %v11320 = vmax.f32 %v11318, %v11319
  %v11321 = vsel %vm6672, %v6586, -inf
  %v11322 = vmax.f32 %v11320, %v11321
  %v11323 = vsel %vm6672, %v6587, -inf
  %v11324 = vmax.f32 %v11322, %v11323
  %v11325 = vsel %vm6672, %v6588, -inf
  %v11326 = vmax.f32 %v11324, %v11325
  %v11327 = vsel %vm6672, %v6589, -inf
  %v11328 = vmax.f32 %v11326, %v11327
  %v11329 = vsel %vm6672, %v6590, -inf
  %v11330 = vmax.f32 %v11328, %v11329
  %v11331 = vsel %vm6672, %v6591, -inf
  %v11332 = vmax.f32 %v11330, %v11331
  %v11333 = vrot.slane %v11332, 4
  %v11334 = vmax.f32 %v11332, %v11333
  %v11335 = vrot.slane %v11334, 2
  %v11336 = vmax.f32 %v11334, %v11335
  %v11337 = vrot.slane %v11336, 1
  %v11338 = vmax.f32 %v11336, %v11337
  %v11339 = vsel %vm6672, %v6592, -inf
  %v11340 = vsel %vm6672, %v6593, -inf
  %v11341 = vmax.f32 %v11339, %v11340
  %v11342 = vsel %vm6672, %v6594, -inf
  %v11343 = vmax.f32 %v11341, %v11342
  %v11344 = vsel %vm6672, %v6595, -inf
  %v11345 = vmax.f32 %v11343, %v11344
  %v11346 = vsel %vm6672, %v6596, -inf
  %v11347 = vmax.f32 %v11345, %v11346
  %v11348 = vsel %vm6672, %v6597, -inf
  %v11349 = vmax.f32 %v11347, %v11348
  %v11350 = vsel %vm6672, %v6598, -inf
  %v11351 = vmax.f32 %v11349, %v11350
  %v11352 = vsel %vm6672, %v6599, -inf
  %v11353 = vmax.f32 %v11351, %v11352
  %v11354 = vrot.slane %v11353, 4
  %v11355 = vmax.f32 %v11353, %v11354
  %v11356 = vrot.slane %v11355, 2
  %v11357 = vmax.f32 %v11355, %v11356
  %v11358 = vrot.slane %v11357, 1
  %v11359 = vmax.f32 %v11357, %v11358
  %v11360 = vsel %vm6672, %v6600, -inf
  %v11361 = vsel %vm6672, %v6601, -inf
  %v11362 = vmax.f32 %v11360, %v11361
  %v11363 = vsel %vm6672, %v6602, -inf
  %v11364 = vmax.f32 %v11362, %v11363
  %v11365 = vsel %vm6672, %v6603, -inf
  %v11366 = vmax.f32 %v11364, %v11365
  %v11367 = vsel %vm6672, %v6604, -inf
  %v11368 = vmax.f32 %v11366, %v11367
  %v11369 = vsel %vm6672, %v6605, -inf
  %v11370 = vmax.f32 %v11368, %v11369
  %v11371 = vsel %vm6672, %v6606, -inf
  %v11372 = vmax.f32 %v11370, %v11371
  %v11373 = vsel %vm6672, %v6607, -inf
  %v11374 = vmax.f32 %v11372, %v11373
  %v11375 = vrot.slane %v11374, 4
  %v11376 = vmax.f32 %v11374, %v11375
  %v11377 = vrot.slane %v11376, 2
  %v11378 = vmax.f32 %v11376, %v11377
  %v11379 = vrot.slane %v11378, 1
  %v11380 = vmax.f32 %v11378, %v11379
  %v11381 = vsel %vm6672, %v6608, -inf
  %v11382 = vsel %vm6672, %v6609, -inf
  %v11383 = vmax.f32 %v11381, %v11382
  %v11384 = vsel %vm6672, %v6610, -inf
  %v11385 = vmax.f32 %v11383, %v11384
  %v11386 = vsel %vm6672, %v6611, -inf
  %v11387 = vmax.f32 %v11385, %v11386
  %v11388 = vsel %vm6672, %v6612, -inf
  %v11389 = vmax.f32 %v11387, %v11388
  %v11390 = vsel %vm6672, %v6613, -inf
  %v11391 = vmax.f32 %v11389, %v11390
  %v11392 = vsel %vm6672, %v6614, -inf
  %v11393 = vmax.f32 %v11391, %v11392
  %v11394 = vsel %vm6672, %v6615, -inf
  %v11395 = vmax.f32 %v11393, %v11394
  %v11396 = vrot.slane %v11395, 4
  %v11397 = vmax.f32 %v11395, %v11396
  %v11398 = vrot.slane %v11397, 2
  %v11399 = vmax.f32 %v11397, %v11398
  %v11400 = vrot.slane %v11399, 1
  %v11401 = vmax.f32 %v11399, %v11400
  %v11402 = vsel %vm6672, %v6616, -inf
  %v11403 = vsel %vm6672, %v6617, -inf
  %v11404 = vmax.f32 %v11402, %v11403
  %v11405 = vsel %vm6672, %v6618, -inf
  %v11406 = vmax.f32 %v11404, %v11405
  %v11407 = vsel %vm6672, %v6619, -inf
  %v11408 = vmax.f32 %v11406, %v11407
  %v11409 = vsel %vm6672, %v6620, -inf
  %v11410 = vmax.f32 %v11408, %v11409
  %v11411 = vsel %vm6672, %v6621, -inf
  %v11412 = vmax.f32 %v11410, %v11411
  %v11413 = vsel %vm6672, %v6622, -inf
  %v11414 = vmax.f32 %v11412, %v11413
  %v11415 = vsel %vm6672, %v6623, -inf
  %v11416 = vmax.f32 %v11414, %v11415
  %v11417 = vrot.slane %v11416, 4
  %v11418 = vmax.f32 %v11416, %v11417
  %v11419 = vrot.slane %v11418, 2
  %v11420 = vmax.f32 %v11418, %v11419
  %v11421 = vrot.slane %v11420, 1
  %v11422 = vmax.f32 %v11420, %v11421
  %v11423 = vsel %vm6672, %v6624, -inf
  %v11424 = vsel %vm6672, %v6625, -inf
  %v11425 = vmax.f32 %v11423, %v11424
  %v11426 = vsel %vm6672, %v6626, -inf
  %v11427 = vmax.f32 %v11425, %v11426
  %v11428 = vsel %vm6672, %v6627, -inf
  %v11429 = vmax.f32 %v11427, %v11428
  %v11430 = vsel %vm6672, %v6628, -inf
  %v11431 = vmax.f32 %v11429, %v11430
  %v11432 = vsel %vm6672, %v6629, -inf
  %v11433 = vmax.f32 %v11431, %v11432
  %v11434 = vsel %vm6672, %v6630, -inf
  %v11435 = vmax.f32 %v11433, %v11434
  %v11436 = vsel %vm6672, %v6631, -inf
  %v11437 = vmax.f32 %v11435, %v11436
  %v11438 = vrot.slane %v11437, 4
  %v11439 = vmax.f32 %v11437, %v11438
  %v11440 = vrot.slane %v11439, 2
  %v11441 = vmax.f32 %v11439, %v11440
  %v11442 = vrot.slane %v11441, 1
  %v11443 = vmax.f32 %v11441, %v11442
  %v11444 = vsel %vm6672, %v6632, -inf
  %v11445 = vsel %vm6672, %v6633, -inf
  %v11446 = vmax.f32 %v11444, %v11445
  %v11447 = vsel %vm6672, %v6634, -inf
  %v11448 = vmax.f32 %v11446, %v11447
  %v11449 = vsel %vm6672, %v6635, -inf
  %v11450 = vmax.f32 %v11448, %v11449
  %v11451 = vsel %vm6672, %v6636, -inf
  %v11452 = vmax.f32 %v11450, %v11451
  %v11453 = vsel %vm6672, %v6637, -inf
  %v11454 = vmax.f32 %v11452, %v11453
  %v11455 = vsel %vm6672, %v6638, -inf
  %v11456 = vmax.f32 %v11454, %v11455
  %v11457 = vsel %vm6672, %v6639, -inf
  %v11458 = vmax.f32 %v11456, %v11457
  %v11459 = vrot.slane %v11458, 4
  %v11460 = vmax.f32 %v11458, %v11459
  %v11461 = vrot.slane %v11460, 2
  %v11462 = vmax.f32 %v11460, %v11461
  %v11463 = vrot.slane %v11462, 1
  %v11464 = vmax.f32 %v11462, %v11463
  %v11465 = vsel %vm6672, %v6640, -inf
  %v11466 = vsel %vm6672, %v6641, -inf
  %v11467 = vmax.f32 %v11465, %v11466
  %v11468 = vsel %vm6672, %v6642, -inf
  %v11469 = vmax.f32 %v11467, %v11468
  %v11470 = vsel %vm6672, %v6643, -inf
  %v11471 = vmax.f32 %v11469, %v11470
  %v11472 = vsel %vm6672, %v6644, -inf
  %v11473 = vmax.f32 %v11471, %v11472
  %v11474 = vsel %vm6672, %v6645, -inf
  %v11475 = vmax.f32 %v11473, %v11474
  %v11476 = vsel %vm6672, %v6646, -inf
  %v11477 = vmax.f32 %v11475, %v11476
  %v11478 = vsel %vm6672, %v6647, -inf
  %v11479 = vmax.f32 %v11477, %v11478
  %v11480 = vrot.slane %v11479, 4
  %v11481 = vmax.f32 %v11479, %v11480
  %v11482 = vrot.slane %v11481, 2
  %v11483 = vmax.f32 %v11481, %v11482
  %v11484 = vrot.slane %v11483, 1
  %v11485 = vmax.f32 %v11483, %v11484
  %v11486 = vsel %vm6672, %v6648, -inf
  %v11487 = vsel %vm6672, %v6649, -inf
  %v11488 = vmax.f32 %v11486, %v11487
  %v11489 = vsel %vm6672, %v6650, -inf
  %v11490 = vmax.f32 %v11488, %v11489
  %v11491 = vsel %vm6672, %v6651, -inf
  %v11492 = vmax.f32 %v11490, %v11491
  %v11493 = vsel %vm6672, %v6652, -inf
  %v11494 = vmax.f32 %v11492, %v11493
  %v11495 = vsel %vm6672, %v6653, -inf
  %v11496 = vmax.f32 %v11494, %v11495
  %v11497 = vsel %vm6672, %v6654, -inf
  %v11498 = vmax.f32 %v11496, %v11497
  %v11499 = vsel %vm6672, %v6655, -inf
  %v11500 = vmax.f32 %v11498, %v11499
  %v11501 = vrot.slane %v11500, 4
  %v11502 = vmax.f32 %v11500, %v11501
  %v11503 = vrot.slane %v11502, 2
  %v11504 = vmax.f32 %v11502, %v11503
  %v11505 = vrot.slane %v11504, 1
  %v11506 = vmax.f32 %v11504, %v11505
  %v11507 = vsel %vm6672, %v6656, -inf
  %v11508 = vsel %vm6672, %v6657, -inf
  %v11509 = vmax.f32 %v11507, %v11508
  %v11510 = vsel %vm6672, %v6658, -inf
  %v11511 = vmax.f32 %v11509, %v11510
  %v11512 = vsel %vm6672, %v6659, -inf
  %v11513 = vmax.f32 %v11511, %v11512
  %v11514 = vsel %vm6672, %v6660, -inf
  %v11515 = vmax.f32 %v11513, %v11514
  %v11516 = vsel %vm6672, %v6661, -inf
  %v11517 = vmax.f32 %v11515, %v11516
  %v11518 = vsel %vm6672, %v6662, -inf
  %v11519 = vmax.f32 %v11517, %v11518
  %v11520 = vsel %vm6672, %v6663, -inf
  %v11521 = vmax.f32 %v11519, %v11520
  %v11522 = vrot.slane %v11521, 4
  %v11523 = vmax.f32 %v11521, %v11522
  %v11524 = vrot.slane %v11523, 2
  %v11525 = vmax.f32 %v11523, %v11524
  %v11526 = vrot.slane %v11525, 1
  %v11527 = vmax.f32 %v11525, %v11526
  %v11592 = vsel %vm8081, %v10225, %v10204
  %v11593 = vsel %vm8083, %v10246, %v11592
  %v11594 = vsel %vm8085, %v10267, %v11593
  %v11595 = vsel %vm8087, %v10288, %v11594
  %v11596 = vsel %vm8089, %v10309, %v11595
  %v11597 = vsel %vm8091, %v10330, %v11596
  %v11598 = vsel %vm8093, %v10351, %v11597
  %v11599 = vsel %vm8081, %v10393, %v10372
  %v11600 = vsel %vm8083, %v10414, %v11599
  %v11601 = vsel %vm8085, %v10435, %v11600
  %v11602 = vsel %vm8087, %v10456, %v11601
  %v11603 = vsel %vm8089, %v10477, %v11602
  %v11604 = vsel %vm8091, %v10498, %v11603
  %v11605 = vsel %vm8093, %v10519, %v11604
  %v11606 = vsel %vm8081, %v10561, %v10540
  %v11607 = vsel %vm8083, %v10582, %v11606
  %v11608 = vsel %vm8085, %v10603, %v11607
  %v11609 = vsel %vm8087, %v10624, %v11608
  %v11610 = vsel %vm8089, %v10645, %v11609
  %v11611 = vsel %vm8091, %v10666, %v11610
  %v11612 = vsel %vm8093, %v10687, %v11611
  %v11613 = vsel %vm8081, %v10729, %v10708
  %v11614 = vsel %vm8083, %v10750, %v11613
  %v11615 = vsel %vm8085, %v10771, %v11614
  %v11616 = vsel %vm8087, %v10792, %v11615
  %v11617 = vsel %vm8089, %v10813, %v11616
  %v11618 = vsel %vm8091, %v10834, %v11617
  %v11619 = vsel %vm8093, %v10855, %v11618
  %v11620 = vsel %vm8081, %v10897, %v10876
  %v11621 = vsel %vm8083, %v10918, %v11620
  %v11622 = vsel %vm8085, %v10939, %v11621
  %v11623 = vsel %vm8087, %v10960, %v11622
  %v11624 = vsel %vm8089, %v10981, %v11623
  %v11625 = vsel %vm8091, %v11002, %v11624
  %v11626 = vsel %vm8093, %v11023, %v11625
  %v11627 = vsel %vm8081, %v11065, %v11044
  %v11628 = vsel %vm8083, %v11086, %v11627
  %v11629 = vsel %vm8085, %v11107, %v11628
  %v11630 = vsel %vm8087, %v11128, %v11629
  %v11631 = vsel %vm8089, %v11149, %v11630
  %v11632 = vsel %vm8091, %v11170, %v11631
  %v11633 = vsel %vm8093, %v11191, %v11632
  %v11634 = vsel %vm8081, %v11233, %v11212
  %v11635 = vsel %vm8083, %v11254, %v11634
  %v11636 = vsel %vm8085, %v11275, %v11635
  %v11637 = vsel %vm8087, %v11296, %v11636
  %v11638 = vsel %vm8089, %v11317, %v11637
  %v11639 = vsel %vm8091, %v11338, %v11638
  %v11640 = vsel %vm8093, %v11359, %v11639
  %v11641 = vsel %vm8081, %v11401, %v11380
  %v11642 = vsel %vm8083, %v11422, %v11641
  %v11643 = vsel %vm8085, %v11443, %v11642
  %v11644 = vsel %vm8087, %v11464, %v11643
  %v11645 = vsel %vm8089, %v11485, %v11644
  %v11646 = vsel %vm8091, %v11506, %v11645
  %v11647 = vsel %vm8093, %v11527, %v11646
  %v11656 = vmax.f32 %v10176, %v11598
  %v11657 = vmax.f32 %v10177, %v11605
  %v11658 = vmax.f32 %v10178, %v11612
  %v11659 = vmax.f32 %v10179, %v11619
  %v11660 = vmax.f32 %v10180, %v11626
  %v11661 = vmax.f32 %v10181, %v11633
  %v11662 = vmax.f32 %v10182, %v11640
  %v11663 = vmax.f32 %v10183, %v11647
  %11664 = vst.msk [vmem:[#allocation5] sm:$0xff] %vm6672, %v11656
  %11665 = vst.msk [vmem:[#allocation5 + $0x8] sm:$0xff] %vm6672, %v11657
  %11666 = vst.msk [vmem:[#allocation5 + $0x10] sm:$0xff] %vm6672, %v11658
  %11667 = vst.msk [vmem:[#allocation5 + $0x18] sm:$0xff] %vm6672, %v11659
  %11668 = vst.msk [vmem:[#allocation5 + $0x20] sm:$0xff] %vm6672, %v11660
  %11669 = vst.msk [vmem:[#allocation5 + $0x28] sm:$0xff] %vm6672, %v11661
  %11670 = vst.msk [vmem:[#allocation5 + $0x30] sm:$0xff] %vm6672, %v11662
  %11671 = vst.msk [vmem:[#allocation5 + $0x38] sm:$0xff] %vm6672, %v11663
  %v11672 = vld [vmem:[#allocation6] sm:$0xff]
  %v11673 = vld [vmem:[#allocation6 + $0x8] sm:$0xff]
  %v11674 = vld [vmem:[#allocation6 + $0x10] sm:$0xff]
  %v11675 = vld [vmem:[#allocation6 + $0x18] sm:$0xff]
  %v11676 = vld [vmem:[#allocation6 + $0x20] sm:$0xff]
  %v11677 = vld [vmem:[#allocation6 + $0x28] sm:$0xff]
  %v11678 = vld [vmem:[#allocation6 + $0x30] sm:$0xff]
  %v11679 = vld [vmem:[#allocation6 + $0x38] sm:$0xff]
  %v11680 = vsel %vm6672, %v6152, inf
  %v11681 = vsel %vm6672, %v6153, inf
  %v11682 = vmin.f32 %v11680, %v11681
  %v11683 = vsel %vm6672, %v6154, inf
  %v11684 = vmin.f32 %v11682, %v11683
  %v11685 = vsel %vm6672, %v6155, inf
  %v11686 = vmin.f32 %v11684, %v11685
  %v11687 = vsel %vm6672, %v6156, inf
  %v11688 = vmin.f32 %v11686, %v11687
  %v11689 = vsel %vm6672, %v6157, inf
  %v11690 = vmin.f32 %v11688, %v11689
  %v11691 = vsel %vm6672, %v6158, inf
  %v11692 = vmin.f32 %v11690, %v11691
  %v11693 = vsel %vm6672, %v6159, inf
  %v11694 = vmin.f32 %v11692, %v11693
  %v11695 = vrot.slane %v11694, 4
  %v11696 = vmin.f32 %v11694, %v11695
  %v11697 = vrot.slane %v11696, 2
  %v11698 = vmin.f32 %v11696, %v11697
  %v11699 = vrot.slane %v11698, 1
  %v11700 = vmin.f32 %v11698, %v11699
  %v11701 = vsel %vm6672, %v6160, inf
  %v11702 = vsel %vm6672, %v6161, inf
  %v11703 = vmin.f32 %v11701, %v11702
  %v11704 = vsel %vm6672, %v6162, inf
  %v11705 = vmin.f32 %v11703, %v11704
  %v11706 = vsel %vm6672, %v6163, inf
  %v11707 = vmin.f32 %v11705, %v11706
  %v11708 = vsel %vm6672, %v6164, inf
  %v11709 = vmin.f32 %v11707, %v11708
  %v11710 = vsel %vm6672, %v6165, inf
  %v11711 = vmin.f32 %v11709, %v11710
  %v11712 = vsel %vm6672, %v6166, inf
  %v11713 = vmin.f32 %v11711, %v11712
  %v11714 = vsel %vm6672, %v6167, inf
  %v11715 = vmin.f32 %v11713, %v11714
  %v11716 = vrot.slane %v11715, 4
  %v11717 = vmin.f32 %v11715, %v11716
  %v11718 = vrot.slane %v11717, 2
  %v11719 = vmin.f32 %v11717, %v11718
  %v11720 = vrot.slane %v11719, 1
  %v11721 = vmin.f32 %v11719, %v11720
  %v11722 = vsel %vm6672, %v6168, inf
  %v11723 = vsel %vm6672, %v6169, inf
  %v11724 = vmin.f32 %v11722, %v11723
  %v11725 = vsel %vm6672, %v6170, inf
  %v11726 = vmin.f32 %v11724, %v11725
  %v11727 = vsel %vm6672, %v6171, inf
  %v11728 = vmin.f32 %v11726, %v11727
  %v11729 = vsel %vm6672, %v6172, inf
  %v11730 = vmin.f32 %v11728, %v11729
  %v11731 = vsel %vm6672, %v6173, inf
  %v11732 = vmin.f32 %v11730, %v11731
  %v11733 = vsel %vm6672, %v6174, inf
  %v11734 = vmin.f32 %v11732, %v11733
  %v11735 = vsel %vm6672, %v6175, inf
  %v11736 = vmin.f32 %v11734, %v11735
  %v11737 = vrot.slane %v11736, 4
  %v11738 = vmin.f32 %v11736, %v11737
  %v11739 = vrot.slane %v11738, 2
  %v11740 = vmin.f32 %v11738, %v11739
  %v11741 = vrot.slane %v11740, 1
  %v11742 = vmin.f32 %v11740, %v11741
  %v11743 = vsel %vm6672, %v6176, inf
  %v11744 = vsel %vm6672, %v6177, inf
  %v11745 = vmin.f32 %v11743, %v11744
  %v11746 = vsel %vm6672, %v6178, inf
  %v11747 = vmin.f32 %v11745, %v11746
  %v11748 = vsel %vm6672, %v6179, inf
  %v11749 = vmin.f32 %v11747, %v11748
  %v11750 = vsel %vm6672, %v6180, inf
  %v11751 = vmin.f32 %v11749, %v11750
  %v11752 = vsel %vm6672, %v6181, inf
  %v11753 = vmin.f32 %v11751, %v11752
  %v11754 = vsel %vm6672, %v6182, inf
  %v11755 = vmin.f32 %v11753, %v11754
  %v11756 = vsel %vm6672, %v6183, inf
  %v11757 = vmin.f32 %v11755, %v11756
  %v11758 = vrot.slane %v11757, 4
  %v11759 = vmin.f32 %v11757, %v11758
  %v11760 = vrot.slane %v11759, 2
  %v11761 = vmin.f32 %v11759, %v11760
  %v11762 = vrot.slane %v11761, 1
  %v11763 = vmin.f32 %v11761, %v11762
  %v11764 = vsel %vm6672, %v6184, inf
  %v11765 = vsel %vm6672, %v6185, inf
  %v11766 = vmin.f32 %v11764, %v11765
  %v11767 = vsel %vm6672, %v6186, inf
  %v11768 = vmin.f32 %v11766, %v11767
  %v11769 = vsel %vm6672, %v6187, inf
  %v11770 = vmin.f32 %v11768, %v11769
  %v11771 = vsel %vm6672, %v6188, inf
  %v11772 = vmin.f32 %v11770, %v11771
  %v11773 = vsel %vm6672, %v6189, inf
  %v11774 = vmin.f32 %v11772, %v11773
  %v11775 = vsel %vm6672, %v6190, inf
  %v11776 = vmin.f32 %v11774, %v11775
  %v11777 = vsel %vm6672, %v6191, inf
  %v11778 = vmin.f32 %v11776, %v11777
  %v11779 = vrot.slane %v11778, 4
  %v11780 = vmin.f32 %v11778, %v11779
  %v11781 = vrot.slane %v11780, 2
  %v11782 = vmin.f32 %v11780, %v11781
  %v11783 = vrot.slane %v11782, 1
  %v11784 = vmin.f32 %v11782, %v11783
  %v11785 = vsel %vm6672, %v6192, inf
  %v11786 = vsel %vm6672, %v6193, inf
  %v11787 = vmin.f32 %v11785, %v11786
  %v11788 = vsel %vm6672, %v6194, inf
  %v11789 = vmin.f32 %v11787, %v11788
  %v11790 = vsel %vm6672, %v6195, inf
  %v11791 = vmin.f32 %v11789, %v11790
  %v11792 = vsel %vm6672, %v6196, inf
  %v11793 = vmin.f32 %v11791, %v11792
  %v11794 = vsel %vm6672, %v6197, inf
  %v11795 = vmin.f32 %v11793, %v11794
  %v11796 = vsel %vm6672, %v6198, inf
  %v11797 = vmin.f32 %v11795, %v11796
  %v11798 = vsel %vm6672, %v6199, inf
  %v11799 = vmin.f32 %v11797, %v11798
  %v11800 = vrot.slane %v11799, 4
  %v11801 = vmin.f32 %v11799, %v11800
  %v11802 = vrot.slane %v11801, 2
  %v11803 = vmin.f32 %v11801, %v11802
  %v11804 = vrot.slane %v11803, 1
  %v11805 = vmin.f32 %v11803, %v11804
  %v11806 = vsel %vm6672, %v6200, inf
  %v11807 = vsel %vm6672, %v6201, inf
  %v11808 = vmin.f32 %v11806, %v11807
  %v11809 = vsel %vm6672, %v6202, inf
  %v11810 = vmin.f32 %v11808, %v11809
  %v11811 = vsel %vm6672, %v6203, inf
  %v11812 = vmin.f32 %v11810, %v11811
  %v11813 = vsel %vm6672, %v6204, inf
  %v11814 = vmin.f32 %v11812, %v11813
  %v11815 = vsel %vm6672, %v6205, inf
  %v11816 = vmin.f32 %v11814, %v11815
  %v11817 = vsel %vm6672, %v6206, inf
  %v11818 = vmin.f32 %v11816, %v11817
  %v11819 = vsel %vm6672, %v6207, inf
  %v11820 = vmin.f32 %v11818, %v11819
  %v11821 = vrot.slane %v11820, 4
  %v11822 = vmin.f32 %v11820, %v11821
  %v11823 = vrot.slane %v11822, 2
  %v11824 = vmin.f32 %v11822, %v11823
  %v11825 = vrot.slane %v11824, 1
  %v11826 = vmin.f32 %v11824, %v11825
  %v11827 = vsel %vm6672, %v6208, inf
  %v11828 = vsel %vm6672, %v6209, inf
  %v11829 = vmin.f32 %v11827, %v11828
  %v11830 = vsel %vm6672, %v6210, inf
  %v11831 = vmin.f32 %v11829, %v11830
  %v11832 = vsel %vm6672, %v6211, inf
  %v11833 = vmin.f32 %v11831, %v11832
  %v11834 = vsel %vm6672, %v6212, inf
  %v11835 = vmin.f32 %v11833, %v11834
  %v11836 = vsel %vm6672, %v6213, inf
  %v11837 = vmin.f32 %v11835, %v11836
  %v11838 = vsel %vm6672, %v6214, inf
  %v11839 = vmin.f32 %v11837, %v11838
  %v11840 = vsel %vm6672, %v6215, inf
  %v11841 = vmin.f32 %v11839, %v11840
  %v11842 = vrot.slane %v11841, 4
  %v11843 = vmin.f32 %v11841, %v11842
  %v11844 = vrot.slane %v11843, 2
  %v11845 = vmin.f32 %v11843, %v11844
  %v11846 = vrot.slane %v11845, 1
  %v11847 = vmin.f32 %v11845, %v11846
  %v11848 = vsel %vm6672, %v6216, inf
  %v11849 = vsel %vm6672, %v6217, inf
  %v11850 = vmin.f32 %v11848, %v11849
  %v11851 = vsel %vm6672, %v6218, inf
  %v11852 = vmin.f32 %v11850, %v11851
  %v11853 = vsel %vm6672, %v6219, inf
  %v11854 = vmin.f32 %v11852, %v11853
  %v11855 = vsel %vm6672, %v6220, inf
  %v11856 = vmin.f32 %v11854, %v11855
  %v11857 = vsel %vm6672, %v6221, inf
  %v11858 = vmin.f32 %v11856, %v11857
  %v11859 = vsel %vm6672, %v6222, inf
  %v11860 = vmin.f32 %v11858, %v11859
  %v11861 = vsel %vm6672, %v6223, inf
  %v11862 = vmin.f32 %v11860, %v11861
  %v11863 = vrot.slane %v11862, 4
  %v11864 = vmin.f32 %v11862, %v11863
  %v11865 = vrot.slane %v11864, 2
  %v11866 = vmin.f32 %v11864, %v11865
  %v11867 = vrot.slane %v11866, 1
  %v11868 = vmin.f32 %v11866, %v11867
  %v11869 = vsel %vm6672, %v6224, inf
  %v11870 = vsel %vm6672, %v6225, inf
  %v11871 = vmin.f32 %v11869, %v11870
  %v11872 = vsel %vm6672, %v6226, inf
  %v11873 = vmin.f32 %v11871, %v11872
  %v11874 = vsel %vm6672, %v6227, inf
  %v11875 = vmin.f32 %v11873, %v11874
  %v11876 = vsel %vm6672, %v6228, inf
  %v11877 = vmin.f32 %v11875, %v11876
  %v11878 = vsel %vm6672, %v6229, inf
  %v11879 = vmin.f32 %v11877, %v11878
  %v11880 = vsel %vm6672, %v6230, inf
  %v11881 = vmin.f32 %v11879, %v11880
  %v11882 = vsel %vm6672, %v6231, inf
  %v11883 = vmin.f32 %v11881, %v11882
  %v11884 = vrot.slane %v11883, 4
  %v11885 = vmin.f32 %v11883, %v11884
  %v11886 = vrot.slane %v11885, 2
  %v11887 = vmin.f32 %v11885, %v11886
  %v11888 = vrot.slane %v11887, 1
  %v11889 = vmin.f32 %v11887, %v11888
  %v11890 = vsel %vm6672, %v6232, inf
  %v11891 = vsel %vm6672, %v6233, inf
  %v11892 = vmin.f32 %v11890, %v11891
  %v11893 = vsel %vm6672, %v6234, inf
  %v11894 = vmin.f32 %v11892, %v11893
  %v11895 = vsel %vm6672, %v6235, inf
  %v11896 = vmin.f32 %v11894, %v11895
  %v11897 = vsel %vm6672, %v6236, inf
  %v11898 = vmin.f32 %v11896, %v11897
  %v11899 = vsel %vm6672, %v6237, inf
  %v11900 = vmin.f32 %v11898, %v11899
  %v11901 = vsel %vm6672, %v6238, inf
  %v11902 = vmin.f32 %v11900, %v11901
  %v11903 = vsel %vm6672, %v6239, inf
  %v11904 = vmin.f32 %v11902, %v11903
  %v11905 = vrot.slane %v11904, 4
  %v11906 = vmin.f32 %v11904, %v11905
  %v11907 = vrot.slane %v11906, 2
  %v11908 = vmin.f32 %v11906, %v11907
  %v11909 = vrot.slane %v11908, 1
  %v11910 = vmin.f32 %v11908, %v11909
  %v11911 = vsel %vm6672, %v6240, inf
  %v11912 = vsel %vm6672, %v6241, inf
  %v11913 = vmin.f32 %v11911, %v11912
  %v11914 = vsel %vm6672, %v6242, inf
  %v11915 = vmin.f32 %v11913, %v11914
  %v11916 = vsel %vm6672, %v6243, inf
  %v11917 = vmin.f32 %v11915, %v11916
  %v11918 = vsel %vm6672, %v6244, inf
  %v11919 = vmin.f32 %v11917, %v11918
  %v11920 = vsel %vm6672, %v6245, inf
  %v11921 = vmin.f32 %v11919, %v11920
  %v11922 = vsel %vm6672, %v6246, inf
  %v11923 = vmin.f32 %v11921, %v11922
  %v11924 = vsel %vm6672, %v6247, inf
  %v11925 = vmin.f32 %v11923, %v11924
  %v11926 = vrot.slane %v11925, 4
  %v11927 = vmin.f32 %v11925, %v11926
  %v11928 = vrot.slane %v11927, 2
  %v11929 = vmin.f32 %v11927, %v11928
  %v11930 = vrot.slane %v11929, 1
  %v11931 = vmin.f32 %v11929, %v11930
  %v11932 = vsel %vm6672, %v6248, inf
  %v11933 = vsel %vm6672, %v6249, inf
  %v11934 = vmin.f32 %v11932, %v11933
  %v11935 = vsel %vm6672, %v6250, inf
  %v11936 = vmin.f32 %v11934, %v11935
  %v11937 = vsel %vm6672, %v6251, inf
  %v11938 = vmin.f32 %v11936, %v11937
  %v11939 = vsel %vm6672, %v6252, inf
  %v11940 = vmin.f32 %v11938, %v11939
  %v11941 = vsel %vm6672, %v6253, inf
  %v11942 = vmin.f32 %v11940, %v11941
  %v11943 = vsel %vm6672, %v6254, inf
  %v11944 = vmin.f32 %v11942, %v11943
  %v11945 = vsel %vm6672, %v6255, inf
  %v11946 = vmin.f32 %v11944, %v11945
  %v11947 = vrot.slane %v11946, 4
  %v11948 = vmin.f32 %v11946, %v11947
  %v11949 = vrot.slane %v11948, 2
  %v11950 = vmin.f32 %v11948, %v11949
  %v11951 = vrot.slane %v11950, 1
  %v11952 = vmin.f32 %v11950, %v11951
  %v11953 = vsel %vm6672, %v6256, inf
  %v11954 = vsel %vm6672, %v6257, inf
  %v11955 = vmin.f32 %v11953, %v11954
  %v11956 = vsel %vm6672, %v6258, inf
  %v11957 = vmin.f32 %v11955, %v11956
  %v11958 = vsel %vm6672, %v6259, inf
  %v11959 = vmin.f32 %v11957, %v11958
  %v11960 = vsel %vm6672, %v6260, inf
  %v11961 = vmin.f32 %v11959, %v11960
  %v11962 = vsel %vm6672, %v6261, inf
  %v11963 = vmin.f32 %v11961, %v11962
  %v11964 = vsel %vm6672, %v6262, inf
  %v11965 = vmin.f32 %v11963, %v11964
  %v11966 = vsel %vm6672, %v6263, inf
  %v11967 = vmin.f32 %v11965, %v11966
  %v11968 = vrot.slane %v11967, 4
  %v11969 = vmin.f32 %v11967, %v11968
  %v11970 = vrot.slane %v11969, 2
  %v11971 = vmin.f32 %v11969, %v11970
  %v11972 = vrot.slane %v11971, 1
  %v11973 = vmin.f32 %v11971, %v11972
  %v11974 = vsel %vm6672, %v6264, inf
  %v11975 = vsel %vm6672, %v6265, inf
  %v11976 = vmin.f32 %v11974, %v11975
  %v11977 = vsel %vm6672, %v6266, inf
  %v11978 = vmin.f32 %v11976, %v11977
  %v11979 = vsel %vm6672, %v6267, inf
  %v11980 = vmin.f32 %v11978, %v11979
  %v11981 = vsel %vm6672, %v6268, inf
  %v11982 = vmin.f32 %v11980, %v11981
  %v11983 = vsel %vm6672, %v6269, inf
  %v11984 = vmin.f32 %v11982, %v11983
  %v11985 = vsel %vm6672, %v6270, inf
  %v11986 = vmin.f32 %v11984, %v11985
  %v11987 = vsel %vm6672, %v6271, inf
  %v11988 = vmin.f32 %v11986, %v11987
  %v11989 = vrot.slane %v11988, 4
  %v11990 = vmin.f32 %v11988, %v11989
  %v11991 = vrot.slane %v11990, 2
  %v11992 = vmin.f32 %v11990, %v11991
  %v11993 = vrot.slane %v11992, 1
  %v11994 = vmin.f32 %v11992, %v11993
  %v11995 = vsel %vm6672, %v6272, inf
  %v11996 = vsel %vm6672, %v6273, inf
  %v11997 = vmin.f32 %v11995, %v11996
  %v11998 = vsel %vm6672, %v6274, inf
  %v11999 = vmin.f32 %v11997, %v11998
  %v12000 = vsel %vm6672, %v6275, inf
  %v12001 = vmin.f32 %v11999, %v12000
  %v12002 = vsel %vm6672, %v6276, inf
  %v12003 = vmin.f32 %v12001, %v12002
  %v12004 = vsel %vm6672, %v6277, inf
  %v12005 = vmin.f32 %v12003, %v12004
  %v12006 = vsel %vm6672, %v6278, inf
  %v12007 = vmin.f32 %v12005, %v12006
  %v12008 = vsel %vm6672, %v6279, inf
  %v12009 = vmin.f32 %v12007, %v12008
  %v12010 = vrot.slane %v12009, 4
  %v12011 = vmin.f32 %v12009, %v12010
  %v12012 = vrot.slane %v12011, 2
  %v12013 = vmin.f32 %v12011, %v12012
  %v12014 = vrot.slane %v12013, 1
  %v12015 = vmin.f32 %v12013, %v12014
  %v12016 = vsel %vm6672, %v6280, inf
  %v12017 = vsel %vm6672, %v6281, inf
  %v12018 = vmin.f32 %v12016, %v12017
  %v12019 = vsel %vm6672, %v6282, inf
  %v12020 = vmin.f32 %v12018, %v12019
  %v12021 = vsel %vm6672, %v6283, inf
  %v12022 = vmin.f32 %v12020, %v12021
  %v12023 = vsel %vm6672, %v6284, inf
  %v12024 = vmin.f32 %v12022, %v12023
  %v12025 = vsel %vm6672, %v6285, inf
  %v12026 = vmin.f32 %v12024, %v12025
  %v12027 = vsel %vm6672, %v6286, inf
  %v12028 = vmin.f32 %v12026, %v12027
  %v12029 = vsel %vm6672, %v6287, inf
  %v12030 = vmin.f32 %v12028, %v12029
  %v12031 = vrot.slane %v12030, 4
  %v12032 = vmin.f32 %v12030, %v12031
  %v12033 = vrot.slane %v12032, 2
  %v12034 = vmin.f32 %v12032, %v12033
  %v12035 = vrot.slane %v12034, 1
  %v12036 = vmin.f32 %v12034, %v12035
  %v12037 = vsel %vm6672, %v6288, inf
  %v12038 = vsel %vm6672, %v6289, inf
  %v12039 = vmin.f32 %v12037, %v12038
  %v12040 = vsel %vm6672, %v6290, inf
  %v12041 = vmin.f32 %v12039, %v12040
  %v12042 = vsel %vm6672, %v6291, inf
  %v12043 = vmin.f32 %v12041, %v12042
  %v12044 = vsel %vm6672, %v6292, inf
  %v12045 = vmin.f32 %v12043, %v12044
  %v12046 = vsel %vm6672, %v6293, inf
  %v12047 = vmin.f32 %v12045, %v12046
  %v12048 = vsel %vm6672, %v6294, inf
  %v12049 = vmin.f32 %v12047, %v12048
  %v12050 = vsel %vm6672, %v6295, inf
  %v12051 = vmin.f32 %v12049, %v12050
  %v12052 = vrot.slane %v12051, 4
  %v12053 = vmin.f32 %v12051, %v12052
  %v12054 = vrot.slane %v12053, 2
  %v12055 = vmin.f32 %v12053, %v12054
  %v12056 = vrot.slane %v12055, 1
  %v12057 = vmin.f32 %v12055, %v12056
  %v12058 = vsel %vm6672, %v6296, inf
  %v12059 = vsel %vm6672, %v6297, inf
  %v12060 = vmin.f32 %v12058, %v12059
  %v12061 = vsel %vm6672, %v6298, inf
  %v12062 = vmin.f32 %v12060, %v12061
  %v12063 = vsel %vm6672, %v6299, inf
  %v12064 = vmin.f32 %v12062, %v12063
  %v12065 = vsel %vm6672, %v6300, inf
  %v12066 = vmin.f32 %v12064, %v12065
  %v12067 = vsel %vm6672, %v6301, inf
  %v12068 = vmin.f32 %v12066, %v12067
  %v12069 = vsel %vm6672, %v6302, inf
  %v12070 = vmin.f32 %v12068, %v12069
  %v12071 = vsel %vm6672, %v6303, inf
  %v12072 = vmin.f32 %v12070, %v12071
  %v12073 = vrot.slane %v12072, 4
  %v12074 = vmin.f32 %v12072, %v12073
  %v12075 = vrot.slane %v12074, 2
  %v12076 = vmin.f32 %v12074, %v12075
  %v12077 = vrot.slane %v12076, 1
  %v12078 = vmin.f32 %v12076, %v12077
  %v12079 = vsel %vm6672, %v6304, inf
  %v12080 = vsel %vm6672, %v6305, inf
  %v12081 = vmin.f32 %v12079, %v12080
  %v12082 = vsel %vm6672, %v6306, inf
  %v12083 = vmin.f32 %v12081, %v12082
  %v12084 = vsel %vm6672, %v6307, inf
  %v12085 = vmin.f32 %v12083, %v12084
  %v12086 = vsel %vm6672, %v6308, inf
  %v12087 = vmin.f32 %v12085, %v12086
  %v12088 = vsel %vm6672, %v6309, inf
  %v12089 = vmin.f32 %v12087, %v12088
  %v12090 = vsel %vm6672, %v6310, inf
  %v12091 = vmin.f32 %v12089, %v12090
  %v12092 = vsel %vm6672, %v6311, inf
  %v12093 = vmin.f32 %v12091, %v12092
  %v12094 = vrot.slane %v12093, 4
  %v12095 = vmin.f32 %v12093, %v12094
  %v12096 = vrot.slane %v12095, 2
  %v12097 = vmin.f32 %v12095, %v12096
  %v12098 = vrot.slane %v12097, 1
  %v12099 = vmin.f32 %v12097, %v12098
  %v12100 = vsel %vm6672, %v6312, inf
  %v12101 = vsel %vm6672, %v6313, inf
  %v12102 = vmin.f32 %v12100, %v12101
  %v12103 = vsel %vm6672, %v6314, inf
  %v12104 = vmin.f32 %v12102, %v12103
  %v12105 = vsel %vm6672, %v6315, inf
  %v12106 = vmin.f32 %v12104, %v12105
  %v12107 = vsel %vm6672, %v6316, inf
  %v12108 = vmin.f32 %v12106, %v12107
  %v12109 = vsel %vm6672, %v6317, inf
  %v12110 = vmin.f32 %v12108, %v12109
  %v12111 = vsel %vm6672, %v6318, inf
  %v12112 = vmin.f32 %v12110, %v12111
  %v12113 = vsel %vm6672, %v6319, inf
  %v12114 = vmin.f32 %v12112, %v12113
  %v12115 = vrot.slane %v12114, 4
  %v12116 = vmin.f32 %v12114, %v12115
  %v12117 = vrot.slane %v12116, 2
  %v12118 = vmin.f32 %v12116, %v12117
  %v12119 = vrot.slane %v12118, 1
  %v12120 = vmin.f32 %v12118, %v12119
  %v12121 = vsel %vm6672, %v6320, inf
  %v12122 = vsel %vm6672, %v6321, inf
  %v12123 = vmin.f32 %v12121, %v12122
  %v12124 = vsel %vm6672, %v6322, inf
  %v12125 = vmin.f32 %v12123, %v12124
  %v12126 = vsel %vm6672, %v6323, inf
  %v12127 = vmin.f32 %v12125, %v12126
  %v12128 = vsel %vm6672, %v6324, inf
  %v12129 = vmin.f32 %v12127, %v12128
  %v12130 = vsel %vm6672, %v6325, inf
  %v12131 = vmin.f32 %v12129, %v12130
  %v12132 = vsel %vm6672, %v6326, inf
  %v12133 = vmin.f32 %v12131, %v12132
  %v12134 = vsel %vm6672, %v6327, inf
  %v12135 = vmin.f32 %v12133, %v12134
  %v12136 = vrot.slane %v12135, 4
  %v12137 = vmin.f32 %v12135, %v12136
  %v12138 = vrot.slane %v12137, 2
  %v12139 = vmin.f32 %v12137, %v12138
  %v12140 = vrot.slane %v12139, 1
  %v12141 = vmin.f32 %v12139, %v12140
  %v12142 = vsel %vm6672, %v6328, inf
  %v12143 = vsel %vm6672, %v6329, inf
  %v12144 = vmin.f32 %v12142, %v12143
  %v12145 = vsel %vm6672, %v6330, inf
  %v12146 = vmin.f32 %v12144, %v12145
  %v12147 = vsel %vm6672, %v6331, inf
  %v12148 = vmin.f32 %v12146, %v12147
  %v12149 = vsel %vm6672, %v6332, inf
  %v12150 = vmin.f32 %v12148, %v12149
  %v12151 = vsel %vm6672, %v6333, inf
  %v12152 = vmin.f32 %v12150, %v12151
  %v12153 = vsel %vm6672, %v6334, inf
  %v12154 = vmin.f32 %v12152, %v12153
  %v12155 = vsel %vm6672, %v6335, inf
  %v12156 = vmin.f32 %v12154, %v12155
  %v12157 = vrot.slane %v12156, 4
  %v12158 = vmin.f32 %v12156, %v12157
  %v12159 = vrot.slane %v12158, 2
  %v12160 = vmin.f32 %v12158, %v12159
  %v12161 = vrot.slane %v12160, 1
  %v12162 = vmin.f32 %v12160, %v12161
  %v12163 = vsel %vm6672, %v6336, inf
  %v12164 = vsel %vm6672, %v6337, inf
  %v12165 = vmin.f32 %v12163, %v12164
  %v12166 = vsel %vm6672, %v6338, inf
  %v12167 = vmin.f32 %v12165, %v12166
  %v12168 = vsel %vm6672, %v6339, inf
  %v12169 = vmin.f32 %v12167, %v12168
  %v12170 = vsel %vm6672, %v6340, inf
  %v12171 = vmin.f32 %v12169, %v12170
  %v12172 = vsel %vm6672, %v6341, inf
  %v12173 = vmin.f32 %v12171, %v12172
  %v12174 = vsel %vm6672, %v6342, inf
  %v12175 = vmin.f32 %v12173, %v12174
  %v12176 = vsel %vm6672, %v6343, inf
  %v12177 = vmin.f32 %v12175, %v12176
  %v12178 = vrot.slane %v12177, 4
  %v12179 = vmin.f32 %v12177, %v12178
  %v12180 = vrot.slane %v12179, 2
  %v12181 = vmin.f32 %v12179, %v12180
  %v12182 = vrot.slane %v12181, 1
  %v12183 = vmin.f32 %v12181, %v12182
  %v12184 = vsel %vm6672, %v6344, inf
  %v12185 = vsel %vm6672, %v6345, inf
  %v12186 = vmin.f32 %v12184, %v12185
  %v12187 = vsel %vm6672, %v6346, inf
  %v12188 = vmin.f32 %v12186, %v12187
  %v12189 = vsel %vm6672, %v6347, inf
  %v12190 = vmin.f32 %v12188, %v12189
  %v12191 = vsel %vm6672, %v6348, inf
  %v12192 = vmin.f32 %v12190, %v12191
  %v12193 = vsel %vm6672, %v6349, inf
  %v12194 = vmin.f32 %v12192, %v12193
  %v12195 = vsel %vm6672, %v6350, inf
  %v12196 = vmin.f32 %v12194, %v12195
  %v12197 = vsel %vm6672, %v6351, inf
  %v12198 = vmin.f32 %v12196, %v12197
  %v12199 = vrot.slane %v12198, 4
  %v12200 = vmin.f32 %v12198, %v12199
  %v12201 = vrot.slane %v12200, 2
  %v12202 = vmin.f32 %v12200, %v12201
  %v12203 = vrot.slane %v12202, 1
  %v12204 = vmin.f32 %v12202, %v12203
  %v12205 = vsel %vm6672, %v6352, inf
  %v12206 = vsel %vm6672, %v6353, inf
  %v12207 = vmin.f32 %v12205, %v12206
  %v12208 = vsel %vm6672, %v6354, inf
  %v12209 = vmin.f32 %v12207, %v12208
  %v12210 = vsel %vm6672, %v6355, inf
  %v12211 = vmin.f32 %v12209, %v12210
  %v12212 = vsel %vm6672, %v6356, inf
  %v12213 = vmin.f32 %v12211, %v12212
  %v12214 = vsel %vm6672, %v6357, inf
  %v12215 = vmin.f32 %v12213, %v12214
  %v12216 = vsel %vm6672, %v6358, inf
  %v12217 = vmin.f32 %v12215, %v12216
  %v12218 = vsel %vm6672, %v6359, inf
  %v12219 = vmin.f32 %v12217, %v12218
  %v12220 = vrot.slane %v12219, 4
  %v12221 = vmin.f32 %v12219, %v12220
  %v12222 = vrot.slane %v12221, 2
  %v12223 = vmin.f32 %v12221, %v12222
  %v12224 = vrot.slane %v12223, 1
  %v12225 = vmin.f32 %v12223, %v12224
  %v12226 = vsel %vm6672, %v6360, inf
  %v12227 = vsel %vm6672, %v6361, inf
  %v12228 = vmin.f32 %v12226, %v12227
  %v12229 = vsel %vm6672, %v6362, inf
  %v12230 = vmin.f32 %v12228, %v12229
  %v12231 = vsel %vm6672, %v6363, inf
  %v12232 = vmin.f32 %v12230, %v12231
  %v12233 = vsel %vm6672, %v6364, inf
  %v12234 = vmin.f32 %v12232, %v12233
  %v12235 = vsel %vm6672, %v6365, inf
  %v12236 = vmin.f32 %v12234, %v12235
  %v12237 = vsel %vm6672, %v6366, inf
  %v12238 = vmin.f32 %v12236, %v12237
  %v12239 = vsel %vm6672, %v6367, inf
  %v12240 = vmin.f32 %v12238, %v12239
  %v12241 = vrot.slane %v12240, 4
  %v12242 = vmin.f32 %v12240, %v12241
  %v12243 = vrot.slane %v12242, 2
  %v12244 = vmin.f32 %v12242, %v12243
  %v12245 = vrot.slane %v12244, 1
  %v12246 = vmin.f32 %v12244, %v12245
  %v12247 = vsel %vm6672, %v6368, inf
  %v12248 = vsel %vm6672, %v6369, inf
  %v12249 = vmin.f32 %v12247, %v12248
  %v12250 = vsel %vm6672, %v6370, inf
  %v12251 = vmin.f32 %v12249, %v12250
  %v12252 = vsel %vm6672, %v6371, inf
  %v12253 = vmin.f32 %v12251, %v12252
  %v12254 = vsel %vm6672, %v6372, inf
  %v12255 = vmin.f32 %v12253, %v12254
  %v12256 = vsel %vm6672, %v6373, inf
  %v12257 = vmin.f32 %v12255, %v12256
  %v12258 = vsel %vm6672, %v6374, inf
  %v12259 = vmin.f32 %v12257, %v12258
  %v12260 = vsel %vm6672, %v6375, inf
  %v12261 = vmin.f32 %v12259, %v12260
  %v12262 = vrot.slane %v12261, 4
  %v12263 = vmin.f32 %v12261, %v12262
  %v12264 = vrot.slane %v12263, 2
  %v12265 = vmin.f32 %v12263, %v12264
  %v12266 = vrot.slane %v12265, 1
  %v12267 = vmin.f32 %v12265, %v12266
  %v12268 = vsel %vm6672, %v6376, inf
  %v12269 = vsel %vm6672, %v6377, inf
  %v12270 = vmin.f32 %v12268, %v12269
  %v12271 = vsel %vm6672, %v6378, inf
  %v12272 = vmin.f32 %v12270, %v12271
  %v12273 = vsel %vm6672, %v6379, inf
  %v12274 = vmin.f32 %v12272, %v12273
  %v12275 = vsel %vm6672, %v6380, inf
  %v12276 = vmin.f32 %v12274, %v12275
  %v12277 = vsel %vm6672, %v6381, inf
  %v12278 = vmin.f32 %v12276, %v12277
  %v12279 = vsel %vm6672, %v6382, inf
  %v12280 = vmin.f32 %v12278, %v12279
  %v12281 = vsel %vm6672, %v6383, inf
  %v12282 = vmin.f32 %v12280, %v12281
  %v12283 = vrot.slane %v12282, 4
  %v12284 = vmin.f32 %v12282, %v12283
  %v12285 = vrot.slane %v12284, 2
  %v12286 = vmin.f32 %v12284, %v12285
  %v12287 = vrot.slane %v12286, 1
  %v12288 = vmin.f32 %v12286, %v12287
  %v12289 = vsel %vm6672, %v6384, inf
  %v12290 = vsel %vm6672, %v6385, inf
  %v12291 = vmin.f32 %v12289, %v12290
  %v12292 = vsel %vm6672, %v6386, inf
  %v12293 = vmin.f32 %v12291, %v12292
  %v12294 = vsel %vm6672, %v6387, inf
  %v12295 = vmin.f32 %v12293, %v12294
  %v12296 = vsel %vm6672, %v6388, inf
  %v12297 = vmin.f32 %v12295, %v12296
  %v12298 = vsel %vm6672, %v6389, inf
  %v12299 = vmin.f32 %v12297, %v12298
  %v12300 = vsel %vm6672, %v6390, inf
  %v12301 = vmin.f32 %v12299, %v12300
  %v12302 = vsel %vm6672, %v6391, inf
  %v12303 = vmin.f32 %v12301, %v12302
  %v12304 = vrot.slane %v12303, 4
  %v12305 = vmin.f32 %v12303, %v12304
  %v12306 = vrot.slane %v12305, 2
  %v12307 = vmin.f32 %v12305, %v12306
  %v12308 = vrot.slane %v12307, 1
  %v12309 = vmin.f32 %v12307, %v12308
  %v12310 = vsel %vm6672, %v6392, inf
  %v12311 = vsel %vm6672, %v6393, inf
  %v12312 = vmin.f32 %v12310, %v12311
  %v12313 = vsel %vm6672, %v6394, inf
  %v12314 = vmin.f32 %v12312, %v12313
  %v12315 = vsel %vm6672, %v6395, inf
  %v12316 = vmin.f32 %v12314, %v12315
  %v12317 = vsel %vm6672, %v6396, inf
  %v12318 = vmin.f32 %v12316, %v12317
  %v12319 = vsel %vm6672, %v6397, inf
  %v12320 = vmin.f32 %v12318, %v12319
  %v12321 = vsel %vm6672, %v6398, inf
  %v12322 = vmin.f32 %v12320, %v12321
  %v12323 = vsel %vm6672, %v6399, inf
  %v12324 = vmin.f32 %v12322, %v12323
  %v12325 = vrot.slane %v12324, 4
  %v12326 = vmin.f32 %v12324, %v12325
  %v12327 = vrot.slane %v12326, 2
  %v12328 = vmin.f32 %v12326, %v12327
  %v12329 = vrot.slane %v12328, 1
  %v12330 = vmin.f32 %v12328, %v12329
  %v12331 = vsel %vm6672, %v6400, inf
  %v12332 = vsel %vm6672, %v6401, inf
  %v12333 = vmin.f32 %v12331, %v12332
  %v12334 = vsel %vm6672, %v6402, inf
  %v12335 = vmin.f32 %v12333, %v12334
  %v12336 = vsel %vm6672, %v6403, inf
  %v12337 = vmin.f32 %v12335, %v12336
  %v12338 = vsel %vm6672, %v6404, inf
  %v12339 = vmin.f32 %v12337, %v12338
  %v12340 = vsel %vm6672, %v6405, inf
  %v12341 = vmin.f32 %v12339, %v12340
  %v12342 = vsel %vm6672, %v6406, inf
  %v12343 = vmin.f32 %v12341, %v12342
  %v12344 = vsel %vm6672, %v6407, inf
  %v12345 = vmin.f32 %v12343, %v12344
  %v12346 = vrot.slane %v12345, 4
  %v12347 = vmin.f32 %v12345, %v12346
  %v12348 = vrot.slane %v12347, 2
  %v12349 = vmin.f32 %v12347, %v12348
  %v12350 = vrot.slane %v12349, 1
  %v12351 = vmin.f32 %v12349, %v12350
  %v12352 = vsel %vm6672, %v6408, inf
  %v12353 = vsel %vm6672, %v6409, inf
  %v12354 = vmin.f32 %v12352, %v12353
  %v12355 = vsel %vm6672, %v6410, inf
  %v12356 = vmin.f32 %v12354, %v12355
  %v12357 = vsel %vm6672, %v6411, inf
  %v12358 = vmin.f32 %v12356, %v12357
  %v12359 = vsel %vm6672, %v6412, inf
  %v12360 = vmin.f32 %v12358, %v12359
  %v12361 = vsel %vm6672, %v6413, inf
  %v12362 = vmin.f32 %v12360, %v12361
  %v12363 = vsel %vm6672, %v6414, inf
  %v12364 = vmin.f32 %v12362, %v12363
  %v12365 = vsel %vm6672, %v6415, inf
  %v12366 = vmin.f32 %v12364, %v12365
  %v12367 = vrot.slane %v12366, 4
  %v12368 = vmin.f32 %v12366, %v12367
  %v12369 = vrot.slane %v12368, 2
  %v12370 = vmin.f32 %v12368, %v12369
  %v12371 = vrot.slane %v12370, 1
  %v12372 = vmin.f32 %v12370, %v12371
  %v12373 = vsel %vm6672, %v6416, inf
  %v12374 = vsel %vm6672, %v6417, inf
  %v12375 = vmin.f32 %v12373, %v12374
  %v12376 = vsel %vm6672, %v6418, inf
  %v12377 = vmin.f32 %v12375, %v12376
  %v12378 = vsel %vm6672, %v6419, inf
  %v12379 = vmin.f32 %v12377, %v12378
  %v12380 = vsel %vm6672, %v6420, inf
  %v12381 = vmin.f32 %v12379, %v12380
  %v12382 = vsel %vm6672, %v6421, inf
  %v12383 = vmin.f32 %v12381, %v12382
  %v12384 = vsel %vm6672, %v6422, inf
  %v12385 = vmin.f32 %v12383, %v12384
  %v12386 = vsel %vm6672, %v6423, inf
  %v12387 = vmin.f32 %v12385, %v12386
  %v12388 = vrot.slane %v12387, 4
  %v12389 = vmin.f32 %v12387, %v12388
  %v12390 = vrot.slane %v12389, 2
  %v12391 = vmin.f32 %v12389, %v12390
  %v12392 = vrot.slane %v12391, 1
  %v12393 = vmin.f32 %v12391, %v12392
  %v12394 = vsel %vm6672, %v6424, inf
  %v12395 = vsel %vm6672, %v6425, inf
  %v12396 = vmin.f32 %v12394, %v12395
  %v12397 = vsel %vm6672, %v6426, inf
  %v12398 = vmin.f32 %v12396, %v12397
  %v12399 = vsel %vm6672, %v6427, inf
  %v12400 = vmin.f32 %v12398, %v12399
  %v12401 = vsel %vm6672, %v6428, inf
  %v12402 = vmin.f32 %v12400, %v12401
  %v12403 = vsel %vm6672, %v6429, inf
  %v12404 = vmin.f32 %v12402, %v12403
  %v12405 = vsel %vm6672, %v6430, inf
  %v12406 = vmin.f32 %v12404, %v12405
  %v12407 = vsel %vm6672, %v6431, inf
  %v12408 = vmin.f32 %v12406, %v12407
  %v12409 = vrot.slane %v12408, 4
  %v12410 = vmin.f32 %v12408, %v12409
  %v12411 = vrot.slane %v12410, 2
  %v12412 = vmin.f32 %v12410, %v12411
  %v12413 = vrot.slane %v12412, 1
  %v12414 = vmin.f32 %v12412, %v12413
  %v12415 = vsel %vm6672, %v6432, inf
  %v12416 = vsel %vm6672, %v6433, inf
  %v12417 = vmin.f32 %v12415, %v12416
  %v12418 = vsel %vm6672, %v6434, inf
  %v12419 = vmin.f32 %v12417, %v12418
  %v12420 = vsel %vm6672, %v6435, inf
  %v12421 = vmin.f32 %v12419, %v12420
  %v12422 = vsel %vm6672, %v6436, inf
  %v12423 = vmin.f32 %v12421, %v12422
  %v12424 = vsel %vm6672, %v6437, inf
  %v12425 = vmin.f32 %v12423, %v12424
  %v12426 = vsel %vm6672, %v6438, inf
  %v12427 = vmin.f32 %v12425, %v12426
  %v12428 = vsel %vm6672, %v6439, inf
  %v12429 = vmin.f32 %v12427, %v12428
  %v12430 = vrot.slane %v12429, 4
  %v12431 = vmin.f32 %v12429, %v12430
  %v12432 = vrot.slane %v12431, 2
  %v12433 = vmin.f32 %v12431, %v12432
  %v12434 = vrot.slane %v12433, 1
  %v12435 = vmin.f32 %v12433, %v12434
  %v12436 = vsel %vm6672, %v6440, inf
  %v12437 = vsel %vm6672, %v6441, inf
  %v12438 = vmin.f32 %v12436, %v12437
  %v12439 = vsel %vm6672, %v6442, inf
  %v12440 = vmin.f32 %v12438, %v12439
  %v12441 = vsel %vm6672, %v6443, inf
  %v12442 = vmin.f32 %v12440, %v12441
  %v12443 = vsel %vm6672, %v6444, inf
  %v12444 = vmin.f32 %v12442, %v12443
  %v12445 = vsel %vm6672, %v6445, inf
  %v12446 = vmin.f32 %v12444, %v12445
  %v12447 = vsel %vm6672, %v6446, inf
  %v12448 = vmin.f32 %v12446, %v12447
  %v12449 = vsel %vm6672, %v6447, inf
  %v12450 = vmin.f32 %v12448, %v12449
  %v12451 = vrot.slane %v12450, 4
  %v12452 = vmin.f32 %v12450, %v12451
  %v12453 = vrot.slane %v12452, 2
  %v12454 = vmin.f32 %v12452, %v12453
  %v12455 = vrot.slane %v12454, 1
  %v12456 = vmin.f32 %v12454, %v12455
  %v12457 = vsel %vm6672, %v6448, inf
  %v12458 = vsel %vm6672, %v6449, inf
  %v12459 = vmin.f32 %v12457, %v12458
  %v12460 = vsel %vm6672, %v6450, inf
  %v12461 = vmin.f32 %v12459, %v12460
  %v12462 = vsel %vm6672, %v6451, inf
  %v12463 = vmin.f32 %v12461, %v12462
  %v12464 = vsel %vm6672, %v6452, inf
  %v12465 = vmin.f32 %v12463, %v12464
  %v12466 = vsel %vm6672, %v6453, inf
  %v12467 = vmin.f32 %v12465, %v12466
  %v12468 = vsel %vm6672, %v6454, inf
  %v12469 = vmin.f32 %v12467, %v12468
  %v12470 = vsel %vm6672, %v6455, inf
  %v12471 = vmin.f32 %v12469, %v12470
  %v12472 = vrot.slane %v12471, 4
  %v12473 = vmin.f32 %v12471, %v12472
  %v12474 = vrot.slane %v12473, 2
  %v12475 = vmin.f32 %v12473, %v12474
  %v12476 = vrot.slane %v12475, 1
  %v12477 = vmin.f32 %v12475, %v12476
  %v12478 = vsel %vm6672, %v6456, inf
  %v12479 = vsel %vm6672, %v6457, inf
  %v12480 = vmin.f32 %v12478, %v12479
  %v12481 = vsel %vm6672, %v6458, inf
  %v12482 = vmin.f32 %v12480, %v12481
  %v12483 = vsel %vm6672, %v6459, inf
  %v12484 = vmin.f32 %v12482, %v12483
  %v12485 = vsel %vm6672, %v6460, inf
  %v12486 = vmin.f32 %v12484, %v12485
  %v12487 = vsel %vm6672, %v6461, inf
  %v12488 = vmin.f32 %v12486, %v12487
  %v12489 = vsel %vm6672, %v6462, inf
  %v12490 = vmin.f32 %v12488, %v12489
  %v12491 = vsel %vm6672, %v6463, inf
  %v12492 = vmin.f32 %v12490, %v12491
  %v12493 = vrot.slane %v12492, 4
  %v12494 = vmin.f32 %v12492, %v12493
  %v12495 = vrot.slane %v12494, 2
  %v12496 = vmin.f32 %v12494, %v12495
  %v12497 = vrot.slane %v12496, 1
  %v12498 = vmin.f32 %v12496, %v12497
  %v12499 = vsel %vm6672, %v6464, inf
  %v12500 = vsel %vm6672, %v6465, inf
  %v12501 = vmin.f32 %v12499, %v12500
  %v12502 = vsel %vm6672, %v6466, inf
  %v12503 = vmin.f32 %v12501, %v12502
  %v12504 = vsel %vm6672, %v6467, inf
  %v12505 = vmin.f32 %v12503, %v12504
  %v12506 = vsel %vm6672, %v6468, inf
  %v12507 = vmin.f32 %v12505, %v12506
  %v12508 = vsel %vm6672, %v6469, inf
  %v12509 = vmin.f32 %v12507, %v12508
  %v12510 = vsel %vm6672, %v6470, inf
  %v12511 = vmin.f32 %v12509, %v12510
  %v12512 = vsel %vm6672, %v6471, inf
  %v12513 = vmin.f32 %v12511, %v12512
  %v12514 = vrot.slane %v12513, 4
  %v12515 = vmin.f32 %v12513, %v12514
  %v12516 = vrot.slane %v12515, 2
  %v12517 = vmin.f32 %v12515, %v12516
  %v12518 = vrot.slane %v12517, 1
  %v12519 = vmin.f32 %v12517, %v12518
  %v12520 = vsel %vm6672, %v6472, inf
  %v12521 = vsel %vm6672, %v6473, inf
  %v12522 = vmin.f32 %v12520, %v12521
  %v12523 = vsel %vm6672, %v6474, inf
  %v12524 = vmin.f32 %v12522, %v12523
  %v12525 = vsel %vm6672, %v6475, inf
  %v12526 = vmin.f32 %v12524, %v12525
  %v12527 = vsel %vm6672, %v6476, inf
  %v12528 = vmin.f32 %v12526, %v12527
  %v12529 = vsel %vm6672, %v6477, inf
  %v12530 = vmin.f32 %v12528, %v12529
  %v12531 = vsel %vm6672, %v6478, inf
  %v12532 = vmin.f32 %v12530, %v12531
  %v12533 = vsel %vm6672, %v6479, inf
  %v12534 = vmin.f32 %v12532, %v12533
  %v12535 = vrot.slane %v12534, 4
  %v12536 = vmin.f32 %v12534, %v12535
  %v12537 = vrot.slane %v12536, 2
  %v12538 = vmin.f32 %v12536, %v12537
  %v12539 = vrot.slane %v12538, 1
  %v12540 = vmin.f32 %v12538, %v12539
  %v12541 = vsel %vm6672, %v6480, inf
  %v12542 = vsel %vm6672, %v6481, inf
  %v12543 = vmin.f32 %v12541, %v12542
  %v12544 = vsel %vm6672, %v6482, inf
  %v12545 = vmin.f32 %v12543, %v12544
  %v12546 = vsel %vm6672, %v6483, inf
  %v12547 = vmin.f32 %v12545, %v12546
  %v12548 = vsel %vm6672, %v6484, inf
  %v12549 = vmin.f32 %v12547, %v12548
  %v12550 = vsel %vm6672, %v6485, inf
  %v12551 = vmin.f32 %v12549, %v12550
  %v12552 = vsel %vm6672, %v6486, inf
  %v12553 = vmin.f32 %v12551, %v12552
  %v12554 = vsel %vm6672, %v6487, inf
  %v12555 = vmin.f32 %v12553, %v12554
  %v12556 = vrot.slane %v12555, 4
  %v12557 = vmin.f32 %v12555, %v12556
  %v12558 = vrot.slane %v12557, 2
  %v12559 = vmin.f32 %v12557, %v12558
  %v12560 = vrot.slane %v12559, 1
  %v12561 = vmin.f32 %v12559, %v12560
  %v12562 = vsel %vm6672, %v6488, inf
  %v12563 = vsel %vm6672, %v6489, inf
  %v12564 = vmin.f32 %v12562, %v12563
  %v12565 = vsel %vm6672, %v6490, inf
  %v12566 = vmin.f32 %v12564, %v12565
  %v12567 = vsel %vm6672, %v6491, inf
  %v12568 = vmin.f32 %v12566, %v12567
  %v12569 = vsel %vm6672, %v6492, inf
  %v12570 = vmin.f32 %v12568, %v12569
  %v12571 = vsel %vm6672, %v6493, inf
  %v12572 = vmin.f32 %v12570, %v12571
  %v12573 = vsel %vm6672, %v6494, inf
  %v12574 = vmin.f32 %v12572, %v12573
  %v12575 = vsel %vm6672, %v6495, inf
  %v12576 = vmin.f32 %v12574, %v12575
  %v12577 = vrot.slane %v12576, 4
  %v12578 = vmin.f32 %v12576, %v12577
  %v12579 = vrot.slane %v12578, 2
  %v12580 = vmin.f32 %v12578, %v12579
  %v12581 = vrot.slane %v12580, 1
  %v12582 = vmin.f32 %v12580, %v12581
  %v12583 = vsel %vm6672, %v6496, inf
  %v12584 = vsel %vm6672, %v6497, inf
  %v12585 = vmin.f32 %v12583, %v12584
  %v12586 = vsel %vm6672, %v6498, inf
  %v12587 = vmin.f32 %v12585, %v12586
  %v12588 = vsel %vm6672, %v6499, inf
  %v12589 = vmin.f32 %v12587, %v12588
  %v12590 = vsel %vm6672, %v6500, inf
  %v12591 = vmin.f32 %v12589, %v12590
  %v12592 = vsel %vm6672, %v6501, inf
  %v12593 = vmin.f32 %v12591, %v12592
  %v12594 = vsel %vm6672, %v6502, inf
  %v12595 = vmin.f32 %v12593, %v12594
  %v12596 = vsel %vm6672, %v6503, inf
  %v12597 = vmin.f32 %v12595, %v12596
  %v12598 = vrot.slane %v12597, 4
  %v12599 = vmin.f32 %v12597, %v12598
  %v12600 = vrot.slane %v12599, 2
  %v12601 = vmin.f32 %v12599, %v12600
  %v12602 = vrot.slane %v12601, 1
  %v12603 = vmin.f32 %v12601, %v12602
  %v12604 = vsel %vm6672, %v6504, inf
  %v12605 = vsel %vm6672, %v6505, inf
  %v12606 = vmin.f32 %v12604, %v12605
  %v12607 = vsel %vm6672, %v6506, inf
  %v12608 = vmin.f32 %v12606, %v12607
  %v12609 = vsel %vm6672, %v6507, inf
  %v12610 = vmin.f32 %v12608, %v12609
  %v12611 = vsel %vm6672, %v6508, inf
  %v12612 = vmin.f32 %v12610, %v12611
  %v12613 = vsel %vm6672, %v6509, inf
  %v12614 = vmin.f32 %v12612, %v12613
  %v12615 = vsel %vm6672, %v6510, inf
  %v12616 = vmin.f32 %v12614, %v12615
  %v12617 = vsel %vm6672, %v6511, inf
  %v12618 = vmin.f32 %v12616, %v12617
  %v12619 = vrot.slane %v12618, 4
  %v12620 = vmin.f32 %v12618, %v12619
  %v12621 = vrot.slane %v12620, 2
  %v12622 = vmin.f32 %v12620, %v12621
  %v12623 = vrot.slane %v12622, 1
  %v12624 = vmin.f32 %v12622, %v12623
  %v12625 = vsel %vm6672, %v6512, inf
  %v12626 = vsel %vm6672, %v6513, inf
  %v12627 = vmin.f32 %v12625, %v12626
  %v12628 = vsel %vm6672, %v6514, inf
  %v12629 = vmin.f32 %v12627, %v12628
  %v12630 = vsel %vm6672, %v6515, inf
  %v12631 = vmin.f32 %v12629, %v12630
  %v12632 = vsel %vm6672, %v6516, inf
  %v12633 = vmin.f32 %v12631, %v12632
  %v12634 = vsel %vm6672, %v6517, inf
  %v12635 = vmin.f32 %v12633, %v12634
  %v12636 = vsel %vm6672, %v6518, inf
  %v12637 = vmin.f32 %v12635, %v12636
  %v12638 = vsel %vm6672, %v6519, inf
  %v12639 = vmin.f32 %v12637, %v12638
  %v12640 = vrot.slane %v12639, 4
  %v12641 = vmin.f32 %v12639, %v12640
  %v12642 = vrot.slane %v12641, 2
  %v12643 = vmin.f32 %v12641, %v12642
  %v12644 = vrot.slane %v12643, 1
  %v12645 = vmin.f32 %v12643, %v12644
  %v12646 = vsel %vm6672, %v6520, inf
  %v12647 = vsel %vm6672, %v6521, inf
  %v12648 = vmin.f32 %v12646, %v12647
  %v12649 = vsel %vm6672, %v6522, inf
  %v12650 = vmin.f32 %v12648, %v12649
  %v12651 = vsel %vm6672, %v6523, inf
  %v12652 = vmin.f32 %v12650, %v12651
  %v12653 = vsel %vm6672, %v6524, inf
  %v12654 = vmin.f32 %v12652, %v12653
  %v12655 = vsel %vm6672, %v6525, inf
  %v12656 = vmin.f32 %v12654, %v12655
  %v12657 = vsel %vm6672, %v6526, inf
  %v12658 = vmin.f32 %v12656, %v12657
  %v12659 = vsel %vm6672, %v6527, inf
  %v12660 = vmin.f32 %v12658, %v12659
  %v12661 = vrot.slane %v12660, 4
  %v12662 = vmin.f32 %v12660, %v12661
  %v12663 = vrot.slane %v12662, 2
  %v12664 = vmin.f32 %v12662, %v12663
  %v12665 = vrot.slane %v12664, 1
  %v12666 = vmin.f32 %v12664, %v12665
  %v12667 = vsel %vm6672, %v6528, inf
  %v12668 = vsel %vm6672, %v6529, inf
  %v12669 = vmin.f32 %v12667, %v12668
  %v12670 = vsel %vm6672, %v6530, inf
  %v12671 = vmin.f32 %v12669, %v12670
  %v12672 = vsel %vm6672, %v6531, inf
  %v12673 = vmin.f32 %v12671, %v12672
  %v12674 = vsel %vm6672, %v6532, inf
  %v12675 = vmin.f32 %v12673, %v12674
  %v12676 = vsel %vm6672, %v6533, inf
  %v12677 = vmin.f32 %v12675, %v12676
  %v12678 = vsel %vm6672, %v6534, inf
  %v12679 = vmin.f32 %v12677, %v12678
  %v12680 = vsel %vm6672, %v6535, inf
  %v12681 = vmin.f32 %v12679, %v12680
  %v12682 = vrot.slane %v12681, 4
  %v12683 = vmin.f32 %v12681, %v12682
  %v12684 = vrot.slane %v12683, 2
  %v12685 = vmin.f32 %v12683, %v12684
  %v12686 = vrot.slane %v12685, 1
  %v12687 = vmin.f32 %v12685, %v12686
  %v12688 = vsel %vm6672, %v6536, inf
  %v12689 = vsel %vm6672, %v6537, inf
  %v12690 = vmin.f32 %v12688, %v12689
  %v12691 = vsel %vm6672, %v6538, inf
  %v12692 = vmin.f32 %v12690, %v12691
  %v12693 = vsel %vm6672, %v6539, inf
  %v12694 = vmin.f32 %v12692, %v12693
  %v12695 = vsel %vm6672, %v6540, inf
  %v12696 = vmin.f32 %v12694, %v12695
  %v12697 = vsel %vm6672, %v6541, inf
  %v12698 = vmin.f32 %v12696, %v12697
  %v12699 = vsel %vm6672, %v6542, inf
  %v12700 = vmin.f32 %v12698, %v12699
  %v12701 = vsel %vm6672, %v6543, inf
  %v12702 = vmin.f32 %v12700, %v12701
  %v12703 = vrot.slane %v12702, 4
  %v12704 = vmin.f32 %v12702, %v12703
  %v12705 = vrot.slane %v12704, 2
  %v12706 = vmin.f32 %v12704, %v12705
  %v12707 = vrot.slane %v12706, 1
  %v12708 = vmin.f32 %v12706, %v12707
  %v12709 = vsel %vm6672, %v6544, inf
  %v12710 = vsel %vm6672, %v6545, inf
  %v12711 = vmin.f32 %v12709, %v12710
  %v12712 = vsel %vm6672, %v6546, inf
  %v12713 = vmin.f32 %v12711, %v12712
  %v12714 = vsel %vm6672, %v6547, inf
  %v12715 = vmin.f32 %v12713, %v12714
  %v12716 = vsel %vm6672, %v6548, inf
  %v12717 = vmin.f32 %v12715, %v12716
  %v12718 = vsel %vm6672, %v6549, inf
  %v12719 = vmin.f32 %v12717, %v12718
  %v12720 = vsel %vm6672, %v6550, inf
  %v12721 = vmin.f32 %v12719, %v12720
  %v12722 = vsel %vm6672, %v6551, inf
  %v12723 = vmin.f32 %v12721, %v12722
  %v12724 = vrot.slane %v12723, 4
  %v12725 = vmin.f32 %v12723, %v12724
  %v12726 = vrot.slane %v12725, 2
  %v12727 = vmin.f32 %v12725, %v12726
  %v12728 = vrot.slane %v12727, 1
  %v12729 = vmin.f32 %v12727, %v12728
  %v12730 = vsel %vm6672, %v6552, inf
  %v12731 = vsel %vm6672, %v6553, inf
  %v12732 = vmin.f32 %v12730, %v12731
  %v12733 = vsel %vm6672, %v6554, inf
  %v12734 = vmin.f32 %v12732, %v12733
  %v12735 = vsel %vm6672, %v6555, inf
  %v12736 = vmin.f32 %v12734, %v12735
  %v12737 = vsel %vm6672, %v6556, inf
  %v12738 = vmin.f32 %v12736, %v12737
  %v12739 = vsel %vm6672, %v6557, inf
  %v12740 = vmin.f32 %v12738, %v12739
  %v12741 = vsel %vm6672, %v6558, inf
  %v12742 = vmin.f32 %v12740, %v12741
  %v12743 = vsel %vm6672, %v6559, inf
  %v12744 = vmin.f32 %v12742, %v12743
  %v12745 = vrot.slane %v12744, 4
  %v12746 = vmin.f32 %v12744, %v12745
  %v12747 = vrot.slane %v12746, 2
  %v12748 = vmin.f32 %v12746, %v12747
  %v12749 = vrot.slane %v12748, 1
  %v12750 = vmin.f32 %v12748, %v12749
  %v12751 = vsel %vm6672, %v6560, inf
  %v12752 = vsel %vm6672, %v6561, inf
  %v12753 = vmin.f32 %v12751, %v12752
  %v12754 = vsel %vm6672, %v6562, inf
  %v12755 = vmin.f32 %v12753, %v12754
  %v12756 = vsel %vm6672, %v6563, inf
  %v12757 = vmin.f32 %v12755, %v12756
  %v12758 = vsel %vm6672, %v6564, inf
  %v12759 = vmin.f32 %v12757, %v12758
  %v12760 = vsel %vm6672, %v6565, inf
  %v12761 = vmin.f32 %v12759, %v12760
  %v12762 = vsel %vm6672, %v6566, inf
  %v12763 = vmin.f32 %v12761, %v12762
  %v12764 = vsel %vm6672, %v6567, inf
  %v12765 = vmin.f32 %v12763, %v12764
  %v12766 = vrot.slane %v12765, 4
  %v12767 = vmin.f32 %v12765, %v12766
  %v12768 = vrot.slane %v12767, 2
  %v12769 = vmin.f32 %v12767, %v12768
  %v12770 = vrot.slane %v12769, 1
  %v12771 = vmin.f32 %v12769, %v12770
  %v12772 = vsel %vm6672, %v6568, inf
  %v12773 = vsel %vm6672, %v6569, inf
  %v12774 = vmin.f32 %v12772, %v12773
  %v12775 = vsel %vm6672, %v6570, inf
  %v12776 = vmin.f32 %v12774, %v12775
  %v12777 = vsel %vm6672, %v6571, inf
  %v12778 = vmin.f32 %v12776, %v12777
  %v12779 = vsel %vm6672, %v6572, inf
  %v12780 = vmin.f32 %v12778, %v12779
  %v12781 = vsel %vm6672, %v6573, inf
  %v12782 = vmin.f32 %v12780, %v12781
  %v12783 = vsel %vm6672, %v6574, inf
  %v12784 = vmin.f32 %v12782, %v12783
  %v12785 = vsel %vm6672, %v6575, inf
  %v12786 = vmin.f32 %v12784, %v12785
  %v12787 = vrot.slane %v12786, 4
  %v12788 = vmin.f32 %v12786, %v12787
  %v12789 = vrot.slane %v12788, 2
  %v12790 = vmin.f32 %v12788, %v12789
  %v12791 = vrot.slane %v12790, 1
  %v12792 = vmin.f32 %v12790, %v12791
  %v12793 = vsel %vm6672, %v6576, inf
  %v12794 = vsel %vm6672, %v6577, inf
  %v12795 = vmin.f32 %v12793, %v12794
  %v12796 = vsel %vm6672, %v6578, inf
  %v12797 = vmin.f32 %v12795, %v12796
  %v12798 = vsel %vm6672, %v6579, inf
  %v12799 = vmin.f32 %v12797, %v12798
  %v12800 = vsel %vm6672, %v6580, inf
  %v12801 = vmin.f32 %v12799, %v12800
  %v12802 = vsel %vm6672, %v6581, inf
  %v12803 = vmin.f32 %v12801, %v12802
  %v12804 = vsel %vm6672, %v6582, inf
  %v12805 = vmin.f32 %v12803, %v12804
  %v12806 = vsel %vm6672, %v6583, inf
  %v12807 = vmin.f32 %v12805, %v12806
  %v12808 = vrot.slane %v12807, 4
  %v12809 = vmin.f32 %v12807, %v12808
  %v12810 = vrot.slane %v12809, 2
  %v12811 = vmin.f32 %v12809, %v12810
  %v12812 = vrot.slane %v12811, 1
  %v12813 = vmin.f32 %v12811, %v12812
  %v12814 = vsel %vm6672, %v6584, inf
  %v12815 = vsel %vm6672, %v6585, inf
  %v12816 = vmin.f32 %v12814, %v12815
  %v12817 = vsel %vm6672, %v6586, inf
  %v12818 = vmin.f32 %v12816, %v12817
  %v12819 = vsel %vm6672, %v6587, inf
  %v12820 = vmin.f32 %v12818, %v12819
  %v12821 = vsel %vm6672, %v6588, inf
  %v12822 = vmin.f32 %v12820, %v12821
  %v12823 = vsel %vm6672, %v6589, inf
  %v12824 = vmin.f32 %v12822, %v12823
  %v12825 = vsel %vm6672, %v6590, inf
  %v12826 = vmin.f32 %v12824, %v12825
  %v12827 = vsel %vm6672, %v6591, inf
  %v12828 = vmin.f32 %v12826, %v12827
  %v12829 = vrot.slane %v12828, 4
  %v12830 = vmin.f32 %v12828, %v12829
  %v12831 = vrot.slane %v12830, 2
  %v12832 = vmin.f32 %v12830, %v12831
  %v12833 = vrot.slane %v12832, 1
  %v12834 = vmin.f32 %v12832, %v12833
  %v12835 = vsel %vm6672, %v6592, inf
  %v12836 = vsel %vm6672, %v6593, inf
  %v12837 = vmin.f32 %v12835, %v12836
  %v12838 = vsel %vm6672, %v6594, inf
  %v12839 = vmin.f32 %v12837, %v12838
  %v12840 = vsel %vm6672, %v6595, inf
  %v12841 = vmin.f32 %v12839, %v12840
  %v12842 = vsel %vm6672, %v6596, inf
  %v12843 = vmin.f32 %v12841, %v12842
  %v12844 = vsel %vm6672, %v6597, inf
  %v12845 = vmin.f32 %v12843, %v12844
  %v12846 = vsel %vm6672, %v6598, inf
  %v12847 = vmin.f32 %v12845, %v12846
  %v12848 = vsel %vm6672, %v6599, inf
  %v12849 = vmin.f32 %v12847, %v12848
  %v12850 = vrot.slane %v12849, 4
  %v12851 = vmin.f32 %v12849, %v12850
  %v12852 = vrot.slane %v12851, 2
  %v12853 = vmin.f32 %v12851, %v12852
  %v12854 = vrot.slane %v12853, 1
  %v12855 = vmin.f32 %v12853, %v12854
  %v12856 = vsel %vm6672, %v6600, inf
  %v12857 = vsel %vm6672, %v6601, inf
  %v12858 = vmin.f32 %v12856, %v12857
  %v12859 = vsel %vm6672, %v6602, inf
  %v12860 = vmin.f32 %v12858, %v12859
  %v12861 = vsel %vm6672, %v6603, inf
  %v12862 = vmin.f32 %v12860, %v12861
  %v12863 = vsel %vm6672, %v6604, inf
  %v12864 = vmin.f32 %v12862, %v12863
  %v12865 = vsel %vm6672, %v6605, inf
  %v12866 = vmin.f32 %v12864, %v12865
  %v12867 = vsel %vm6672, %v6606, inf
  %v12868 = vmin.f32 %v12866, %v12867
  %v12869 = vsel %vm6672, %v6607, inf
  %v12870 = vmin.f32 %v12868, %v12869
  %v12871 = vrot.slane %v12870, 4
  %v12872 = vmin.f32 %v12870, %v12871
  %v12873 = vrot.slane %v12872, 2
  %v12874 = vmin.f32 %v12872, %v12873
  %v12875 = vrot.slane %v12874, 1
  %v12876 = vmin.f32 %v12874, %v12875
  %v12877 = vsel %vm6672, %v6608, inf
  %v12878 = vsel %vm6672, %v6609, inf
  %v12879 = vmin.f32 %v12877, %v12878
  %v12880 = vsel %vm6672, %v6610, inf
  %v12881 = vmin.f32 %v12879, %v12880
  %v12882 = vsel %vm6672, %v6611, inf
  %v12883 = vmin.f32 %v12881, %v12882
  %v12884 = vsel %vm6672, %v6612, inf
  %v12885 = vmin.f32 %v12883, %v12884
  %v12886 = vsel %vm6672, %v6613, inf
  %v12887 = vmin.f32 %v12885, %v12886
  %v12888 = vsel %vm6672, %v6614, inf
  %v12889 = vmin.f32 %v12887, %v12888
  %v12890 = vsel %vm6672, %v6615, inf
  %v12891 = vmin.f32 %v12889, %v12890
  %v12892 = vrot.slane %v12891, 4
  %v12893 = vmin.f32 %v12891, %v12892
  %v12894 = vrot.slane %v12893, 2
  %v12895 = vmin.f32 %v12893, %v12894
  %v12896 = vrot.slane %v12895, 1
  %v12897 = vmin.f32 %v12895, %v12896
  %v12898 = vsel %vm6672, %v6616, inf
  %v12899 = vsel %vm6672, %v6617, inf
  %v12900 = vmin.f32 %v12898, %v12899
  %v12901 = vsel %vm6672, %v6618, inf
  %v12902 = vmin.f32 %v12900, %v12901
  %v12903 = vsel %vm6672, %v6619, inf
  %v12904 = vmin.f32 %v12902, %v12903
  %v12905 = vsel %vm6672, %v6620, inf
  %v12906 = vmin.f32 %v12904, %v12905
  %v12907 = vsel %vm6672, %v6621, inf
  %v12908 = vmin.f32 %v12906, %v12907
  %v12909 = vsel %vm6672, %v6622, inf
  %v12910 = vmin.f32 %v12908, %v12909
  %v12911 = vsel %vm6672, %v6623, inf
  %v12912 = vmin.f32 %v12910, %v12911
  %v12913 = vrot.slane %v12912, 4
  %v12914 = vmin.f32 %v12912, %v12913
  %v12915 = vrot.slane %v12914, 2
  %v12916 = vmin.f32 %v12914, %v12915
  %v12917 = vrot.slane %v12916, 1
  %v12918 = vmin.f32 %v12916, %v12917
  %v12919 = vsel %vm6672, %v6624, inf
  %v12920 = vsel %vm6672, %v6625, inf
  %v12921 = vmin.f32 %v12919, %v12920
  %v12922 = vsel %vm6672, %v6626, inf
  %v12923 = vmin.f32 %v12921, %v12922
  %v12924 = vsel %vm6672, %v6627, inf
  %v12925 = vmin.f32 %v12923, %v12924
  %v12926 = vsel %vm6672, %v6628, inf
  %v12927 = vmin.f32 %v12925, %v12926
  %v12928 = vsel %vm6672, %v6629, inf
  %v12929 = vmin.f32 %v12927, %v12928
  %v12930 = vsel %vm6672, %v6630, inf
  %v12931 = vmin.f32 %v12929, %v12930
  %v12932 = vsel %vm6672, %v6631, inf
  %v12933 = vmin.f32 %v12931, %v12932
  %v12934 = vrot.slane %v12933, 4
  %v12935 = vmin.f32 %v12933, %v12934
  %v12936 = vrot.slane %v12935, 2
  %v12937 = vmin.f32 %v12935, %v12936
  %v12938 = vrot.slane %v12937, 1
  %v12939 = vmin.f32 %v12937, %v12938
  %v12940 = vsel %vm6672, %v6632, inf
  %v12941 = vsel %vm6672, %v6633, inf
  %v12942 = vmin.f32 %v12940, %v12941
  %v12943 = vsel %vm6672, %v6634, inf
  %v12944 = vmin.f32 %v12942, %v12943
  %v12945 = vsel %vm6672, %v6635, inf
  %v12946 = vmin.f32 %v12944, %v12945
  %v12947 = vsel %vm6672, %v6636, inf
  %v12948 = vmin.f32 %v12946, %v12947
  %v12949 = vsel %vm6672, %v6637, inf
  %v12950 = vmin.f32 %v12948, %v12949
  %v12951 = vsel %vm6672, %v6638, inf
  %v12952 = vmin.f32 %v12950, %v12951
  %v12953 = vsel %vm6672, %v6639, inf
  %v12954 = vmin.f32 %v12952, %v12953
  %v12955 = vrot.slane %v12954, 4
  %v12956 = vmin.f32 %v12954, %v12955
  %v12957 = vrot.slane %v12956, 2
  %v12958 = vmin.f32 %v12956, %v12957
  %v12959 = vrot.slane %v12958, 1
  %v12960 = vmin.f32 %v12958, %v12959
  %v12961 = vsel %vm6672, %v6640, inf
  %v12962 = vsel %vm6672, %v6641, inf
  %v12963 = vmin.f32 %v12961, %v12962
  %v12964 = vsel %vm6672, %v6642, inf
  %v12965 = vmin.f32 %v12963, %v12964
  %v12966 = vsel %vm6672, %v6643, inf
  %v12967 = vmin.f32 %v12965, %v12966
  %v12968 = vsel %vm6672, %v6644, inf
  %v12969 = vmin.f32 %v12967, %v12968
  %v12970 = vsel %vm6672, %v6645, inf
  %v12971 = vmin.f32 %v12969, %v12970
  %v12972 = vsel %vm6672, %v6646, inf
  %v12973 = vmin.f32 %v12971, %v12972
  %v12974 = vsel %vm6672, %v6647, inf
  %v12975 = vmin.f32 %v12973, %v12974
  %v12976 = vrot.slane %v12975, 4
  %v12977 = vmin.f32 %v12975, %v12976
  %v12978 = vrot.slane %v12977, 2
  %v12979 = vmin.f32 %v12977, %v12978
  %v12980 = vrot.slane %v12979, 1
  %v12981 = vmin.f32 %v12979, %v12980
  %v12982 = vsel %vm6672, %v6648, inf
  %v12983 = vsel %vm6672, %v6649, inf
  %v12984 = vmin.f32 %v12982, %v12983
  %v12985 = vsel %vm6672, %v6650, inf
  %v12986 = vmin.f32 %v12984, %v12985
  %v12987 = vsel %vm6672, %v6651, inf
  %v12988 = vmin.f32 %v12986, %v12987
  %v12989 = vsel %vm6672, %v6652, inf
  %v12990 = vmin.f32 %v12988, %v12989
  %v12991 = vsel %vm6672, %v6653, inf
  %v12992 = vmin.f32 %v12990, %v12991
  %v12993 = vsel %vm6672, %v6654, inf
  %v12994 = vmin.f32 %v12992, %v12993
  %v12995 = vsel %vm6672, %v6655, inf
  %v12996 = vmin.f32 %v12994, %v12995
  %v12997 = vrot.slane %v12996, 4
  %v12998 = vmin.f32 %v12996, %v12997
  %v12999 = vrot.slane %v12998, 2
  %v13000 = vmin.f32 %v12998, %v12999
  %v13001 = vrot.slane %v13000, 1
  %v13002 = vmin.f32 %v13000, %v13001
  %v13003 = vsel %vm6672, %v6656, inf
  %v13004 = vsel %vm6672, %v6657, inf
  %v13005 = vmin.f32 %v13003, %v13004
  %v13006 = vsel %vm6672, %v6658, inf
  %v13007 = vmin.f32 %v13005, %v13006
  %v13008 = vsel %vm6672, %v6659, inf
  %v13009 = vmin.f32 %v13007, %v13008
  %v13010 = vsel %vm6672, %v6660, inf
  %v13011 = vmin.f32 %v13009, %v13010
  %v13012 = vsel %vm6672, %v6661, inf
  %v13013 = vmin.f32 %v13011, %v13012
  %v13014 = vsel %vm6672, %v6662, inf
  %v13015 = vmin.f32 %v13013, %v13014
  %v13016 = vsel %vm6672, %v6663, inf
  %v13017 = vmin.f32 %v13015, %v13016
  %v13018 = vrot.slane %v13017, 4
  %v13019 = vmin.f32 %v13017, %v13018
  %v13020 = vrot.slane %v13019, 2
  %v13021 = vmin.f32 %v13019, %v13020
  %v13022 = vrot.slane %v13021, 1
  %v13023 = vmin.f32 %v13021, %v13022
  %v13088 = vsel %vm8081, %v11721, %v11700
  %v13089 = vsel %vm8083, %v11742, %v13088
  %v13090 = vsel %vm8085, %v11763, %v13089
  %v13091 = vsel %vm8087, %v11784, %v13090
  %v13092 = vsel %vm8089, %v11805, %v13091
  %v13093 = vsel %vm8091, %v11826, %v13092
  %v13094 = vsel %vm8093, %v11847, %v13093
  %v13095 = vsel %vm8081, %v11889, %v11868
  %v13096 = vsel %vm8083, %v11910, %v13095
  %v13097 = vsel %vm8085, %v11931, %v13096
  %v13098 = vsel %vm8087, %v11952, %v13097
  %v13099 = vsel %vm8089, %v11973, %v13098
  %v13100 = vsel %vm8091, %v11994, %v13099
  %v13101 = vsel %vm8093, %v12015, %v13100
  %v13102 = vsel %vm8081, %v12057, %v12036
  %v13103 = vsel %vm8083, %v12078, %v13102
  %v13104 = vsel %vm8085, %v12099, %v13103
  %v13105 = vsel %vm8087, %v12120, %v13104
  %v13106 = vsel %vm8089, %v12141, %v13105
  %v13107 = vsel %vm8091, %v12162, %v13106
  %v13108 = vsel %vm8093, %v12183, %v13107
  %v13109 = vsel %vm8081, %v12225, %v12204
  %v13110 = vsel %vm8083, %v12246, %v13109
  %v13111 = vsel %vm8085, %v12267, %v13110
  %v13112 = vsel %vm8087, %v12288, %v13111
  %v13113 = vsel %vm8089, %v12309, %v13112
  %v13114 = vsel %vm8091, %v12330, %v13113
  %v13115 = vsel %vm8093, %v12351, %v13114
  %v13116 = vsel %vm8081, %v12393, %v12372
  %v13117 = vsel %vm8083, %v12414, %v13116
  %v13118 = vsel %vm8085, %v12435, %v13117
  %v13119 = vsel %vm8087, %v12456, %v13118
  %v13120 = vsel %vm8089, %v12477, %v13119
  %v13121 = vsel %vm8091, %v12498, %v13120
  %v13122 = vsel %vm8093, %v12519, %v13121
  %v13123 = vsel %vm8081, %v12561, %v12540
  %v13124 = vsel %vm8083, %v12582, %v13123
  %v13125 = vsel %vm8085, %v12603, %v13124
  %v13126 = vsel %vm8087, %v12624, %v13125
  %v13127 = vsel %vm8089, %v12645, %v13126
  %v13128 = vsel %vm8091, %v12666, %v13127
  %v13129 = vsel %vm8093, %v12687, %v13128
  %v13130 = vsel %vm8081, %v12729, %v12708
  %v13131 = vsel %vm8083, %v12750, %v13130
  %v13132 = vsel %vm8085, %v12771, %v13131
  %v13133 = vsel %vm8087, %v12792, %v13132
  %v13134 = vsel %vm8089, %v12813, %v13133
  %v13135 = vsel %vm8091, %v12834, %v13134
  %v13136 = vsel %vm8093, %v12855, %v13135
  %v13137 = vsel %vm8081, %v12897, %v12876
  %v13138 = vsel %vm8083, %v12918, %v13137
  %v13139 = vsel %vm8085, %v12939, %v13138
  %v13140 = vsel %vm8087, %v12960, %v13139
  %v13141 = vsel %vm8089, %v12981, %v13140
  %v13142 = vsel %vm8091, %v13002, %v13141
  %v13143 = vsel %vm8093, %v13023, %v13142
  %v13152 = vmin.f32 %v11672, %v13094
  %v13153 = vmin.f32 %v11673, %v13101
  %v13154 = vmin.f32 %v11674, %v13108
  %v13155 = vmin.f32 %v11675, %v13115
  %v13156 = vmin.f32 %v11676, %v13122
  %v13157 = vmin.f32 %v11677, %v13129
  %v13158 = vmin.f32 %v11678, %v13136
  %v13159 = vmin.f32 %v11679, %v13143
  %13160 = vst.msk [vmem:[#allocation6] sm:$0xff] %vm6672, %v13152
  %13161 = vst.msk [vmem:[#allocation6 + $0x8] sm:$0xff] %vm6672, %v13153
  %13162 = vst.msk [vmem:[#allocation6 + $0x10] sm:$0xff] %vm6672, %v13154
  %13163 = vst.msk [vmem:[#allocation6 + $0x18] sm:$0xff] %vm6672, %v13155
  %13164 = vst.msk [vmem:[#allocation6 + $0x20] sm:$0xff] %vm6672, %v13156
  %13165 = vst.msk [vmem:[#allocation6 + $0x28] sm:$0xff] %vm6672, %v13157
  %13166 = vst.msk [vmem:[#allocation6 + $0x30] sm:$0xff] %vm6672, %v13158
  %13167 = vst.msk [vmem:[#allocation6 + $0x38] sm:$0xff] %vm6672, %v13159
  // Predicated region
  $region46: #{tpu_custom_call.1} parent=0 // pred_check
    %p13168 = pneg %p35
  $region47: #{tpu_custom_call.1} parent=0 // pred_check_branch
    %13170 = sbr.rel (%p13168) target = $region49
  $region48: #{tpu_custom_call.1} parent=0 // pred_region
    %v13171 = vld [vmem:[%s0] sm:$0xff]
    %v13172 = vld [vmem:[%s0 + $0x8] sm:$0xff]
    %v13173 = vld [vmem:[%s0 + $0x10] sm:$0xff]
    %v13174 = vld [vmem:[%s0 + $0x18] sm:$0xff]
    %v13175 = vld [vmem:[%s0 + $0x20] sm:$0xff]
    %v13176 = vld [vmem:[%s0 + $0x28] sm:$0xff]
    %v13177 = vld [vmem:[%s0 + $0x30] sm:$0xff]
    %v13178 = vld [vmem:[%s0 + $0x38] sm:$0xff]
    %v13179 = vld [vmem:[#allocation3] sm:$0xff]
    %v13180 = vld [vmem:[#allocation3 + $0x8] sm:$0xff]
    %v13181 = vld [vmem:[#allocation3 + $0x10] sm:$0xff]
    %v13182 = vld [vmem:[#allocation3 + $0x18] sm:$0xff]
    %v13183 = vld [vmem:[#allocation3 + $0x20] sm:$0xff]
    %v13184 = vld [vmem:[#allocation3 + $0x28] sm:$0xff]
    %v13185 = vld [vmem:[#allocation3 + $0x30] sm:$0xff]
    %v13186 = vld [vmem:[#allocation3 + $0x38] sm:$0xff]
    %v13187 = vmul.f32 %v13179, 0.015625
    %v13188 = vmul.f32 %v13180, 0.015625
    %v13189 = vmul.f32 %v13181, 0.015625
    %v13190 = vmul.f32 %v13182, 0.015625
    %v13191 = vmul.f32 %v13183, 0.015625
    %v13192 = vmul.f32 %v13184, 0.015625
    %v13193 = vmul.f32 %v13185, 0.015625
    %v13194 = vmul.f32 %v13186, 0.015625
    %v13195 = vld [vmem:[#allocation4] sm:$0xff]
    %v13196 = vld [vmem:[#allocation4 + $0x8] sm:$0xff]
    %v13197 = vld [vmem:[#allocation4 + $0x10] sm:$0xff]
    %v13198 = vld [vmem:[#allocation4 + $0x18] sm:$0xff]
    %v13199 = vld [vmem:[#allocation4 + $0x20] sm:$0xff]
    %v13200 = vld [vmem:[#allocation4 + $0x28] sm:$0xff]
    %v13201 = vld [vmem:[#allocation4 + $0x30] sm:$0xff]
    %v13202 = vld [vmem:[#allocation4 + $0x38] sm:$0xff]
    %v13203 = vmul.f32 %v13195, 0.015625
    %v13204 = vmul.f32 %v13196, 0.015625
    %v13205 = vmul.f32 %v13197, 0.015625
    %v13206 = vmul.f32 %v13198, 0.015625
    %v13207 = vmul.f32 %v13199, 0.015625
    %v13208 = vmul.f32 %v13200, 0.015625
    %v13209 = vmul.f32 %v13201, 0.015625
    %v13210 = vmul.f32 %v13202, 0.015625
    %v13211 = vmul.f32 %v13187, %v13187
    %v13212 = vmul.f32 %v13188, %v13188
    %v13213 = vmul.f32 %v13189, %v13189
    %v13214 = vmul.f32 %v13190, %v13190
    %v13215 = vmul.f32 %v13191, %v13191
    %v13216 = vmul.f32 %v13192, %v13192
    %v13217 = vmul.f32 %v13193, %v13193
    %v13218 = vmul.f32 %v13194, %v13194
    %v13219 = vsub.f32 %v13203, %v13211
    %v13220 = vsub.f32 %v13204, %v13212
    %v13221 = vsub.f32 %v13205, %v13213
    %v13222 = vsub.f32 %v13206, %v13214
    %v13223 = vsub.f32 %v13207, %v13215
    %v13224 = vsub.f32 %v13208, %v13216
    %v13225 = vsub.f32 %v13209, %v13217
    %v13226 = vsub.f32 %v13210, %v13218
    %v13227 = vmax.f32 %v13219, 0.0
    %v13228 = vmax.f32 %v13220, 0.0
    %v13229 = vmax.f32 %v13221, 0.0
    %v13230 = vmax.f32 %v13222, 0.0
    %v13231 = vmax.f32 %v13223, 0.0
    %v13232 = vmax.f32 %v13224, 0.0
    %v13233 = vmax.f32 %v13225, 0.0
    %v13234 = vmax.f32 %v13226, 0.0
    %v13235 = vadd.f32 %v13227, 1e-05
    %v13236 = vadd.f32 %v13228, 1e-05
    %v13237 = vadd.f32 %v13229, 1e-05
    %v13238 = vadd.f32 %v13230, 1e-05
    %v13239 = vadd.f32 %v13231, 1e-05
    %v13240 = vadd.f32 %v13232, 1e-05
    %v13241 = vadd.f32 %v13233, 1e-05
    %v13242 = vadd.f32 %v13234, 1e-05
    %v13243 = vrsqrt.pop %v13235
    %v13244 = vmul.f32 %v13235, %v13243
    %vm13245 = vcmp.eq.f32.partialorder %v13235, inf
    %v13246 = vsel %vm13245, %v13235, %v13244
    %vm13247 = vcmp.eq.f32.partialorder %v13235, 0.0
    %v13248 = vand.u32 %v13235, 2147483648
    %v13249 = vsel %vm13247, %v13248, %v13246
    %v13250 = vrsqrt.pop %v13236
    %v13251 = vmul.f32 %v13236, %v13250
    %vm13252 = vcmp.eq.f32.partialorder %v13236, inf
    %v13253 = vsel %vm13252, %v13236, %v13251
    %vm13254 = vcmp.eq.f32.partialorder %v13236, 0.0
    %v13255 = vand.u32 %v13236, 2147483648
    %v13256 = vsel %vm13254, %v13255, %v13253
    %v13257 = vrsqrt.pop %v13237
    %v13258 = vmul.f32 %v13237, %v13257
    %vm13259 = vcmp.eq.f32.partialorder %v13237, inf
    %v13260 = vsel %vm13259, %v13237, %v13258
    %vm13261 = vcmp.eq.f32.partialorder %v13237, 0.0
    %v13262 = vand.u32 %v13237, 2147483648
    %v13263 = vsel %vm13261, %v13262, %v13260
    %v13264 = vrsqrt.pop %v13238
    %v13265 = vmul.f32 %v13238, %v13264
    %vm13266 = vcmp.eq.f32.partialorder %v13238, inf
    %v13267 = vsel %vm13266, %v13238, %v13265
    %vm13268 = vcmp.eq.f32.partialorder %v13238, 0.0
    %v13269 = vand.u32 %v13238, 2147483648
    %v13270 = vsel %vm13268, %v13269, %v13267
    %v13271 = vrsqrt.pop %v13239
    %v13272 = vmul.f32 %v13239, %v13271
    %vm13273 = vcmp.eq.f32.partialorder %v13239, inf
    %v13274 = vsel %vm13273, %v13239, %v13272
    %vm13275 = vcmp.eq.f32.partialorder %v13239, 0.0
    %v13276 = vand.u32 %v13239, 2147483648
    %v13277 = vsel %vm13275, %v13276, %v13274
    %v13278 = vrsqrt.pop %v13240
    %v13279 = vmul.f32 %v13240, %v13278
    %vm13280 = vcmp.eq.f32.partialorder %v13240, inf
    %v13281 = vsel %vm13280, %v13240, %v13279
    %vm13282 = vcmp.eq.f32.partialorder %v13240, 0.0
    %v13283 = vand.u32 %v13240, 2147483648
    %v13284 = vsel %vm13282, %v13283, %v13281
    %v13285 = vrsqrt.pop %v13241
    %v13286 = vmul.f32 %v13241, %v13285
    %vm13287 = vcmp.eq.f32.partialorder %v13241, inf
    %v13288 = vsel %vm13287, %v13241, %v13286
    %vm13289 = vcmp.eq.f32.partialorder %v13241, 0.0
    %v13290 = vand.u32 %v13241, 2147483648
    %v13291 = vsel %vm13289, %v13290, %v13288
    %v13292 = vrsqrt.pop %v13242
    %v13293 = vmul.f32 %v13242, %v13292
    %vm13294 = vcmp.eq.f32.partialorder %v13242, inf
    %v13295 = vsel %vm13294, %v13242, %v13293
    %vm13296 = vcmp.eq.f32.partialorder %v13242, 0.0
    %v13297 = vand.u32 %v13242, 2147483648
    %v13298 = vsel %vm13296, %v13297, %v13295
    %v13299 = vld [vmem:[#allocation5] sm:$0xff]
    %v13300 = vld [vmem:[#allocation5 + $0x8] sm:$0xff]
    %v13301 = vld [vmem:[#allocation5 + $0x10] sm:$0xff]
    %v13302 = vld [vmem:[#allocation5 + $0x18] sm:$0xff]
    %v13303 = vld [vmem:[#allocation5 + $0x20] sm:$0xff]
    %v13304 = vld [vmem:[#allocation5 + $0x28] sm:$0xff]
    %v13305 = vld [vmem:[#allocation5 + $0x30] sm:$0xff]
    %v13306 = vld [vmem:[#allocation5 + $0x38] sm:$0xff]
    %v13307 = vld [vmem:[#allocation6] sm:$0xff]
    %v13308 = vld [vmem:[#allocation6 + $0x8] sm:$0xff]
    %v13309 = vld [vmem:[#allocation6 + $0x10] sm:$0xff]
    %v13310 = vld [vmem:[#allocation6 + $0x18] sm:$0xff]
    %v13311 = vld [vmem:[#allocation6 + $0x20] sm:$0xff]
    %v13312 = vld [vmem:[#allocation6 + $0x28] sm:$0xff]
    %v13313 = vld [vmem:[#allocation6 + $0x30] sm:$0xff]
    %v13314 = vld [vmem:[#allocation6 + $0x38] sm:$0xff]
    %13323 = vrot.lane.b32.xlu0 %v13187, 32
    %v13324 = vpop.permute.xlu0 %13323
    %13325 = vrot.lane.b32.xlu0 %v13188, 32
    %v13326 = vpop.permute.xlu0 %13325
    %13327 = vrot.lane.b32.xlu0 %v13189, 32
    %v13328 = vpop.permute.xlu0 %13327
    %13329 = vrot.lane.b32.xlu0 %v13190, 32
    %v13330 = vpop.permute.xlu0 %13329
    %13331 = vrot.lane.b32.xlu0 %v13191, 32
    %v13332 = vpop.permute.xlu0 %13331
    %13333 = vrot.lane.b32.xlu0 %v13192, 32
    %v13334 = vpop.permute.xlu0 %13333
    %13335 = vrot.lane.b32.xlu0 %v13193, 32
    %v13336 = vpop.permute.xlu0 %13335
    %13337 = vrot.lane.b32.xlu0 %v13194, 32
    %v13338 = vpop.permute.xlu0 %13337
    %13355 = vrot.lane.b32.xlu0 %v13299, 64
    %v13356 = vpop.permute.xlu0 %13355
    %13357 = vrot.lane.b32.xlu0 %v13300, 64
    %v13358 = vpop.permute.xlu0 %13357
    %13359 = vrot.lane.b32.xlu0 %v13301, 64
    %v13360 = vpop.permute.xlu0 %13359
    %13361 = vrot.lane.b32.xlu0 %v13302, 64
    %v13362 = vpop.permute.xlu0 %13361
    %13363 = vrot.lane.b32.xlu0 %v13303, 64
    %v13364 = vpop.permute.xlu0 %13363
    %13365 = vrot.lane.b32.xlu0 %v13304, 64
    %v13366 = vpop.permute.xlu0 %13365
    %13367 = vrot.lane.b32.xlu0 %v13305, 64
    %v13368 = vpop.permute.xlu0 %13367
    %13369 = vrot.lane.b32.xlu0 %v13306, 64
    %v13370 = vpop.permute.xlu0 %13369
    %13387 = vrot.lane.b32.xlu0 %v13307, 96
    %v13388 = vpop.permute.xlu0 %13387
    %13389 = vrot.lane.b32.xlu0 %v13308, 96
    %v13390 = vpop.permute.xlu0 %13389
    %13391 = vrot.lane.b32.xlu0 %v13309, 96
    %v13392 = vpop.permute.xlu0 %13391
    %13393 = vrot.lane.b32.xlu0 %v13310, 96
    %v13394 = vpop.permute.xlu0 %13393
    %13395 = vrot.lane.b32.xlu0 %v13311, 96
    %v13396 = vpop.permute.xlu0 %13395
    %13397 = vrot.lane.b32.xlu0 %v13312, 96
    %v13398 = vpop.permute.xlu0 %13397
    %13399 = vrot.lane.b32.xlu0 %v13313, 96
    %v13400 = vpop.permute.xlu0 %13399
    %13401 = vrot.lane.b32.xlu0 %v13314, 96
    %v13402 = vpop.permute.xlu0 %13401
    %v13411 = vsel %vm6672, %v13171, %v13324
    %v13412 = vsel %vm6672, %v13172, %v13326
    %v13413 = vsel %vm6672, %v13173, %v13328
    %v13414 = vsel %vm6672, %v13174, %v13330
    %v13415 = vsel %vm6672, %v13175, %v13332
    %v13416 = vsel %vm6672, %v13176, %v13334
    %v13417 = vsel %vm6672, %v13177, %v13336
    %v13418 = vsel %vm6672, %v13178, %v13338
    %vm13419 = vcmask 523264
    %v13420 = vsel %vm13419, %v13411, %v13356
    %v13421 = vsel %vm13419, %v13412, %v13358
    %v13422 = vsel %vm13419, %v13413, %v13360
    %v13423 = vsel %vm13419, %v13414, %v13362
    %v13424 = vsel %vm13419, %v13415, %v13364
    %v13425 = vsel %vm13419, %v13416, %v13366
    %v13426 = vsel %vm13419, %v13417, %v13368
    %v13427 = vsel %vm13419, %v13418, %v13370
    %vm13428 = vcmask 785408
    %v13429 = vsel %vm13428, %v13420, %v13388
    %v13430 = vsel %vm13428, %v13421, %v13390
    %v13431 = vsel %vm13428, %v13422, %v13392
    %v13432 = vsel %vm13428, %v13423, %v13394
    %v13433 = vsel %vm13428, %v13424, %v13396
    %v13434 = vsel %vm13428, %v13425, %v13398
    %v13435 = vsel %vm13428, %v13426, %v13400
    %v13436 = vsel %vm13428, %v13427, %v13402
    %v13437 = vld [vmem:[%s6] sm:$0xff]
    %v13438 = vld [vmem:[%s6 + $0x8] sm:$0xff]
    %v13439 = vld [vmem:[%s6 + $0x10] sm:$0xff]
    %v13440 = vld [vmem:[%s6 + $0x18] sm:$0xff]
    %v13441 = vld [vmem:[%s6 + $0x20] sm:$0xff]
    %v13442 = vld [vmem:[%s6 + $0x28] sm:$0xff]
    %v13443 = vld [vmem:[%s6 + $0x30] sm:$0xff]
    %v13444 = vld [vmem:[%s6 + $0x38] sm:$0xff]
    %v13445 = vld [vmem:[%s6 + $0x40] sm:$0xff]
    %v13446 = vld [vmem:[%s6 + $0x48] sm:$0xff]
    %v13447 = vld [vmem:[%s6 + $0x50] sm:$0xff]
    %v13448 = vld [vmem:[%s6 + $0x58] sm:$0xff]
    %v13449 = vld [vmem:[%s6 + $0x60] sm:$0xff]
    %v13450 = vld [vmem:[%s6 + $0x68] sm:$0xff]
    %v13451 = vld [vmem:[%s6 + $0x70] sm:$0xff]
    %v13452 = vld [vmem:[%s6 + $0x78] sm:$0xff]
    %v13453 = vld [vmem:[%s6 + $0x80] sm:$0xff]
    %v13454 = vld [vmem:[%s6 + $0x88] sm:$0xff]
    %v13455 = vld [vmem:[%s6 + $0x90] sm:$0xff]
    %v13456 = vld [vmem:[%s6 + $0x98] sm:$0xff]
    %v13457 = vld [vmem:[%s7] sm:$0x1]
    %v13459 = vlaneseq
    %v13460 = vshrl.u32 %v13459, 7
    %v13461 = vsub.s32 0, %v13460
    %v13462 = vrot.slane %v13457, %v13461
    %v13465 = vsel %vm6672, %v13249, 0
    %v13468 = vsel %vm6672, %v13256, 0
    %v13471 = vsel %vm6672, %v13263, 0
    %v13474 = vsel %vm6672, %v13270, 0
    %v13477 = vsel %vm6672, %v13277, 0
    %v13480 = vsel %vm6672, %v13284, 0
    %v13483 = vsel %vm6672, %v13291, 0
    %v13486 = vsel %vm6672, %v13298, 0
    %13488 = vmatprep.subr.mxu0 0.0
    %13489 = vmatpush1.msra.mxu0 %v13437
    %13490 = vmatprep.subr.mxu0 0.0
    %13491 = vmatpush1.msra.mxu0 %v13438
    %13492 = vmatprep.subr.mxu0 0.0
    %13493 = vmatpush1.msra.mxu0 %v13439
    %13494 = vmatprep.subr.mxu0 0.0
    %13495 = vmatpush1.msra.mxu0 %v13440
    %13496 = vmatprep.subr.mxu0 0.0
    %13497 = vmatpush1.msra.mxu0 %v13441
    %13498 = vmatprep.subr.mxu0 0.0
    %13499 = vmatpush1.msra.mxu0 %v13442
    %13500 = vmatprep.subr.mxu0 0.0
    %13501 = vmatpush1.msra.mxu0 %v13443
    %13502 = vmatprep.subr.mxu0 0.0
    %13503 = vmatpush1.msra.mxu0 %v13444
    %13504 = vmatprep.subr.mxu0 0.0
    %13505 = vmatpush1.msra.mxu0 %v13445
    %13506 = vmatprep.subr.mxu0 0.0
    %13507 = vmatpush1.msra.mxu0 %v13446
    %13508 = vmatprep.subr.mxu0 0.0
    %13509 = vmatpush1.msra.mxu0 %v13447
    %13510 = vmatprep.subr.mxu0 0.0
    %13511 = vmatpush1.msra.mxu0 %v13448
    %13512 = vmatprep.subr.mxu0 0.0
    %13513 = vmatpush1.msra.mxu0 %v13449
    %13514 = vmatprep.subr.mxu0 0.0
    %13515 = vmatpush1.msra.mxu0 %v13450
    %13516 = vmatprep.subr.mxu0 0.0
    %13517 = vmatpush1.msra.mxu0 %v13451
    %13518 = vmatprep.subr.mxu0 0.0
    %13519 = vmatpush1.msra.mxu0 %v13452
    %13520 = vmatprep.subr.mxu0 0.0
    %13521 = vmatpush1.msra.mxu0 %v13453
    %13522 = vmatprep.subr.mxu0 0.0
    %13523 = vmatpush1.msra.mxu0 %v13454
    %13524 = vmatprep.subr.mxu0 0.0
    %13525 = vmatpush1.msra.mxu0 %v13455
    %13526 = vmatprep.subr.mxu0 0.0
    %13527 = vmatpush1.msra.mxu0 %v13456
    %13528 = vmatprep.subr.mxu0 0.0
    %13529 = vmatpush1.msra.mxu0 0.0
    %13530 = vmatprep.subr.mxu0 0.0
    %13531 = vmatpush1.msra.mxu0 0.0
    %13532 = vmatprep.subr.mxu0 0.0
    %13533 = vmatpush1.msra.mxu0 0.0
    %13534 = vmatprep.subr.mxu0 0.0
    %13535 = vmatpush1.msra.mxu0 0.0
    %13536 = vmatprep.subr.mxu0 0.0
    %13537 = vmatpush1.msra.mxu0 0.0
    %13538 = vmatprep.subr.mxu0 0.0
    %13539 = vmatpush1.msra.mxu0 0.0
    %13540 = vmatprep.subr.mxu0 0.0
    %13541 = vmatpush1.msra.mxu0 0.0
    %13542 = vmatprep.subr.mxu0 0.0
    %13543 = vmatpush1.msra.mxu0 0.0
    %13544 = vmatprep.subr.mxu0 0.0
    %13545 = vmatpush1.msra.mxu0 0.0
    %13546 = vmatprep.subr.mxu0 0.0
    %13547 = vmatpush1.msra.mxu0 0.0
    %13548 = vmatprep.subr.mxu0 0.0
    %13549 = vmatpush1.msra.mxu0 0.0
    %13550 = vmatprep.subr.mxu0 0.0
    %13551 = vmatpush1.msra.mxu0 0.0
    %13552 = vmatprep.mubr.f32.mxu0 %v13465
    %13553 = vmatmul.mubr.f32.gmra.mrb[0].mxu0 %v13429
    %v13554 = vpop.f32.mrb[0].mxu0
    %v13555 = vadd.f32 %v13462, %v13554
    %v13556 = vpop.f32.mrb[0].mxu0
    %13557 = vmatprep.mubr.f32.mxu0 %v13468
    %13558 = vmatmul.mubr.f32.gmra.mrb[0].mxu0 %v13430
    %v13559 = vpop.f32.mrb[0].mxu0
    %v13560 = vadd.f32 %v13462, %v13559
    %v13561 = vpop.f32.mrb[0].mxu0
    %13562 = vmatprep.mubr.f32.mxu0 %v13471
    %13563 = vmatmul.mubr.f32.gmra.mrb[0].mxu0 %v13431
    %v13564 = vpop.f32.mrb[0].mxu0
    %v13565 = vadd.f32 %v13462, %v13564
    %v13566 = vpop.f32.mrb[0].mxu0
    %13567 = vmatprep.mubr.f32.mxu0 %v13474
    %13568 = vmatmul.mubr.f32.gmra.mrb[0].mxu0 %v13432
    %v13569 = vpop.f32.mrb[0].mxu0
    %v13570 = vadd.f32 %v13462, %v13569
    %v13571 = vpop.f32.mrb[0].mxu0
    %13572 = vmatprep.mubr.f32.mxu0 %v13477
    %13573 = vmatmul.mubr.f32.gmra.mrb[0].mxu0 %v13433
    %v13574 = vpop.f32.mrb[0].mxu0
    %v13575 = vadd.f32 %v13462, %v13574
    %v13576 = vpop.f32.mrb[0].mxu0
    %13577 = vmatprep.mubr.f32.mxu0 %v13480
    %13578 = vmatmul.mubr.f32.gmra.mrb[0].mxu0 %v13434
    %v13579 = vpop.f32.mrb[0].mxu0
    %v13580 = vadd.f32 %v13462, %v13579
    %v13581 = vpop.f32.mrb[0].mxu0
    %13582 = vmatprep.mubr.f32.mxu0 %v13483
    %13583 = vmatmul.mubr.f32.gmra.mrb[0].mxu0 %v13435
    %v13584 = vpop.f32.mrb[0].mxu0
    %v13585 = vadd.f32 %v13462, %v13584
    %v13586 = vpop.f32.mrb[0].mxu0
    %13587 = vmatprep.mubr.f32.mxu0 %v13486
    %13588 = vmatmul.mubr.f32.gmra.mrb[0].mxu0 %v13436
    %v13589 = vpop.f32.mrb[0].mxu0
    %v13590 = vadd.f32 %v13462, %v13589
    %v13591 = vpop.f32.mrb[0].mxu0
    %13592 = vdwg.mxu0
    %v13593 = vmax.f32 %v13555, 0.0
    %v13594 = vmax.f32 %v13560, 0.0
    %v13595 = vmax.f32 %v13565, 0.0
    %v13596 = vmax.f32 %v13570, 0.0
    %v13597 = vmax.f32 %v13575, 0.0
    %v13598 = vmax.f32 %v13580, 0.0
    %v13599 = vmax.f32 %v13585, 0.0
    %v13600 = vmax.f32 %v13590, 0.0
    %v13601 = vld [vmem:[%s8] sm:$0xff]
    %v13602 = vld [vmem:[%s8 + $0x8] sm:$0xff]
    %v13603 = vld [vmem:[%s8 + $0x10] sm:$0xff]
    %v13604 = vld [vmem:[%s8 + $0x18] sm:$0xff]
    %v13605 = vld [vmem:[%s9] sm:$0x1]
    %v13607 = vlaneseq
    %v13608 = vshrl.u32 %v13607, 7
    %v13609 = vsub.s32 0, %v13608
    %v13610 = vrot.slane %v13605, %v13609
    %v13613 = vsel %vm6672, %v13593, 0
    %v13616 = vsel %vm6672, %v13594, 0
    %v13619 = vsel %vm6672, %v13595, 0
    %v13622 = vsel %vm6672, %v13596, 0
    %v13625 = vsel %vm6672, %v13597, 0
    %v13628 = vsel %vm6672, %v13598, 0
    %v13631 = vsel %vm6672, %v13599, 0
    %v13634 = vsel %vm6672, %v13600, 0
    %13636 = vmatprep.subr.mxu0 0.0
    %13637 = vmatpush1.msra.mxu0 %v13601
    %13638 = vmatprep.subr.mxu0 0.0
    %13639 = vmatpush1.msra.mxu0 %v13602
    %13640 = vmatprep.subr.mxu0 0.0
    %13641 = vmatpush1.msra.mxu0 %v13603
    %13642 = vmatprep.subr.mxu0 0.0
    %13643 = vmatpush1.msra.mxu0 %v13604
    %13644 = vmatprep.subr.mxu0 0.0
    %13645 = vmatpush1.msra.mxu0 0.0
    %13646 = vmatprep.subr.mxu0 0.0
    %13647 = vmatpush1.msra.mxu0 0.0
    %13648 = vmatprep.subr.mxu0 0.0
    %13649 = vmatpush1.msra.mxu0 0.0
    %13650 = vmatprep.subr.mxu0 0.0
    %13651 = vmatpush1.msra.mxu0 0.0
    %13652 = vmatprep.subr.mxu0 0.0
    %13653 = vmatpush1.msra.mxu0 0.0
    %13654 = vmatprep.subr.mxu0 0.0
    %13655 = vmatpush1.msra.mxu0 0.0
    %13656 = vmatprep.subr.mxu0 0.0
    %13657 = vmatpush1.msra.mxu0 0.0
    %13658 = vmatprep.subr.mxu0 0.0
    %13659 = vmatpush1.msra.mxu0 0.0
    %13660 = vmatprep.subr.mxu0 0.0
    %13661 = vmatpush1.msra.mxu0 0.0
    %13662 = vmatprep.subr.mxu0 0.0
    %13663 = vmatpush1.msra.mxu0 0.0
    %13664 = vmatprep.subr.mxu0 0.0
    %13665 = vmatpush1.msra.mxu0 0.0
    %13666 = vmatprep.subr.mxu0 0.0
    %13667 = vmatpush1.msra.mxu0 0.0
    %13668 = vmatprep.subr.mxu0 0.0
    %13669 = vmatpush1.msra.mxu0 0.0
    %13670 = vmatprep.subr.mxu0 0.0
    %13671 = vmatpush1.msra.mxu0 0.0
    %13672 = vmatprep.subr.mxu0 0.0
    %13673 = vmatpush1.msra.mxu0 0.0
    %13674 = vmatprep.subr.mxu0 0.0
    %13675 = vmatpush1.msra.mxu0 0.0
    %13676 = vmatprep.subr.mxu0 0.0
    %13677 = vmatpush1.msra.mxu0 0.0
    %13678 = vmatprep.subr.mxu0 0.0
    %13679 = vmatpush1.msra.mxu0 0.0
    %13680 = vmatprep.subr.mxu0 0.0
    %13681 = vmatpush1.msra.mxu0 0.0
    %13682 = vmatprep.subr.mxu0 0.0
    %13683 = vmatpush1.msra.mxu0 0.0
    %13684 = vmatprep.subr.mxu0 0.0
    %13685 = vmatpush1.msra.mxu0 0.0
    %13686 = vmatprep.subr.mxu0 0.0
    %13687 = vmatpush1.msra.mxu0 0.0
    %13688 = vmatprep.subr.mxu0 0.0
    %13689 = vmatpush1.msra.mxu0 0.0
    %13690 = vmatprep.subr.mxu0 0.0
    %13691 = vmatpush1.msra.mxu0 0.0
    %13692 = vmatprep.subr.mxu0 0.0
    %13693 = vmatpush1.msra.mxu0 0.0
    %13694 = vmatprep.subr.mxu0 0.0
    %13695 = vmatpush1.msra.mxu0 0.0
    %13696 = vmatprep.subr.mxu0 0.0
    %13697 = vmatpush1.msra.mxu0 0.0
    %13698 = vmatprep.subr.mxu0 0.0
    %13699 = vmatpush1.msra.mxu0 0.0
    %13700 = vmatprep.mubr.f32.mxu0 0.0
    %13701 = vmatmul.mubr.f32.gmra.mrb[0].mxu0 %v13613
    %v13702 = vpop.f32.mrb[0].mxu0
    %v13703 = vadd.f32 %v13610, %v13702
    %v13704 = vpop.f32.mrb[0].mxu0
    %13705 = vmatprep.mubr.f32.mxu0 0.0
    %13706 = vmatmul.mubr.f32.gmra.mrb[0].mxu0 %v13616
    %v13707 = vpop.f32.mrb[0].mxu0
    %v13708 = vadd.f32 %v13610, %v13707
    %v13709 = vpop.f32.mrb[0].mxu0
    %13710 = vmatprep.mubr.f32.mxu0 0.0
    %13711 = vmatmul.mubr.f32.gmra.mrb[0].mxu0 %v13619
    %v13712 = vpop.f32.mrb[0].mxu0
    %v13713 = vadd.f32 %v13610, %v13712
    %v13714 = vpop.f32.mrb[0].mxu0
    %13715 = vmatprep.mubr.f32.mxu0 0.0
    %13716 = vmatmul.mubr.f32.gmra.mrb[0].mxu0 %v13622
    %v13717 = vpop.f32.mrb[0].mxu0
    %v13718 = vadd.f32 %v13610, %v13717
    %v13719 = vpop.f32.mrb[0].mxu0
    %13720 = vmatprep.mubr.f32.mxu0 0.0
    %13721 = vmatmul.mubr.f32.gmra.mrb[0].mxu0 %v13625
    %v13722 = vpop.f32.mrb[0].mxu0
    %v13723 = vadd.f32 %v13610, %v13722
    %v13724 = vpop.f32.mrb[0].mxu0
    %13725 = vmatprep.mubr.f32.mxu0 0.0
    %13726 = vmatmul.mubr.f32.gmra.mrb[0].mxu0 %v13628
    %v13727 = vpop.f32.mrb[0].mxu0
    %v13728 = vadd.f32 %v13610, %v13727
    %v13729 = vpop.f32.mrb[0].mxu0
    %13730 = vmatprep.mubr.f32.mxu0 0.0
    %13731 = vmatmul.mubr.f32.gmra.mrb[0].mxu0 %v13631
    %v13732 = vpop.f32.mrb[0].mxu0
    %v13733 = vadd.f32 %v13610, %v13732
    %v13734 = vpop.f32.mrb[0].mxu0
    %13735 = vmatprep.mubr.f32.mxu0 0.0
    %13736 = vmatmul.mubr.f32.gmra.mrb[0].mxu0 %v13634
    %v13737 = vpop.f32.mrb[0].mxu0
    %v13738 = vadd.f32 %v13610, %v13737
    %v13739 = vpop.f32.mrb[0].mxu0
    %13740 = vdwg.mxu0
    %v13741 = vadd.f32 %v13703, %v13171
    %v13742 = vadd.f32 %v13708, %v13172
    %v13743 = vadd.f32 %v13713, %v13173
    %v13744 = vadd.f32 %v13718, %v13174
    %v13745 = vadd.f32 %v13723, %v13175
    %v13746 = vadd.f32 %v13728, %v13176
    %v13747 = vadd.f32 %v13733, %v13177
    %v13748 = vadd.f32 %v13738, %v13178
    %13749 = vst.msk [vmem:[%s10] sm:$0xff] %vm6672, %v13741
    %13750 = vst.msk [vmem:[%s10 + $0x8] sm:$0xff] %vm6672, %v13742
    %13751 = vst.msk [vmem:[%s10 + $0x10] sm:$0xff] %vm6672, %v13743
    %13752 = vst.msk [vmem:[%s10 + $0x18] sm:$0xff] %vm6672, %v13744
    %13753 = vst.msk [vmem:[%s10 + $0x20] sm:$0xff] %vm6672, %v13745
    %13754 = vst.msk [vmem:[%s10 + $0x28] sm:$0xff] %vm6672, %v13746
    %13755 = vst.msk [vmem:[%s10 + $0x30] sm:$0xff] %vm6672, %v13747
    %13756 = vst.msk [vmem:[%s10 + $0x38] sm:$0xff] %vm6672, %v13748
  $region49: #{tpu_custom_call.1} parent=0 // pred_fallthru
    _
  // Predicated region
  $region50: #{tpu_custom_call.1} parent=0 // pred_check
    _
  $region51: #{tpu_custom_call.1} parent=0 // pred_check_branch
    %13758 = sbr.rel (0) target = $region53
  $region52: #{tpu_custom_call.1} parent=0 // pred_region
    _
  $region53: #{tpu_custom_call.1} parent=0 // pred_fallthru
    _
  // Predicated region
  $region54: #{tpu_custom_call.1} parent=0 // pred_check
    _
  $region55: #{tpu_custom_call.1} parent=0 // pred_check_branch
    %13760 = sbr.rel (0) target = $region57
  $region56: #{tpu_custom_call.1} parent=0 // pred_region
    _
  $region57: #{tpu_custom_call.1} parent=0 // pred_fallthru
    _

</llo_original>
